<compile_context>
chip_gen: v7x
topology: tpu7x:2x2x1
jax: 0.10.0
libtpu: 0.0.40
codegen_flags: <defaults>
</compile_context>

<pallas_src>
import jax
import jax.numpy as jnp
from jax.experimental import pallas as pl
from jax.experimental.pallas import tpu as pltpu

SEQ = 20   # fixed by the module (x.chunk(20, dim=1), fc1 in-features = hidden*2*20)
FEAT = 2   # LSTMCell input size


def _round_up(n, m):
    return ((n + m - 1) // m) * m


def _slab_offsets(H):
    """Row offsets of the packed parameter slab (all 8-aligned)."""
    wih_off = 0                                  # rows [0, FEAT)
    whh_off = _round_up(FEAT, 8)                 # rows [8, 8+H)
    bias_off = whh_off + _round_up(H, 8)         # 1 row
    head_off = bias_off + 8                      # 1 row: [0:H]=fc1_b, [H:2H]=fc2_w, [2H]=fc2_b
    n_rows = head_off + 8
    return wih_off, whh_off, bias_off, head_off, n_rows


def lstm_classifier_kernel(x_ref, hc_ref, slab_ref, w1_ref, out_ref, xproj_ref):
    # x_ref    : (SEQ*2*BP, FEAT)  rows ordered (t, agent, padded-batch)
    # hc_ref   : (4*BP, H)         rows [0:2BP)=h0, [2BP:4BP)=c0, agent-major within each
    # slab_ref : (n_rows, 4H)      packed small params (see _slab_offsets)
    # w1_ref   : (2*SEQ, H, H)     fc1 weight blocks, block a*SEQ + t
    # out_ref  : (batch, 1)
    # xproj_ref: (SEQ*2*BP, 4H)    VMEM scratch for the hoisted input projection
    H = hc_ref.shape[1]
    BP = hc_ref.shape[0] // 4
    R = 2 * BP
    batch = out_ref.shape[0]
    wih_off, whh_off, bias_off, head_off, _ = _slab_offsets(H)

    # --- unpack parameters (static, aligned slices; loaded once) ---
    wih = slab_ref[wih_off:wih_off + FEAT, :]            # (FEAT, 4H)
    whh = slab_ref[whh_off:whh_off + H, :]               # (H, 4H)
    bias = slab_ref[bias_off:bias_off + 1, :]            # (1, 4H)
    head = slab_ref[head_off:head_off + 1, :]            # (1, 4H)
    b1 = head[:, 0:H]                                    # (1, H)
    w2 = head[:, H:2 * H]                                # (1, H)
    b2 = head[:, 2 * H:2 * H + 1]                        # (1, 1)

    h = hc_ref[0:2 * BP, :]                              # (2BP, H)
    c = hc_ref[2 * BP:4 * BP, :]                         # (2BP, H)

    # --- hoisted input projection: one matmul + bias, off the serial chain ---
    xproj_ref[...] = (jnp.dot(x_ref[...], wih, preferred_element_type=jnp.float32)
                      + bias)                            # (SEQ*2BP, 4H)

    acc = jnp.zeros((BP, H), jnp.float32)                # fc1 accumulator

    for t in range(SEQ):  # static unroll of the short recurrence
        gates = (xproj_ref[t * R:(t + 1) * R, :]
                 + jnp.dot(h, whh, preferred_element_type=jnp.float32))   # (2BP, 4H)
        # full-width activations (2 EUP launches/step), then lane slices
        sg = jax.nn.sigmoid(gates)
        th = jnp.tanh(gates)
        i_g = sg[:, 0 * H:1 * H]
        f_g = sg[:, 1 * H:2 * H]
        g_g = th[:, 2 * H:3 * H]
        o_g = sg[:, 3 * H:4 * H]
        c = f_g * c + i_g * g_g
        h = o_g * jnp.tanh(c)
        # fc1 accumulation: per-agent (BP,H)@(H,H) blocks (static leading index)
        acc = (acc
               + jnp.dot(h[0:BP, :], w1_ref[t], preferred_element_type=jnp.float32)
               + jnp.dot(h[BP:2 * BP, :], w1_ref[SEQ + t],
                         preferred_element_type=jnp.float32))

    out1 = jnp.maximum(acc + b1, 0.0)                                 # ReLU, (BP, H)
    out2 = jnp.sum(out1 * w2, axis=1, keepdims=True) + b2             # (BP, 1)
    out_ref[...] = jax.nn.sigmoid(out2[0:batch, :])                   # (batch, 1)


def lstm_classifier_forward(x, x_agents, h0, c0, params):
    """x: (batch, 2, SEQ, FEAT); h0/c0: (2*batch, H) in torch row order r = 2b + a."""
    del x_agents  # unused by the torch forward as well
    batch = x.shape[0]
    H = h0.shape[1]
    BP = _round_up(batch, 8)          # padded per-agent row count (8-aligned slices)

    # x: (batch, 2, SEQ, FEAT) -> rows ordered (t, agent, padded-batch) -> (SEQ*2*BP, FEAT)
    x_t = jnp.transpose(x, (2, 1, 0, 3))                              # (SEQ, 2, batch, FEAT)
    x_p = jnp.pad(x_t, ((0, 0), (0, 0), (0, BP - batch), (0, 0)))     # (SEQ, 2, BP, FEAT)
    x_flat = x_p.reshape(SEQ * 2 * BP, FEAT)

    def to_agent_major(v):  # torch rows r = 2b + a  ->  rows a*BP + b (zero-padded)
        v = v.reshape(batch, 2, H).transpose(1, 0, 2)                 # (2, batch, H)
        v = jnp.pad(v, ((0, 0), (0, BP - batch), (0, 0)))             # (2, BP, H)
        return v.reshape(2 * BP, H)

    hc0 = jnp.concatenate([to_agent_major(h0), to_agent_major(c0)], axis=0)  # (4BP, H)

    # --- pack the small parameters into one lane-dense slab ---
    wih_off, whh_off, bias_off, head_off, n_rows = _slab_offsets(H)
    wih = params["weight_ih"].T                                       # (FEAT, 4H)
    whh = params["weight_hh"].T                                       # (H, 4H)
    bias = (params["bias_ih"] + params["bias_hh"]).reshape(1, 4 * H)
    head = jnp.zeros((1, 4 * H), jnp.float32)
    head = head.at[0, 0:H].set(params["fc1_b"])
    head = head.at[0, H:2 * H].set(params["fc2_w"].reshape(H))
    head = head.at[0, 2 * H].set(params["fc2_b"][0])
    slab = jnp.zeros((n_rows, 4 * H), jnp.float32)
    slab = slab.at[wih_off:wih_off + FEAT, :].set(wih)
    slab = slab.at[whh_off:whh_off + H, :].set(whh)
    slab = slab.at[bias_off:bias_off + 1, :].set(bias)
    slab = slab.at[head_off:head_off + 1, :].set(head)

    # fc1 weight as (2*SEQ, H, H) blocks: block a*SEQ + t, contracted with h_t of agent a
    w1 = params["fc1_w"].T.reshape(2 * SEQ, H, H)

    vmem = pl.BlockSpec(memory_space=pltpu.MemorySpace.VMEM)
    out = pl.pallas_call(
        lstm_classifier_kernel,
        out_shape=jax.ShapeDtypeStruct((batch, 1), jnp.float32),
        in_specs=[vmem] * 4,
        out_specs=vmem,
        scratch_shapes=[pltpu.VMEM((SEQ * 2 * BP, 4 * H), jnp.float32)],
    )(x_flat, hc0, slab, w1)
    return out


def reference_forward(x, h0, c0, params):
    """Pure-JAX replica of the torch forward (training_step=2) for validation."""
    batch = x.shape[0]
    H = h0.shape[1]
    xr = x.reshape(batch * 2, SEQ, FEAT)
    h, c = h0, c0
    hs = []
    for t in range(SEQ):
        inp = xr[:, t, :]
        gates = (inp @ params["weight_ih"].T + params["bias_ih"]
                 + h @ params["weight_hh"].T + params["bias_hh"])
        i = jax.nn.sigmoid(gates[:, :H])
        f = jax.nn.sigmoid(gates[:, H:2 * H])
        g = jnp.tanh(gates[:, 2 * H:3 * H])
        o = jax.nn.sigmoid(gates[:, 3 * H:])
        c = f * c + i * g
        h = o * jnp.tanh(c)
        hs.append(h)
    states = jnp.stack(hs, 0).transpose(1, 0, 2).reshape(batch, 2 * SEQ * H)
    out = jnp.maximum(states @ params["fc1_w"].T + params["fc1_b"], 0.0)
    out = out @ params["fc2_w"].T + params["fc2_b"]
    return jax.nn.sigmoid(out)


if __name__ == "__main__":
    batch = 2
    H = 32  # hidden_size

    key = jax.random.PRNGKey(0)
    keys = jax.random.split(key, 12)
    k_lstm = 1.0 / (H ** 0.5)
    k_fc1 = 1.0 / ((2 * SEQ * H) ** 0.5)
    params = {
        "weight_ih": jax.random.uniform(keys[0], (4 * H, FEAT), jnp.float32, -k_lstm, k_lstm),
        "weight_hh": jax.random.uniform(keys[1], (4 * H, H), jnp.float32, -k_lstm, k_lstm),
        "bias_ih":   jax.random.uniform(keys[2], (4 * H,), jnp.float32, -k_lstm, k_lstm),
        "bias_hh":   jax.random.uniform(keys[3], (4 * H,), jnp.float32, -k_lstm, k_lstm),
        "fc1_w":     jax.random.uniform(keys[4], (H, 2 * SEQ * H), jnp.float32, -k_fc1, k_fc1),
        "fc1_b":     jax.random.uniform(keys[5], (H,), jnp.float32, -k_fc1, k_fc1),
        "fc2_w":     jax.random.uniform(keys[6], (1, H), jnp.float32, -k_lstm, k_lstm),
        "fc2_b":     jax.random.uniform(keys[7], (1,), jnp.float32, -k_lstm, k_lstm),
    }

    x = jax.random.normal(keys[8], (batch, 2, SEQ, FEAT), jnp.float32)
    x_agents = jax.random.normal(keys[9], (batch, 2), jnp.float32)      # unused, like torch
    # deterministic stand-in for torch.randn init_hidden (torch row order r = 2b + a)
    h0 = jax.random.normal(keys[10], (2 * batch, H), jnp.float32)
    c0 = jax.random.normal(keys[11], (2 * batch, H), jnp.float32)

    out = lstm_classifier_forward(x, x_agents, h0, c0, params)
    out = jax.block_until_ready(out)
    assert out.shape == (batch, 1)

    ref = reference_forward(x, h0, c0, params)
    assert jnp.allclose(out, ref, atol=1e-3, rtol=1e-3)

    print("KERNEL_OK")
</pallas_src>

<mosaic_0001>
module attributes {stable_mosaic.version = 11 : i64} {
  func.func @lstm_classifier_kernel(%arg0: memref<320x2xf32, #tpu.memory_space<vmem>>, %arg1: memref<32x32xf32, #tpu.memory_space<vmem>>, %arg2: memref<56x128xf32, #tpu.memory_space<vmem>>, %arg3: memref<40x32x32xf32, #tpu.memory_space<vmem>>, %arg4: memref<2x1xf32, #tpu.memory_space<vmem>>, %arg5: memref<320x128xf32, #tpu.memory_space<vmem>>) attributes {dimension_semantics = [], scalar_prefetch = 0 : i64, scratch_operands = 1 : i64, tpu.core_type = #tpu.core_type<tc>} {
    %c0 = arith.constant 0 : index
    %c0_0 = arith.constant 0 : index
    %0 = vector.load %arg2[%c0, %c0_0] : memref<56x128xf32, #tpu.memory_space<vmem>>, vector<2x128xf32>
    %c8 = arith.constant 8 : index
    %c0_1 = arith.constant 0 : index
    %1 = vector.load %arg2[%c8, %c0_1] : memref<56x128xf32, #tpu.memory_space<vmem>>, vector<32x128xf32>
    %c40 = arith.constant 40 : index
    %c0_2 = arith.constant 0 : index
    %2 = vector.load %arg2[%c40, %c0_2] : memref<56x128xf32, #tpu.memory_space<vmem>>, vector<1x128xf32>
    %c48 = arith.constant 48 : index
    %c0_3 = arith.constant 0 : index
    %3 = vector.load %arg2[%c48, %c0_3] : memref<56x128xf32, #tpu.memory_space<vmem>>, vector<1x128xf32>
    %4 = vector.extract_strided_slice %3 {offsets = [0, 0], sizes = [1, 32], strides = [1, 1]} : vector<1x128xf32> to vector<1x32xf32>
    %5 = vector.extract_strided_slice %3 {offsets = [0, 32], sizes = [1, 32], strides = [1, 1]} : vector<1x128xf32> to vector<1x32xf32>
    %6 = vector.extract_strided_slice %3 {offsets = [0, 64], sizes = [1, 1], strides = [1, 1]} : vector<1x128xf32> to vector<1x1xf32>
    %c0_4 = arith.constant 0 : index
    %c0_5 = arith.constant 0 : index
    %7 = vector.load %arg1[%c0_4, %c0_5] : memref<32x32xf32, #tpu.memory_space<vmem>>, vector<16x32xf32>
    %c16 = arith.constant 16 : index
    %c0_6 = arith.constant 0 : index
    %8 = vector.load %arg1[%c16, %c0_6] : memref<32x32xf32, #tpu.memory_space<vmem>>, vector<16x32xf32>
    %c0_7 = arith.constant 0 : index
    %c0_8 = arith.constant 0 : index
    %9 = vector.load %arg0[%c0_7, %c0_8] : memref<320x2xf32, #tpu.memory_space<vmem>>, vector<320x2xf32>
    %cst = arith.constant dense<0.000000e+00> : vector<320x128xf32>
    %10 = tpu.matmul %9, %0, %cst {dimension_numbers = #tpu.dot_dimension_numbers<[1], [0], [0], [1], [0, 0, 1, 1], [], []>} : vector<320x2xf32>, vector<2x128xf32>, vector<320x128xf32> -> vector<320x128xf32>
    %11 = vector.broadcast %2 : vector<1x128xf32> to vector<320x128xf32>
    %12 = arith.addf %10, %11 : vector<320x128xf32>
    %c0_9 = arith.constant 0 : index
    %c0_10 = arith.constant 0 : index
    %13 = vector.load %arg5[%c0_9, %c0_10] : memref<320x128xf32, #tpu.memory_space<vmem>>, vector<320x128xf32>
    tpu.vector_store %arg5[%c0_9, %c0_10], %12 {strides = array<i32>} : memref<320x128xf32, #tpu.memory_space<vmem>>, vector<320x128xf32>,
    %cst_11 = arith.constant 0.000000e+00 : f32
    %14 = vector.broadcast %cst_11 : f32 to vector<8x32xf32>
    %c0_12 = arith.constant 0 : index
    %c0_13 = arith.constant 0 : index
    %15 = vector.load %arg5[%c0_12, %c0_13] : memref<320x128xf32, #tpu.memory_space<vmem>>, vector<16x128xf32>
    %cst_14 = arith.constant dense<0.000000e+00> : vector<16x128xf32>
    %16 = tpu.matmul %7, %1, %cst_14 {dimension_numbers = #tpu.dot_dimension_numbers<[1], [0], [0], [1], [0, 0, 1, 1], [], []>} : vector<16x32xf32>, vector<32x128xf32>, vector<16x128xf32> -> vector<16x128xf32>
    %17 = arith.addf %15, %16 : vector<16x128xf32>
    %18 = arith.negf %17 : vector<16x128xf32>
    %19 = math.exp %18 : vector<16x128xf32>
    %cst_15 = arith.constant 1.000000e+00 : f32
    %20 = vector.broadcast %cst_15 : f32 to vector<16x128xf32>
    %21 = arith.addf %20, %19 : vector<16x128xf32>
    %22 = arith.divf %20, %21 : vector<16x128xf32>
    %23 = math.tanh %17 : vector<16x128xf32>
    %24 = vector.extract_strided_slice %22 {offsets = [0, 0], sizes = [16, 32], strides = [1, 1]} : vector<16x128xf32> to vector<16x32xf32>
    %25 = vector.extract_strided_slice %22 {offsets = [0, 32], sizes = [16, 32], strides = [1, 1]} : vector<16x128xf32> to vector<16x32xf32>
    %26 = vector.extract_strided_slice %23 {offsets = [0, 64], sizes = [16, 32], strides = [1, 1]} : vector<16x128xf32> to vector<16x32xf32>
    %27 = vector.extract_strided_slice %22 {offsets = [0, 96], sizes = [16, 32], strides = [1, 1]} : vector<16x128xf32> to vector<16x32xf32>
    %28 = arith.mulf %25, %8 : vector<16x32xf32>
    %29 = arith.mulf %24, %26 : vector<16x32xf32>
    %30 = arith.addf %28, %29 : vector<16x32xf32>
    %31 = math.tanh %30 : vector<16x32xf32>
    %32 = arith.mulf %27, %31 : vector<16x32xf32>
    %33 = vector.extract_strided_slice %32 {offsets = [0, 0], sizes = [8, 32], strides = [1, 1]} : vector<16x32xf32> to vector<8x32xf32>
    %c0_16 = arith.constant 0 : index
    %c0_17 = arith.constant 0 : index
    %c0_18 = arith.constant 0 : index
    %34 = vector.load %arg3[%c0_16, %c0_17, %c0_18] : memref<40x32x32xf32, #tpu.memory_space<vmem>>, vector<1x32x32xf32>
    %35 = vector.shape_cast %34 : vector<1x32x32xf32> to vector<32x32xf32>
    %cst_19 = arith.constant dense<0.000000e+00> : vector<8x32xf32>
    %36 = tpu.matmul %33, %35, %cst_19 {dimension_numbers = #tpu.dot_dimension_numbers<[1], [0], [0], [1], [0, 0, 1, 1], [], []>} : vector<8x32xf32>, vector<32x32xf32>, vector<8x32xf32> -> vector<8x32xf32>
    %37 = arith.addf %14, %36 : vector<8x32xf32>
    %38 = vector.extract_strided_slice %32 {offsets = [8, 0], sizes = [8, 32], strides = [1, 1]} : vector<16x32xf32> to vector<8x32xf32>
    %c20 = arith.constant 20 : index
    %c0_20 = arith.constant 0 : index
    %c0_21 = arith.constant 0 : index
    %39 = vector.load %arg3[%c20, %c0_20, %c0_21] : memref<40x32x32xf32, #tpu.memory_space<vmem>>, vector<1x32x32xf32>
    %40 = vector.shape_cast %39 : vector<1x32x32xf32> to vector<32x32xf32>
    %cst_22 = arith.constant dense<0.000000e+00> : vector<8x32xf32>
    %41 = tpu.matmul %38, %40, %cst_22 {dimension_numbers = #tpu.dot_dimension_numbers<[1], [0], [0], [1], [0, 0, 1, 1], [], []>} : vector<8x32xf32>, vector<32x32xf32>, vector<8x32xf32> -> vector<8x32xf32>
    %42 = arith.addf %37, %41 : vector<8x32xf32>
    %c16_23 = arith.constant 16 : index
    %c0_24 = arith.constant 0 : index
    %43 = vector.load %arg5[%c16_23, %c0_24] : memref<320x128xf32, #tpu.memory_space<vmem>>, vector<16x128xf32>
    %cst_25 = arith.constant dense<0.000000e+00> : vector<16x128xf32>
    %44 = tpu.matmul %32, %1, %cst_25 {dimension_numbers = #tpu.dot_dimension_numbers<[1], [0], [0], [1], [0, 0, 1, 1], [], []>} : vector<16x32xf32>, vector<32x128xf32>, vector<16x128xf32> -> vector<16x128xf32>
    %45 = arith.addf %43, %44 : vector<16x128xf32>
    %46 = arith.negf %45 : vector<16x128xf32>
    %47 = math.exp %46 : vector<16x128xf32>
    %cst_26 = arith.constant 1.000000e+00 : f32
    %48 = vector.broadcast %cst_26 : f32 to vector<16x128xf32>
    %49 = arith.addf %48, %47 : vector<16x128xf32>
    %50 = arith.divf %48, %49 : vector<16x128xf32>
    %51 = math.tanh %45 : vector<16x128xf32>
    %52 = vector.extract_strided_slice %50 {offsets = [0, 0], sizes = [16, 32], strides = [1, 1]} : vector<16x128xf32> to vector<16x32xf32>
    %53 = vector.extract_strided_slice %50 {offsets = [0, 32], sizes = [16, 32], strides = [1, 1]} : vector<16x128xf32> to vector<16x32xf32>
    %54 = vector.extract_strided_slice %51 {offsets = [0, 64], sizes = [16, 32], strides = [1, 1]} : vector<16x128xf32> to vector<16x32xf32>
    %55 = vector.extract_strided_slice %50 {offsets = [0, 96], sizes = [16, 32], strides = [1, 1]} : vector<16x128xf32> to vector<16x32xf32>
    %56 = arith.mulf %53, %30 : vector<16x32xf32>
    %57 = arith.mulf %52, %54 : vector<16x32xf32>
    %58 = arith.addf %56, %57 : vector<16x32xf32>
    %59 = math.tanh %58 : vector<16x32xf32>
    %60 = arith.mulf %55, %59 : vector<16x32xf32>
    %61 = vector.extract_strided_slice %60 {offsets = [0, 0], sizes = [8, 32], strides = [1, 1]} : vector<16x32xf32> to vector<8x32xf32>
    %c1 = arith.constant 1 : index
    %c0_27 = arith.constant 0 : index
    %c0_28 = arith.constant 0 : index
    %62 = vector.load %arg3[%c1, %c0_27, %c0_28] : memref<40x32x32xf32, #tpu.memory_space<vmem>>, vector<1x32x32xf32>
    %63 = vector.shape_cast %62 : vector<1x32x32xf32> to vector<32x32xf32>
    %cst_29 = arith.constant dense<0.000000e+00> : vector<8x32xf32>
    %64 = tpu.matmul %61, %63, %cst_29 {dimension_numbers = #tpu.dot_dimension_numbers<[1], [0], [0], [1], [0, 0, 1, 1], [], []>} : vector<8x32xf32>, vector<32x32xf32>, vector<8x32xf32> -> vector<8x32xf32>
    %65 = arith.addf %42, %64 : vector<8x32xf32>
    %66 = vector.extract_strided_slice %60 {offsets = [8, 0], sizes = [8, 32], strides = [1, 1]} : vector<16x32xf32> to vector<8x32xf32>
    %c21 = arith.constant 21 : index
    %c0_30 = arith.constant 0 : index
    %c0_31 = arith.constant 0 : index
    %67 = vector.load %arg3[%c21, %c0_30, %c0_31] : memref<40x32x32xf32, #tpu.memory_space<vmem>>, vector<1x32x32xf32>
    %68 = vector.shape_cast %67 : vector<1x32x32xf32> to vector<32x32xf32>
    %cst_32 = arith.constant dense<0.000000e+00> : vector<8x32xf32>
    %69 = tpu.matmul %66, %68, %cst_32 {dimension_numbers = #tpu.dot_dimension_numbers<[1], [0], [0], [1], [0, 0, 1, 1], [], []>} : vector<8x32xf32>, vector<32x32xf32>, vector<8x32xf32> -> vector<8x32xf32>
    %70 = arith.addf %65, %69 : vector<8x32xf32>
    %c32 = arith.constant 32 : index
    %c0_33 = arith.constant 0 : index
    %71 = vector.load %arg5[%c32, %c0_33] : memref<320x128xf32, #tpu.memory_space<vmem>>, vector<16x128xf32>
    %cst_34 = arith.constant dense<0.000000e+00> : vector<16x128xf32>
    %72 = tpu.matmul %60, %1, %cst_34 {dimension_numbers = #tpu.dot_dimension_numbers<[1], [0], [0], [1], [0, 0, 1, 1], [], []>} : vector<16x32xf32>, vector<32x128xf32>, vector<16x128xf32> -> vector<16x128xf32>
    %73 = arith.addf %71, %72 : vector<16x128xf32>
    %74 = arith.negf %73 : vector<16x128xf32>
    %75 = math.exp %74 : vector<16x128xf32>
    %cst_35 = arith.constant 1.000000e+00 : f32
    %76 = vector.broadcast %cst_35 : f32 to vector<16x128xf32>
    %77 = arith.addf %76, %75 : vector<16x128xf32>
    %78 = arith.divf %76, %77 : vector<16x128xf32>
    %79 = math.tanh %73 : vector<16x128xf32>
    %80 = vector.extract_strided_slice %78 {offsets = [0, 0], sizes = [16, 32], strides = [1, 1]} : vector<16x128xf32> to vector<16x32xf32>
    %81 = vector.extract_strided_slice %78 {offsets = [0, 32], sizes = [16, 32], strides = [1, 1]} : vector<16x128xf32> to vector<16x32xf32>
    %82 = vector.extract_strided_slice %79 {offsets = [0, 64], sizes = [16, 32], strides = [1, 1]} : vector<16x128xf32> to vector<16x32xf32>
    %83 = vector.extract_strided_slice %78 {offsets = [0, 96], sizes = [16, 32], strides = [1, 1]} : vector<16x128xf32> to vector<16x32xf32>
    %84 = arith.mulf %81, %58 : vector<16x32xf32>
    %85 = arith.mulf %80, %82 : vector<16x32xf32>
    %86 = arith.addf %84, %85 : vector<16x32xf32>
    %87 = math.tanh %86 : vector<16x32xf32>
    %88 = arith.mulf %83, %87 : vector<16x32xf32>
    %89 = vector.extract_strided_slice %88 {offsets = [0, 0], sizes = [8, 32], strides = [1, 1]} : vector<16x32xf32> to vector<8x32xf32>
    %c2 = arith.constant 2 : index
    %c0_36 = arith.constant 0 : index
    %c0_37 = arith.constant 0 : index
    %90 = vector.load %arg3[%c2, %c0_36, %c0_37] : memref<40x32x32xf32, #tpu.memory_space<vmem>>, vector<1x32x32xf32>
    %91 = vector.shape_cast %90 : vector<1x32x32xf32> to vector<32x32xf32>
    %cst_38 = arith.constant dense<0.000000e+00> : vector<8x32xf32>
    %92 = tpu.matmul %89, %91, %cst_38 {dimension_numbers = #tpu.dot_dimension_numbers<[1], [0], [0], [1], [0, 0, 1, 1], [], []>} : vector<8x32xf32>, vector<32x32xf32>, vector<8x32xf32> -> vector<8x32xf32>
    %93 = arith.addf %70, %92 : vector<8x32xf32>
    %94 = vector.extract_strided_slice %88 {offsets = [8, 0], sizes = [8, 32], strides = [1, 1]} : vector<16x32xf32> to vector<8x32xf32>
    %c22 = arith.constant 22 : index
    %c0_39 = arith.constant 0 : index
    %c0_40 = arith.constant 0 : index
    %95 = vector.load %arg3[%c22, %c0_39, %c0_40] : memref<40x32x32xf32, #tpu.memory_space<vmem>>, vector<1x32x32xf32>
    %96 = vector.shape_cast %95 : vector<1x32x32xf32> to vector<32x32xf32>
    %cst_41 = arith.constant dense<0.000000e+00> : vector<8x32xf32>
    %97 = tpu.matmul %94, %96, %cst_41 {dimension_numbers = #tpu.dot_dimension_numbers<[1], [0], [0], [1], [0, 0, 1, 1], [], []>} : vector<8x32xf32>, vector<32x32xf32>, vector<8x32xf32> -> vector<8x32xf32>
    %98 = arith.addf %93, %97 : vector<8x32xf32>
    %c48_42 = arith.constant 48 : index
    %c0_43 = arith.constant 0 : index
    %99 = vector.load %arg5[%c48_42, %c0_43] : memref<320x128xf32, #tpu.memory_space<vmem>>, vector<16x128xf32>
    %cst_44 = arith.constant dense<0.000000e+00> : vector<16x128xf32>
    %100 = tpu.matmul %88, %1, %cst_44 {dimension_numbers = #tpu.dot_dimension_numbers<[1], [0], [0], [1], [0, 0, 1, 1], [], []>} : vector<16x32xf32>, vector<32x128xf32>, vector<16x128xf32> -> vector<16x128xf32>
    %101 = arith.addf %99, %100 : vector<16x128xf32>
    %102 = arith.negf %101 : vector<16x128xf32>
    %103 = math.exp %102 : vector<16x128xf32>
    %cst_45 = arith.constant 1.000000e+00 : f32
    %104 = vector.broadcast %cst_45 : f32 to vector<16x128xf32>
    %105 = arith.addf %104, %103 : vector<16x128xf32>
    %106 = arith.divf %104, %105 : vector<16x128xf32>
    %107 = math.tanh %101 : vector<16x128xf32>
    %108 = vector.extract_strided_slice %106 {offsets = [0, 0], sizes = [16, 32], strides = [1, 1]} : vector<16x128xf32> to vector<16x32xf32>
    %109 = vector.extract_strided_slice %106 {offsets = [0, 32], sizes = [16, 32], strides = [1, 1]} : vector<16x128xf32> to vector<16x32xf32>
    %110 = vector.extract_strided_slice %107 {offsets = [0, 64], sizes = [16, 32], strides = [1, 1]} : vector<16x128xf32> to vector<16x32xf32>
    %111 = vector.extract_strided_slice %106 {offsets = [0, 96], sizes = [16, 32], strides = [1, 1]} : vector<16x128xf32> to vector<16x32xf32>
    %112 = arith.mulf %109, %86 : vector<16x32xf32>
    %113 = arith.mulf %108, %110 : vector<16x32xf32>
    %114 = arith.addf %112, %113 : vector<16x32xf32>
    %115 = math.tanh %114 : vector<16x32xf32>
    %116 = arith.mulf %111, %115 : vector<16x32xf32>
    %117 = vector.extract_strided_slice %116 {offsets = [0, 0], sizes = [8, 32], strides = [1, 1]} : vector<16x32xf32> to vector<8x32xf32>
    %c3 = arith.constant 3 : index
    %c0_46 = arith.constant 0 : index
    %c0_47 = arith.constant 0 : index
    %118 = vector.load %arg3[%c3, %c0_46, %c0_47] : memref<40x32x32xf32, #tpu.memory_space<vmem>>, vector<1x32x32xf32>
    %119 = vector.shape_cast %118 : vector<1x32x32xf32> to vector<32x32xf32>
    %cst_48 = arith.constant dense<0.000000e+00> : vector<8x32xf32>
    %120 = tpu.matmul %117, %119, %cst_48 {dimension_numbers = #tpu.dot_dimension_numbers<[1], [0], [0], [1], [0, 0, 1, 1], [], []>} : vector<8x32xf32>, vector<32x32xf32>, vector<8x32xf32> -> vector<8x32xf32>
    %121 = arith.addf %98, %120 : vector<8x32xf32>
    %122 = vector.extract_strided_slice %116 {offsets = [8, 0], sizes = [8, 32], strides = [1, 1]} : vector<16x32xf32> to vector<8x32xf32>
    %c23 = arith.constant 23 : index
    %c0_49 = arith.constant 0 : index
    %c0_50 = arith.constant 0 : index
    %123 = vector.load %arg3[%c23, %c0_49, %c0_50] : memref<40x32x32xf32, #tpu.memory_space<vmem>>, vector<1x32x32xf32>
    %124 = vector.shape_cast %123 : vector<1x32x32xf32> to vector<32x32xf32>
    %cst_51 = arith.constant dense<0.000000e+00> : vector<8x32xf32>
    %125 = tpu.matmul %122, %124, %cst_51 {dimension_numbers = #tpu.dot_dimension_numbers<[1], [0], [0], [1], [0, 0, 1, 1], [], []>} : vector<8x32xf32>, vector<32x32xf32>, vector<8x32xf32> -> vector<8x32xf32>
    %126 = arith.addf %121, %125 : vector<8x32xf32>
    %c64 = arith.constant 64 : index
    %c0_52 = arith.constant 0 : index
    %127 = vector.load %arg5[%c64, %c0_52] : memref<320x128xf32, #tpu.memory_space<vmem>>, vector<16x128xf32>
    %cst_53 = arith.constant dense<0.000000e+00> : vector<16x128xf32>
    %128 = tpu.matmul %116, %1, %cst_53 {dimension_numbers = #tpu.dot_dimension_numbers<[1], [0], [0], [1], [0, 0, 1, 1], [], []>} : vector<16x32xf32>, vector<32x128xf32>, vector<16x128xf32> -> vector<16x128xf32>
    %129 = arith.addf %127, %128 : vector<16x128xf32>
    %130 = arith.negf %129 : vector<16x128xf32>
    %131 = math.exp %130 : vector<16x128xf32>
    %cst_54 = arith.constant 1.000000e+00 : f32
    %132 = vector.broadcast %cst_54 : f32 to vector<16x128xf32>
    %133 = arith.addf %132, %131 : vector<16x128xf32>
    %134 = arith.divf %132, %133 : vector<16x128xf32>
    %135 = math.tanh %129 : vector<16x128xf32>
    %136 = vector.extract_strided_slice %134 {offsets = [0, 0], sizes = [16, 32], strides = [1, 1]} : vector<16x128xf32> to vector<16x32xf32>
    %137 = vector.extract_strided_slice %134 {offsets = [0, 32], sizes = [16, 32], strides = [1, 1]} : vector<16x128xf32> to vector<16x32xf32>
    %138 = vector.extract_strided_slice %135 {offsets = [0, 64], sizes = [16, 32], strides = [1, 1]} : vector<16x128xf32> to vector<16x32xf32>
    %139 = vector.extract_strided_slice %134 {offsets = [0, 96], sizes = [16, 32], strides = [1, 1]} : vector<16x128xf32> to vector<16x32xf32>
    %140 = arith.mulf %137, %114 : vector<16x32xf32>
    %141 = arith.mulf %136, %138 : vector<16x32xf32>
    %142 = arith.addf %140, %141 : vector<16x32xf32>
    %143 = math.tanh %142 : vector<16x32xf32>
    %144 = arith.mulf %139, %143 : vector<16x32xf32>
    %145 = vector.extract_strided_slice %144 {offsets = [0, 0], sizes = [8, 32], strides = [1, 1]} : vector<16x32xf32> to vector<8x32xf32>
    %c4 = arith.constant 4 : index
    %c0_55 = arith.constant 0 : index
    %c0_56 = arith.constant 0 : index
    %146 = vector.load %arg3[%c4, %c0_55, %c0_56] : memref<40x32x32xf32, #tpu.memory_space<vmem>>, vector<1x32x32xf32>
    %147 = vector.shape_cast %146 : vector<1x32x32xf32> to vector<32x32xf32>
    %cst_57 = arith.constant dense<0.000000e+00> : vector<8x32xf32>
    %148 = tpu.matmul %145, %147, %cst_57 {dimension_numbers = #tpu.dot_dimension_numbers<[1], [0], [0], [1], [0, 0, 1, 1], [], []>} : vector<8x32xf32>, vector<32x32xf32>, vector<8x32xf32> -> vector<8x32xf32>
    %149 = arith.addf %126, %148 : vector<8x32xf32>
    %150 = vector.extract_strided_slice %144 {offsets = [8, 0], sizes = [8, 32], strides = [1, 1]} : vector<16x32xf32> to vector<8x32xf32>
    %c24 = arith.constant 24 : index
    %c0_58 = arith.constant 0 : index
    %c0_59 = arith.constant 0 : index
    %151 = vector.load %arg3[%c24, %c0_58, %c0_59] : memref<40x32x32xf32, #tpu.memory_space<vmem>>, vector<1x32x32xf32>
    %152 = vector.shape_cast %151 : vector<1x32x32xf32> to vector<32x32xf32>
    %cst_60 = arith.constant dense<0.000000e+00> : vector<8x32xf32>
    %153 = tpu.matmul %150, %152, %cst_60 {dimension_numbers = #tpu.dot_dimension_numbers<[1], [0], [0], [1], [0, 0, 1, 1], [], []>} : vector<8x32xf32>, vector<32x32xf32>, vector<8x32xf32> -> vector<8x32xf32>
    %154 = arith.addf %149, %153 : vector<8x32xf32>
    %c80 = arith.constant 80 : index
    %c0_61 = arith.constant 0 : index
    %155 = vector.load %arg5[%c80, %c0_61] : memref<320x128xf32, #tpu.memory_space<vmem>>, vector<16x128xf32>
    %cst_62 = arith.constant dense<0.000000e+00> : vector<16x128xf32>
    %156 = tpu.matmul %144, %1, %cst_62 {dimension_numbers = #tpu.dot_dimension_numbers<[1], [0], [0], [1], [0, 0, 1, 1], [], []>} : vector<16x32xf32>, vector<32x128xf32>, vector<16x128xf32> -> vector<16x128xf32>
    %157 = arith.addf %155, %156 : vector<16x128xf32>
    %158 = arith.negf %157 : vector<16x128xf32>
    %159 = math.exp %158 : vector<16x128xf32>
    %cst_63 = arith.constant 1.000000e+00 : f32
    %160 = vector.broadcast %cst_63 : f32 to vector<16x128xf32>
    %161 = arith.addf %160, %159 : vector<16x128xf32>
    %162 = arith.divf %160, %161 : vector<16x128xf32>
    %163 = math.tanh %157 : vector<16x128xf32>
    %164 = vector.extract_strided_slice %162 {offsets = [0, 0], sizes = [16, 32], strides = [1, 1]} : vector<16x128xf32> to vector<16x32xf32>
    %165 = vector.extract_strided_slice %162 {offsets = [0, 32], sizes = [16, 32], strides = [1, 1]} : vector<16x128xf32> to vector<16x32xf32>
    %166 = vector.extract_strided_slice %163 {offsets = [0, 64], sizes = [16, 32], strides = [1, 1]} : vector<16x128xf32> to vector<16x32xf32>
    %167 = vector.extract_strided_slice %162 {offsets = [0, 96], sizes = [16, 32], strides = [1, 1]} : vector<16x128xf32> to vector<16x32xf32>
    %168 = arith.mulf %165, %142 : vector<16x32xf32>
    %169 = arith.mulf %164, %166 : vector<16x32xf32>
    %170 = arith.addf %168, %169 : vector<16x32xf32>
    %171 = math.tanh %170 : vector<16x32xf32>
    %172 = arith.mulf %167, %171 : vector<16x32xf32>
    %173 = vector.extract_strided_slice %172 {offsets = [0, 0], sizes = [8, 32], strides = [1, 1]} : vector<16x32xf32> to vector<8x32xf32>
    %c5 = arith.constant 5 : index
    %c0_64 = arith.constant 0 : index
    %c0_65 = arith.constant 0 : index
    %174 = vector.load %arg3[%c5, %c0_64, %c0_65] : memref<40x32x32xf32, #tpu.memory_space<vmem>>, vector<1x32x32xf32>
    %175 = vector.shape_cast %174 : vector<1x32x32xf32> to vector<32x32xf32>
    %cst_66 = arith.constant dense<0.000000e+00> : vector<8x32xf32>
    %176 = tpu.matmul %173, %175, %cst_66 {dimension_numbers = #tpu.dot_dimension_numbers<[1], [0], [0], [1], [0, 0, 1, 1], [], []>} : vector<8x32xf32>, vector<32x32xf32>, vector<8x32xf32> -> vector<8x32xf32>
    %177 = arith.addf %154, %176 : vector<8x32xf32>
    %178 = vector.extract_strided_slice %172 {offsets = [8, 0], sizes = [8, 32], strides = [1, 1]} : vector<16x32xf32> to vector<8x32xf32>
    %c25 = arith.constant 25 : index
    %c0_67 = arith.constant 0 : index
    %c0_68 = arith.constant 0 : index
    %179 = vector.load %arg3[%c25, %c0_67, %c0_68] : memref<40x32x32xf32, #tpu.memory_space<vmem>>, vector<1x32x32xf32>
    %180 = vector.shape_cast %179 : vector<1x32x32xf32> to vector<32x32xf32>
    %cst_69 = arith.constant dense<0.000000e+00> : vector<8x32xf32>
    %181 = tpu.matmul %178, %180, %cst_69 {dimension_numbers = #tpu.dot_dimension_numbers<[1], [0], [0], [1], [0, 0, 1, 1], [], []>} : vector<8x32xf32>, vector<32x32xf32>, vector<8x32xf32> -> vector<8x32xf32>
    %182 = arith.addf %177, %181 : vector<8x32xf32>
    %c96 = arith.constant 96 : index
    %c0_70 = arith.constant 0 : index
    %183 = vector.load %arg5[%c96, %c0_70] : memref<320x128xf32, #tpu.memory_space<vmem>>, vector<16x128xf32>
    %cst_71 = arith.constant dense<0.000000e+00> : vector<16x128xf32>
    %184 = tpu.matmul %172, %1, %cst_71 {dimension_numbers = #tpu.dot_dimension_numbers<[1], [0], [0], [1], [0, 0, 1, 1], [], []>} : vector<16x32xf32>, vector<32x128xf32>, vector<16x128xf32> -> vector<16x128xf32>
    %185 = arith.addf %183, %184 : vector<16x128xf32>
    %186 = arith.negf %185 : vector<16x128xf32>
    %187 = math.exp %186 : vector<16x128xf32>
    %cst_72 = arith.constant 1.000000e+00 : f32
    %188 = vector.broadcast %cst_72 : f32 to vector<16x128xf32>
    %189 = arith.addf %188, %187 : vector<16x128xf32>
    %190 = arith.divf %188, %189 : vector<16x128xf32>
    %191 = math.tanh %185 : vector<16x128xf32>
    %192 = vector.extract_strided_slice %190 {offsets = [0, 0], sizes = [16, 32], strides = [1, 1]} : vector<16x128xf32> to vector<16x32xf32>
    %193 = vector.extract_strided_slice %190 {offsets = [0, 32], sizes = [16, 32], strides = [1, 1]} : vector<16x128xf32> to vector<16x32xf32>
    %194 = vector.extract_strided_slice %191 {offsets = [0, 64], sizes = [16, 32], strides = [1, 1]} : vector<16x128xf32> to vector<16x32xf32>
    %195 = vector.extract_strided_slice %190 {offsets = [0, 96], sizes = [16, 32], strides = [1, 1]} : vector<16x128xf32> to vector<16x32xf32>
    %196 = arith.mulf %193, %170 : vector<16x32xf32>
    %197 = arith.mulf %192, %194 : vector<16x32xf32>
    %198 = arith.addf %196, %197 : vector<16x32xf32>
    %199 = math.tanh %198 : vector<16x32xf32>
    %200 = arith.mulf %195, %199 : vector<16x32xf32>
    %201 = vector.extract_strided_slice %200 {offsets = [0, 0], sizes = [8, 32], strides = [1, 1]} : vector<16x32xf32> to vector<8x32xf32>
    %c6 = arith.constant 6 : index
    %c0_73 = arith.constant 0 : index
    %c0_74 = arith.constant 0 : index
    %202 = vector.load %arg3[%c6, %c0_73, %c0_74] : memref<40x32x32xf32, #tpu.memory_space<vmem>>, vector<1x32x32xf32>
    %203 = vector.shape_cast %202 : vector<1x32x32xf32> to vector<32x32xf32>
    %cst_75 = arith.constant dense<0.000000e+00> : vector<8x32xf32>
    %204 = tpu.matmul %201, %203, %cst_75 {dimension_numbers = #tpu.dot_dimension_numbers<[1], [0], [0], [1], [0, 0, 1, 1], [], []>} : vector<8x32xf32>, vector<32x32xf32>, vector<8x32xf32> -> vector<8x32xf32>
    %205 = arith.addf %182, %204 : vector<8x32xf32>
    %206 = vector.extract_strided_slice %200 {offsets = [8, 0], sizes = [8, 32], strides = [1, 1]} : vector<16x32xf32> to vector<8x32xf32>
    %c26 = arith.constant 26 : index
    %c0_76 = arith.constant 0 : index
    %c0_77 = arith.constant 0 : index
    %207 = vector.load %arg3[%c26, %c0_76, %c0_77] : memref<40x32x32xf32, #tpu.memory_space<vmem>>, vector<1x32x32xf32>
    %208 = vector.shape_cast %207 : vector<1x32x32xf32> to vector<32x32xf32>
    %cst_78 = arith.constant dense<0.000000e+00> : vector<8x32xf32>
    %209 = tpu.matmul %206, %208, %cst_78 {dimension_numbers = #tpu.dot_dimension_numbers<[1], [0], [0], [1], [0, 0, 1, 1], [], []>} : vector<8x32xf32>, vector<32x32xf32>, vector<8x32xf32> -> vector<8x32xf32>
    %210 = arith.addf %205, %209 : vector<8x32xf32>
    %c112 = arith.constant 112 : index
    %c0_79 = arith.constant 0 : index
    %211 = vector.load %arg5[%c112, %c0_79] : memref<320x128xf32, #tpu.memory_space<vmem>>, vector<16x128xf32>
    %cst_80 = arith.constant dense<0.000000e+00> : vector<16x128xf32>
    %212 = tpu.matmul %200, %1, %cst_80 {dimension_numbers = #tpu.dot_dimension_numbers<[1], [0], [0], [1], [0, 0, 1, 1], [], []>} : vector<16x32xf32>, vector<32x128xf32>, vector<16x128xf32> -> vector<16x128xf32>
    %213 = arith.addf %211, %212 : vector<16x128xf32>
    %214 = arith.negf %213 : vector<16x128xf32>
    %215 = math.exp %214 : vector<16x128xf32>
    %cst_81 = arith.constant 1.000000e+00 : f32
    %216 = vector.broadcast %cst_81 : f32 to vector<16x128xf32>
    %217 = arith.addf %216, %215 : vector<16x128xf32>
    %218 = arith.divf %216, %217 : vector<16x128xf32>
    %219 = math.tanh %213 : vector<16x128xf32>
    %220 = vector.extract_strided_slice %218 {offsets = [0, 0], sizes = [16, 32], strides = [1, 1]} : vector<16x128xf32> to vector<16x32xf32>
    %221 = vector.extract_strided_slice %218 {offsets = [0, 32], sizes = [16, 32], strides = [1, 1]} : vector<16x128xf32> to vector<16x32xf32>
    %222 = vector.extract_strided_slice %219 {offsets = [0, 64], sizes = [16, 32], strides = [1, 1]} : vector<16x128xf32> to vector<16x32xf32>
    %223 = vector.extract_strided_slice %218 {offsets = [0, 96], sizes = [16, 32], strides = [1, 1]} : vector<16x128xf32> to vector<16x32xf32>
    %224 = arith.mulf %221, %198 : vector<16x32xf32>
    %225 = arith.mulf %220, %222 : vector<16x32xf32>
    %226 = arith.addf %224, %225 : vector<16x32xf32>
    %227 = math.tanh %226 : vector<16x32xf32>
    %228 = arith.mulf %223, %227 : vector<16x32xf32>
    %229 = vector.extract_strided_slice %228 {offsets = [0, 0], sizes = [8, 32], strides = [1, 1]} : vector<16x32xf32> to vector<8x32xf32>
    %c7 = arith.constant 7 : index
    %c0_82 = arith.constant 0 : index
    %c0_83 = arith.constant 0 : index
    %230 = vector.load %arg3[%c7, %c0_82, %c0_83] : memref<40x32x32xf32, #tpu.memory_space<vmem>>, vector<1x32x32xf32>
    %231 = vector.shape_cast %230 : vector<1x32x32xf32> to vector<32x32xf32>
    %cst_84 = arith.constant dense<0.000000e+00> : vector<8x32xf32>
    %232 = tpu.matmul %229, %231, %cst_84 {dimension_numbers = #tpu.dot_dimension_numbers<[1], [0], [0], [1], [0, 0, 1, 1], [], []>} : vector<8x32xf32>, vector<32x32xf32>, vector<8x32xf32> -> vector<8x32xf32>
    %233 = arith.addf %210, %232 : vector<8x32xf32>
    %234 = vector.extract_strided_slice %228 {offsets = [8, 0], sizes = [8, 32], strides = [1, 1]} : vector<16x32xf32> to vector<8x32xf32>
    %c27 = arith.constant 27 : index
    %c0_85 = arith.constant 0 : index
    %c0_86 = arith.constant 0 : index
    %235 = vector.load %arg3[%c27, %c0_85, %c0_86] : memref<40x32x32xf32, #tpu.memory_space<vmem>>, vector<1x32x32xf32>
    %236 = vector.shape_cast %235 : vector<1x32x32xf32> to vector<32x32xf32>
    %cst_87 = arith.constant dense<0.000000e+00> : vector<8x32xf32>
    %237 = tpu.matmul %234, %236, %cst_87 {dimension_numbers = #tpu.dot_dimension_numbers<[1], [0], [0], [1], [0, 0, 1, 1], [], []>} : vector<8x32xf32>, vector<32x32xf32>, vector<8x32xf32> -> vector<8x32xf32>
    %238 = arith.addf %233, %237 : vector<8x32xf32>
    %c128 = arith.constant 128 : index
    %c0_88 = arith.constant 0 : index
    %239 = vector.load %arg5[%c128, %c0_88] : memref<320x128xf32, #tpu.memory_space<vmem>>, vector<16x128xf32>
    %cst_89 = arith.constant dense<0.000000e+00> : vector<16x128xf32>
    %240 = tpu.matmul %228, %1, %cst_89 {dimension_numbers = #tpu.dot_dimension_numbers<[1], [0], [0], [1], [0, 0, 1, 1], [], []>} : vector<16x32xf32>, vector<32x128xf32>, vector<16x128xf32> -> vector<16x128xf32>
    %241 = arith.addf %239, %240 : vector<16x128xf32>
    %242 = arith.negf %241 : vector<16x128xf32>
    %243 = math.exp %242 : vector<16x128xf32>
    %cst_90 = arith.constant 1.000000e+00 : f32
    %244 = vector.broadcast %cst_90 : f32 to vector<16x128xf32>
    %245 = arith.addf %244, %243 : vector<16x128xf32>
    %246 = arith.divf %244, %245 : vector<16x128xf32>
    %247 = math.tanh %241 : vector<16x128xf32>
    %248 = vector.extract_strided_slice %246 {offsets = [0, 0], sizes = [16, 32], strides = [1, 1]} : vector<16x128xf32> to vector<16x32xf32>
    %249 = vector.extract_strided_slice %246 {offsets = [0, 32], sizes = [16, 32], strides = [1, 1]} : vector<16x128xf32> to vector<16x32xf32>
    %250 = vector.extract_strided_slice %247 {offsets = [0, 64], sizes = [16, 32], strides = [1, 1]} : vector<16x128xf32> to vector<16x32xf32>
    %251 = vector.extract_strided_slice %246 {offsets = [0, 96], sizes = [16, 32], strides = [1, 1]} : vector<16x128xf32> to vector<16x32xf32>
    %252 = arith.mulf %249, %226 : vector<16x32xf32>
    %253 = arith.mulf %248, %250 : vector<16x32xf32>
    %254 = arith.addf %252, %253 : vector<16x32xf32>
    %255 = math.tanh %254 : vector<16x32xf32>
    %256 = arith.mulf %251, %255 : vector<16x32xf32>
    %257 = vector.extract_strided_slice %256 {offsets = [0, 0], sizes = [8, 32], strides = [1, 1]} : vector<16x32xf32> to vector<8x32xf32>
    %c8_91 = arith.constant 8 : index
    %c0_92 = arith.constant 0 : index
    %c0_93 = arith.constant 0 : index
    %258 = vector.load %arg3[%c8_91, %c0_92, %c0_93] : memref<40x32x32xf32, #tpu.memory_space<vmem>>, vector<1x32x32xf32>
    %259 = vector.shape_cast %258 : vector<1x32x32xf32> to vector<32x32xf32>
    %cst_94 = arith.constant dense<0.000000e+00> : vector<8x32xf32>
    %260 = tpu.matmul %257, %259, %cst_94 {dimension_numbers = #tpu.dot_dimension_numbers<[1], [0], [0], [1], [0, 0, 1, 1], [], []>} : vector<8x32xf32>, vector<32x32xf32>, vector<8x32xf32> -> vector<8x32xf32>
    %261 = arith.addf %238, %260 : vector<8x32xf32>
    %262 = vector.extract_strided_slice %256 {offsets = [8, 0], sizes = [8, 32], strides = [1, 1]} : vector<16x32xf32> to vector<8x32xf32>
    %c28 = arith.constant 28 : index
    %c0_95 = arith.constant 0 : index
    %c0_96 = arith.constant 0 : index
    %263 = vector.load %arg3[%c28, %c0_95, %c0_96] : memref<40x32x32xf32, #tpu.memory_space<vmem>>, vector<1x32x32xf32>
    %264 = vector.shape_cast %263 : vector<1x32x32xf32> to vector<32x32xf32>
    %cst_97 = arith.constant dense<0.000000e+00> : vector<8x32xf32>
    %265 = tpu.matmul %262, %264, %cst_97 {dimension_numbers = #tpu.dot_dimension_numbers<[1], [0], [0], [1], [0, 0, 1, 1], [], []>} : vector<8x32xf32>, vector<32x32xf32>, vector<8x32xf32> -> vector<8x32xf32>
    %266 = arith.addf %261, %265 : vector<8x32xf32>
    %c144 = arith.constant 144 : index
    %c0_98 = arith.constant 0 : index
    %267 = vector.load %arg5[%c144, %c0_98] : memref<320x128xf32, #tpu.memory_space<vmem>>, vector<16x128xf32>
    %cst_99 = arith.constant dense<0.000000e+00> : vector<16x128xf32>
    %268 = tpu.matmul %256, %1, %cst_99 {dimension_numbers = #tpu.dot_dimension_numbers<[1], [0], [0], [1], [0, 0, 1, 1], [], []>} : vector<16x32xf32>, vector<32x128xf32>, vector<16x128xf32> -> vector<16x128xf32>
    %269 = arith.addf %267, %268 : vector<16x128xf32>
    %270 = arith.negf %269 : vector<16x128xf32>
    %271 = math.exp %270 : vector<16x128xf32>
    %cst_100 = arith.constant 1.000000e+00 : f32
    %272 = vector.broadcast %cst_100 : f32 to vector<16x128xf32>
    %273 = arith.addf %272, %271 : vector<16x128xf32>
    %274 = arith.divf %272, %273 : vector<16x128xf32>
    %275 = math.tanh %269 : vector<16x128xf32>
    %276 = vector.extract_strided_slice %274 {offsets = [0, 0], sizes = [16, 32], strides = [1, 1]} : vector<16x128xf32> to vector<16x32xf32>
    %277 = vector.extract_strided_slice %274 {offsets = [0, 32], sizes = [16, 32], strides = [1, 1]} : vector<16x128xf32> to vector<16x32xf32>
    %278 = vector.extract_strided_slice %275 {offsets = [0, 64], sizes = [16, 32], strides = [1, 1]} : vector<16x128xf32> to vector<16x32xf32>
    %279 = vector.extract_strided_slice %274 {offsets = [0, 96], sizes = [16, 32], strides = [1, 1]} : vector<16x128xf32> to vector<16x32xf32>
    %280 = arith.mulf %277, %254 : vector<16x32xf32>
    %281 = arith.mulf %276, %278 : vector<16x32xf32>
    %282 = arith.addf %280, %281 : vector<16x32xf32>
    %283 = math.tanh %282 : vector<16x32xf32>
    %284 = arith.mulf %279, %283 : vector<16x32xf32>
    %285 = vector.extract_strided_slice %284 {offsets = [0, 0], sizes = [8, 32], strides = [1, 1]} : vector<16x32xf32> to vector<8x32xf32>
    %c9 = arith.constant 9 : index
    %c0_101 = arith.constant 0 : index
    %c0_102 = arith.constant 0 : index
    %286 = vector.load %arg3[%c9, %c0_101, %c0_102] : memref<40x32x32xf32, #tpu.memory_space<vmem>>, vector<1x32x32xf32>
    %287 = vector.shape_cast %286 : vector<1x32x32xf32> to vector<32x32xf32>
    %cst_103 = arith.constant dense<0.000000e+00> : vector<8x32xf32>
    %288 = tpu.matmul %285, %287, %cst_103 {dimension_numbers = #tpu.dot_dimension_numbers<[1], [0], [0], [1], [0, 0, 1, 1], [], []>} : vector<8x32xf32>, vector<32x32xf32>, vector<8x32xf32> -> vector<8x32xf32>
    %289 = arith.addf %266, %288 : vector<8x32xf32>
    %290 = vector.extract_strided_slice %284 {offsets = [8, 0], sizes = [8, 32], strides = [1, 1]} : vector<16x32xf32> to vector<8x32xf32>
    %c29 = arith.constant 29 : index
    %c0_104 = arith.constant 0 : index
    %c0_105 = arith.constant 0 : index
    %291 = vector.load %arg3[%c29, %c0_104, %c0_105] : memref<40x32x32xf32, #tpu.memory_space<vmem>>, vector<1x32x32xf32>
    %292 = vector.shape_cast %291 : vector<1x32x32xf32> to vector<32x32xf32>
    %cst_106 = arith.constant dense<0.000000e+00> : vector<8x32xf32>
    %293 = tpu.matmul %290, %292, %cst_106 {dimension_numbers = #tpu.dot_dimension_numbers<[1], [0], [0], [1], [0, 0, 1, 1], [], []>} : vector<8x32xf32>, vector<32x32xf32>, vector<8x32xf32> -> vector<8x32xf32>
    %294 = arith.addf %289, %293 : vector<8x32xf32>
    %c160 = arith.constant 160 : index
    %c0_107 = arith.constant 0 : index
    %295 = vector.load %arg5[%c160, %c0_107] : memref<320x128xf32, #tpu.memory_space<vmem>>, vector<16x128xf32>
    %cst_108 = arith.constant dense<0.000000e+00> : vector<16x128xf32>
    %296 = tpu.matmul %284, %1, %cst_108 {dimension_numbers = #tpu.dot_dimension_numbers<[1], [0], [0], [1], [0, 0, 1, 1], [], []>} : vector<16x32xf32>, vector<32x128xf32>, vector<16x128xf32> -> vector<16x128xf32>
    %297 = arith.addf %295, %296 : vector<16x128xf32>
    %298 = arith.negf %297 : vector<16x128xf32>
    %299 = math.exp %298 : vector<16x128xf32>
    %cst_109 = arith.constant 1.000000e+00 : f32
    %300 = vector.broadcast %cst_109 : f32 to vector<16x128xf32>
    %301 = arith.addf %300, %299 : vector<16x128xf32>
    %302 = arith.divf %300, %301 : vector<16x128xf32>
    %303 = math.tanh %297 : vector<16x128xf32>
    %304 = vector.extract_strided_slice %302 {offsets = [0, 0], sizes = [16, 32], strides = [1, 1]} : vector<16x128xf32> to vector<16x32xf32>
    %305 = vector.extract_strided_slice %302 {offsets = [0, 32], sizes = [16, 32], strides = [1, 1]} : vector<16x128xf32> to vector<16x32xf32>
    %306 = vector.extract_strided_slice %303 {offsets = [0, 64], sizes = [16, 32], strides = [1, 1]} : vector<16x128xf32> to vector<16x32xf32>
    %307 = vector.extract_strided_slice %302 {offsets = [0, 96], sizes = [16, 32], strides = [1, 1]} : vector<16x128xf32> to vector<16x32xf32>
    %308 = arith.mulf %305, %282 : vector<16x32xf32>
    %309 = arith.mulf %304, %306 : vector<16x32xf32>
    %310 = arith.addf %308, %309 : vector<16x32xf32>
    %311 = math.tanh %310 : vector<16x32xf32>
    %312 = arith.mulf %307, %311 : vector<16x32xf32>
    %313 = vector.extract_strided_slice %312 {offsets = [0, 0], sizes = [8, 32], strides = [1, 1]} : vector<16x32xf32> to vector<8x32xf32>
    %c10 = arith.constant 10 : index
    %c0_110 = arith.constant 0 : index
    %c0_111 = arith.constant 0 : index
    %314 = vector.load %arg3[%c10, %c0_110, %c0_111] : memref<40x32x32xf32, #tpu.memory_space<vmem>>, vector<1x32x32xf32>
    %315 = vector.shape_cast %314 : vector<1x32x32xf32> to vector<32x32xf32>
    %cst_112 = arith.constant dense<0.000000e+00> : vector<8x32xf32>
    %316 = tpu.matmul %313, %315, %cst_112 {dimension_numbers = #tpu.dot_dimension_numbers<[1], [0], [0], [1], [0, 0, 1, 1], [], []>} : vector<8x32xf32>, vector<32x32xf32>, vector<8x32xf32> -> vector<8x32xf32>
    %317 = arith.addf %294, %316 : vector<8x32xf32>
    %318 = vector.extract_strided_slice %312 {offsets = [8, 0], sizes = [8, 32], strides = [1, 1]} : vector<16x32xf32> to vector<8x32xf32>
    %c30 = arith.constant 30 : index
    %c0_113 = arith.constant 0 : index
    %c0_114 = arith.constant 0 : index
    %319 = vector.load %arg3[%c30, %c0_113, %c0_114] : memref<40x32x32xf32, #tpu.memory_space<vmem>>, vector<1x32x32xf32>
    %320 = vector.shape_cast %319 : vector<1x32x32xf32> to vector<32x32xf32>
    %cst_115 = arith.constant dense<0.000000e+00> : vector<8x32xf32>
    %321 = tpu.matmul %318, %320, %cst_115 {dimension_numbers = #tpu.dot_dimension_numbers<[1], [0], [0], [1], [0, 0, 1, 1], [], []>} : vector<8x32xf32>, vector<32x32xf32>, vector<8x32xf32> -> vector<8x32xf32>
    %322 = arith.addf %317, %321 : vector<8x32xf32>
    %c176 = arith.constant 176 : index
    %c0_116 = arith.constant 0 : index
    %323 = vector.load %arg5[%c176, %c0_116] : memref<320x128xf32, #tpu.memory_space<vmem>>, vector<16x128xf32>
    %cst_117 = arith.constant dense<0.000000e+00> : vector<16x128xf32>
    %324 = tpu.matmul %312, %1, %cst_117 {dimension_numbers = #tpu.dot_dimension_numbers<[1], [0], [0], [1], [0, 0, 1, 1], [], []>} : vector<16x32xf32>, vector<32x128xf32>, vector<16x128xf32> -> vector<16x128xf32>
    %325 = arith.addf %323, %324 : vector<16x128xf32>
    %326 = arith.negf %325 : vector<16x128xf32>
    %327 = math.exp %326 : vector<16x128xf32>
    %cst_118 = arith.constant 1.000000e+00 : f32
    %328 = vector.broadcast %cst_118 : f32 to vector<16x128xf32>
    %329 = arith.addf %328, %327 : vector<16x128xf32>
    %330 = arith.divf %328, %329 : vector<16x128xf32>
    %331 = math.tanh %325 : vector<16x128xf32>
    %332 = vector.extract_strided_slice %330 {offsets = [0, 0], sizes = [16, 32], strides = [1, 1]} : vector<16x128xf32> to vector<16x32xf32>
    %333 = vector.extract_strided_slice %330 {offsets = [0, 32], sizes = [16, 32], strides = [1, 1]} : vector<16x128xf32> to vector<16x32xf32>
    %334 = vector.extract_strided_slice %331 {offsets = [0, 64], sizes = [16, 32], strides = [1, 1]} : vector<16x128xf32> to vector<16x32xf32>
    %335 = vector.extract_strided_slice %330 {offsets = [0, 96], sizes = [16, 32], strides = [1, 1]} : vector<16x128xf32> to vector<16x32xf32>
    %336 = arith.mulf %333, %310 : vector<16x32xf32>
    %337 = arith.mulf %332, %334 : vector<16x32xf32>
    %338 = arith.addf %336, %337 : vector<16x32xf32>
    %339 = math.tanh %338 : vector<16x32xf32>
    %340 = arith.mulf %335, %339 : vector<16x32xf32>
    %341 = vector.extract_strided_slice %340 {offsets = [0, 0], sizes = [8, 32], strides = [1, 1]} : vector<16x32xf32> to vector<8x32xf32>
    %c11 = arith.constant 11 : index
    %c0_119 = arith.constant 0 : index
    %c0_120 = arith.constant 0 : index
    %342 = vector.load %arg3[%c11, %c0_119, %c0_120] : memref<40x32x32xf32, #tpu.memory_space<vmem>>, vector<1x32x32xf32>
    %343 = vector.shape_cast %342 : vector<1x32x32xf32> to vector<32x32xf32>
    %cst_121 = arith.constant dense<0.000000e+00> : vector<8x32xf32>
    %344 = tpu.matmul %341, %343, %cst_121 {dimension_numbers = #tpu.dot_dimension_numbers<[1], [0], [0], [1], [0, 0, 1, 1], [], []>} : vector<8x32xf32>, vector<32x32xf32>, vector<8x32xf32> -> vector<8x32xf32>
    %345 = arith.addf %322, %344 : vector<8x32xf32>
    %346 = vector.extract_strided_slice %340 {offsets = [8, 0], sizes = [8, 32], strides = [1, 1]} : vector<16x32xf32> to vector<8x32xf32>
    %c31 = arith.constant 31 : index
    %c0_122 = arith.constant 0 : index
    %c0_123 = arith.constant 0 : index
    %347 = vector.load %arg3[%c31, %c0_122, %c0_123] : memref<40x32x32xf32, #tpu.memory_space<vmem>>, vector<1x32x32xf32>
    %348 = vector.shape_cast %347 : vector<1x32x32xf32> to vector<32x32xf32>
    %cst_124 = arith.constant dense<0.000000e+00> : vector<8x32xf32>
    %349 = tpu.matmul %346, %348, %cst_124 {dimension_numbers = #tpu.dot_dimension_numbers<[1], [0], [0], [1], [0, 0, 1, 1], [], []>} : vector<8x32xf32>, vector<32x32xf32>, vector<8x32xf32> -> vector<8x32xf32>
    %350 = arith.addf %345, %349 : vector<8x32xf32>
    %c192 = arith.constant 192 : index
    %c0_125 = arith.constant 0 : index
    %351 = vector.load %arg5[%c192, %c0_125] : memref<320x128xf32, #tpu.memory_space<vmem>>, vector<16x128xf32>
    %cst_126 = arith.constant dense<0.000000e+00> : vector<16x128xf32>
    %352 = tpu.matmul %340, %1, %cst_126 {dimension_numbers = #tpu.dot_dimension_numbers<[1], [0], [0], [1], [0, 0, 1, 1], [], []>} : vector<16x32xf32>, vector<32x128xf32>, vector<16x128xf32> -> vector<16x128xf32>
    %353 = arith.addf %351, %352 : vector<16x128xf32>
    %354 = arith.negf %353 : vector<16x128xf32>
    %355 = math.exp %354 : vector<16x128xf32>
    %cst_127 = arith.constant 1.000000e+00 : f32
    %356 = vector.broadcast %cst_127 : f32 to vector<16x128xf32>
    %357 = arith.addf %356, %355 : vector<16x128xf32>
    %358 = arith.divf %356, %357 : vector<16x128xf32>
    %359 = math.tanh %353 : vector<16x128xf32>
    %360 = vector.extract_strided_slice %358 {offsets = [0, 0], sizes = [16, 32], strides = [1, 1]} : vector<16x128xf32> to vector<16x32xf32>
    %361 = vector.extract_strided_slice %358 {offsets = [0, 32], sizes = [16, 32], strides = [1, 1]} : vector<16x128xf32> to vector<16x32xf32>
    %362 = vector.extract_strided_slice %359 {offsets = [0, 64], sizes = [16, 32], strides = [1, 1]} : vector<16x128xf32> to vector<16x32xf32>
    %363 = vector.extract_strided_slice %358 {offsets = [0, 96], sizes = [16, 32], strides = [1, 1]} : vector<16x128xf32> to vector<16x32xf32>
    %364 = arith.mulf %361, %338 : vector<16x32xf32>
    %365 = arith.mulf %360, %362 : vector<16x32xf32>
    %366 = arith.addf %364, %365 : vector<16x32xf32>
    %367 = math.tanh %366 : vector<16x32xf32>
    %368 = arith.mulf %363, %367 : vector<16x32xf32>
    %369 = vector.extract_strided_slice %368 {offsets = [0, 0], sizes = [8, 32], strides = [1, 1]} : vector<16x32xf32> to vector<8x32xf32>
    %c12 = arith.constant 12 : index
    %c0_128 = arith.constant 0 : index
    %c0_129 = arith.constant 0 : index
    %370 = vector.load %arg3[%c12, %c0_128, %c0_129] : memref<40x32x32xf32, #tpu.memory_space<vmem>>, vector<1x32x32xf32>
    %371 = vector.shape_cast %370 : vector<1x32x32xf32> to vector<32x32xf32>
    %cst_130 = arith.constant dense<0.000000e+00> : vector<8x32xf32>
    %372 = tpu.matmul %369, %371, %cst_130 {dimension_numbers = #tpu.dot_dimension_numbers<[1], [0], [0], [1], [0, 0, 1, 1], [], []>} : vector<8x32xf32>, vector<32x32xf32>, vector<8x32xf32> -> vector<8x32xf32>
    %373 = arith.addf %350, %372 : vector<8x32xf32>
    %374 = vector.extract_strided_slice %368 {offsets = [8, 0], sizes = [8, 32], strides = [1, 1]} : vector<16x32xf32> to vector<8x32xf32>
    %c32_131 = arith.constant 32 : index
    %c0_132 = arith.constant 0 : index
    %c0_133 = arith.constant 0 : index
    %375 = vector.load %arg3[%c32_131, %c0_132, %c0_133] : memref<40x32x32xf32, #tpu.memory_space<vmem>>, vector<1x32x32xf32>
    %376 = vector.shape_cast %375 : vector<1x32x32xf32> to vector<32x32xf32>
    %cst_134 = arith.constant dense<0.000000e+00> : vector<8x32xf32>
    %377 = tpu.matmul %374, %376, %cst_134 {dimension_numbers = #tpu.dot_dimension_numbers<[1], [0], [0], [1], [0, 0, 1, 1], [], []>} : vector<8x32xf32>, vector<32x32xf32>, vector<8x32xf32> -> vector<8x32xf32>
    %378 = arith.addf %373, %377 : vector<8x32xf32>
    %c208 = arith.constant 208 : index
    %c0_135 = arith.constant 0 : index
    %379 = vector.load %arg5[%c208, %c0_135] : memref<320x128xf32, #tpu.memory_space<vmem>>, vector<16x128xf32>
    %cst_136 = arith.constant dense<0.000000e+00> : vector<16x128xf32>
    %380 = tpu.matmul %368, %1, %cst_136 {dimension_numbers = #tpu.dot_dimension_numbers<[1], [0], [0], [1], [0, 0, 1, 1], [], []>} : vector<16x32xf32>, vector<32x128xf32>, vector<16x128xf32> -> vector<16x128xf32>
    %381 = arith.addf %379, %380 : vector<16x128xf32>
    %382 = arith.negf %381 : vector<16x128xf32>
    %383 = math.exp %382 : vector<16x128xf32>
    %cst_137 = arith.constant 1.000000e+00 : f32
    %384 = vector.broadcast %cst_137 : f32 to vector<16x128xf32>
    %385 = arith.addf %384, %383 : vector<16x128xf32>
    %386 = arith.divf %384, %385 : vector<16x128xf32>
    %387 = math.tanh %381 : vector<16x128xf32>
    %388 = vector.extract_strided_slice %386 {offsets = [0, 0], sizes = [16, 32], strides = [1, 1]} : vector<16x128xf32> to vector<16x32xf32>
    %389 = vector.extract_strided_slice %386 {offsets = [0, 32], sizes = [16, 32], strides = [1, 1]} : vector<16x128xf32> to vector<16x32xf32>
    %390 = vector.extract_strided_slice %387 {offsets = [0, 64], sizes = [16, 32], strides = [1, 1]} : vector<16x128xf32> to vector<16x32xf32>
    %391 = vector.extract_strided_slice %386 {offsets = [0, 96], sizes = [16, 32], strides = [1, 1]} : vector<16x128xf32> to vector<16x32xf32>
    %392 = arith.mulf %389, %366 : vector<16x32xf32>
    %393 = arith.mulf %388, %390 : vector<16x32xf32>
    %394 = arith.addf %392, %393 : vector<16x32xf32>
    %395 = math.tanh %394 : vector<16x32xf32>
    %396 = arith.mulf %391, %395 : vector<16x32xf32>
    %397 = vector.extract_strided_slice %396 {offsets = [0, 0], sizes = [8, 32], strides = [1, 1]} : vector<16x32xf32> to vector<8x32xf32>
    %c13 = arith.constant 13 : index
    %c0_138 = arith.constant 0 : index
    %c0_139 = arith.constant 0 : index
    %398 = vector.load %arg3[%c13, %c0_138, %c0_139] : memref<40x32x32xf32, #tpu.memory_space<vmem>>, vector<1x32x32xf32>
    %399 = vector.shape_cast %398 : vector<1x32x32xf32> to vector<32x32xf32>
    %cst_140 = arith.constant dense<0.000000e+00> : vector<8x32xf32>
    %400 = tpu.matmul %397, %399, %cst_140 {dimension_numbers = #tpu.dot_dimension_numbers<[1], [0], [0], [1], [0, 0, 1, 1], [], []>} : vector<8x32xf32>, vector<32x32xf32>, vector<8x32xf32> -> vector<8x32xf32>
    %401 = arith.addf %378, %400 : vector<8x32xf32>
    %402 = vector.extract_strided_slice %396 {offsets = [8, 0], sizes = [8, 32], strides = [1, 1]} : vector<16x32xf32> to vector<8x32xf32>
    %c33 = arith.constant 33 : index
    %c0_141 = arith.constant 0 : index
    %c0_142 = arith.constant 0 : index
    %403 = vector.load %arg3[%c33, %c0_141, %c0_142] : memref<40x32x32xf32, #tpu.memory_space<vmem>>, vector<1x32x32xf32>
    %404 = vector.shape_cast %403 : vector<1x32x32xf32> to vector<32x32xf32>
    %cst_143 = arith.constant dense<0.000000e+00> : vector<8x32xf32>
    %405 = tpu.matmul %402, %404, %cst_143 {dimension_numbers = #tpu.dot_dimension_numbers<[1], [0], [0], [1], [0, 0, 1, 1], [], []>} : vector<8x32xf32>, vector<32x32xf32>, vector<8x32xf32> -> vector<8x32xf32>
    %406 = arith.addf %401, %405 : vector<8x32xf32>
    %c224 = arith.constant 224 : index
    %c0_144 = arith.constant 0 : index
    %407 = vector.load %arg5[%c224, %c0_144] : memref<320x128xf32, #tpu.memory_space<vmem>>, vector<16x128xf32>
    %cst_145 = arith.constant dense<0.000000e+00> : vector<16x128xf32>
    %408 = tpu.matmul %396, %1, %cst_145 {dimension_numbers = #tpu.dot_dimension_numbers<[1], [0], [0], [1], [0, 0, 1, 1], [], []>} : vector<16x32xf32>, vector<32x128xf32>, vector<16x128xf32> -> vector<16x128xf32>
    %409 = arith.addf %407, %408 : vector<16x128xf32>
    %410 = arith.negf %409 : vector<16x128xf32>
    %411 = math.exp %410 : vector<16x128xf32>
    %cst_146 = arith.constant 1.000000e+00 : f32
    %412 = vector.broadcast %cst_146 : f32 to vector<16x128xf32>
    %413 = arith.addf %412, %411 : vector<16x128xf32>
    %414 = arith.divf %412, %413 : vector<16x128xf32>
    %415 = math.tanh %409 : vector<16x128xf32>
    %416 = vector.extract_strided_slice %414 {offsets = [0, 0], sizes = [16, 32], strides = [1, 1]} : vector<16x128xf32> to vector<16x32xf32>
    %417 = vector.extract_strided_slice %414 {offsets = [0, 32], sizes = [16, 32], strides = [1, 1]} : vector<16x128xf32> to vector<16x32xf32>
    %418 = vector.extract_strided_slice %415 {offsets = [0, 64], sizes = [16, 32], strides = [1, 1]} : vector<16x128xf32> to vector<16x32xf32>
    %419 = vector.extract_strided_slice %414 {offsets = [0, 96], sizes = [16, 32], strides = [1, 1]} : vector<16x128xf32> to vector<16x32xf32>
    %420 = arith.mulf %417, %394 : vector<16x32xf32>
    %421 = arith.mulf %416, %418 : vector<16x32xf32>
    %422 = arith.addf %420, %421 : vector<16x32xf32>
    %423 = math.tanh %422 : vector<16x32xf32>
    %424 = arith.mulf %419, %423 : vector<16x32xf32>
    %425 = vector.extract_strided_slice %424 {offsets = [0, 0], sizes = [8, 32], strides = [1, 1]} : vector<16x32xf32> to vector<8x32xf32>
    %c14 = arith.constant 14 : index
    %c0_147 = arith.constant 0 : index
    %c0_148 = arith.constant 0 : index
    %426 = vector.load %arg3[%c14, %c0_147, %c0_148] : memref<40x32x32xf32, #tpu.memory_space<vmem>>, vector<1x32x32xf32>
    %427 = vector.shape_cast %426 : vector<1x32x32xf32> to vector<32x32xf32>
    %cst_149 = arith.constant dense<0.000000e+00> : vector<8x32xf32>
    %428 = tpu.matmul %425, %427, %cst_149 {dimension_numbers = #tpu.dot_dimension_numbers<[1], [0], [0], [1], [0, 0, 1, 1], [], []>} : vector<8x32xf32>, vector<32x32xf32>, vector<8x32xf32> -> vector<8x32xf32>
    %429 = arith.addf %406, %428 : vector<8x32xf32>
    %430 = vector.extract_strided_slice %424 {offsets = [8, 0], sizes = [8, 32], strides = [1, 1]} : vector<16x32xf32> to vector<8x32xf32>
    %c34 = arith.constant 34 : index
    %c0_150 = arith.constant 0 : index
    %c0_151 = arith.constant 0 : index
    %431 = vector.load %arg3[%c34, %c0_150, %c0_151] : memref<40x32x32xf32, #tpu.memory_space<vmem>>, vector<1x32x32xf32>
    %432 = vector.shape_cast %431 : vector<1x32x32xf32> to vector<32x32xf32>
    %cst_152 = arith.constant dense<0.000000e+00> : vector<8x32xf32>
    %433 = tpu.matmul %430, %432, %cst_152 {dimension_numbers = #tpu.dot_dimension_numbers<[1], [0], [0], [1], [0, 0, 1, 1], [], []>} : vector<8x32xf32>, vector<32x32xf32>, vector<8x32xf32> -> vector<8x32xf32>
    %434 = arith.addf %429, %433 : vector<8x32xf32>
    %c240 = arith.constant 240 : index
    %c0_153 = arith.constant 0 : index
    %435 = vector.load %arg5[%c240, %c0_153] : memref<320x128xf32, #tpu.memory_space<vmem>>, vector<16x128xf32>
    %cst_154 = arith.constant dense<0.000000e+00> : vector<16x128xf32>
    %436 = tpu.matmul %424, %1, %cst_154 {dimension_numbers = #tpu.dot_dimension_numbers<[1], [0], [0], [1], [0, 0, 1, 1], [], []>} : vector<16x32xf32>, vector<32x128xf32>, vector<16x128xf32> -> vector<16x128xf32>
    %437 = arith.addf %435, %436 : vector<16x128xf32>
    %438 = arith.negf %437 : vector<16x128xf32>
    %439 = math.exp %438 : vector<16x128xf32>
    %cst_155 = arith.constant 1.000000e+00 : f32
    %440 = vector.broadcast %cst_155 : f32 to vector<16x128xf32>
    %441 = arith.addf %440, %439 : vector<16x128xf32>
    %442 = arith.divf %440, %441 : vector<16x128xf32>
    %443 = math.tanh %437 : vector<16x128xf32>
    %444 = vector.extract_strided_slice %442 {offsets = [0, 0], sizes = [16, 32], strides = [1, 1]} : vector<16x128xf32> to vector<16x32xf32>
    %445 = vector.extract_strided_slice %442 {offsets = [0, 32], sizes = [16, 32], strides = [1, 1]} : vector<16x128xf32> to vector<16x32xf32>
    %446 = vector.extract_strided_slice %443 {offsets = [0, 64], sizes = [16, 32], strides = [1, 1]} : vector<16x128xf32> to vector<16x32xf32>
    %447 = vector.extract_strided_slice %442 {offsets = [0, 96], sizes = [16, 32], strides = [1, 1]} : vector<16x128xf32> to vector<16x32xf32>
    %448 = arith.mulf %445, %422 : vector<16x32xf32>
    %449 = arith.mulf %444, %446 : vector<16x32xf32>
    %450 = arith.addf %448, %449 : vector<16x32xf32>
    %451 = math.tanh %450 : vector<16x32xf32>
    %452 = arith.mulf %447, %451 : vector<16x32xf32>
    %453 = vector.extract_strided_slice %452 {offsets = [0, 0], sizes = [8, 32], strides = [1, 1]} : vector<16x32xf32> to vector<8x32xf32>
    %c15 = arith.constant 15 : index
    %c0_156 = arith.constant 0 : index
    %c0_157 = arith.constant 0 : index
    %454 = vector.load %arg3[%c15, %c0_156, %c0_157] : memref<40x32x32xf32, #tpu.memory_space<vmem>>, vector<1x32x32xf32>
    %455 = vector.shape_cast %454 : vector<1x32x32xf32> to vector<32x32xf32>
    %cst_158 = arith.constant dense<0.000000e+00> : vector<8x32xf32>
    %456 = tpu.matmul %453, %455, %cst_158 {dimension_numbers = #tpu.dot_dimension_numbers<[1], [0], [0], [1], [0, 0, 1, 1], [], []>} : vector<8x32xf32>, vector<32x32xf32>, vector<8x32xf32> -> vector<8x32xf32>
    %457 = arith.addf %434, %456 : vector<8x32xf32>
    %458 = vector.extract_strided_slice %452 {offsets = [8, 0], sizes = [8, 32], strides = [1, 1]} : vector<16x32xf32> to vector<8x32xf32>
    %c35 = arith.constant 35 : index
    %c0_159 = arith.constant 0 : index
    %c0_160 = arith.constant 0 : index
    %459 = vector.load %arg3[%c35, %c0_159, %c0_160] : memref<40x32x32xf32, #tpu.memory_space<vmem>>, vector<1x32x32xf32>
    %460 = vector.shape_cast %459 : vector<1x32x32xf32> to vector<32x32xf32>
    %cst_161 = arith.constant dense<0.000000e+00> : vector<8x32xf32>
    %461 = tpu.matmul %458, %460, %cst_161 {dimension_numbers = #tpu.dot_dimension_numbers<[1], [0], [0], [1], [0, 0, 1, 1], [], []>} : vector<8x32xf32>, vector<32x32xf32>, vector<8x32xf32> -> vector<8x32xf32>
    %462 = arith.addf %457, %461 : vector<8x32xf32>
    %c256 = arith.constant 256 : index
    %c0_162 = arith.constant 0 : index
    %463 = vector.load %arg5[%c256, %c0_162] : memref<320x128xf32, #tpu.memory_space<vmem>>, vector<16x128xf32>
    %cst_163 = arith.constant dense<0.000000e+00> : vector<16x128xf32>
    %464 = tpu.matmul %452, %1, %cst_163 {dimension_numbers = #tpu.dot_dimension_numbers<[1], [0], [0], [1], [0, 0, 1, 1], [], []>} : vector<16x32xf32>, vector<32x128xf32>, vector<16x128xf32> -> vector<16x128xf32>
    %465 = arith.addf %463, %464 : vector<16x128xf32>
    %466 = arith.negf %465 : vector<16x128xf32>
    %467 = math.exp %466 : vector<16x128xf32>
    %cst_164 = arith.constant 1.000000e+00 : f32
    %468 = vector.broadcast %cst_164 : f32 to vector<16x128xf32>
    %469 = arith.addf %468, %467 : vector<16x128xf32>
    %470 = arith.divf %468, %469 : vector<16x128xf32>
    %471 = math.tanh %465 : vector<16x128xf32>
    %472 = vector.extract_strided_slice %470 {offsets = [0, 0], sizes = [16, 32], strides = [1, 1]} : vector<16x128xf32> to vector<16x32xf32>
    %473 = vector.extract_strided_slice %470 {offsets = [0, 32], sizes = [16, 32], strides = [1, 1]} : vector<16x128xf32> to vector<16x32xf32>
    %474 = vector.extract_strided_slice %471 {offsets = [0, 64], sizes = [16, 32], strides = [1, 1]} : vector<16x128xf32> to vector<16x32xf32>
    %475 = vector.extract_strided_slice %470 {offsets = [0, 96], sizes = [16, 32], strides = [1, 1]} : vector<16x128xf32> to vector<16x32xf32>
    %476 = arith.mulf %473, %450 : vector<16x32xf32>
    %477 = arith.mulf %472, %474 : vector<16x32xf32>
    %478 = arith.addf %476, %477 : vector<16x32xf32>
    %479 = math.tanh %478 : vector<16x32xf32>
    %480 = arith.mulf %475, %479 : vector<16x32xf32>
    %481 = vector.extract_strided_slice %480 {offsets = [0, 0], sizes = [8, 32], strides = [1, 1]} : vector<16x32xf32> to vector<8x32xf32>
    %c16_165 = arith.constant 16 : index
    %c0_166 = arith.constant 0 : index
    %c0_167 = arith.constant 0 : index
    %482 = vector.load %arg3[%c16_165, %c0_166, %c0_167] : memref<40x32x32xf32, #tpu.memory_space<vmem>>, vector<1x32x32xf32>
    %483 = vector.shape_cast %482 : vector<1x32x32xf32> to vector<32x32xf32>
    %cst_168 = arith.constant dense<0.000000e+00> : vector<8x32xf32>
    %484 = tpu.matmul %481, %483, %cst_168 {dimension_numbers = #tpu.dot_dimension_numbers<[1], [0], [0], [1], [0, 0, 1, 1], [], []>} : vector<8x32xf32>, vector<32x32xf32>, vector<8x32xf32> -> vector<8x32xf32>
    %485 = arith.addf %462, %484 : vector<8x32xf32>
    %486 = vector.extract_strided_slice %480 {offsets = [8, 0], sizes = [8, 32], strides = [1, 1]} : vector<16x32xf32> to vector<8x32xf32>
    %c36 = arith.constant 36 : index
    %c0_169 = arith.constant 0 : index
    %c0_170 = arith.constant 0 : index
    %487 = vector.load %arg3[%c36, %c0_169, %c0_170] : memref<40x32x32xf32, #tpu.memory_space<vmem>>, vector<1x32x32xf32>
    %488 = vector.shape_cast %487 : vector<1x32x32xf32> to vector<32x32xf32>
    %cst_171 = arith.constant dense<0.000000e+00> : vector<8x32xf32>
    %489 = tpu.matmul %486, %488, %cst_171 {dimension_numbers = #tpu.dot_dimension_numbers<[1], [0], [0], [1], [0, 0, 1, 1], [], []>} : vector<8x32xf32>, vector<32x32xf32>, vector<8x32xf32> -> vector<8x32xf32>
    %490 = arith.addf %485, %489 : vector<8x32xf32>
    %c272 = arith.constant 272 : index
    %c0_172 = arith.constant 0 : index
    %491 = vector.load %arg5[%c272, %c0_172] : memref<320x128xf32, #tpu.memory_space<vmem>>, vector<16x128xf32>
    %cst_173 = arith.constant dense<0.000000e+00> : vector<16x128xf32>
    %492 = tpu.matmul %480, %1, %cst_173 {dimension_numbers = #tpu.dot_dimension_numbers<[1], [0], [0], [1], [0, 0, 1, 1], [], []>} : vector<16x32xf32>, vector<32x128xf32>, vector<16x128xf32> -> vector<16x128xf32>
    %493 = arith.addf %491, %492 : vector<16x128xf32>
    %494 = arith.negf %493 : vector<16x128xf32>
    %495 = math.exp %494 : vector<16x128xf32>
    %cst_174 = arith.constant 1.000000e+00 : f32
    %496 = vector.broadcast %cst_174 : f32 to vector<16x128xf32>
    %497 = arith.addf %496, %495 : vector<16x128xf32>
    %498 = arith.divf %496, %497 : vector<16x128xf32>
    %499 = math.tanh %493 : vector<16x128xf32>
    %500 = vector.extract_strided_slice %498 {offsets = [0, 0], sizes = [16, 32], strides = [1, 1]} : vector<16x128xf32> to vector<16x32xf32>
    %501 = vector.extract_strided_slice %498 {offsets = [0, 32], sizes = [16, 32], strides = [1, 1]} : vector<16x128xf32> to vector<16x32xf32>
    %502 = vector.extract_strided_slice %499 {offsets = [0, 64], sizes = [16, 32], strides = [1, 1]} : vector<16x128xf32> to vector<16x32xf32>
    %503 = vector.extract_strided_slice %498 {offsets = [0, 96], sizes = [16, 32], strides = [1, 1]} : vector<16x128xf32> to vector<16x32xf32>
    %504 = arith.mulf %501, %478 : vector<16x32xf32>
    %505 = arith.mulf %500, %502 : vector<16x32xf32>
    %506 = arith.addf %504, %505 : vector<16x32xf32>
    %507 = math.tanh %506 : vector<16x32xf32>
    %508 = arith.mulf %503, %507 : vector<16x32xf32>
    %509 = vector.extract_strided_slice %508 {offsets = [0, 0], sizes = [8, 32], strides = [1, 1]} : vector<16x32xf32> to vector<8x32xf32>
    %c17 = arith.constant 17 : index
    %c0_175 = arith.constant 0 : index
    %c0_176 = arith.constant 0 : index
    %510 = vector.load %arg3[%c17, %c0_175, %c0_176] : memref<40x32x32xf32, #tpu.memory_space<vmem>>, vector<1x32x32xf32>
    %511 = vector.shape_cast %510 : vector<1x32x32xf32> to vector<32x32xf32>
    %cst_177 = arith.constant dense<0.000000e+00> : vector<8x32xf32>
    %512 = tpu.matmul %509, %511, %cst_177 {dimension_numbers = #tpu.dot_dimension_numbers<[1], [0], [0], [1], [0, 0, 1, 1], [], []>} : vector<8x32xf32>, vector<32x32xf32>, vector<8x32xf32> -> vector<8x32xf32>
    %513 = arith.addf %490, %512 : vector<8x32xf32>
    %514 = vector.extract_strided_slice %508 {offsets = [8, 0], sizes = [8, 32], strides = [1, 1]} : vector<16x32xf32> to vector<8x32xf32>
    %c37 = arith.constant 37 : index
    %c0_178 = arith.constant 0 : index
    %c0_179 = arith.constant 0 : index
    %515 = vector.load %arg3[%c37, %c0_178, %c0_179] : memref<40x32x32xf32, #tpu.memory_space<vmem>>, vector<1x32x32xf32>
    %516 = vector.shape_cast %515 : vector<1x32x32xf32> to vector<32x32xf32>
    %cst_180 = arith.constant dense<0.000000e+00> : vector<8x32xf32>
    %517 = tpu.matmul %514, %516, %cst_180 {dimension_numbers = #tpu.dot_dimension_numbers<[1], [0], [0], [1], [0, 0, 1, 1], [], []>} : vector<8x32xf32>, vector<32x32xf32>, vector<8x32xf32> -> vector<8x32xf32>
    %518 = arith.addf %513, %517 : vector<8x32xf32>
    %c288 = arith.constant 288 : index
    %c0_181 = arith.constant 0 : index
    %519 = vector.load %arg5[%c288, %c0_181] : memref<320x128xf32, #tpu.memory_space<vmem>>, vector<16x128xf32>
    %cst_182 = arith.constant dense<0.000000e+00> : vector<16x128xf32>
    %520 = tpu.matmul %508, %1, %cst_182 {dimension_numbers = #tpu.dot_dimension_numbers<[1], [0], [0], [1], [0, 0, 1, 1], [], []>} : vector<16x32xf32>, vector<32x128xf32>, vector<16x128xf32> -> vector<16x128xf32>
    %521 = arith.addf %519, %520 : vector<16x128xf32>
    %522 = arith.negf %521 : vector<16x128xf32>
    %523 = math.exp %522 : vector<16x128xf32>
    %cst_183 = arith.constant 1.000000e+00 : f32
    %524 = vector.broadcast %cst_183 : f32 to vector<16x128xf32>
    %525 = arith.addf %524, %523 : vector<16x128xf32>
    %526 = arith.divf %524, %525 : vector<16x128xf32>
    %527 = math.tanh %521 : vector<16x128xf32>
    %528 = vector.extract_strided_slice %526 {offsets = [0, 0], sizes = [16, 32], strides = [1, 1]} : vector<16x128xf32> to vector<16x32xf32>
    %529 = vector.extract_strided_slice %526 {offsets = [0, 32], sizes = [16, 32], strides = [1, 1]} : vector<16x128xf32> to vector<16x32xf32>
    %530 = vector.extract_strided_slice %527 {offsets = [0, 64], sizes = [16, 32], strides = [1, 1]} : vector<16x128xf32> to vector<16x32xf32>
    %531 = vector.extract_strided_slice %526 {offsets = [0, 96], sizes = [16, 32], strides = [1, 1]} : vector<16x128xf32> to vector<16x32xf32>
    %532 = arith.mulf %529, %506 : vector<16x32xf32>
    %533 = arith.mulf %528, %530 : vector<16x32xf32>
    %534 = arith.addf %532, %533 : vector<16x32xf32>
    %535 = math.tanh %534 : vector<16x32xf32>
    %536 = arith.mulf %531, %535 : vector<16x32xf32>
    %537 = vector.extract_strided_slice %536 {offsets = [0, 0], sizes = [8, 32], strides = [1, 1]} : vector<16x32xf32> to vector<8x32xf32>
    %c18 = arith.constant 18 : index
    %c0_184 = arith.constant 0 : index
    %c0_185 = arith.constant 0 : index
    %538 = vector.load %arg3[%c18, %c0_184, %c0_185] : memref<40x32x32xf32, #tpu.memory_space<vmem>>, vector<1x32x32xf32>
    %539 = vector.shape_cast %538 : vector<1x32x32xf32> to vector<32x32xf32>
    %cst_186 = arith.constant dense<0.000000e+00> : vector<8x32xf32>
    %540 = tpu.matmul %537, %539, %cst_186 {dimension_numbers = #tpu.dot_dimension_numbers<[1], [0], [0], [1], [0, 0, 1, 1], [], []>} : vector<8x32xf32>, vector<32x32xf32>, vector<8x32xf32> -> vector<8x32xf32>
    %541 = arith.addf %518, %540 : vector<8x32xf32>
    %542 = vector.extract_strided_slice %536 {offsets = [8, 0], sizes = [8, 32], strides = [1, 1]} : vector<16x32xf32> to vector<8x32xf32>
    %c38 = arith.constant 38 : index
    %c0_187 = arith.constant 0 : index
    %c0_188 = arith.constant 0 : index
    %543 = vector.load %arg3[%c38, %c0_187, %c0_188] : memref<40x32x32xf32, #tpu.memory_space<vmem>>, vector<1x32x32xf32>
    %544 = vector.shape_cast %543 : vector<1x32x32xf32> to vector<32x32xf32>
    %cst_189 = arith.constant dense<0.000000e+00> : vector<8x32xf32>
    %545 = tpu.matmul %542, %544, %cst_189 {dimension_numbers = #tpu.dot_dimension_numbers<[1], [0], [0], [1], [0, 0, 1, 1], [], []>} : vector<8x32xf32>, vector<32x32xf32>, vector<8x32xf32> -> vector<8x32xf32>
    %546 = arith.addf %541, %545 : vector<8x32xf32>
    %c304 = arith.constant 304 : index
    %c0_190 = arith.constant 0 : index
    %547 = vector.load %arg5[%c304, %c0_190] : memref<320x128xf32, #tpu.memory_space<vmem>>, vector<16x128xf32>
    %cst_191 = arith.constant dense<0.000000e+00> : vector<16x128xf32>
    %548 = tpu.matmul %536, %1, %cst_191 {dimension_numbers = #tpu.dot_dimension_numbers<[1], [0], [0], [1], [0, 0, 1, 1], [], []>} : vector<16x32xf32>, vector<32x128xf32>, vector<16x128xf32> -> vector<16x128xf32>
    %549 = arith.addf %547, %548 : vector<16x128xf32>
    %550 = arith.negf %549 : vector<16x128xf32>
    %551 = math.exp %550 : vector<16x128xf32>
    %cst_192 = arith.constant 1.000000e+00 : f32
    %552 = vector.broadcast %cst_192 : f32 to vector<16x128xf32>
    %553 = arith.addf %552, %551 : vector<16x128xf32>
    %554 = arith.divf %552, %553 : vector<16x128xf32>
    %555 = math.tanh %549 : vector<16x128xf32>
    %556 = vector.extract_strided_slice %554 {offsets = [0, 0], sizes = [16, 32], strides = [1, 1]} : vector<16x128xf32> to vector<16x32xf32>
    %557 = vector.extract_strided_slice %554 {offsets = [0, 32], sizes = [16, 32], strides = [1, 1]} : vector<16x128xf32> to vector<16x32xf32>
    %558 = vector.extract_strided_slice %555 {offsets = [0, 64], sizes = [16, 32], strides = [1, 1]} : vector<16x128xf32> to vector<16x32xf32>
    %559 = vector.extract_strided_slice %554 {offsets = [0, 96], sizes = [16, 32], strides = [1, 1]} : vector<16x128xf32> to vector<16x32xf32>
    %560 = arith.mulf %557, %534 : vector<16x32xf32>
    %561 = arith.mulf %556, %558 : vector<16x32xf32>
    %562 = arith.addf %560, %561 : vector<16x32xf32>
    %563 = math.tanh %562 : vector<16x32xf32>
    %564 = arith.mulf %559, %563 : vector<16x32xf32>
    %565 = vector.extract_strided_slice %564 {offsets = [0, 0], sizes = [8, 32], strides = [1, 1]} : vector<16x32xf32> to vector<8x32xf32>
    %c19 = arith.constant 19 : index
    %c0_193 = arith.constant 0 : index
    %c0_194 = arith.constant 0 : index
    %566 = vector.load %arg3[%c19, %c0_193, %c0_194] : memref<40x32x32xf32, #tpu.memory_space<vmem>>, vector<1x32x32xf32>
    %567 = vector.shape_cast %566 : vector<1x32x32xf32> to vector<32x32xf32>
    %cst_195 = arith.constant dense<0.000000e+00> : vector<8x32xf32>
    %568 = tpu.matmul %565, %567, %cst_195 {dimension_numbers = #tpu.dot_dimension_numbers<[1], [0], [0], [1], [0, 0, 1, 1], [], []>} : vector<8x32xf32>, vector<32x32xf32>, vector<8x32xf32> -> vector<8x32xf32>
    %569 = arith.addf %546, %568 : vector<8x32xf32>
    %570 = vector.extract_strided_slice %564 {offsets = [8, 0], sizes = [8, 32], strides = [1, 1]} : vector<16x32xf32> to vector<8x32xf32>
    %c39 = arith.constant 39 : index
    %c0_196 = arith.constant 0 : index
    %c0_197 = arith.constant 0 : index
    %571 = vector.load %arg3[%c39, %c0_196, %c0_197] : memref<40x32x32xf32, #tpu.memory_space<vmem>>, vector<1x32x32xf32>
    %572 = vector.shape_cast %571 : vector<1x32x32xf32> to vector<32x32xf32>
    %cst_198 = arith.constant dense<0.000000e+00> : vector<8x32xf32>
    %573 = tpu.matmul %570, %572, %cst_198 {dimension_numbers = #tpu.dot_dimension_numbers<[1], [0], [0], [1], [0, 0, 1, 1], [], []>} : vector<8x32xf32>, vector<32x32xf32>, vector<8x32xf32> -> vector<8x32xf32>
    %574 = arith.addf %569, %573 : vector<8x32xf32>
    %575 = vector.broadcast %4 : vector<1x32xf32> to vector<8x32xf32>
    %576 = arith.addf %574, %575 : vector<8x32xf32>
    %cst_199 = arith.constant 0.000000e+00 : f32
    %577 = vector.broadcast %cst_199 : f32 to vector<8x32xf32>
    %578 = arith.maximumf %576, %577 : vector<8x32xf32>
    %579 = vector.broadcast %5 : vector<1x32xf32> to vector<8x32xf32>
    %580 = arith.mulf %578, %579 : vector<8x32xf32>
    %cst_200 = arith.constant dense<0.000000e+00> : vector<8xf32>
    %581 = vector.multi_reduction <add>, %580, %cst_200 [1] : vector<8x32xf32> to vector<8xf32>
    %582 = vector.shape_cast %581 : vector<8xf32> to vector<8x1xf32>
    %583 = vector.broadcast %6 : vector<1x1xf32> to vector<8x1xf32>
    %584 = arith.addf %582, %583 : vector<8x1xf32>
    %585 = vector.extract_strided_slice %584 {offsets = [0, 0], sizes = [2, 1], strides = [1, 1]} : vector<8x1xf32> to vector<2x1xf32>
    %586 = arith.negf %585 : vector<2x1xf32>
    %587 = math.exp %586 : vector<2x1xf32>
    %cst_201 = arith.constant 1.000000e+00 : f32
    %588 = vector.broadcast %cst_201 : f32 to vector<2x1xf32>
    %589 = arith.addf %588, %587 : vector<2x1xf32>
    %590 = arith.divf %588, %589 : vector<2x1xf32>
    %c0_202 = arith.constant 0 : index
    %c0_203 = arith.constant 0 : index
    %591 = vector.load %arg4[%c0_202, %c0_203] : memref<2x1xf32, #tpu.memory_space<vmem>>, vector<2x1xf32>
    tpu.vector_store %arg4[%c0_202, %c0_203], %590 {strides = array<i32>} : memref<2x1xf32, #tpu.memory_space<vmem>>, vector<2x1xf32>,
    return
  }
}

</mosaic_0001>

<llo_original>
// kernel: tpu_custom_call.1
$region0: #{tpu_custom_call.1}
  #allocation0 [shape = 'u32[]', space=smem, size = 0x4, offset = 0x4, fixed_abs, tag = 'smem constant byte address 0x4 - core index']
  #allocation1 [shape = 'u32[144,128]{1,0:T(1,128)}', space=vmem, size = 0x12000, scoped, tag = 'internal scratch']
  #allocation2 [shape = 'f32[320,128]{1,0:T(8,128)}', space=vmem, size = 0x28000, scoped, tag = 'scratch operand']
  %s0 = inlined_call_operand.vmem [shape: f32[320,2], index: 0, kind: input, shape index: {}]
  %s1 = inlined_call_operand.vmem [shape: f32[32,32], index: 1, kind: input, shape index: {}]
  %s2 = inlined_call_operand.vmem [shape: f32[56,128], index: 2, kind: input, shape index: {}]
  %s3 = inlined_call_operand.vmem [shape: f32[40,32,32], index: 3, kind: input, shape index: {}]
  %s4 = inlined_call_operand.vmem [shape: f32[2,1], index: 4, kind: output, shape index: {}]
  %s5 = sld [smem:[#allocation0]]
  $region26: #{tpu_custom_call.1} parent=0
    _
  %s7 = ssub.s32 1, %s5
  %s8 = scalar_select 0, %s7, %s5
  // Predicated region
  $region2: #{tpu_custom_call.1} parent=0 // pred_check
    _
  $region3: #{tpu_custom_call.1} parent=0 // pred_check_branch
    %10 = sbr.rel (0) target = $region5
  $region4: #{tpu_custom_call.1} parent=0 // pred_region
    _
  $region5: #{tpu_custom_call.1} parent=0 // pred_fallthru
    _
  // Predicated region
  $region6: #{tpu_custom_call.1} parent=0 // pred_check
    _
  $region7: #{tpu_custom_call.1} parent=0 // pred_check_branch
    %12 = sbr.rel (0) target = $region9
  $region8: #{tpu_custom_call.1} parent=0 // pred_region
    _
  $region9: #{tpu_custom_call.1} parent=0 // pred_fallthru
    _
  // Predicated region
  $region10: #{tpu_custom_call.1} parent=0 // pred_check
    _
  $region11: #{tpu_custom_call.1} parent=0 // pred_check_branch
    %14 = sbr.rel (0) target = $region13
  $region12: #{tpu_custom_call.1} parent=0 // pred_region
    _
  $region13: #{tpu_custom_call.1} parent=0 // pred_fallthru
    _
  // Predicated region
  $region14: #{tpu_custom_call.1} parent=0 // pred_check
    _
  $region15: #{tpu_custom_call.1} parent=0 // pred_check_branch
    %16 = sbr.rel (0) target = $region17
  $region16: #{tpu_custom_call.1} parent=0 // pred_region
    _
  $region17: #{tpu_custom_call.1} parent=0 // pred_fallthru
    _
  %v17 = vld [vmem:[%s2] sm:$0x3]
  %v18 = vld [vmem:[%s2 + $0x8] sm:$0xff]
  %v19 = vld [vmem:[%s2 + $0x10] sm:$0xff]
  %v20 = vld [vmem:[%s2 + $0x18] sm:$0xff]
  %v21 = vld [vmem:[%s2 + $0x20] sm:$0xff]
  %v22 = vld [vmem:[%s2 + $0x28] sm:$0x1]
  %v23 = vld [vmem:[%s2 + $0x30] sm:$0x1]
  %v24 = vld [vmem:[%s1] sm:$0xff]
  %v25 = vld [vmem:[%s1 + $0x8] sm:$0xff]
  %v26 = vld [vmem:[%s1 + $0x10] sm:$0xff]
  %v27 = vld [vmem:[%s1 + $0x18] sm:$0xff]
  %v28 = vld [vmem:[%s0] sm:$0xff]
  %v29 = vld [vmem:[%s0 + $0x8] sm:$0xff]
  %v30 = vld [vmem:[%s0 + $0x10] sm:$0xff]
  %v31 = vld [vmem:[%s0 + $0x18] sm:$0xff]
  %v32 = vld [vmem:[%s0 + $0x20] sm:$0xff]
  %v33 = vld [vmem:[%s0 + $0x28] sm:$0xff]
  %v34 = vld [vmem:[%s0 + $0x30] sm:$0xff]
  %v35 = vld [vmem:[%s0 + $0x38] sm:$0xff]
  %v36 = vld [vmem:[%s0 + $0x40] sm:$0xff]
  %v37 = vld [vmem:[%s0 + $0x48] sm:$0xff]
  %v38 = vld [vmem:[%s0 + $0x50] sm:$0xff]
  %v39 = vld [vmem:[%s0 + $0x58] sm:$0xff]
  %v40 = vld [vmem:[%s0 + $0x60] sm:$0xff]
  %v41 = vld [vmem:[%s0 + $0x68] sm:$0xff]
  %v42 = vld [vmem:[%s0 + $0x70] sm:$0xff]
  %v43 = vld [vmem:[%s0 + $0x78] sm:$0xff]
  %v44 = vld [vmem:[%s0 + $0x80] sm:$0xff]
  %v45 = vld [vmem:[%s0 + $0x88] sm:$0xff]
  %v46 = vld [vmem:[%s0 + $0x90] sm:$0xff]
  %v47 = vld [vmem:[%s0 + $0x98] sm:$0xff]
  %v48 = vld [vmem:[%s0 + $0xa0] sm:$0xff]
  %v49 = vld [vmem:[%s0 + $0xa8] sm:$0xff]
  %v50 = vld [vmem:[%s0 + $0xb0] sm:$0xff]
  %v51 = vld [vmem:[%s0 + $0xb8] sm:$0xff]
  %v52 = vld [vmem:[%s0 + $0xc0] sm:$0xff]
  %v53 = vld [vmem:[%s0 + $0xc8] sm:$0xff]
  %v54 = vld [vmem:[%s0 + $0xd0] sm:$0xff]
  %v55 = vld [vmem:[%s0 + $0xd8] sm:$0xff]
  %v56 = vld [vmem:[%s0 + $0xe0] sm:$0xff]
  %v57 = vld [vmem:[%s0 + $0xe8] sm:$0xff]
  %v58 = vld [vmem:[%s0 + $0xf0] sm:$0xff]
  %v59 = vld [vmem:[%s0 + $0xf8] sm:$0xff]
  %v60 = vld [vmem:[%s0 + $0x100] sm:$0xff]
  %v61 = vld [vmem:[%s0 + $0x108] sm:$0xff]
  %v62 = vld [vmem:[%s0 + $0x110] sm:$0xff]
  %v63 = vld [vmem:[%s0 + $0x118] sm:$0xff]
  %v64 = vld [vmem:[%s0 + $0x120] sm:$0xff]
  %v65 = vld [vmem:[%s0 + $0x128] sm:$0xff]
  %v66 = vld [vmem:[%s0 + $0x130] sm:$0xff]
  %v67 = vld [vmem:[%s0 + $0x138] sm:$0xff]
  %v68 = vlaneseq
  %v69 = vshrl.u32 %v68, 7
  %v70 = vsub.s32 0, %v69
  %v71 = vrot.slane %v22, %v70
  %vm72 = vcmask 15360
  %v74 = vsel %vm72, %v28, 0
  %v77 = vsel %vm72, %v29, 0
  %v80 = vsel %vm72, %v30, 0
  %v83 = vsel %vm72, %v31, 0
  %v86 = vsel %vm72, %v32, 0
  %v89 = vsel %vm72, %v33, 0
  %v92 = vsel %vm72, %v34, 0
  %v95 = vsel %vm72, %v35, 0
  %v98 = vsel %vm72, %v36, 0
  %v101 = vsel %vm72, %v37, 0
  %v104 = vsel %vm72, %v38, 0
  %v107 = vsel %vm72, %v39, 0
  %v110 = vsel %vm72, %v40, 0
  %v113 = vsel %vm72, %v41, 0
  %v116 = vsel %vm72, %v42, 0
  %v119 = vsel %vm72, %v43, 0
  %v122 = vsel %vm72, %v44, 0
  %v125 = vsel %vm72, %v45, 0
  %v128 = vsel %vm72, %v46, 0
  %v131 = vsel %vm72, %v47, 0
  %v134 = vsel %vm72, %v48, 0
  %v137 = vsel %vm72, %v49, 0
  %v140 = vsel %vm72, %v50, 0
  %v143 = vsel %vm72, %v51, 0
  %v146 = vsel %vm72, %v52, 0
  %v149 = vsel %vm72, %v53, 0
  %v152 = vsel %vm72, %v54, 0
  %v155 = vsel %vm72, %v55, 0
  %v158 = vsel %vm72, %v56, 0
  %v161 = vsel %vm72, %v57, 0
  %v164 = vsel %vm72, %v58, 0
  %v167 = vsel %vm72, %v59, 0
  %v170 = vsel %vm72, %v60, 0
  %v173 = vsel %vm72, %v61, 0
  %v176 = vsel %vm72, %v62, 0
  %v179 = vsel %vm72, %v63, 0
  %v182 = vsel %vm72, %v64, 0
  %v185 = vsel %vm72, %v65, 0
  %v188 = vsel %vm72, %v66, 0
  %v191 = vsel %vm72, %v67, 0
  %vm193 = vcmask 1041408
  %v195 = vsel %vm193, %v17, 0
  %197 = vmatprep.subr.mxu0 0.0
  %198 = vmatpush1.msra.mxu0 %v195
  %199 = vmatprep.subr.mxu0 0.0
  %200 = vmatpush1.msra.mxu0 0.0
  %201 = vmatprep.subr.mxu0 0.0
  %202 = vmatpush1.msra.mxu0 0.0
  %203 = vmatprep.subr.mxu0 0.0
  %204 = vmatpush1.msra.mxu0 0.0
  %205 = vmatprep.subr.mxu0 0.0
  %206 = vmatpush1.msra.mxu0 0.0
  %207 = vmatprep.subr.mxu0 0.0
  %208 = vmatpush1.msra.mxu0 0.0
  %209 = vmatprep.subr.mxu0 0.0
  %210 = vmatpush1.msra.mxu0 0.0
  %211 = vmatprep.subr.mxu0 0.0
  %212 = vmatpush1.msra.mxu0 0.0
  %213 = vmatprep.subr.mxu0 0.0
  %214 = vmatpush1.msra.mxu0 0.0
  %215 = vmatprep.subr.mxu0 0.0
  %216 = vmatpush1.msra.mxu0 0.0
  %217 = vmatprep.subr.mxu0 0.0
  %218 = vmatpush1.msra.mxu0 0.0
  %219 = vmatprep.subr.mxu0 0.0
  %220 = vmatpush1.msra.mxu0 0.0
  %221 = vmatprep.subr.mxu0 0.0
  %222 = vmatpush1.msra.mxu0 0.0
  %223 = vmatprep.subr.mxu0 0.0
  %224 = vmatpush1.msra.mxu0 0.0
  %225 = vmatprep.subr.mxu0 0.0
  %226 = vmatpush1.msra.mxu0 0.0
  %227 = vmatprep.subr.mxu0 0.0
  %228 = vmatpush1.msra.mxu0 0.0
  %229 = vmatprep.subr.mxu0 0.0
  %230 = vmatpush1.msra.mxu0 0.0
  %231 = vmatprep.subr.mxu0 0.0
  %232 = vmatpush1.msra.mxu0 0.0
  %233 = vmatprep.subr.mxu0 0.0
  %234 = vmatpush1.msra.mxu0 0.0
  %235 = vmatprep.subr.mxu0 0.0
  %236 = vmatpush1.msra.mxu0 0.0
  %237 = vmatprep.subr.mxu0 0.0
  %238 = vmatpush1.msra.mxu0 0.0
  %239 = vmatprep.subr.mxu0 0.0
  %240 = vmatpush1.msra.mxu0 0.0
  %241 = vmatprep.subr.mxu0 0.0
  %242 = vmatpush1.msra.mxu0 0.0
  %243 = vmatprep.subr.mxu0 0.0
  %244 = vmatpush1.msra.mxu0 0.0
  %245 = vmatprep.subr.mxu0 0.0
  %246 = vmatpush1.msra.mxu0 0.0
  %247 = vmatprep.subr.mxu0 0.0
  %248 = vmatpush1.msra.mxu0 0.0
  %249 = vmatprep.subr.mxu0 0.0
  %250 = vmatpush1.msra.mxu0 0.0
  %251 = vmatprep.subr.mxu0 0.0
  %252 = vmatpush1.msra.mxu0 0.0
  %253 = vmatprep.subr.mxu0 0.0
  %254 = vmatpush1.msra.mxu0 0.0
  %255 = vmatprep.subr.mxu0 0.0
  %256 = vmatpush1.msra.mxu0 0.0
  %257 = vmatprep.subr.mxu0 0.0
  %258 = vmatpush1.msra.mxu0 0.0
  %259 = vmatprep.subr.mxu0 0.0
  %260 = vmatpush1.msra.mxu0 0.0
  %261 = vmatprep.mubr.f32.mxu0 0.0
  %262 = vmatmul.mubr.f32.gmra.mrb[0].mxu0 %v74
  %v263 = vpop.f32.mrb[0].mxu0
  %v264 = vadd.f32 %v71, %v263
  %v265 = vpop.f32.mrb[0].mxu0
  %266 = vmatprep.mubr.f32.mxu0 0.0
  %267 = vmatmul.mubr.f32.gmra.mrb[0].mxu0 %v77
  %v268 = vpop.f32.mrb[0].mxu0
  %v269 = vadd.f32 %v71, %v268
  %v270 = vpop.f32.mrb[0].mxu0
  %271 = vmatprep.mubr.f32.mxu0 0.0
  %272 = vmatmul.mubr.f32.gmra.mrb[0].mxu0 %v80
  %v273 = vpop.f32.mrb[0].mxu0
  %v274 = vadd.f32 %v71, %v273
  %v275 = vpop.f32.mrb[0].mxu0
  %276 = vmatprep.mubr.f32.mxu0 0.0
  %277 = vmatmul.mubr.f32.gmra.mrb[0].mxu0 %v83
  %v278 = vpop.f32.mrb[0].mxu0
  %v279 = vadd.f32 %v71, %v278
  %v280 = vpop.f32.mrb[0].mxu0
  %281 = vmatprep.mubr.f32.mxu0 0.0
  %282 = vmatmul.mubr.f32.gmra.mrb[0].mxu0 %v86
  %v283 = vpop.f32.mrb[0].mxu0
  %v284 = vadd.f32 %v71, %v283
  %v285 = vpop.f32.mrb[0].mxu0
  %286 = vmatprep.mubr.f32.mxu0 0.0
  %287 = vmatmul.mubr.f32.gmra.mrb[0].mxu0 %v89
  %v288 = vpop.f32.mrb[0].mxu0
  %v289 = vadd.f32 %v71, %v288
  %v290 = vpop.f32.mrb[0].mxu0
  %291 = vmatprep.mubr.f32.mxu0 0.0
  %292 = vmatmul.mubr.f32.gmra.mrb[0].mxu0 %v92
  %v293 = vpop.f32.mrb[0].mxu0
  %v294 = vadd.f32 %v71, %v293
  %v295 = vpop.f32.mrb[0].mxu0
  %296 = vmatprep.mubr.f32.mxu0 0.0
  %297 = vmatmul.mubr.f32.gmra.mrb[0].mxu0 %v95
  %v298 = vpop.f32.mrb[0].mxu0
  %v299 = vadd.f32 %v71, %v298
  %v300 = vpop.f32.mrb[0].mxu0
  %301 = vmatprep.mubr.f32.mxu0 0.0
  %302 = vmatmul.mubr.f32.gmra.mrb[0].mxu0 %v98
  %v303 = vpop.f32.mrb[0].mxu0
  %v304 = vadd.f32 %v71, %v303
  %v305 = vpop.f32.mrb[0].mxu0
  %306 = vmatprep.mubr.f32.mxu0 0.0
  %307 = vmatmul.mubr.f32.gmra.mrb[0].mxu0 %v101
  %v308 = vpop.f32.mrb[0].mxu0
  %v309 = vadd.f32 %v71, %v308
  %v310 = vpop.f32.mrb[0].mxu0
  %311 = vmatprep.mubr.f32.mxu0 0.0
  %312 = vmatmul.mubr.f32.gmra.mrb[0].mxu0 %v104
  %v313 = vpop.f32.mrb[0].mxu0
  %v314 = vadd.f32 %v71, %v313
  %v315 = vpop.f32.mrb[0].mxu0
  %316 = vmatprep.mubr.f32.mxu0 0.0
  %317 = vmatmul.mubr.f32.gmra.mrb[0].mxu0 %v107
  %v318 = vpop.f32.mrb[0].mxu0
  %v319 = vadd.f32 %v71, %v318
  %v320 = vpop.f32.mrb[0].mxu0
  %321 = vmatprep.mubr.f32.mxu0 0.0
  %322 = vmatmul.mubr.f32.gmra.mrb[0].mxu0 %v110
  %v323 = vpop.f32.mrb[0].mxu0
  %v324 = vadd.f32 %v71, %v323
  %v325 = vpop.f32.mrb[0].mxu0
  %326 = vmatprep.mubr.f32.mxu0 0.0
  %327 = vmatmul.mubr.f32.gmra.mrb[0].mxu0 %v113
  %v328 = vpop.f32.mrb[0].mxu0
  %v329 = vadd.f32 %v71, %v328
  %v330 = vpop.f32.mrb[0].mxu0
  %331 = vmatprep.mubr.f32.mxu0 0.0
  %332 = vmatmul.mubr.f32.gmra.mrb[0].mxu0 %v116
  %v333 = vpop.f32.mrb[0].mxu0
  %v334 = vadd.f32 %v71, %v333
  %v335 = vpop.f32.mrb[0].mxu0
  %336 = vmatprep.mubr.f32.mxu0 0.0
  %337 = vmatmul.mubr.f32.gmra.mrb[0].mxu0 %v119
  %v338 = vpop.f32.mrb[0].mxu0
  %v339 = vadd.f32 %v71, %v338
  %v340 = vpop.f32.mrb[0].mxu0
  %341 = vmatprep.mubr.f32.mxu0 0.0
  %342 = vmatmul.mubr.f32.gmra.mrb[0].mxu0 %v122
  %v343 = vpop.f32.mrb[0].mxu0
  %v344 = vadd.f32 %v71, %v343
  %v345 = vpop.f32.mrb[0].mxu0
  %346 = vmatprep.mubr.f32.mxu0 0.0
  %347 = vmatmul.mubr.f32.gmra.mrb[0].mxu0 %v125
  %v348 = vpop.f32.mrb[0].mxu0
  %v349 = vadd.f32 %v71, %v348
  %v350 = vpop.f32.mrb[0].mxu0
  %351 = vmatprep.mubr.f32.mxu0 0.0
  %352 = vmatmul.mubr.f32.gmra.mrb[0].mxu0 %v128
  %v353 = vpop.f32.mrb[0].mxu0
  %v354 = vadd.f32 %v71, %v353
  %v355 = vpop.f32.mrb[0].mxu0
  %356 = vmatprep.mubr.f32.mxu0 0.0
  %357 = vmatmul.mubr.f32.gmra.mrb[0].mxu0 %v131
  %v358 = vpop.f32.mrb[0].mxu0
  %v359 = vadd.f32 %v71, %v358
  %v360 = vpop.f32.mrb[0].mxu0
  %361 = vmatprep.mubr.f32.mxu0 0.0
  %362 = vmatmul.mubr.f32.gmra.mrb[0].mxu0 %v134
  %v363 = vpop.f32.mrb[0].mxu0
  %v364 = vadd.f32 %v71, %v363
  %v365 = vpop.f32.mrb[0].mxu0
  %366 = vmatprep.mubr.f32.mxu0 0.0
  %367 = vmatmul.mubr.f32.gmra.mrb[0].mxu0 %v137
  %v368 = vpop.f32.mrb[0].mxu0
  %v369 = vadd.f32 %v71, %v368
  %v370 = vpop.f32.mrb[0].mxu0
  %371 = vmatprep.mubr.f32.mxu0 0.0
  %372 = vmatmul.mubr.f32.gmra.mrb[0].mxu0 %v140
  %v373 = vpop.f32.mrb[0].mxu0
  %v374 = vadd.f32 %v71, %v373
  %v375 = vpop.f32.mrb[0].mxu0
  %376 = vmatprep.mubr.f32.mxu0 0.0
  %377 = vmatmul.mubr.f32.gmra.mrb[0].mxu0 %v143
  %v378 = vpop.f32.mrb[0].mxu0
  %v379 = vadd.f32 %v71, %v378
  %v380 = vpop.f32.mrb[0].mxu0
  %381 = vmatprep.mubr.f32.mxu0 0.0
  %382 = vmatmul.mubr.f32.gmra.mrb[0].mxu0 %v146
  %v383 = vpop.f32.mrb[0].mxu0
  %v384 = vadd.f32 %v71, %v383
  %v385 = vpop.f32.mrb[0].mxu0
  %386 = vmatprep.mubr.f32.mxu0 0.0
  %387 = vmatmul.mubr.f32.gmra.mrb[0].mxu0 %v149
  %v388 = vpop.f32.mrb[0].mxu0
  %v389 = vadd.f32 %v71, %v388
  %v390 = vpop.f32.mrb[0].mxu0
  %391 = vmatprep.mubr.f32.mxu0 0.0
  %392 = vmatmul.mubr.f32.gmra.mrb[0].mxu0 %v152
  %v393 = vpop.f32.mrb[0].mxu0
  %v394 = vadd.f32 %v71, %v393
  %v395 = vpop.f32.mrb[0].mxu0
  %396 = vmatprep.mubr.f32.mxu0 0.0
  %397 = vmatmul.mubr.f32.gmra.mrb[0].mxu0 %v155
  %v398 = vpop.f32.mrb[0].mxu0
  %v399 = vadd.f32 %v71, %v398
  %v400 = vpop.f32.mrb[0].mxu0
  %401 = vmatprep.mubr.f32.mxu0 0.0
  %402 = vmatmul.mubr.f32.gmra.mrb[0].mxu0 %v158
  %v403 = vpop.f32.mrb[0].mxu0
  %v404 = vadd.f32 %v71, %v403
  %v405 = vpop.f32.mrb[0].mxu0
  %406 = vmatprep.mubr.f32.mxu0 0.0
  %407 = vmatmul.mubr.f32.gmra.mrb[0].mxu0 %v161
  %v408 = vpop.f32.mrb[0].mxu0
  %v409 = vadd.f32 %v71, %v408
  %v410 = vpop.f32.mrb[0].mxu0
  %411 = vmatprep.mubr.f32.mxu0 0.0
  %412 = vmatmul.mubr.f32.gmra.mrb[0].mxu0 %v164
  %v413 = vpop.f32.mrb[0].mxu0
  %v414 = vadd.f32 %v71, %v413
  %v415 = vpop.f32.mrb[0].mxu0
  %416 = vmatprep.mubr.f32.mxu0 0.0
  %417 = vmatmul.mubr.f32.gmra.mrb[0].mxu0 %v167
  %v418 = vpop.f32.mrb[0].mxu0
  %v419 = vadd.f32 %v71, %v418
  %v420 = vpop.f32.mrb[0].mxu0
  %421 = vmatprep.mubr.f32.mxu0 0.0
  %422 = vmatmul.mubr.f32.gmra.mrb[0].mxu0 %v170
  %v423 = vpop.f32.mrb[0].mxu0
  %v424 = vadd.f32 %v71, %v423
  %v425 = vpop.f32.mrb[0].mxu0
  %426 = vmatprep.mubr.f32.mxu0 0.0
  %427 = vmatmul.mubr.f32.gmra.mrb[0].mxu0 %v173
  %v428 = vpop.f32.mrb[0].mxu0
  %v429 = vadd.f32 %v71, %v428
  %v430 = vpop.f32.mrb[0].mxu0
  %431 = vmatprep.mubr.f32.mxu0 0.0
  %432 = vmatmul.mubr.f32.gmra.mrb[0].mxu0 %v176
  %v433 = vpop.f32.mrb[0].mxu0
  %v434 = vadd.f32 %v71, %v433
  %v435 = vpop.f32.mrb[0].mxu0
  %436 = vmatprep.mubr.f32.mxu0 0.0
  %437 = vmatmul.mubr.f32.gmra.mrb[0].mxu0 %v179
  %v438 = vpop.f32.mrb[0].mxu0
  %v439 = vadd.f32 %v71, %v438
  %v440 = vpop.f32.mrb[0].mxu0
  %441 = vmatprep.mubr.f32.mxu0 0.0
  %442 = vmatmul.mubr.f32.gmra.mrb[0].mxu0 %v182
  %v443 = vpop.f32.mrb[0].mxu0
  %v444 = vadd.f32 %v71, %v443
  %v445 = vpop.f32.mrb[0].mxu0
  %446 = vmatprep.mubr.f32.mxu0 0.0
  %447 = vmatmul.mubr.f32.gmra.mrb[0].mxu0 %v185
  %v448 = vpop.f32.mrb[0].mxu0
  %v449 = vadd.f32 %v71, %v448
  %v450 = vpop.f32.mrb[0].mxu0
  %451 = vmatprep.mubr.f32.mxu0 0.0
  %452 = vmatmul.mubr.f32.gmra.mrb[0].mxu0 %v188
  %v453 = vpop.f32.mrb[0].mxu0
  %v454 = vadd.f32 %v71, %v453
  %v455 = vpop.f32.mrb[0].mxu0
  %456 = vmatprep.mubr.f32.mxu0 0.0
  %457 = vmatmul.mubr.f32.gmra.mrb[0].mxu0 %v191
  %v458 = vpop.f32.mrb[0].mxu0
  %v459 = vadd.f32 %v71, %v458
  %v460 = vpop.f32.mrb[0].mxu0
  %461 = vdwg.mxu0
  %462 = vst [vmem:[#allocation2] sm:$0xff] %v264
  %463 = vst [vmem:[#allocation2 + $0x8] sm:$0xff] %v269
  %464 = vst [vmem:[#allocation2 + $0x10] sm:$0xff] %v274
  %465 = vst [vmem:[#allocation2 + $0x18] sm:$0xff] %v279
  %466 = vst [vmem:[#allocation2 + $0x20] sm:$0xff] %v284
  %467 = vst [vmem:[#allocation2 + $0x28] sm:$0xff] %v289
  %468 = vst [vmem:[#allocation2 + $0x30] sm:$0xff] %v294
  %469 = vst [vmem:[#allocation2 + $0x38] sm:$0xff] %v299
  %470 = vst [vmem:[#allocation2 + $0x40] sm:$0xff] %v304
  %471 = vst [vmem:[#allocation2 + $0x48] sm:$0xff] %v309
  %472 = vst [vmem:[#allocation2 + $0x50] sm:$0xff] %v314
  %473 = vst [vmem:[#allocation2 + $0x58] sm:$0xff] %v319
  %474 = vst [vmem:[#allocation2 + $0x60] sm:$0xff] %v324
  %475 = vst [vmem:[#allocation2 + $0x68] sm:$0xff] %v329
  %476 = vst [vmem:[#allocation2 + $0x70] sm:$0xff] %v334
  %477 = vst [vmem:[#allocation2 + $0x78] sm:$0xff] %v339
  %478 = vst [vmem:[#allocation2 + $0x80] sm:$0xff] %v344
  %479 = vst [vmem:[#allocation2 + $0x88] sm:$0xff] %v349
  %480 = vst [vmem:[#allocation2 + $0x90] sm:$0xff] %v354
  %481 = vst [vmem:[#allocation2 + $0x98] sm:$0xff] %v359
  %482 = vst [vmem:[#allocation2 + $0xa0] sm:$0xff] %v364
  %483 = vst [vmem:[#allocation2 + $0xa8] sm:$0xff] %v369
  %484 = vst [vmem:[#allocation2 + $0xb0] sm:$0xff] %v374
  %485 = vst [vmem:[#allocation2 + $0xb8] sm:$0xff] %v379
  %486 = vst [vmem:[#allocation2 + $0xc0] sm:$0xff] %v384
  %487 = vst [vmem:[#allocation2 + $0xc8] sm:$0xff] %v389
  %488 = vst [vmem:[#allocation2 + $0xd0] sm:$0xff] %v394
  %489 = vst [vmem:[#allocation2 + $0xd8] sm:$0xff] %v399
  %490 = vst [vmem:[#allocation2 + $0xe0] sm:$0xff] %v404
  %491 = vst [vmem:[#allocation2 + $0xe8] sm:$0xff] %v409
  %492 = vst [vmem:[#allocation2 + $0xf0] sm:$0xff] %v414
  %493 = vst [vmem:[#allocation2 + $0xf8] sm:$0xff] %v419
  %494 = vst [vmem:[#allocation2 + $0x100] sm:$0xff] %v424
  %495 = vst [vmem:[#allocation2 + $0x108] sm:$0xff] %v429
  %496 = vst [vmem:[#allocation2 + $0x110] sm:$0xff] %v434
  %497 = vst [vmem:[#allocation2 + $0x118] sm:$0xff] %v439
  %498 = vst [vmem:[#allocation2 + $0x120] sm:$0xff] %v444
  %499 = vst [vmem:[#allocation2 + $0x128] sm:$0xff] %v449
  %500 = vst [vmem:[#allocation2 + $0x130] sm:$0xff] %v454
  %501 = vst [vmem:[#allocation2 + $0x138] sm:$0xff] %v459
  %v502 = vld [vmem:[#allocation2] sm:$0xff]
  %v503 = vld [vmem:[#allocation2 + $0x8] sm:$0xff]
  %vm504 = vcmask 261120
  %v506 = vsel %vm504, %v24, 0
  %v509 = vsel %vm504, %v25, 0
  %511 = vmatprep.subr.mxu0 0.0
  %512 = vmatpush1.msra.mxu0 %v18
  %513 = vmatprep.subr.mxu0 0.0
  %514 = vmatpush1.msra.mxu0 %v19
  %515 = vmatprep.subr.mxu0 0.0
  %516 = vmatpush1.msra.mxu0 %v20
  %517 = vmatprep.subr.mxu0 0.0
  %518 = vmatpush1.msra.mxu0 %v21
  %519 = vmatprep.subr.mxu0 0.0
  %520 = vmatpush1.msra.mxu0 0.0
  %521 = vmatprep.subr.mxu0 0.0
  %522 = vmatpush1.msra.mxu0 0.0
  %523 = vmatprep.subr.mxu0 0.0
  %524 = vmatpush1.msra.mxu0 0.0
  %525 = vmatprep.subr.mxu0 0.0
  %526 = vmatpush1.msra.mxu0 0.0
  %527 = vmatprep.subr.mxu0 0.0
  %528 = vmatpush1.msra.mxu0 0.0
  %529 = vmatprep.subr.mxu0 0.0
  %530 = vmatpush1.msra.mxu0 0.0
  %531 = vmatprep.subr.mxu0 0.0
  %532 = vmatpush1.msra.mxu0 0.0
  %533 = vmatprep.subr.mxu0 0.0
  %534 = vmatpush1.msra.mxu0 0.0
  %535 = vmatprep.subr.mxu0 0.0
  %536 = vmatpush1.msra.mxu0 0.0
  %537 = vmatprep.subr.mxu0 0.0
  %538 = vmatpush1.msra.mxu0 0.0
  %539 = vmatprep.subr.mxu0 0.0
  %540 = vmatpush1.msra.mxu0 0.0
  %541 = vmatprep.subr.mxu0 0.0
  %542 = vmatpush1.msra.mxu0 0.0
  %543 = vmatprep.subr.mxu0 0.0
  %544 = vmatpush1.msra.mxu0 0.0
  %545 = vmatprep.subr.mxu0 0.0
  %546 = vmatpush1.msra.mxu0 0.0
  %547 = vmatprep.subr.mxu0 0.0
  %548 = vmatpush1.msra.mxu0 0.0
  %549 = vmatprep.subr.mxu0 0.0
  %550 = vmatpush1.msra.mxu0 0.0
  %551 = vmatprep.subr.mxu0 0.0
  %552 = vmatpush1.msra.mxu0 0.0
  %553 = vmatprep.subr.mxu0 0.0
  %554 = vmatpush1.msra.mxu0 0.0
  %555 = vmatprep.subr.mxu0 0.0
  %556 = vmatpush1.msra.mxu0 0.0
  %557 = vmatprep.subr.mxu0 0.0
  %558 = vmatpush1.msra.mxu0 0.0
  %559 = vmatprep.subr.mxu0 0.0
  %560 = vmatpush1.msra.mxu0 0.0
  %561 = vmatprep.subr.mxu0 0.0
  %562 = vmatpush1.msra.mxu0 0.0
  %563 = vmatprep.subr.mxu0 0.0
  %564 = vmatpush1.msra.mxu0 0.0
  %565 = vmatprep.subr.mxu0 0.0
  %566 = vmatpush1.msra.mxu0 0.0
  %567 = vmatprep.subr.mxu0 0.0
  %568 = vmatpush1.msra.mxu0 0.0
  %569 = vmatprep.subr.mxu0 0.0
  %570 = vmatpush1.msra.mxu0 0.0
  %571 = vmatprep.subr.mxu0 0.0
  %572 = vmatpush1.msra.mxu0 0.0
  %573 = vmatprep.subr.mxu0 0.0
  %574 = vmatpush1.msra.mxu0 0.0
  %575 = vmatprep.mubr.f32.mxu0 0.0
  %576 = vmatmul.mubr.f32.gmra.mrb[0].mxu0 %v506
  %v577 = vpop.f32.mrb[0].mxu0
  %v578 = vadd.f32 0.0, %v577
  %v579 = vpop.f32.mrb[0].mxu0
  %580 = vmatprep.mubr.f32.mxu0 0.0
  %581 = vmatmul.mubr.f32.gmra.mrb[0].mxu0 %v509
  %v582 = vpop.f32.mrb[0].mxu0
  %v583 = vadd.f32 0.0, %v582
  %v584 = vpop.f32.mrb[0].mxu0
  %585 = vdwg.mxu0
  %v586 = vadd.f32 %v502, %v578
  %v587 = vadd.f32 %v503, %v583
  %v588 = vxor.u32 %v586, 2147483648
  %v589 = vxor.u32 %v587, 2147483648
  %v590 = vmul.f32 %v588, 1.442695
  %v591 = vpow.pop %v590
  %v592 = vmul.f32 %v589, 1.442695
  %v593 = vpow.pop %v592
  %v594 = vadd.f32 %v591, 1.0
  %v595 = vadd.f32 %v593, 1.0
  %v596 = vrcp.pop %v594
  %v597 = vmul.f32 1.0, %v596
  %v598 = vrcp.pop %v595
  %v599 = vmul.f32 1.0, %v598
  %v600 = vtanh.pop %v586
  %v601 = vtanh.pop %v587
  %604 = vrot.lane.b32.xlu0 %v26, 32
  %v605 = vpop.permute.xlu0 %604
  %606 = vrot.lane.b32.xlu0 %v27, 32
  %v607 = vpop.permute.xlu0 %606
  %v610 = vmul.f32 %v597, %v605
  %v611 = vmul.f32 %v599, %v607
  %614 = vrot.lane.b32.xlu0 %v600, 64
  %v615 = vpop.permute.xlu0 %614
  %616 = vrot.lane.b32.xlu0 %v601, 64
  %v617 = vpop.permute.xlu0 %616
  %v620 = vmul.f32 %v597, %v615
  %v621 = vmul.f32 %v599, %v617
  %624 = vrot.lane.b32.xlu0 %v620, 32
  %v625 = vpop.permute.xlu0 %624
  %626 = vrot.lane.b32.xlu0 %v621, 32
  %v627 = vpop.permute.xlu0 %626
  %v630 = vadd.f32 %v610, %v625
  %v631 = vadd.f32 %v611, %v627
  %v632 = vtanh.pop %v630
  %v633 = vtanh.pop %v631
  %636 = vrot.lane.b32.xlu0 %v632, 64
  %v637 = vpop.permute.xlu0 %636
  %638 = vrot.lane.b32.xlu0 %v633, 64
  %v639 = vpop.permute.xlu0 %638
  %v642 = vmul.f32 %v597, %v637
  %v643 = vmul.f32 %v599, %v639
  %v644 = vld [vmem:[%s3] sm:$0xff]
  %v645 = vld [vmem:[%s3 + $0x8] sm:$0xff]
  %v646 = vld [vmem:[%s3 + $0x10] sm:$0xff]
  %v647 = vld [vmem:[%s3 + $0x18] sm:$0xff]
  %s648 = scalar_lea.vmem %s3, 640
  %v649 = vld [vmem:[%s648] sm:$0xff]
  %v650 = vld [vmem:[%s648 + $0x8] sm:$0xff]
  %v651 = vld [vmem:[%s648 + $0x10] sm:$0xff]
  %v652 = vld [vmem:[%s648 + $0x18] sm:$0xff]
  %654 = vrot.lane.b32.xlu0 %v643, 32
  %v655 = vpop.permute.xlu0 %654
  %v656 = vsel %vm504, %v655, 0
  %658 = vmatprep.subr.mxu0 0.0
  %659 = vmatpush1.msra.mxu0 %v649
  %660 = vmatprep.subr.mxu0 0.0
  %661 = vmatpush1.msra.mxu0 %v650
  %662 = vmatprep.subr.mxu0 0.0
  %663 = vmatpush1.msra.mxu0 %v651
  %664 = vmatprep.subr.mxu0 0.0
  %665 = vmatpush1.msra.mxu0 %v652
  %666 = vmatprep.subr.mxu0 0.0
  %667 = vmatpush1.msra.mxu0 0.0
  %668 = vmatprep.subr.mxu0 0.0
  %669 = vmatpush1.msra.mxu0 0.0
  %670 = vmatprep.subr.mxu0 0.0
  %671 = vmatpush1.msra.mxu0 0.0
  %672 = vmatprep.subr.mxu0 0.0
  %673 = vmatpush1.msra.mxu0 0.0
  %674 = vmatprep.subr.mxu0 0.0
  %675 = vmatpush1.msra.mxu0 0.0
  %676 = vmatprep.subr.mxu0 0.0
  %677 = vmatpush1.msra.mxu0 0.0
  %678 = vmatprep.subr.mxu0 0.0
  %679 = vmatpush1.msra.mxu0 0.0
  %680 = vmatprep.subr.mxu0 0.0
  %681 = vmatpush1.msra.mxu0 0.0
  %682 = vmatprep.subr.mxu0 0.0
  %683 = vmatpush1.msra.mxu0 0.0
  %684 = vmatprep.subr.mxu0 0.0
  %685 = vmatpush1.msra.mxu0 0.0
  %686 = vmatprep.subr.mxu0 0.0
  %687 = vmatpush1.msra.mxu0 0.0
  %688 = vmatprep.subr.mxu0 0.0
  %689 = vmatpush1.msra.mxu0 0.0
  %690 = vmatprep.subr.mxu0 0.0
  %691 = vmatpush1.msra.mxu0 0.0
  %692 = vmatprep.subr.mxu0 0.0
  %693 = vmatpush1.msra.mxu0 0.0
  %694 = vmatprep.subr.mxu0 0.0
  %695 = vmatpush1.msra.mxu0 0.0
  %696 = vmatprep.subr.mxu0 0.0
  %697 = vmatpush1.msra.mxu0 0.0
  %698 = vmatprep.subr.mxu0 0.0
  %699 = vmatpush1.msra.mxu0 0.0
  %700 = vmatprep.subr.mxu0 0.0
  %701 = vmatpush1.msra.mxu0 0.0
  %702 = vmatprep.subr.mxu0 0.0
  %703 = vmatpush1.msra.mxu0 0.0
  %704 = vmatprep.subr.mxu0 0.0
  %705 = vmatpush1.msra.mxu0 0.0
  %706 = vmatprep.subr.mxu0 0.0
  %707 = vmatpush1.msra.mxu0 0.0
  %708 = vmatprep.subr.mxu0 0.0
  %709 = vmatpush1.msra.mxu0 0.0
  %710 = vmatprep.subr.mxu0 0.0
  %711 = vmatpush1.msra.mxu0 0.0
  %712 = vmatprep.subr.mxu0 0.0
  %713 = vmatpush1.msra.mxu0 0.0
  %714 = vmatprep.subr.mxu0 0.0
  %715 = vmatpush1.msra.mxu0 0.0
  %716 = vmatprep.subr.mxu0 0.0
  %717 = vmatpush1.msra.mxu0 0.0
  %718 = vmatprep.subr.mxu0 0.0
  %719 = vmatpush1.msra.mxu0 0.0
  %720 = vmatprep.subr.mxu0 0.0
  %721 = vmatpush1.msra.mxu0 0.0
  %722 = vmatprep.mubr.f32.mxu0 0.0
  %723 = vmatmul.mubr.f32.gmra.mrb[0].mxu0 %v656
  %v724 = vpop.f32.mrb[0].mxu0
  %v725 = vadd.f32 0.0, %v724
  %v726 = vpop.f32.mrb[0].mxu0
  %727 = vdwg.mxu0
  %729 = vrot.lane.b32.xlu0 %v642, 32
  %v730 = vpop.permute.xlu0 %729
  %v731 = vsel %vm504, %v730, 0
  %733 = vmatprep.subr.mxu0 0.0
  %734 = vmatpush1.msra.mxu0 %v644
  %735 = vmatprep.subr.mxu0 0.0
  %736 = vmatpush1.msra.mxu0 %v645
  %737 = vmatprep.subr.mxu0 0.0
  %738 = vmatpush1.msra.mxu0 %v646
  %739 = vmatprep.subr.mxu0 0.0
  %740 = vmatpush1.msra.mxu0 %v647
  %741 = vmatprep.subr.mxu0 0.0
  %742 = vmatpush1.msra.mxu0 0.0
  %743 = vmatprep.subr.mxu0 0.0
  %744 = vmatpush1.msra.mxu0 0.0
  %745 = vmatprep.subr.mxu0 0.0
  %746 = vmatpush1.msra.mxu0 0.0
  %747 = vmatprep.subr.mxu0 0.0
  %748 = vmatpush1.msra.mxu0 0.0
  %749 = vmatprep.subr.mxu0 0.0
  %750 = vmatpush1.msra.mxu0 0.0
  %751 = vmatprep.subr.mxu0 0.0
  %752 = vmatpush1.msra.mxu0 0.0
  %753 = vmatprep.subr.mxu0 0.0
  %754 = vmatpush1.msra.mxu0 0.0
  %755 = vmatprep.subr.mxu0 0.0
  %756 = vmatpush1.msra.mxu0 0.0
  %757 = vmatprep.subr.mxu0 0.0
  %758 = vmatpush1.msra.mxu0 0.0
  %759 = vmatprep.subr.mxu0 0.0
  %760 = vmatpush1.msra.mxu0 0.0
  %761 = vmatprep.subr.mxu0 0.0
  %762 = vmatpush1.msra.mxu0 0.0
  %763 = vmatprep.subr.mxu0 0.0
  %764 = vmatpush1.msra.mxu0 0.0
  %765 = vmatprep.subr.mxu0 0.0
  %766 = vmatpush1.msra.mxu0 0.0
  %767 = vmatprep.subr.mxu0 0.0
  %768 = vmatpush1.msra.mxu0 0.0
  %769 = vmatprep.subr.mxu0 0.0
  %770 = vmatpush1.msra.mxu0 0.0
  %771 = vmatprep.subr.mxu0 0.0
  %772 = vmatpush1.msra.mxu0 0.0
  %773 = vmatprep.subr.mxu0 0.0
  %774 = vmatpush1.msra.mxu0 0.0
  %775 = vmatprep.subr.mxu0 0.0
  %776 = vmatpush1.msra.mxu0 0.0
  %777 = vmatprep.subr.mxu0 0.0
  %778 = vmatpush1.msra.mxu0 0.0
  %779 = vmatprep.subr.mxu0 0.0
  %780 = vmatpush1.msra.mxu0 0.0
  %781 = vmatprep.subr.mxu0 0.0
  %782 = vmatpush1.msra.mxu0 0.0
  %783 = vmatprep.subr.mxu0 0.0
  %784 = vmatpush1.msra.mxu0 0.0
  %785 = vmatprep.subr.mxu0 0.0
  %786 = vmatpush1.msra.mxu0 0.0
  %787 = vmatprep.subr.mxu0 0.0
  %788 = vmatpush1.msra.mxu0 0.0
  %789 = vmatprep.subr.mxu0 0.0
  %790 = vmatpush1.msra.mxu0 0.0
  %791 = vmatprep.subr.mxu0 0.0
  %792 = vmatpush1.msra.mxu0 0.0
  %793 = vmatprep.subr.mxu0 0.0
  %794 = vmatpush1.msra.mxu0 0.0
  %795 = vmatprep.subr.mxu0 0.0
  %796 = vmatpush1.msra.mxu0 0.0
  %797 = vmatprep.mubr.f32.mxu0 0.0
  %798 = vmatmul.mubr.f32.gmra.mrb[0].mxu0 %v731
  %v799 = vpop.f32.mrb[0].mxu0
  %v800 = vadd.f32 %v725, %v799
  %v801 = vpop.f32.mrb[0].mxu0
  %802 = vdwg.mxu0
  %v803 = vld [vmem:[#allocation2 + $0x10] sm:$0xff]
  %v804 = vld [vmem:[#allocation2 + $0x18] sm:$0xff]
  %805 = vmatprep.subr.mxu0 0.0
  %806 = vmatpush1.msra.mxu0 %v18
  %807 = vmatprep.subr.mxu0 0.0
  %808 = vmatpush1.msra.mxu0 %v19
  %809 = vmatprep.subr.mxu0 0.0
  %810 = vmatpush1.msra.mxu0 %v20
  %811 = vmatprep.subr.mxu0 0.0
  %812 = vmatpush1.msra.mxu0 %v21
  %813 = vmatprep.subr.mxu0 0.0
  %814 = vmatpush1.msra.mxu0 0.0
  %815 = vmatprep.subr.mxu0 0.0
  %816 = vmatpush1.msra.mxu0 0.0
  %817 = vmatprep.subr.mxu0 0.0
  %818 = vmatpush1.msra.mxu0 0.0
  %819 = vmatprep.subr.mxu0 0.0
  %820 = vmatpush1.msra.mxu0 0.0
  %821 = vmatprep.subr.mxu0 0.0
  %822 = vmatpush1.msra.mxu0 0.0
  %823 = vmatprep.subr.mxu0 0.0
  %824 = vmatpush1.msra.mxu0 0.0
  %825 = vmatprep.subr.mxu0 0.0
  %826 = vmatpush1.msra.mxu0 0.0
  %827 = vmatprep.subr.mxu0 0.0
  %828 = vmatpush1.msra.mxu0 0.0
  %829 = vmatprep.subr.mxu0 0.0
  %830 = vmatpush1.msra.mxu0 0.0
  %831 = vmatprep.subr.mxu0 0.0
  %832 = vmatpush1.msra.mxu0 0.0
  %833 = vmatprep.subr.mxu0 0.0
  %834 = vmatpush1.msra.mxu0 0.0
  %835 = vmatprep.subr.mxu0 0.0
  %836 = vmatpush1.msra.mxu0 0.0
  %837 = vmatprep.subr.mxu0 0.0
  %838 = vmatpush1.msra.mxu0 0.0
  %839 = vmatprep.subr.mxu0 0.0
  %840 = vmatpush1.msra.mxu0 0.0
  %841 = vmatprep.subr.mxu0 0.0
  %842 = vmatpush1.msra.mxu0 0.0
  %843 = vmatprep.subr.mxu0 0.0
  %844 = vmatpush1.msra.mxu0 0.0
  %845 = vmatprep.subr.mxu0 0.0
  %846 = vmatpush1.msra.mxu0 0.0
  %847 = vmatprep.subr.mxu0 0.0
  %848 = vmatpush1.msra.mxu0 0.0
  %849 = vmatprep.subr.mxu0 0.0
  %850 = vmatpush1.msra.mxu0 0.0
  %851 = vmatprep.subr.mxu0 0.0
  %852 = vmatpush1.msra.mxu0 0.0
  %853 = vmatprep.subr.mxu0 0.0
  %854 = vmatpush1.msra.mxu0 0.0
  %855 = vmatprep.subr.mxu0 0.0
  %856 = vmatpush1.msra.mxu0 0.0
  %857 = vmatprep.subr.mxu0 0.0
  %858 = vmatpush1.msra.mxu0 0.0
  %859 = vmatprep.subr.mxu0 0.0
  %860 = vmatpush1.msra.mxu0 0.0
  %861 = vmatprep.subr.mxu0 0.0
  %862 = vmatpush1.msra.mxu0 0.0
  %863 = vmatprep.subr.mxu0 0.0
  %864 = vmatpush1.msra.mxu0 0.0
  %865 = vmatprep.subr.mxu0 0.0
  %866 = vmatpush1.msra.mxu0 0.0
  %867 = vmatprep.subr.mxu0 0.0
  %868 = vmatpush1.msra.mxu0 0.0
  %869 = vmatprep.mubr.f32.mxu0 0.0
  %870 = vmatmul.mubr.f32.gmra.mrb[0].mxu0 %v731
  %v871 = vpop.f32.mrb[0].mxu0
  %v872 = vadd.f32 0.0, %v871
  %v873 = vpop.f32.mrb[0].mxu0
  %874 = vmatprep.mubr.f32.mxu0 0.0
  %875 = vmatmul.mubr.f32.gmra.mrb[0].mxu0 %v656
  %v876 = vpop.f32.mrb[0].mxu0
  %v877 = vadd.f32 0.0, %v876
  %v878 = vpop.f32.mrb[0].mxu0
  %879 = vdwg.mxu0
  %v880 = vadd.f32 %v803, %v872
  %v881 = vadd.f32 %v804, %v877
  %v882 = vxor.u32 %v880, 2147483648
  %v883 = vxor.u32 %v881, 2147483648
  %v884 = vmul.f32 %v882, 1.442695
  %v885 = vpow.pop %v884
  %v886 = vmul.f32 %v883, 1.442695
  %v887 = vpow.pop %v886
  %v888 = vadd.f32 %v885, 1.0
  %v889 = vadd.f32 %v887, 1.0
  %v890 = vrcp.pop %v888
  %v891 = vmul.f32 1.0, %v890
  %v892 = vrcp.pop %v889
  %v893 = vmul.f32 1.0, %v892
  %v894 = vtanh.pop %v880
  %v895 = vtanh.pop %v881
  %v896 = vmul.f32 %v891, %v630
  %v897 = vmul.f32 %v893, %v631
  %900 = vrot.lane.b32.xlu0 %v894, 64
  %v901 = vpop.permute.xlu0 %900
  %902 = vrot.lane.b32.xlu0 %v895, 64
  %v903 = vpop.permute.xlu0 %902
  %v906 = vmul.f32 %v891, %v901
  %v907 = vmul.f32 %v893, %v903
  %910 = vrot.lane.b32.xlu0 %v906, 32
  %v911 = vpop.permute.xlu0 %910
  %912 = vrot.lane.b32.xlu0 %v907, 32
  %v913 = vpop.permute.xlu0 %912
  %v916 = vadd.f32 %v896, %v911
  %v917 = vadd.f32 %v897, %v913
  %v918 = vtanh.pop %v916
  %v919 = vtanh.pop %v917
  %922 = vrot.lane.b32.xlu0 %v918, 64
  %v923 = vpop.permute.xlu0 %922
  %924 = vrot.lane.b32.xlu0 %v919, 64
  %v925 = vpop.permute.xlu0 %924
  %v928 = vmul.f32 %v891, %v923
  %v929 = vmul.f32 %v893, %v925
  %s930 = scalar_lea.vmem %s3, 32
  %v931 = vld [vmem:[%s930] sm:$0xff]
  %v932 = vld [vmem:[%s930 + $0x8] sm:$0xff]
  %v933 = vld [vmem:[%s930 + $0x10] sm:$0xff]
  %v934 = vld [vmem:[%s930 + $0x18] sm:$0xff]
  %936 = vrot.lane.b32.xlu0 %v928, 32
  %v937 = vpop.permute.xlu0 %936
  %v938 = vsel %vm504, %v937, 0
  %940 = vmatprep.subr.mxu0 0.0
  %941 = vmatpush1.msra.mxu0 %v931
  %942 = vmatprep.subr.mxu0 0.0
  %943 = vmatpush1.msra.mxu0 %v932
  %944 = vmatprep.subr.mxu0 0.0
  %945 = vmatpush1.msra.mxu0 %v933
  %946 = vmatprep.subr.mxu0 0.0
  %947 = vmatpush1.msra.mxu0 %v934
  %948 = vmatprep.subr.mxu0 0.0
  %949 = vmatpush1.msra.mxu0 0.0
  %950 = vmatprep.subr.mxu0 0.0
  %951 = vmatpush1.msra.mxu0 0.0
  %952 = vmatprep.subr.mxu0 0.0
  %953 = vmatpush1.msra.mxu0 0.0
  %954 = vmatprep.subr.mxu0 0.0
  %955 = vmatpush1.msra.mxu0 0.0
  %956 = vmatprep.subr.mxu0 0.0
  %957 = vmatpush1.msra.mxu0 0.0
  %958 = vmatprep.subr.mxu0 0.0
  %959 = vmatpush1.msra.mxu0 0.0
  %960 = vmatprep.subr.mxu0 0.0
  %961 = vmatpush1.msra.mxu0 0.0
  %962 = vmatprep.subr.mxu0 0.0
  %963 = vmatpush1.msra.mxu0 0.0
  %964 = vmatprep.subr.mxu0 0.0
  %965 = vmatpush1.msra.mxu0 0.0
  %966 = vmatprep.subr.mxu0 0.0
  %967 = vmatpush1.msra.mxu0 0.0
  %968 = vmatprep.subr.mxu0 0.0
  %969 = vmatpush1.msra.mxu0 0.0
  %970 = vmatprep.subr.mxu0 0.0
  %971 = vmatpush1.msra.mxu0 0.0
  %972 = vmatprep.subr.mxu0 0.0
  %973 = vmatpush1.msra.mxu0 0.0
  %974 = vmatprep.subr.mxu0 0.0
  %975 = vmatpush1.msra.mxu0 0.0
  %976 = vmatprep.subr.mxu0 0.0
  %977 = vmatpush1.msra.mxu0 0.0
  %978 = vmatprep.subr.mxu0 0.0
  %979 = vmatpush1.msra.mxu0 0.0
  %980 = vmatprep.subr.mxu0 0.0
  %981 = vmatpush1.msra.mxu0 0.0
  %982 = vmatprep.subr.mxu0 0.0
  %983 = vmatpush1.msra.mxu0 0.0
  %984 = vmatprep.subr.mxu0 0.0
  %985 = vmatpush1.msra.mxu0 0.0
  %986 = vmatprep.subr.mxu0 0.0
  %987 = vmatpush1.msra.mxu0 0.0
  %988 = vmatprep.subr.mxu0 0.0
  %989 = vmatpush1.msra.mxu0 0.0
  %990 = vmatprep.subr.mxu0 0.0
  %991 = vmatpush1.msra.mxu0 0.0
  %992 = vmatprep.subr.mxu0 0.0
  %993 = vmatpush1.msra.mxu0 0.0
  %994 = vmatprep.subr.mxu0 0.0
  %995 = vmatpush1.msra.mxu0 0.0
  %996 = vmatprep.subr.mxu0 0.0
  %997 = vmatpush1.msra.mxu0 0.0
  %998 = vmatprep.subr.mxu0 0.0
  %999 = vmatpush1.msra.mxu0 0.0
  %1000 = vmatprep.subr.mxu0 0.0
  %1001 = vmatpush1.msra.mxu0 0.0
  %1002 = vmatprep.subr.mxu0 0.0
  %1003 = vmatpush1.msra.mxu0 0.0
  %1004 = vmatprep.mubr.f32.mxu0 0.0
  %1005 = vmatmul.mubr.f32.gmra.mrb[0].mxu0 %v938
  %v1006 = vpop.f32.mrb[0].mxu0
  %v1007 = vadd.f32 0.0, %v1006
  %v1008 = vpop.f32.mrb[0].mxu0
  %1009 = vdwg.mxu0
  %v1010 = vadd.f32 %v800, %v1007
  %s1011 = scalar_lea.vmem %s3, 672
  %v1012 = vld [vmem:[%s1011] sm:$0xff]
  %v1013 = vld [vmem:[%s1011 + $0x8] sm:$0xff]
  %v1014 = vld [vmem:[%s1011 + $0x10] sm:$0xff]
  %v1015 = vld [vmem:[%s1011 + $0x18] sm:$0xff]
  %1017 = vrot.lane.b32.xlu0 %v929, 32
  %v1018 = vpop.permute.xlu0 %1017
  %v1019 = vsel %vm504, %v1018, 0
  %1021 = vmatprep.subr.mxu0 0.0
  %1022 = vmatpush1.msra.mxu0 %v1012
  %1023 = vmatprep.subr.mxu0 0.0
  %1024 = vmatpush1.msra.mxu0 %v1013
  %1025 = vmatprep.subr.mxu0 0.0
  %1026 = vmatpush1.msra.mxu0 %v1014
  %1027 = vmatprep.subr.mxu0 0.0
  %1028 = vmatpush1.msra.mxu0 %v1015
  %1029 = vmatprep.subr.mxu0 0.0
  %1030 = vmatpush1.msra.mxu0 0.0
  %1031 = vmatprep.subr.mxu0 0.0
  %1032 = vmatpush1.msra.mxu0 0.0
  %1033 = vmatprep.subr.mxu0 0.0
  %1034 = vmatpush1.msra.mxu0 0.0
  %1035 = vmatprep.subr.mxu0 0.0
  %1036 = vmatpush1.msra.mxu0 0.0
  %1037 = vmatprep.subr.mxu0 0.0
  %1038 = vmatpush1.msra.mxu0 0.0
  %1039 = vmatprep.subr.mxu0 0.0
  %1040 = vmatpush1.msra.mxu0 0.0
  %1041 = vmatprep.subr.mxu0 0.0
  %1042 = vmatpush1.msra.mxu0 0.0
  %1043 = vmatprep.subr.mxu0 0.0
  %1044 = vmatpush1.msra.mxu0 0.0
  %1045 = vmatprep.subr.mxu0 0.0
  %1046 = vmatpush1.msra.mxu0 0.0
  %1047 = vmatprep.subr.mxu0 0.0
  %1048 = vmatpush1.msra.mxu0 0.0
  %1049 = vmatprep.subr.mxu0 0.0
  %1050 = vmatpush1.msra.mxu0 0.0
  %1051 = vmatprep.subr.mxu0 0.0
  %1052 = vmatpush1.msra.mxu0 0.0
  %1053 = vmatprep.subr.mxu0 0.0
  %1054 = vmatpush1.msra.mxu0 0.0
  %1055 = vmatprep.subr.mxu0 0.0
  %1056 = vmatpush1.msra.mxu0 0.0
  %1057 = vmatprep.subr.mxu0 0.0
  %1058 = vmatpush1.msra.mxu0 0.0
  %1059 = vmatprep.subr.mxu0 0.0
  %1060 = vmatpush1.msra.mxu0 0.0
  %1061 = vmatprep.subr.mxu0 0.0
  %1062 = vmatpush1.msra.mxu0 0.0
  %1063 = vmatprep.subr.mxu0 0.0
  %1064 = vmatpush1.msra.mxu0 0.0
  %1065 = vmatprep.subr.mxu0 0.0
  %1066 = vmatpush1.msra.mxu0 0.0
  %1067 = vmatprep.subr.mxu0 0.0
  %1068 = vmatpush1.msra.mxu0 0.0
  %1069 = vmatprep.subr.mxu0 0.0
  %1070 = vmatpush1.msra.mxu0 0.0
  %1071 = vmatprep.subr.mxu0 0.0
  %1072 = vmatpush1.msra.mxu0 0.0
  %1073 = vmatprep.subr.mxu0 0.0
  %1074 = vmatpush1.msra.mxu0 0.0
  %1075 = vmatprep.subr.mxu0 0.0
  %1076 = vmatpush1.msra.mxu0 0.0
  %1077 = vmatprep.subr.mxu0 0.0
  %1078 = vmatpush1.msra.mxu0 0.0
  %1079 = vmatprep.subr.mxu0 0.0
  %1080 = vmatpush1.msra.mxu0 0.0
  %1081 = vmatprep.subr.mxu0 0.0
  %1082 = vmatpush1.msra.mxu0 0.0
  %1083 = vmatprep.subr.mxu0 0.0
  %1084 = vmatpush1.msra.mxu0 0.0
  %1085 = vmatprep.mubr.f32.mxu0 0.0
  %1086 = vmatmul.mubr.f32.gmra.mrb[0].mxu0 %v1019
  %v1087 = vpop.f32.mrb[0].mxu0
  %v1088 = vadd.f32 0.0, %v1087
  %v1089 = vpop.f32.mrb[0].mxu0
  %1090 = vdwg.mxu0
  %v1091 = vadd.f32 %v1010, %v1088
  %v1092 = vld [vmem:[#allocation2 + $0x20] sm:$0xff]
  %v1093 = vld [vmem:[#allocation2 + $0x28] sm:$0xff]
  %1094 = vmatprep.subr.mxu0 0.0
  %1095 = vmatpush1.msra.mxu0 %v18
  %1096 = vmatprep.subr.mxu0 0.0
  %1097 = vmatpush1.msra.mxu0 %v19
  %1098 = vmatprep.subr.mxu0 0.0
  %1099 = vmatpush1.msra.mxu0 %v20
  %1100 = vmatprep.subr.mxu0 0.0
  %1101 = vmatpush1.msra.mxu0 %v21
  %1102 = vmatprep.subr.mxu0 0.0
  %1103 = vmatpush1.msra.mxu0 0.0
  %1104 = vmatprep.subr.mxu0 0.0
  %1105 = vmatpush1.msra.mxu0 0.0
  %1106 = vmatprep.subr.mxu0 0.0
  %1107 = vmatpush1.msra.mxu0 0.0
  %1108 = vmatprep.subr.mxu0 0.0
  %1109 = vmatpush1.msra.mxu0 0.0
  %1110 = vmatprep.subr.mxu0 0.0
  %1111 = vmatpush1.msra.mxu0 0.0
  %1112 = vmatprep.subr.mxu0 0.0
  %1113 = vmatpush1.msra.mxu0 0.0
  %1114 = vmatprep.subr.mxu0 0.0
  %1115 = vmatpush1.msra.mxu0 0.0
  %1116 = vmatprep.subr.mxu0 0.0
  %1117 = vmatpush1.msra.mxu0 0.0
  %1118 = vmatprep.subr.mxu0 0.0
  %1119 = vmatpush1.msra.mxu0 0.0
  %1120 = vmatprep.subr.mxu0 0.0
  %1121 = vmatpush1.msra.mxu0 0.0
  %1122 = vmatprep.subr.mxu0 0.0
  %1123 = vmatpush1.msra.mxu0 0.0
  %1124 = vmatprep.subr.mxu0 0.0
  %1125 = vmatpush1.msra.mxu0 0.0
  %1126 = vmatprep.subr.mxu0 0.0
  %1127 = vmatpush1.msra.mxu0 0.0
  %1128 = vmatprep.subr.mxu0 0.0
  %1129 = vmatpush1.msra.mxu0 0.0
  %1130 = vmatprep.subr.mxu0 0.0
  %1131 = vmatpush1.msra.mxu0 0.0
  %1132 = vmatprep.subr.mxu0 0.0
  %1133 = vmatpush1.msra.mxu0 0.0
  %1134 = vmatprep.subr.mxu0 0.0
  %1135 = vmatpush1.msra.mxu0 0.0
  %1136 = vmatprep.subr.mxu0 0.0
  %1137 = vmatpush1.msra.mxu0 0.0
  %1138 = vmatprep.subr.mxu0 0.0
  %1139 = vmatpush1.msra.mxu0 0.0
  %1140 = vmatprep.subr.mxu0 0.0
  %1141 = vmatpush1.msra.mxu0 0.0
  %1142 = vmatprep.subr.mxu0 0.0
  %1143 = vmatpush1.msra.mxu0 0.0
  %1144 = vmatprep.subr.mxu0 0.0
  %1145 = vmatpush1.msra.mxu0 0.0
  %1146 = vmatprep.subr.mxu0 0.0
  %1147 = vmatpush1.msra.mxu0 0.0
  %1148 = vmatprep.subr.mxu0 0.0
  %1149 = vmatpush1.msra.mxu0 0.0
  %1150 = vmatprep.subr.mxu0 0.0
  %1151 = vmatpush1.msra.mxu0 0.0
  %1152 = vmatprep.subr.mxu0 0.0
  %1153 = vmatpush1.msra.mxu0 0.0
  %1154 = vmatprep.subr.mxu0 0.0
  %1155 = vmatpush1.msra.mxu0 0.0
  %1156 = vmatprep.subr.mxu0 0.0
  %1157 = vmatpush1.msra.mxu0 0.0
  %1158 = vmatprep.mubr.f32.mxu0 0.0
  %1159 = vmatmul.mubr.f32.gmra.mrb[0].mxu0 %v938
  %v1160 = vpop.f32.mrb[0].mxu0
  %v1161 = vadd.f32 0.0, %v1160
  %v1162 = vpop.f32.mrb[0].mxu0
  %1163 = vmatprep.mubr.f32.mxu0 0.0
  %1164 = vmatmul.mubr.f32.gmra.mrb[0].mxu0 %v1019
  %v1165 = vpop.f32.mrb[0].mxu0
  %v1166 = vadd.f32 0.0, %v1165
  %v1167 = vpop.f32.mrb[0].mxu0
  %1168 = vdwg.mxu0
  %v1169 = vadd.f32 %v1092, %v1161
  %v1170 = vadd.f32 %v1093, %v1166
  %v1171 = vxor.u32 %v1169, 2147483648
  %v1172 = vxor.u32 %v1170, 2147483648
  %v1173 = vmul.f32 %v1171, 1.442695
  %v1174 = vpow.pop %v1173
  %v1175 = vmul.f32 %v1172, 1.442695
  %v1176 = vpow.pop %v1175
  %v1177 = vadd.f32 %v1174, 1.0
  %v1178 = vadd.f32 %v1176, 1.0
  %v1179 = vrcp.pop %v1177
  %v1180 = vmul.f32 1.0, %v1179
  %v1181 = vrcp.pop %v1178
  %v1182 = vmul.f32 1.0, %v1181
  %v1183 = vtanh.pop %v1169
  %v1184 = vtanh.pop %v1170
  %v1185 = vmul.f32 %v1180, %v916
  %v1186 = vmul.f32 %v1182, %v917
  %1189 = vrot.lane.b32.xlu0 %v1183, 64
  %v1190 = vpop.permute.xlu0 %1189
  %1191 = vrot.lane.b32.xlu0 %v1184, 64
  %v1192 = vpop.permute.xlu0 %1191
  %v1195 = vmul.f32 %v1180, %v1190
  %v1196 = vmul.f32 %v1182, %v1192
  %1199 = vrot.lane.b32.xlu0 %v1195, 32
  %v1200 = vpop.permute.xlu0 %1199
  %1201 = vrot.lane.b32.xlu0 %v1196, 32
  %v1202 = vpop.permute.xlu0 %1201
  %v1205 = vadd.f32 %v1185, %v1200
  %v1206 = vadd.f32 %v1186, %v1202
  %v1207 = vtanh.pop %v1205
  %v1208 = vtanh.pop %v1206
  %1211 = vrot.lane.b32.xlu0 %v1207, 64
  %v1212 = vpop.permute.xlu0 %1211
  %1213 = vrot.lane.b32.xlu0 %v1208, 64
  %v1214 = vpop.permute.xlu0 %1213
  %v1217 = vmul.f32 %v1180, %v1212
  %v1218 = vmul.f32 %v1182, %v1214
  %s1219 = scalar_lea.vmem %s3, 64
  %v1220 = vld [vmem:[%s1219] sm:$0xff]
  %v1221 = vld [vmem:[%s1219 + $0x8] sm:$0xff]
  %v1222 = vld [vmem:[%s1219 + $0x10] sm:$0xff]
  %v1223 = vld [vmem:[%s1219 + $0x18] sm:$0xff]
  %1225 = vrot.lane.b32.xlu0 %v1217, 32
  %v1226 = vpop.permute.xlu0 %1225
  %v1227 = vsel %vm504, %v1226, 0
  %1229 = vmatprep.subr.mxu0 0.0
  %1230 = vmatpush1.msra.mxu0 %v1220
  %1231 = vmatprep.subr.mxu0 0.0
  %1232 = vmatpush1.msra.mxu0 %v1221
  %1233 = vmatprep.subr.mxu0 0.0
  %1234 = vmatpush1.msra.mxu0 %v1222
  %1235 = vmatprep.subr.mxu0 0.0
  %1236 = vmatpush1.msra.mxu0 %v1223
  %1237 = vmatprep.subr.mxu0 0.0
  %1238 = vmatpush1.msra.mxu0 0.0
  %1239 = vmatprep.subr.mxu0 0.0
  %1240 = vmatpush1.msra.mxu0 0.0
  %1241 = vmatprep.subr.mxu0 0.0
  %1242 = vmatpush1.msra.mxu0 0.0
  %1243 = vmatprep.subr.mxu0 0.0
  %1244 = vmatpush1.msra.mxu0 0.0
  %1245 = vmatprep.subr.mxu0 0.0
  %1246 = vmatpush1.msra.mxu0 0.0
  %1247 = vmatprep.subr.mxu0 0.0
  %1248 = vmatpush1.msra.mxu0 0.0
  %1249 = vmatprep.subr.mxu0 0.0
  %1250 = vmatpush1.msra.mxu0 0.0
  %1251 = vmatprep.subr.mxu0 0.0
  %1252 = vmatpush1.msra.mxu0 0.0
  %1253 = vmatprep.subr.mxu0 0.0
  %1254 = vmatpush1.msra.mxu0 0.0
  %1255 = vmatprep.subr.mxu0 0.0
  %1256 = vmatpush1.msra.mxu0 0.0
  %1257 = vmatprep.subr.mxu0 0.0
  %1258 = vmatpush1.msra.mxu0 0.0
  %1259 = vmatprep.subr.mxu0 0.0
  %1260 = vmatpush1.msra.mxu0 0.0
  %1261 = vmatprep.subr.mxu0 0.0
  %1262 = vmatpush1.msra.mxu0 0.0
  %1263 = vmatprep.subr.mxu0 0.0
  %1264 = vmatpush1.msra.mxu0 0.0
  %1265 = vmatprep.subr.mxu0 0.0
  %1266 = vmatpush1.msra.mxu0 0.0
  %1267 = vmatprep.subr.mxu0 0.0
  %1268 = vmatpush1.msra.mxu0 0.0
  %1269 = vmatprep.subr.mxu0 0.0
  %1270 = vmatpush1.msra.mxu0 0.0
  %1271 = vmatprep.subr.mxu0 0.0
  %1272 = vmatpush1.msra.mxu0 0.0
  %1273 = vmatprep.subr.mxu0 0.0
  %1274 = vmatpush1.msra.mxu0 0.0
  %1275 = vmatprep.subr.mxu0 0.0
  %1276 = vmatpush1.msra.mxu0 0.0
  %1277 = vmatprep.subr.mxu0 0.0
  %1278 = vmatpush1.msra.mxu0 0.0
  %1279 = vmatprep.subr.mxu0 0.0
  %1280 = vmatpush1.msra.mxu0 0.0
  %1281 = vmatprep.subr.mxu0 0.0
  %1282 = vmatpush1.msra.mxu0 0.0
  %1283 = vmatprep.subr.mxu0 0.0
  %1284 = vmatpush1.msra.mxu0 0.0
  %1285 = vmatprep.subr.mxu0 0.0
  %1286 = vmatpush1.msra.mxu0 0.0
  %1287 = vmatprep.subr.mxu0 0.0
  %1288 = vmatpush1.msra.mxu0 0.0
  %1289 = vmatprep.subr.mxu0 0.0
  %1290 = vmatpush1.msra.mxu0 0.0
  %1291 = vmatprep.subr.mxu0 0.0
  %1292 = vmatpush1.msra.mxu0 0.0
  %1293 = vmatprep.mubr.f32.mxu0 0.0
  %1294 = vmatmul.mubr.f32.gmra.mrb[0].mxu0 %v1227
  %v1295 = vpop.f32.mrb[0].mxu0
  %v1296 = vadd.f32 0.0, %v1295
  %v1297 = vpop.f32.mrb[0].mxu0
  %1298 = vdwg.mxu0
  %v1299 = vadd.f32 %v1091, %v1296
  %s1300 = scalar_lea.vmem %s3, 704
  %v1301 = vld [vmem:[%s1300] sm:$0xff]
  %v1302 = vld [vmem:[%s1300 + $0x8] sm:$0xff]
  %v1303 = vld [vmem:[%s1300 + $0x10] sm:$0xff]
  %v1304 = vld [vmem:[%s1300 + $0x18] sm:$0xff]
  %1306 = vrot.lane.b32.xlu0 %v1218, 32
  %v1307 = vpop.permute.xlu0 %1306
  %v1308 = vsel %vm504, %v1307, 0
  %1310 = vmatprep.subr.mxu0 0.0
  %1311 = vmatpush1.msra.mxu0 %v1301
  %1312 = vmatprep.subr.mxu0 0.0
  %1313 = vmatpush1.msra.mxu0 %v1302
  %1314 = vmatprep.subr.mxu0 0.0
  %1315 = vmatpush1.msra.mxu0 %v1303
  %1316 = vmatprep.subr.mxu0 0.0
  %1317 = vmatpush1.msra.mxu0 %v1304
  %1318 = vmatprep.subr.mxu0 0.0
  %1319 = vmatpush1.msra.mxu0 0.0
  %1320 = vmatprep.subr.mxu0 0.0
  %1321 = vmatpush1.msra.mxu0 0.0
  %1322 = vmatprep.subr.mxu0 0.0
  %1323 = vmatpush1.msra.mxu0 0.0
  %1324 = vmatprep.subr.mxu0 0.0
  %1325 = vmatpush1.msra.mxu0 0.0
  %1326 = vmatprep.subr.mxu0 0.0
  %1327 = vmatpush1.msra.mxu0 0.0
  %1328 = vmatprep.subr.mxu0 0.0
  %1329 = vmatpush1.msra.mxu0 0.0
  %1330 = vmatprep.subr.mxu0 0.0
  %1331 = vmatpush1.msra.mxu0 0.0
  %1332 = vmatprep.subr.mxu0 0.0
  %1333 = vmatpush1.msra.mxu0 0.0
  %1334 = vmatprep.subr.mxu0 0.0
  %1335 = vmatpush1.msra.mxu0 0.0
  %1336 = vmatprep.subr.mxu0 0.0
  %1337 = vmatpush1.msra.mxu0 0.0
  %1338 = vmatprep.subr.mxu0 0.0
  %1339 = vmatpush1.msra.mxu0 0.0
  %1340 = vmatprep.subr.mxu0 0.0
  %1341 = vmatpush1.msra.mxu0 0.0
  %1342 = vmatprep.subr.mxu0 0.0
  %1343 = vmatpush1.msra.mxu0 0.0
  %1344 = vmatprep.subr.mxu0 0.0
  %1345 = vmatpush1.msra.mxu0 0.0
  %1346 = vmatprep.subr.mxu0 0.0
  %1347 = vmatpush1.msra.mxu0 0.0
  %1348 = vmatprep.subr.mxu0 0.0
  %1349 = vmatpush1.msra.mxu0 0.0
  %1350 = vmatprep.subr.mxu0 0.0
  %1351 = vmatpush1.msra.mxu0 0.0
  %1352 = vmatprep.subr.mxu0 0.0
  %1353 = vmatpush1.msra.mxu0 0.0
  %1354 = vmatprep.subr.mxu0 0.0
  %1355 = vmatpush1.msra.mxu0 0.0
  %1356 = vmatprep.subr.mxu0 0.0
  %1357 = vmatpush1.msra.mxu0 0.0
  %1358 = vmatprep.subr.mxu0 0.0
  %1359 = vmatpush1.msra.mxu0 0.0
  %1360 = vmatprep.subr.mxu0 0.0
  %1361 = vmatpush1.msra.mxu0 0.0
  %1362 = vmatprep.subr.mxu0 0.0
  %1363 = vmatpush1.msra.mxu0 0.0
  %1364 = vmatprep.subr.mxu0 0.0
  %1365 = vmatpush1.msra.mxu0 0.0
  %1366 = vmatprep.subr.mxu0 0.0
  %1367 = vmatpush1.msra.mxu0 0.0
  %1368 = vmatprep.subr.mxu0 0.0
  %1369 = vmatpush1.msra.mxu0 0.0
  %1370 = vmatprep.subr.mxu0 0.0
  %1371 = vmatpush1.msra.mxu0 0.0
  %1372 = vmatprep.subr.mxu0 0.0
  %1373 = vmatpush1.msra.mxu0 0.0
  %1374 = vmatprep.mubr.f32.mxu0 0.0
  %1375 = vmatmul.mubr.f32.gmra.mrb[0].mxu0 %v1308
  %v1376 = vpop.f32.mrb[0].mxu0
  %v1377 = vadd.f32 0.0, %v1376
  %v1378 = vpop.f32.mrb[0].mxu0
  %1379 = vdwg.mxu0
  %v1380 = vadd.f32 %v1299, %v1377
  %v1381 = vld [vmem:[#allocation2 + $0x30] sm:$0xff]
  %v1382 = vld [vmem:[#allocation2 + $0x38] sm:$0xff]
  %1383 = vmatprep.subr.mxu0 0.0
  %1384 = vmatpush1.msra.mxu0 %v18
  %1385 = vmatprep.subr.mxu0 0.0
  %1386 = vmatpush1.msra.mxu0 %v19
  %1387 = vmatprep.subr.mxu0 0.0
  %1388 = vmatpush1.msra.mxu0 %v20
  %1389 = vmatprep.subr.mxu0 0.0
  %1390 = vmatpush1.msra.mxu0 %v21
  %1391 = vmatprep.subr.mxu0 0.0
  %1392 = vmatpush1.msra.mxu0 0.0
  %1393 = vmatprep.subr.mxu0 0.0
  %1394 = vmatpush1.msra.mxu0 0.0
  %1395 = vmatprep.subr.mxu0 0.0
  %1396 = vmatpush1.msra.mxu0 0.0
  %1397 = vmatprep.subr.mxu0 0.0
  %1398 = vmatpush1.msra.mxu0 0.0
  %1399 = vmatprep.subr.mxu0 0.0
  %1400 = vmatpush1.msra.mxu0 0.0
  %1401 = vmatprep.subr.mxu0 0.0
  %1402 = vmatpush1.msra.mxu0 0.0
  %1403 = vmatprep.subr.mxu0 0.0
  %1404 = vmatpush1.msra.mxu0 0.0
  %1405 = vmatprep.subr.mxu0 0.0
  %1406 = vmatpush1.msra.mxu0 0.0
  %1407 = vmatprep.subr.mxu0 0.0
  %1408 = vmatpush1.msra.mxu0 0.0
  %1409 = vmatprep.subr.mxu0 0.0
  %1410 = vmatpush1.msra.mxu0 0.0
  %1411 = vmatprep.subr.mxu0 0.0
  %1412 = vmatpush1.msra.mxu0 0.0
  %1413 = vmatprep.subr.mxu0 0.0
  %1414 = vmatpush1.msra.mxu0 0.0
  %1415 = vmatprep.subr.mxu0 0.0
  %1416 = vmatpush1.msra.mxu0 0.0
  %1417 = vmatprep.subr.mxu0 0.0
  %1418 = vmatpush1.msra.mxu0 0.0
  %1419 = vmatprep.subr.mxu0 0.0
  %1420 = vmatpush1.msra.mxu0 0.0
  %1421 = vmatprep.subr.mxu0 0.0
  %1422 = vmatpush1.msra.mxu0 0.0
  %1423 = vmatprep.subr.mxu0 0.0
  %1424 = vmatpush1.msra.mxu0 0.0
  %1425 = vmatprep.subr.mxu0 0.0
  %1426 = vmatpush1.msra.mxu0 0.0
  %1427 = vmatprep.subr.mxu0 0.0
  %1428 = vmatpush1.msra.mxu0 0.0
  %1429 = vmatprep.subr.mxu0 0.0
  %1430 = vmatpush1.msra.mxu0 0.0
  %1431 = vmatprep.subr.mxu0 0.0
  %1432 = vmatpush1.msra.mxu0 0.0
  %1433 = vmatprep.subr.mxu0 0.0
  %1434 = vmatpush1.msra.mxu0 0.0
  %1435 = vmatprep.subr.mxu0 0.0
  %1436 = vmatpush1.msra.mxu0 0.0
  %1437 = vmatprep.subr.mxu0 0.0
  %1438 = vmatpush1.msra.mxu0 0.0
  %1439 = vmatprep.subr.mxu0 0.0
  %1440 = vmatpush1.msra.mxu0 0.0
  %1441 = vmatprep.subr.mxu0 0.0
  %1442 = vmatpush1.msra.mxu0 0.0
  %1443 = vmatprep.subr.mxu0 0.0
  %1444 = vmatpush1.msra.mxu0 0.0
  %1445 = vmatprep.subr.mxu0 0.0
  %1446 = vmatpush1.msra.mxu0 0.0
  %1447 = vmatprep.mubr.f32.mxu0 0.0
  %1448 = vmatmul.mubr.f32.gmra.mrb[0].mxu0 %v1227
  %v1449 = vpop.f32.mrb[0].mxu0
  %v1450 = vadd.f32 0.0, %v1449
  %v1451 = vpop.f32.mrb[0].mxu0
  %1452 = vmatprep.mubr.f32.mxu0 0.0
  %1453 = vmatmul.mubr.f32.gmra.mrb[0].mxu0 %v1308
  %v1454 = vpop.f32.mrb[0].mxu0
  %v1455 = vadd.f32 0.0, %v1454
  %v1456 = vpop.f32.mrb[0].mxu0
  %1457 = vdwg.mxu0
  %v1458 = vadd.f32 %v1381, %v1450
  %v1459 = vadd.f32 %v1382, %v1455
  %v1460 = vxor.u32 %v1458, 2147483648
  %v1461 = vxor.u32 %v1459, 2147483648
  %v1462 = vmul.f32 %v1460, 1.442695
  %v1463 = vpow.pop %v1462
  %v1464 = vmul.f32 %v1461, 1.442695
  %v1465 = vpow.pop %v1464
  %v1466 = vadd.f32 %v1463, 1.0
  %v1467 = vadd.f32 %v1465, 1.0
  %v1468 = vrcp.pop %v1466
  %v1469 = vmul.f32 1.0, %v1468
  %v1470 = vrcp.pop %v1467
  %v1471 = vmul.f32 1.0, %v1470
  %v1472 = vtanh.pop %v1458
  %v1473 = vtanh.pop %v1459
  %v1474 = vmul.f32 %v1469, %v1205
  %v1475 = vmul.f32 %v1471, %v1206
  %1478 = vrot.lane.b32.xlu0 %v1472, 64
  %v1479 = vpop.permute.xlu0 %1478
  %1480 = vrot.lane.b32.xlu0 %v1473, 64
  %v1481 = vpop.permute.xlu0 %1480
  %v1484 = vmul.f32 %v1469, %v1479
  %v1485 = vmul.f32 %v1471, %v1481
  %1488 = vrot.lane.b32.xlu0 %v1484, 32
  %v1489 = vpop.permute.xlu0 %1488
  %1490 = vrot.lane.b32.xlu0 %v1485, 32
  %v1491 = vpop.permute.xlu0 %1490
  %v1494 = vadd.f32 %v1474, %v1489
  %v1495 = vadd.f32 %v1475, %v1491
  %v1496 = vtanh.pop %v1494
  %v1497 = vtanh.pop %v1495
  %1500 = vrot.lane.b32.xlu0 %v1496, 64
  %v1501 = vpop.permute.xlu0 %1500
  %1502 = vrot.lane.b32.xlu0 %v1497, 64
  %v1503 = vpop.permute.xlu0 %1502
  %v1506 = vmul.f32 %v1469, %v1501
  %v1507 = vmul.f32 %v1471, %v1503
  %s1508 = scalar_lea.vmem %s3, 96
  %v1509 = vld [vmem:[%s1508] sm:$0xff]
  %v1510 = vld [vmem:[%s1508 + $0x8] sm:$0xff]
  %v1511 = vld [vmem:[%s1508 + $0x10] sm:$0xff]
  %v1512 = vld [vmem:[%s1508 + $0x18] sm:$0xff]
  %1514 = vrot.lane.b32.xlu0 %v1506, 32
  %v1515 = vpop.permute.xlu0 %1514
  %v1516 = vsel %vm504, %v1515, 0
  %1518 = vmatprep.subr.mxu0 0.0
  %1519 = vmatpush1.msra.mxu0 %v1509
  %1520 = vmatprep.subr.mxu0 0.0
  %1521 = vmatpush1.msra.mxu0 %v1510
  %1522 = vmatprep.subr.mxu0 0.0
  %1523 = vmatpush1.msra.mxu0 %v1511
  %1524 = vmatprep.subr.mxu0 0.0
  %1525 = vmatpush1.msra.mxu0 %v1512
  %1526 = vmatprep.subr.mxu0 0.0
  %1527 = vmatpush1.msra.mxu0 0.0
  %1528 = vmatprep.subr.mxu0 0.0
  %1529 = vmatpush1.msra.mxu0 0.0
  %1530 = vmatprep.subr.mxu0 0.0
  %1531 = vmatpush1.msra.mxu0 0.0
  %1532 = vmatprep.subr.mxu0 0.0
  %1533 = vmatpush1.msra.mxu0 0.0
  %1534 = vmatprep.subr.mxu0 0.0
  %1535 = vmatpush1.msra.mxu0 0.0
  %1536 = vmatprep.subr.mxu0 0.0
  %1537 = vmatpush1.msra.mxu0 0.0
  %1538 = vmatprep.subr.mxu0 0.0
  %1539 = vmatpush1.msra.mxu0 0.0
  %1540 = vmatprep.subr.mxu0 0.0
  %1541 = vmatpush1.msra.mxu0 0.0
  %1542 = vmatprep.subr.mxu0 0.0
  %1543 = vmatpush1.msra.mxu0 0.0
  %1544 = vmatprep.subr.mxu0 0.0
  %1545 = vmatpush1.msra.mxu0 0.0
  %1546 = vmatprep.subr.mxu0 0.0
  %1547 = vmatpush1.msra.mxu0 0.0
  %1548 = vmatprep.subr.mxu0 0.0
  %1549 = vmatpush1.msra.mxu0 0.0
  %1550 = vmatprep.subr.mxu0 0.0
  %1551 = vmatpush1.msra.mxu0 0.0
  %1552 = vmatprep.subr.mxu0 0.0
  %1553 = vmatpush1.msra.mxu0 0.0
  %1554 = vmatprep.subr.mxu0 0.0
  %1555 = vmatpush1.msra.mxu0 0.0
  %1556 = vmatprep.subr.mxu0 0.0
  %1557 = vmatpush1.msra.mxu0 0.0
  %1558 = vmatprep.subr.mxu0 0.0
  %1559 = vmatpush1.msra.mxu0 0.0
  %1560 = vmatprep.subr.mxu0 0.0
  %1561 = vmatpush1.msra.mxu0 0.0
  %1562 = vmatprep.subr.mxu0 0.0
  %1563 = vmatpush1.msra.mxu0 0.0
  %1564 = vmatprep.subr.mxu0 0.0
  %1565 = vmatpush1.msra.mxu0 0.0
  %1566 = vmatprep.subr.mxu0 0.0
  %1567 = vmatpush1.msra.mxu0 0.0
  %1568 = vmatprep.subr.mxu0 0.0
  %1569 = vmatpush1.msra.mxu0 0.0
  %1570 = vmatprep.subr.mxu0 0.0
  %1571 = vmatpush1.msra.mxu0 0.0
  %1572 = vmatprep.subr.mxu0 0.0
  %1573 = vmatpush1.msra.mxu0 0.0
  %1574 = vmatprep.subr.mxu0 0.0
  %1575 = vmatpush1.msra.mxu0 0.0
  %1576 = vmatprep.subr.mxu0 0.0
  %1577 = vmatpush1.msra.mxu0 0.0
  %1578 = vmatprep.subr.mxu0 0.0
  %1579 = vmatpush1.msra.mxu0 0.0
  %1580 = vmatprep.subr.mxu0 0.0
  %1581 = vmatpush1.msra.mxu0 0.0
  %1582 = vmatprep.mubr.f32.mxu0 0.0
  %1583 = vmatmul.mubr.f32.gmra.mrb[0].mxu0 %v1516
  %v1584 = vpop.f32.mrb[0].mxu0
  %v1585 = vadd.f32 0.0, %v1584
  %v1586 = vpop.f32.mrb[0].mxu0
  %1587 = vdwg.mxu0
  %v1588 = vadd.f32 %v1380, %v1585
  %s1589 = scalar_lea.vmem %s3, 736
  %v1590 = vld [vmem:[%s1589] sm:$0xff]
  %v1591 = vld [vmem:[%s1589 + $0x8] sm:$0xff]
  %v1592 = vld [vmem:[%s1589 + $0x10] sm:$0xff]
  %v1593 = vld [vmem:[%s1589 + $0x18] sm:$0xff]
  %1595 = vrot.lane.b32.xlu0 %v1507, 32
  %v1596 = vpop.permute.xlu0 %1595
  %v1597 = vsel %vm504, %v1596, 0
  %1599 = vmatprep.subr.mxu0 0.0
  %1600 = vmatpush1.msra.mxu0 %v1590
  %1601 = vmatprep.subr.mxu0 0.0
  %1602 = vmatpush1.msra.mxu0 %v1591
  %1603 = vmatprep.subr.mxu0 0.0
  %1604 = vmatpush1.msra.mxu0 %v1592
  %1605 = vmatprep.subr.mxu0 0.0
  %1606 = vmatpush1.msra.mxu0 %v1593
  %1607 = vmatprep.subr.mxu0 0.0
  %1608 = vmatpush1.msra.mxu0 0.0
  %1609 = vmatprep.subr.mxu0 0.0
  %1610 = vmatpush1.msra.mxu0 0.0
  %1611 = vmatprep.subr.mxu0 0.0
  %1612 = vmatpush1.msra.mxu0 0.0
  %1613 = vmatprep.subr.mxu0 0.0
  %1614 = vmatpush1.msra.mxu0 0.0
  %1615 = vmatprep.subr.mxu0 0.0
  %1616 = vmatpush1.msra.mxu0 0.0
  %1617 = vmatprep.subr.mxu0 0.0
  %1618 = vmatpush1.msra.mxu0 0.0
  %1619 = vmatprep.subr.mxu0 0.0
  %1620 = vmatpush1.msra.mxu0 0.0
  %1621 = vmatprep.subr.mxu0 0.0
  %1622 = vmatpush1.msra.mxu0 0.0
  %1623 = vmatprep.subr.mxu0 0.0
  %1624 = vmatpush1.msra.mxu0 0.0
  %1625 = vmatprep.subr.mxu0 0.0
  %1626 = vmatpush1.msra.mxu0 0.0
  %1627 = vmatprep.subr.mxu0 0.0
  %1628 = vmatpush1.msra.mxu0 0.0
  %1629 = vmatprep.subr.mxu0 0.0
  %1630 = vmatpush1.msra.mxu0 0.0
  %1631 = vmatprep.subr.mxu0 0.0
  %1632 = vmatpush1.msra.mxu0 0.0
  %1633 = vmatprep.subr.mxu0 0.0
  %1634 = vmatpush1.msra.mxu0 0.0
  %1635 = vmatprep.subr.mxu0 0.0
  %1636 = vmatpush1.msra.mxu0 0.0
  %1637 = vmatprep.subr.mxu0 0.0
  %1638 = vmatpush1.msra.mxu0 0.0
  %1639 = vmatprep.subr.mxu0 0.0
  %1640 = vmatpush1.msra.mxu0 0.0
  %1641 = vmatprep.subr.mxu0 0.0
  %1642 = vmatpush1.msra.mxu0 0.0
  %1643 = vmatprep.subr.mxu0 0.0
  %1644 = vmatpush1.msra.mxu0 0.0
  %1645 = vmatprep.subr.mxu0 0.0
  %1646 = vmatpush1.msra.mxu0 0.0
  %1647 = vmatprep.subr.mxu0 0.0
  %1648 = vmatpush1.msra.mxu0 0.0
  %1649 = vmatprep.subr.mxu0 0.0
  %1650 = vmatpush1.msra.mxu0 0.0
  %1651 = vmatprep.subr.mxu0 0.0
  %1652 = vmatpush1.msra.mxu0 0.0
  %1653 = vmatprep.subr.mxu0 0.0
  %1654 = vmatpush1.msra.mxu0 0.0
  %1655 = vmatprep.subr.mxu0 0.0
  %1656 = vmatpush1.msra.mxu0 0.0
  %1657 = vmatprep.subr.mxu0 0.0
  %1658 = vmatpush1.msra.mxu0 0.0
  %1659 = vmatprep.subr.mxu0 0.0
  %1660 = vmatpush1.msra.mxu0 0.0
  %1661 = vmatprep.subr.mxu0 0.0
  %1662 = vmatpush1.msra.mxu0 0.0
  %1663 = vmatprep.mubr.f32.mxu0 0.0
  %1664 = vmatmul.mubr.f32.gmra.mrb[0].mxu0 %v1597
  %v1665 = vpop.f32.mrb[0].mxu0
  %v1666 = vadd.f32 0.0, %v1665
  %v1667 = vpop.f32.mrb[0].mxu0
  %1668 = vdwg.mxu0
  %v1669 = vadd.f32 %v1588, %v1666
  %v1670 = vld [vmem:[#allocation2 + $0x40] sm:$0xff]
  %v1671 = vld [vmem:[#allocation2 + $0x48] sm:$0xff]
  %1672 = vmatprep.subr.mxu0 0.0
  %1673 = vmatpush1.msra.mxu0 %v18
  %1674 = vmatprep.subr.mxu0 0.0
  %1675 = vmatpush1.msra.mxu0 %v19
  %1676 = vmatprep.subr.mxu0 0.0
  %1677 = vmatpush1.msra.mxu0 %v20
  %1678 = vmatprep.subr.mxu0 0.0
  %1679 = vmatpush1.msra.mxu0 %v21
  %1680 = vmatprep.subr.mxu0 0.0
  %1681 = vmatpush1.msra.mxu0 0.0
  %1682 = vmatprep.subr.mxu0 0.0
  %1683 = vmatpush1.msra.mxu0 0.0
  %1684 = vmatprep.subr.mxu0 0.0
  %1685 = vmatpush1.msra.mxu0 0.0
  %1686 = vmatprep.subr.mxu0 0.0
  %1687 = vmatpush1.msra.mxu0 0.0
  %1688 = vmatprep.subr.mxu0 0.0
  %1689 = vmatpush1.msra.mxu0 0.0
  %1690 = vmatprep.subr.mxu0 0.0
  %1691 = vmatpush1.msra.mxu0 0.0
  %1692 = vmatprep.subr.mxu0 0.0
  %1693 = vmatpush1.msra.mxu0 0.0
  %1694 = vmatprep.subr.mxu0 0.0
  %1695 = vmatpush1.msra.mxu0 0.0
  %1696 = vmatprep.subr.mxu0 0.0
  %1697 = vmatpush1.msra.mxu0 0.0
  %1698 = vmatprep.subr.mxu0 0.0
  %1699 = vmatpush1.msra.mxu0 0.0
  %1700 = vmatprep.subr.mxu0 0.0
  %1701 = vmatpush1.msra.mxu0 0.0
  %1702 = vmatprep.subr.mxu0 0.0
  %1703 = vmatpush1.msra.mxu0 0.0
  %1704 = vmatprep.subr.mxu0 0.0
  %1705 = vmatpush1.msra.mxu0 0.0
  %1706 = vmatprep.subr.mxu0 0.0
  %1707 = vmatpush1.msra.mxu0 0.0
  %1708 = vmatprep.subr.mxu0 0.0
  %1709 = vmatpush1.msra.mxu0 0.0
  %1710 = vmatprep.subr.mxu0 0.0
  %1711 = vmatpush1.msra.mxu0 0.0
  %1712 = vmatprep.subr.mxu0 0.0
  %1713 = vmatpush1.msra.mxu0 0.0
  %1714 = vmatprep.subr.mxu0 0.0
  %1715 = vmatpush1.msra.mxu0 0.0
  %1716 = vmatprep.subr.mxu0 0.0
  %1717 = vmatpush1.msra.mxu0 0.0
  %1718 = vmatprep.subr.mxu0 0.0
  %1719 = vmatpush1.msra.mxu0 0.0
  %1720 = vmatprep.subr.mxu0 0.0
  %1721 = vmatpush1.msra.mxu0 0.0
  %1722 = vmatprep.subr.mxu0 0.0
  %1723 = vmatpush1.msra.mxu0 0.0
  %1724 = vmatprep.subr.mxu0 0.0
  %1725 = vmatpush1.msra.mxu0 0.0
  %1726 = vmatprep.subr.mxu0 0.0
  %1727 = vmatpush1.msra.mxu0 0.0
  %1728 = vmatprep.subr.mxu0 0.0
  %1729 = vmatpush1.msra.mxu0 0.0
  %1730 = vmatprep.subr.mxu0 0.0
  %1731 = vmatpush1.msra.mxu0 0.0
  %1732 = vmatprep.subr.mxu0 0.0
  %1733 = vmatpush1.msra.mxu0 0.0
  %1734 = vmatprep.subr.mxu0 0.0
  %1735 = vmatpush1.msra.mxu0 0.0
  %1736 = vmatprep.mubr.f32.mxu0 0.0
  %1737 = vmatmul.mubr.f32.gmra.mrb[0].mxu0 %v1516
  %v1738 = vpop.f32.mrb[0].mxu0
  %v1739 = vadd.f32 0.0, %v1738
  %v1740 = vpop.f32.mrb[0].mxu0
  %1741 = vmatprep.mubr.f32.mxu0 0.0
  %1742 = vmatmul.mubr.f32.gmra.mrb[0].mxu0 %v1597
  %v1743 = vpop.f32.mrb[0].mxu0
  %v1744 = vadd.f32 0.0, %v1743
  %v1745 = vpop.f32.mrb[0].mxu0
  %1746 = vdwg.mxu0
  %v1747 = vadd.f32 %v1670, %v1739
  %v1748 = vadd.f32 %v1671, %v1744
  %v1749 = vxor.u32 %v1747, 2147483648
  %v1750 = vxor.u32 %v1748, 2147483648
  %v1751 = vmul.f32 %v1749, 1.442695
  %v1752 = vpow.pop %v1751
  %v1753 = vmul.f32 %v1750, 1.442695
  %v1754 = vpow.pop %v1753
  %v1755 = vadd.f32 %v1752, 1.0
  %v1756 = vadd.f32 %v1754, 1.0
  %v1757 = vrcp.pop %v1755
  %v1758 = vmul.f32 1.0, %v1757
  %v1759 = vrcp.pop %v1756
  %v1760 = vmul.f32 1.0, %v1759
  %v1761 = vtanh.pop %v1747
  %v1762 = vtanh.pop %v1748
  %v1763 = vmul.f32 %v1758, %v1494
  %v1764 = vmul.f32 %v1760, %v1495
  %1767 = vrot.lane.b32.xlu0 %v1761, 64
  %v1768 = vpop.permute.xlu0 %1767
  %1769 = vrot.lane.b32.xlu0 %v1762, 64
  %v1770 = vpop.permute.xlu0 %1769
  %v1773 = vmul.f32 %v1758, %v1768
  %v1774 = vmul.f32 %v1760, %v1770
  %1777 = vrot.lane.b32.xlu0 %v1773, 32
  %v1778 = vpop.permute.xlu0 %1777
  %1779 = vrot.lane.b32.xlu0 %v1774, 32
  %v1780 = vpop.permute.xlu0 %1779
  %v1783 = vadd.f32 %v1763, %v1778
  %v1784 = vadd.f32 %v1764, %v1780
  %v1785 = vtanh.pop %v1783
  %v1786 = vtanh.pop %v1784
  %1789 = vrot.lane.b32.xlu0 %v1785, 64
  %v1790 = vpop.permute.xlu0 %1789
  %1791 = vrot.lane.b32.xlu0 %v1786, 64
  %v1792 = vpop.permute.xlu0 %1791
  %v1795 = vmul.f32 %v1758, %v1790
  %v1796 = vmul.f32 %v1760, %v1792
  %s1797 = scalar_lea.vmem %s3, 128
  %v1798 = vld [vmem:[%s1797] sm:$0xff]
  %v1799 = vld [vmem:[%s1797 + $0x8] sm:$0xff]
  %v1800 = vld [vmem:[%s1797 + $0x10] sm:$0xff]
  %v1801 = vld [vmem:[%s1797 + $0x18] sm:$0xff]
  %1803 = vrot.lane.b32.xlu0 %v1795, 32
  %v1804 = vpop.permute.xlu0 %1803
  %v1805 = vsel %vm504, %v1804, 0
  %1807 = vmatprep.subr.mxu0 0.0
  %1808 = vmatpush1.msra.mxu0 %v1798
  %1809 = vmatprep.subr.mxu0 0.0
  %1810 = vmatpush1.msra.mxu0 %v1799
  %1811 = vmatprep.subr.mxu0 0.0
  %1812 = vmatpush1.msra.mxu0 %v1800
  %1813 = vmatprep.subr.mxu0 0.0
  %1814 = vmatpush1.msra.mxu0 %v1801
  %1815 = vmatprep.subr.mxu0 0.0
  %1816 = vmatpush1.msra.mxu0 0.0
  %1817 = vmatprep.subr.mxu0 0.0
  %1818 = vmatpush1.msra.mxu0 0.0
  %1819 = vmatprep.subr.mxu0 0.0
  %1820 = vmatpush1.msra.mxu0 0.0
  %1821 = vmatprep.subr.mxu0 0.0
  %1822 = vmatpush1.msra.mxu0 0.0
  %1823 = vmatprep.subr.mxu0 0.0
  %1824 = vmatpush1.msra.mxu0 0.0
  %1825 = vmatprep.subr.mxu0 0.0
  %1826 = vmatpush1.msra.mxu0 0.0
  %1827 = vmatprep.subr.mxu0 0.0
  %1828 = vmatpush1.msra.mxu0 0.0
  %1829 = vmatprep.subr.mxu0 0.0
  %1830 = vmatpush1.msra.mxu0 0.0
  %1831 = vmatprep.subr.mxu0 0.0
  %1832 = vmatpush1.msra.mxu0 0.0
  %1833 = vmatprep.subr.mxu0 0.0
  %1834 = vmatpush1.msra.mxu0 0.0
  %1835 = vmatprep.subr.mxu0 0.0
  %1836 = vmatpush1.msra.mxu0 0.0
  %1837 = vmatprep.subr.mxu0 0.0
  %1838 = vmatpush1.msra.mxu0 0.0
  %1839 = vmatprep.subr.mxu0 0.0
  %1840 = vmatpush1.msra.mxu0 0.0
  %1841 = vmatprep.subr.mxu0 0.0
  %1842 = vmatpush1.msra.mxu0 0.0
  %1843 = vmatprep.subr.mxu0 0.0
  %1844 = vmatpush1.msra.mxu0 0.0
  %1845 = vmatprep.subr.mxu0 0.0
  %1846 = vmatpush1.msra.mxu0 0.0
  %1847 = vmatprep.subr.mxu0 0.0
  %1848 = vmatpush1.msra.mxu0 0.0
  %1849 = vmatprep.subr.mxu0 0.0
  %1850 = vmatpush1.msra.mxu0 0.0
  %1851 = vmatprep.subr.mxu0 0.0
  %1852 = vmatpush1.msra.mxu0 0.0
  %1853 = vmatprep.subr.mxu0 0.0
  %1854 = vmatpush1.msra.mxu0 0.0
  %1855 = vmatprep.subr.mxu0 0.0
  %1856 = vmatpush1.msra.mxu0 0.0
  %1857 = vmatprep.subr.mxu0 0.0
  %1858 = vmatpush1.msra.mxu0 0.0
  %1859 = vmatprep.subr.mxu0 0.0
  %1860 = vmatpush1.msra.mxu0 0.0
  %1861 = vmatprep.subr.mxu0 0.0
  %1862 = vmatpush1.msra.mxu0 0.0
  %1863 = vmatprep.subr.mxu0 0.0
  %1864 = vmatpush1.msra.mxu0 0.0
  %1865 = vmatprep.subr.mxu0 0.0
  %1866 = vmatpush1.msra.mxu0 0.0
  %1867 = vmatprep.subr.mxu0 0.0
  %1868 = vmatpush1.msra.mxu0 0.0
  %1869 = vmatprep.subr.mxu0 0.0
  %1870 = vmatpush1.msra.mxu0 0.0
  %1871 = vmatprep.mubr.f32.mxu0 0.0
  %1872 = vmatmul.mubr.f32.gmra.mrb[0].mxu0 %v1805
  %v1873 = vpop.f32.mrb[0].mxu0
  %v1874 = vadd.f32 0.0, %v1873
  %v1875 = vpop.f32.mrb[0].mxu0
  %1876 = vdwg.mxu0
  %v1877 = vadd.f32 %v1669, %v1874
  %s1878 = scalar_lea.vmem %s3, 768
  %v1879 = vld [vmem:[%s1878] sm:$0xff]
  %v1880 = vld [vmem:[%s1878 + $0x8] sm:$0xff]
  %v1881 = vld [vmem:[%s1878 + $0x10] sm:$0xff]
  %v1882 = vld [vmem:[%s1878 + $0x18] sm:$0xff]
  %1884 = vrot.lane.b32.xlu0 %v1796, 32
  %v1885 = vpop.permute.xlu0 %1884
  %v1886 = vsel %vm504, %v1885, 0
  %1888 = vmatprep.subr.mxu0 0.0
  %1889 = vmatpush1.msra.mxu0 %v1879
  %1890 = vmatprep.subr.mxu0 0.0
  %1891 = vmatpush1.msra.mxu0 %v1880
  %1892 = vmatprep.subr.mxu0 0.0
  %1893 = vmatpush1.msra.mxu0 %v1881
  %1894 = vmatprep.subr.mxu0 0.0
  %1895 = vmatpush1.msra.mxu0 %v1882
  %1896 = vmatprep.subr.mxu0 0.0
  %1897 = vmatpush1.msra.mxu0 0.0
  %1898 = vmatprep.subr.mxu0 0.0
  %1899 = vmatpush1.msra.mxu0 0.0
  %1900 = vmatprep.subr.mxu0 0.0
  %1901 = vmatpush1.msra.mxu0 0.0
  %1902 = vmatprep.subr.mxu0 0.0
  %1903 = vmatpush1.msra.mxu0 0.0
  %1904 = vmatprep.subr.mxu0 0.0
  %1905 = vmatpush1.msra.mxu0 0.0
  %1906 = vmatprep.subr.mxu0 0.0
  %1907 = vmatpush1.msra.mxu0 0.0
  %1908 = vmatprep.subr.mxu0 0.0
  %1909 = vmatpush1.msra.mxu0 0.0
  %1910 = vmatprep.subr.mxu0 0.0
  %1911 = vmatpush1.msra.mxu0 0.0
  %1912 = vmatprep.subr.mxu0 0.0
  %1913 = vmatpush1.msra.mxu0 0.0
  %1914 = vmatprep.subr.mxu0 0.0
  %1915 = vmatpush1.msra.mxu0 0.0
  %1916 = vmatprep.subr.mxu0 0.0
  %1917 = vmatpush1.msra.mxu0 0.0
  %1918 = vmatprep.subr.mxu0 0.0
  %1919 = vmatpush1.msra.mxu0 0.0
  %1920 = vmatprep.subr.mxu0 0.0
  %1921 = vmatpush1.msra.mxu0 0.0
  %1922 = vmatprep.subr.mxu0 0.0
  %1923 = vmatpush1.msra.mxu0 0.0
  %1924 = vmatprep.subr.mxu0 0.0
  %1925 = vmatpush1.msra.mxu0 0.0
  %1926 = vmatprep.subr.mxu0 0.0
  %1927 = vmatpush1.msra.mxu0 0.0
  %1928 = vmatprep.subr.mxu0 0.0
  %1929 = vmatpush1.msra.mxu0 0.0
  %1930 = vmatprep.subr.mxu0 0.0
  %1931 = vmatpush1.msra.mxu0 0.0
  %1932 = vmatprep.subr.mxu0 0.0
  %1933 = vmatpush1.msra.mxu0 0.0
  %1934 = vmatprep.subr.mxu0 0.0
  %1935 = vmatpush1.msra.mxu0 0.0
  %1936 = vmatprep.subr.mxu0 0.0
  %1937 = vmatpush1.msra.mxu0 0.0
  %1938 = vmatprep.subr.mxu0 0.0
  %1939 = vmatpush1.msra.mxu0 0.0
  %1940 = vmatprep.subr.mxu0 0.0
  %1941 = vmatpush1.msra.mxu0 0.0
  %1942 = vmatprep.subr.mxu0 0.0
  %1943 = vmatpush1.msra.mxu0 0.0
  %1944 = vmatprep.subr.mxu0 0.0
  %1945 = vmatpush1.msra.mxu0 0.0
  %1946 = vmatprep.subr.mxu0 0.0
  %1947 = vmatpush1.msra.mxu0 0.0
  %1948 = vmatprep.subr.mxu0 0.0
  %1949 = vmatpush1.msra.mxu0 0.0
  %1950 = vmatprep.subr.mxu0 0.0
  %1951 = vmatpush1.msra.mxu0 0.0
  %1952 = vmatprep.mubr.f32.mxu0 0.0
  %1953 = vmatmul.mubr.f32.gmra.mrb[0].mxu0 %v1886
  %v1954 = vpop.f32.mrb[0].mxu0
  %v1955 = vadd.f32 0.0, %v1954
  %v1956 = vpop.f32.mrb[0].mxu0
  %1957 = vdwg.mxu0
  %v1958 = vadd.f32 %v1877, %v1955
  %v1959 = vld [vmem:[#allocation2 + $0x50] sm:$0xff]
  %v1960 = vld [vmem:[#allocation2 + $0x58] sm:$0xff]
  %1961 = vmatprep.subr.mxu0 0.0
  %1962 = vmatpush1.msra.mxu0 %v18
  %1963 = vmatprep.subr.mxu0 0.0
  %1964 = vmatpush1.msra.mxu0 %v19
  %1965 = vmatprep.subr.mxu0 0.0
  %1966 = vmatpush1.msra.mxu0 %v20
  %1967 = vmatprep.subr.mxu0 0.0
  %1968 = vmatpush1.msra.mxu0 %v21
  %1969 = vmatprep.subr.mxu0 0.0
  %1970 = vmatpush1.msra.mxu0 0.0
  %1971 = vmatprep.subr.mxu0 0.0
  %1972 = vmatpush1.msra.mxu0 0.0
  %1973 = vmatprep.subr.mxu0 0.0
  %1974 = vmatpush1.msra.mxu0 0.0
  %1975 = vmatprep.subr.mxu0 0.0
  %1976 = vmatpush1.msra.mxu0 0.0
  %1977 = vmatprep.subr.mxu0 0.0
  %1978 = vmatpush1.msra.mxu0 0.0
  %1979 = vmatprep.subr.mxu0 0.0
  %1980 = vmatpush1.msra.mxu0 0.0
  %1981 = vmatprep.subr.mxu0 0.0
  %1982 = vmatpush1.msra.mxu0 0.0
  %1983 = vmatprep.subr.mxu0 0.0
  %1984 = vmatpush1.msra.mxu0 0.0
  %1985 = vmatprep.subr.mxu0 0.0
  %1986 = vmatpush1.msra.mxu0 0.0
  %1987 = vmatprep.subr.mxu0 0.0
  %1988 = vmatpush1.msra.mxu0 0.0
  %1989 = vmatprep.subr.mxu0 0.0
  %1990 = vmatpush1.msra.mxu0 0.0
  %1991 = vmatprep.subr.mxu0 0.0
  %1992 = vmatpush1.msra.mxu0 0.0
  %1993 = vmatprep.subr.mxu0 0.0
  %1994 = vmatpush1.msra.mxu0 0.0
  %1995 = vmatprep.subr.mxu0 0.0
  %1996 = vmatpush1.msra.mxu0 0.0
  %1997 = vmatprep.subr.mxu0 0.0
  %1998 = vmatpush1.msra.mxu0 0.0
  %1999 = vmatprep.subr.mxu0 0.0
  %2000 = vmatpush1.msra.mxu0 0.0
  %2001 = vmatprep.subr.mxu0 0.0
  %2002 = vmatpush1.msra.mxu0 0.0
  %2003 = vmatprep.subr.mxu0 0.0
  %2004 = vmatpush1.msra.mxu0 0.0
  %2005 = vmatprep.subr.mxu0 0.0
  %2006 = vmatpush1.msra.mxu0 0.0
  %2007 = vmatprep.subr.mxu0 0.0
  %2008 = vmatpush1.msra.mxu0 0.0
  %2009 = vmatprep.subr.mxu0 0.0
  %2010 = vmatpush1.msra.mxu0 0.0
  %2011 = vmatprep.subr.mxu0 0.0
  %2012 = vmatpush1.msra.mxu0 0.0
  %2013 = vmatprep.subr.mxu0 0.0
  %2014 = vmatpush1.msra.mxu0 0.0
  %2015 = vmatprep.subr.mxu0 0.0
  %2016 = vmatpush1.msra.mxu0 0.0
  %2017 = vmatprep.subr.mxu0 0.0
  %2018 = vmatpush1.msra.mxu0 0.0
  %2019 = vmatprep.subr.mxu0 0.0
  %2020 = vmatpush1.msra.mxu0 0.0
  %2021 = vmatprep.subr.mxu0 0.0
  %2022 = vmatpush1.msra.mxu0 0.0
  %2023 = vmatprep.subr.mxu0 0.0
  %2024 = vmatpush1.msra.mxu0 0.0
  %2025 = vmatprep.mubr.f32.mxu0 0.0
  %2026 = vmatmul.mubr.f32.gmra.mrb[0].mxu0 %v1805
  %v2027 = vpop.f32.mrb[0].mxu0
  %v2028 = vadd.f32 0.0, %v2027
  %v2029 = vpop.f32.mrb[0].mxu0
  %2030 = vmatprep.mubr.f32.mxu0 0.0
  %2031 = vmatmul.mubr.f32.gmra.mrb[0].mxu0 %v1886
  %v2032 = vpop.f32.mrb[0].mxu0
  %v2033 = vadd.f32 0.0, %v2032
  %v2034 = vpop.f32.mrb[0].mxu0
  %2035 = vdwg.mxu0
  %v2036 = vadd.f32 %v1959, %v2028
  %v2037 = vadd.f32 %v1960, %v2033
  %v2038 = vxor.u32 %v2036, 2147483648
  %v2039 = vxor.u32 %v2037, 2147483648
  %v2040 = vmul.f32 %v2038, 1.442695
  %v2041 = vpow.pop %v2040
  %v2042 = vmul.f32 %v2039, 1.442695
  %v2043 = vpow.pop %v2042
  %v2044 = vadd.f32 %v2041, 1.0
  %v2045 = vadd.f32 %v2043, 1.0
  %v2046 = vrcp.pop %v2044
  %v2047 = vmul.f32 1.0, %v2046
  %v2048 = vrcp.pop %v2045
  %v2049 = vmul.f32 1.0, %v2048
  %v2050 = vtanh.pop %v2036
  %v2051 = vtanh.pop %v2037
  %v2052 = vmul.f32 %v2047, %v1783
  %v2053 = vmul.f32 %v2049, %v1784
  %2056 = vrot.lane.b32.xlu0 %v2050, 64
  %v2057 = vpop.permute.xlu0 %2056
  %2058 = vrot.lane.b32.xlu0 %v2051, 64
  %v2059 = vpop.permute.xlu0 %2058
  %v2062 = vmul.f32 %v2047, %v2057
  %v2063 = vmul.f32 %v2049, %v2059
  %2066 = vrot.lane.b32.xlu0 %v2062, 32
  %v2067 = vpop.permute.xlu0 %2066
  %2068 = vrot.lane.b32.xlu0 %v2063, 32
  %v2069 = vpop.permute.xlu0 %2068
  %v2072 = vadd.f32 %v2052, %v2067
  %v2073 = vadd.f32 %v2053, %v2069
  %v2074 = vtanh.pop %v2072
  %v2075 = vtanh.pop %v2073
  %2078 = vrot.lane.b32.xlu0 %v2074, 64
  %v2079 = vpop.permute.xlu0 %2078
  %2080 = vrot.lane.b32.xlu0 %v2075, 64
  %v2081 = vpop.permute.xlu0 %2080
  %v2084 = vmul.f32 %v2047, %v2079
  %v2085 = vmul.f32 %v2049, %v2081
  %s2086 = scalar_lea.vmem %s3, 160
  %v2087 = vld [vmem:[%s2086] sm:$0xff]
  %v2088 = vld [vmem:[%s2086 + $0x8] sm:$0xff]
  %v2089 = vld [vmem:[%s2086 + $0x10] sm:$0xff]
  %v2090 = vld [vmem:[%s2086 + $0x18] sm:$0xff]
  %2092 = vrot.lane.b32.xlu0 %v2084, 32
  %v2093 = vpop.permute.xlu0 %2092
  %v2094 = vsel %vm504, %v2093, 0
  %2096 = vmatprep.subr.mxu0 0.0
  %2097 = vmatpush1.msra.mxu0 %v2087
  %2098 = vmatprep.subr.mxu0 0.0
  %2099 = vmatpush1.msra.mxu0 %v2088
  %2100 = vmatprep.subr.mxu0 0.0
  %2101 = vmatpush1.msra.mxu0 %v2089
  %2102 = vmatprep.subr.mxu0 0.0
  %2103 = vmatpush1.msra.mxu0 %v2090
  %2104 = vmatprep.subr.mxu0 0.0
  %2105 = vmatpush1.msra.mxu0 0.0
  %2106 = vmatprep.subr.mxu0 0.0
  %2107 = vmatpush1.msra.mxu0 0.0
  %2108 = vmatprep.subr.mxu0 0.0
  %2109 = vmatpush1.msra.mxu0 0.0
  %2110 = vmatprep.subr.mxu0 0.0
  %2111 = vmatpush1.msra.mxu0 0.0
  %2112 = vmatprep.subr.mxu0 0.0
  %2113 = vmatpush1.msra.mxu0 0.0
  %2114 = vmatprep.subr.mxu0 0.0
  %2115 = vmatpush1.msra.mxu0 0.0
  %2116 = vmatprep.subr.mxu0 0.0
  %2117 = vmatpush1.msra.mxu0 0.0
  %2118 = vmatprep.subr.mxu0 0.0
  %2119 = vmatpush1.msra.mxu0 0.0
  %2120 = vmatprep.subr.mxu0 0.0
  %2121 = vmatpush1.msra.mxu0 0.0
  %2122 = vmatprep.subr.mxu0 0.0
  %2123 = vmatpush1.msra.mxu0 0.0
  %2124 = vmatprep.subr.mxu0 0.0
  %2125 = vmatpush1.msra.mxu0 0.0
  %2126 = vmatprep.subr.mxu0 0.0
  %2127 = vmatpush1.msra.mxu0 0.0
  %2128 = vmatprep.subr.mxu0 0.0
  %2129 = vmatpush1.msra.mxu0 0.0
  %2130 = vmatprep.subr.mxu0 0.0
  %2131 = vmatpush1.msra.mxu0 0.0
  %2132 = vmatprep.subr.mxu0 0.0
  %2133 = vmatpush1.msra.mxu0 0.0
  %2134 = vmatprep.subr.mxu0 0.0
  %2135 = vmatpush1.msra.mxu0 0.0
  %2136 = vmatprep.subr.mxu0 0.0
  %2137 = vmatpush1.msra.mxu0 0.0
  %2138 = vmatprep.subr.mxu0 0.0
  %2139 = vmatpush1.msra.mxu0 0.0
  %2140 = vmatprep.subr.mxu0 0.0
  %2141 = vmatpush1.msra.mxu0 0.0
  %2142 = vmatprep.subr.mxu0 0.0
  %2143 = vmatpush1.msra.mxu0 0.0
  %2144 = vmatprep.subr.mxu0 0.0
  %2145 = vmatpush1.msra.mxu0 0.0
  %2146 = vmatprep.subr.mxu0 0.0
  %2147 = vmatpush1.msra.mxu0 0.0
  %2148 = vmatprep.subr.mxu0 0.0
  %2149 = vmatpush1.msra.mxu0 0.0
  %2150 = vmatprep.subr.mxu0 0.0
  %2151 = vmatpush1.msra.mxu0 0.0
  %2152 = vmatprep.subr.mxu0 0.0
  %2153 = vmatpush1.msra.mxu0 0.0
  %2154 = vmatprep.subr.mxu0 0.0
  %2155 = vmatpush1.msra.mxu0 0.0
  %2156 = vmatprep.subr.mxu0 0.0
  %2157 = vmatpush1.msra.mxu0 0.0
  %2158 = vmatprep.subr.mxu0 0.0
  %2159 = vmatpush1.msra.mxu0 0.0
  %2160 = vmatprep.mubr.f32.mxu0 0.0
  %2161 = vmatmul.mubr.f32.gmra.mrb[0].mxu0 %v2094
  %v2162 = vpop.f32.mrb[0].mxu0
  %v2163 = vadd.f32 0.0, %v2162
  %v2164 = vpop.f32.mrb[0].mxu0
  %2165 = vdwg.mxu0
  %v2166 = vadd.f32 %v1958, %v2163
  %s2167 = scalar_lea.vmem %s3, 800
  %v2168 = vld [vmem:[%s2167] sm:$0xff]
  %v2169 = vld [vmem:[%s2167 + $0x8] sm:$0xff]
  %v2170 = vld [vmem:[%s2167 + $0x10] sm:$0xff]
  %v2171 = vld [vmem:[%s2167 + $0x18] sm:$0xff]
  %2173 = vrot.lane.b32.xlu0 %v2085, 32
  %v2174 = vpop.permute.xlu0 %2173
  %v2175 = vsel %vm504, %v2174, 0
  %2177 = vmatprep.subr.mxu0 0.0
  %2178 = vmatpush1.msra.mxu0 %v2168
  %2179 = vmatprep.subr.mxu0 0.0
  %2180 = vmatpush1.msra.mxu0 %v2169
  %2181 = vmatprep.subr.mxu0 0.0
  %2182 = vmatpush1.msra.mxu0 %v2170
  %2183 = vmatprep.subr.mxu0 0.0
  %2184 = vmatpush1.msra.mxu0 %v2171
  %2185 = vmatprep.subr.mxu0 0.0
  %2186 = vmatpush1.msra.mxu0 0.0
  %2187 = vmatprep.subr.mxu0 0.0
  %2188 = vmatpush1.msra.mxu0 0.0
  %2189 = vmatprep.subr.mxu0 0.0
  %2190 = vmatpush1.msra.mxu0 0.0
  %2191 = vmatprep.subr.mxu0 0.0
  %2192 = vmatpush1.msra.mxu0 0.0
  %2193 = vmatprep.subr.mxu0 0.0
  %2194 = vmatpush1.msra.mxu0 0.0
  %2195 = vmatprep.subr.mxu0 0.0
  %2196 = vmatpush1.msra.mxu0 0.0
  %2197 = vmatprep.subr.mxu0 0.0
  %2198 = vmatpush1.msra.mxu0 0.0
  %2199 = vmatprep.subr.mxu0 0.0
  %2200 = vmatpush1.msra.mxu0 0.0
  %2201 = vmatprep.subr.mxu0 0.0
  %2202 = vmatpush1.msra.mxu0 0.0
  %2203 = vmatprep.subr.mxu0 0.0
  %2204 = vmatpush1.msra.mxu0 0.0
  %2205 = vmatprep.subr.mxu0 0.0
  %2206 = vmatpush1.msra.mxu0 0.0
  %2207 = vmatprep.subr.mxu0 0.0
  %2208 = vmatpush1.msra.mxu0 0.0
  %2209 = vmatprep.subr.mxu0 0.0
  %2210 = vmatpush1.msra.mxu0 0.0
  %2211 = vmatprep.subr.mxu0 0.0
  %2212 = vmatpush1.msra.mxu0 0.0
  %2213 = vmatprep.subr.mxu0 0.0
  %2214 = vmatpush1.msra.mxu0 0.0
  %2215 = vmatprep.subr.mxu0 0.0
  %2216 = vmatpush1.msra.mxu0 0.0
  %2217 = vmatprep.subr.mxu0 0.0
  %2218 = vmatpush1.msra.mxu0 0.0
  %2219 = vmatprep.subr.mxu0 0.0
  %2220 = vmatpush1.msra.mxu0 0.0
  %2221 = vmatprep.subr.mxu0 0.0
  %2222 = vmatpush1.msra.mxu0 0.0
  %2223 = vmatprep.subr.mxu0 0.0
  %2224 = vmatpush1.msra.mxu0 0.0
  %2225 = vmatprep.subr.mxu0 0.0
  %2226 = vmatpush1.msra.mxu0 0.0
  %2227 = vmatprep.subr.mxu0 0.0
  %2228 = vmatpush1.msra.mxu0 0.0
  %2229 = vmatprep.subr.mxu0 0.0
  %2230 = vmatpush1.msra.mxu0 0.0
  %2231 = vmatprep.subr.mxu0 0.0
  %2232 = vmatpush1.msra.mxu0 0.0
  %2233 = vmatprep.subr.mxu0 0.0
  %2234 = vmatpush1.msra.mxu0 0.0
  %2235 = vmatprep.subr.mxu0 0.0
  %2236 = vmatpush1.msra.mxu0 0.0
  %2237 = vmatprep.subr.mxu0 0.0
  %2238 = vmatpush1.msra.mxu0 0.0
  %2239 = vmatprep.subr.mxu0 0.0
  %2240 = vmatpush1.msra.mxu0 0.0
  %2241 = vmatprep.mubr.f32.mxu0 0.0
  %2242 = vmatmul.mubr.f32.gmra.mrb[0].mxu0 %v2175
  %v2243 = vpop.f32.mrb[0].mxu0
  %v2244 = vadd.f32 0.0, %v2243
  %v2245 = vpop.f32.mrb[0].mxu0
  %2246 = vdwg.mxu0
  %v2247 = vadd.f32 %v2166, %v2244
  %v2248 = vld [vmem:[#allocation2 + $0x60] sm:$0xff]
  %v2249 = vld [vmem:[#allocation2 + $0x68] sm:$0xff]
  %2250 = vmatprep.subr.mxu0 0.0
  %2251 = vmatpush1.msra.mxu0 %v18
  %2252 = vmatprep.subr.mxu0 0.0
  %2253 = vmatpush1.msra.mxu0 %v19
  %2254 = vmatprep.subr.mxu0 0.0
  %2255 = vmatpush1.msra.mxu0 %v20
  %2256 = vmatprep.subr.mxu0 0.0
  %2257 = vmatpush1.msra.mxu0 %v21
  %2258 = vmatprep.subr.mxu0 0.0
  %2259 = vmatpush1.msra.mxu0 0.0
  %2260 = vmatprep.subr.mxu0 0.0
  %2261 = vmatpush1.msra.mxu0 0.0
  %2262 = vmatprep.subr.mxu0 0.0
  %2263 = vmatpush1.msra.mxu0 0.0
  %2264 = vmatprep.subr.mxu0 0.0
  %2265 = vmatpush1.msra.mxu0 0.0
  %2266 = vmatprep.subr.mxu0 0.0
  %2267 = vmatpush1.msra.mxu0 0.0
  %2268 = vmatprep.subr.mxu0 0.0
  %2269 = vmatpush1.msra.mxu0 0.0
  %2270 = vmatprep.subr.mxu0 0.0
  %2271 = vmatpush1.msra.mxu0 0.0
  %2272 = vmatprep.subr.mxu0 0.0
  %2273 = vmatpush1.msra.mxu0 0.0
  %2274 = vmatprep.subr.mxu0 0.0
  %2275 = vmatpush1.msra.mxu0 0.0
  %2276 = vmatprep.subr.mxu0 0.0
  %2277 = vmatpush1.msra.mxu0 0.0
  %2278 = vmatprep.subr.mxu0 0.0
  %2279 = vmatpush1.msra.mxu0 0.0
  %2280 = vmatprep.subr.mxu0 0.0
  %2281 = vmatpush1.msra.mxu0 0.0
  %2282 = vmatprep.subr.mxu0 0.0
  %2283 = vmatpush1.msra.mxu0 0.0
  %2284 = vmatprep.subr.mxu0 0.0
  %2285 = vmatpush1.msra.mxu0 0.0
  %2286 = vmatprep.subr.mxu0 0.0
  %2287 = vmatpush1.msra.mxu0 0.0
  %2288 = vmatprep.subr.mxu0 0.0
  %2289 = vmatpush1.msra.mxu0 0.0
  %2290 = vmatprep.subr.mxu0 0.0
  %2291 = vmatpush1.msra.mxu0 0.0
  %2292 = vmatprep.subr.mxu0 0.0
  %2293 = vmatpush1.msra.mxu0 0.0
  %2294 = vmatprep.subr.mxu0 0.0
  %2295 = vmatpush1.msra.mxu0 0.0
  %2296 = vmatprep.subr.mxu0 0.0
  %2297 = vmatpush1.msra.mxu0 0.0
  %2298 = vmatprep.subr.mxu0 0.0
  %2299 = vmatpush1.msra.mxu0 0.0
  %2300 = vmatprep.subr.mxu0 0.0
  %2301 = vmatpush1.msra.mxu0 0.0
  %2302 = vmatprep.subr.mxu0 0.0
  %2303 = vmatpush1.msra.mxu0 0.0
  %2304 = vmatprep.subr.mxu0 0.0
  %2305 = vmatpush1.msra.mxu0 0.0
  %2306 = vmatprep.subr.mxu0 0.0
  %2307 = vmatpush1.msra.mxu0 0.0
  %2308 = vmatprep.subr.mxu0 0.0
  %2309 = vmatpush1.msra.mxu0 0.0
  %2310 = vmatprep.subr.mxu0 0.0
  %2311 = vmatpush1.msra.mxu0 0.0
  %2312 = vmatprep.subr.mxu0 0.0
  %2313 = vmatpush1.msra.mxu0 0.0
  %2314 = vmatprep.mubr.f32.mxu0 0.0
  %2315 = vmatmul.mubr.f32.gmra.mrb[0].mxu0 %v2094
  %v2316 = vpop.f32.mrb[0].mxu0
  %v2317 = vadd.f32 0.0, %v2316
  %v2318 = vpop.f32.mrb[0].mxu0
  %2319 = vmatprep.mubr.f32.mxu0 0.0
  %2320 = vmatmul.mubr.f32.gmra.mrb[0].mxu0 %v2175
  %v2321 = vpop.f32.mrb[0].mxu0
  %v2322 = vadd.f32 0.0, %v2321
  %v2323 = vpop.f32.mrb[0].mxu0
  %2324 = vdwg.mxu0
  %v2325 = vadd.f32 %v2248, %v2317
  %v2326 = vadd.f32 %v2249, %v2322
  %v2327 = vxor.u32 %v2325, 2147483648
  %v2328 = vxor.u32 %v2326, 2147483648
  %v2329 = vmul.f32 %v2327, 1.442695
  %v2330 = vpow.pop %v2329
  %v2331 = vmul.f32 %v2328, 1.442695
  %v2332 = vpow.pop %v2331
  %v2333 = vadd.f32 %v2330, 1.0
  %v2334 = vadd.f32 %v2332, 1.0
  %v2335 = vrcp.pop %v2333
  %v2336 = vmul.f32 1.0, %v2335
  %v2337 = vrcp.pop %v2334
  %v2338 = vmul.f32 1.0, %v2337
  %v2339 = vtanh.pop %v2325
  %v2340 = vtanh.pop %v2326
  %v2341 = vmul.f32 %v2336, %v2072
  %v2342 = vmul.f32 %v2338, %v2073
  %2345 = vrot.lane.b32.xlu0 %v2339, 64
  %v2346 = vpop.permute.xlu0 %2345
  %2347 = vrot.lane.b32.xlu0 %v2340, 64
  %v2348 = vpop.permute.xlu0 %2347
  %v2351 = vmul.f32 %v2336, %v2346
  %v2352 = vmul.f32 %v2338, %v2348
  %2355 = vrot.lane.b32.xlu0 %v2351, 32
  %v2356 = vpop.permute.xlu0 %2355
  %2357 = vrot.lane.b32.xlu0 %v2352, 32
  %v2358 = vpop.permute.xlu0 %2357
  %v2361 = vadd.f32 %v2341, %v2356
  %v2362 = vadd.f32 %v2342, %v2358
  %v2363 = vtanh.pop %v2361
  %v2364 = vtanh.pop %v2362
  %2367 = vrot.lane.b32.xlu0 %v2363, 64
  %v2368 = vpop.permute.xlu0 %2367
  %2369 = vrot.lane.b32.xlu0 %v2364, 64
  %v2370 = vpop.permute.xlu0 %2369
  %v2373 = vmul.f32 %v2336, %v2368
  %v2374 = vmul.f32 %v2338, %v2370
  %s2375 = scalar_lea.vmem %s3, 192
  %v2376 = vld [vmem:[%s2375] sm:$0xff]
  %v2377 = vld [vmem:[%s2375 + $0x8] sm:$0xff]
  %v2378 = vld [vmem:[%s2375 + $0x10] sm:$0xff]
  %v2379 = vld [vmem:[%s2375 + $0x18] sm:$0xff]
  %2381 = vrot.lane.b32.xlu0 %v2373, 32
  %v2382 = vpop.permute.xlu0 %2381
  %v2383 = vsel %vm504, %v2382, 0
  %2385 = vmatprep.subr.mxu0 0.0
  %2386 = vmatpush1.msra.mxu0 %v2376
  %2387 = vmatprep.subr.mxu0 0.0
  %2388 = vmatpush1.msra.mxu0 %v2377
  %2389 = vmatprep.subr.mxu0 0.0
  %2390 = vmatpush1.msra.mxu0 %v2378
  %2391 = vmatprep.subr.mxu0 0.0
  %2392 = vmatpush1.msra.mxu0 %v2379
  %2393 = vmatprep.subr.mxu0 0.0
  %2394 = vmatpush1.msra.mxu0 0.0
  %2395 = vmatprep.subr.mxu0 0.0
  %2396 = vmatpush1.msra.mxu0 0.0
  %2397 = vmatprep.subr.mxu0 0.0
  %2398 = vmatpush1.msra.mxu0 0.0
  %2399 = vmatprep.subr.mxu0 0.0
  %2400 = vmatpush1.msra.mxu0 0.0
  %2401 = vmatprep.subr.mxu0 0.0
  %2402 = vmatpush1.msra.mxu0 0.0
  %2403 = vmatprep.subr.mxu0 0.0
  %2404 = vmatpush1.msra.mxu0 0.0
  %2405 = vmatprep.subr.mxu0 0.0
  %2406 = vmatpush1.msra.mxu0 0.0
  %2407 = vmatprep.subr.mxu0 0.0
  %2408 = vmatpush1.msra.mxu0 0.0
  %2409 = vmatprep.subr.mxu0 0.0
  %2410 = vmatpush1.msra.mxu0 0.0
  %2411 = vmatprep.subr.mxu0 0.0
  %2412 = vmatpush1.msra.mxu0 0.0
  %2413 = vmatprep.subr.mxu0 0.0
  %2414 = vmatpush1.msra.mxu0 0.0
  %2415 = vmatprep.subr.mxu0 0.0
  %2416 = vmatpush1.msra.mxu0 0.0
  %2417 = vmatprep.subr.mxu0 0.0
  %2418 = vmatpush1.msra.mxu0 0.0
  %2419 = vmatprep.subr.mxu0 0.0
  %2420 = vmatpush1.msra.mxu0 0.0
  %2421 = vmatprep.subr.mxu0 0.0
  %2422 = vmatpush1.msra.mxu0 0.0
  %2423 = vmatprep.subr.mxu0 0.0
  %2424 = vmatpush1.msra.mxu0 0.0
  %2425 = vmatprep.subr.mxu0 0.0
  %2426 = vmatpush1.msra.mxu0 0.0
  %2427 = vmatprep.subr.mxu0 0.0
  %2428 = vmatpush1.msra.mxu0 0.0
  %2429 = vmatprep.subr.mxu0 0.0
  %2430 = vmatpush1.msra.mxu0 0.0
  %2431 = vmatprep.subr.mxu0 0.0
  %2432 = vmatpush1.msra.mxu0 0.0
  %2433 = vmatprep.subr.mxu0 0.0
  %2434 = vmatpush1.msra.mxu0 0.0
  %2435 = vmatprep.subr.mxu0 0.0
  %2436 = vmatpush1.msra.mxu0 0.0
  %2437 = vmatprep.subr.mxu0 0.0
  %2438 = vmatpush1.msra.mxu0 0.0
  %2439 = vmatprep.subr.mxu0 0.0
  %2440 = vmatpush1.msra.mxu0 0.0
  %2441 = vmatprep.subr.mxu0 0.0
  %2442 = vmatpush1.msra.mxu0 0.0
  %2443 = vmatprep.subr.mxu0 0.0
  %2444 = vmatpush1.msra.mxu0 0.0
  %2445 = vmatprep.subr.mxu0 0.0
  %2446 = vmatpush1.msra.mxu0 0.0
  %2447 = vmatprep.subr.mxu0 0.0
  %2448 = vmatpush1.msra.mxu0 0.0
  %2449 = vmatprep.mubr.f32.mxu0 0.0
  %2450 = vmatmul.mubr.f32.gmra.mrb[0].mxu0 %v2383
  %v2451 = vpop.f32.mrb[0].mxu0
  %v2452 = vadd.f32 0.0, %v2451
  %v2453 = vpop.f32.mrb[0].mxu0
  %2454 = vdwg.mxu0
  %v2455 = vadd.f32 %v2247, %v2452
  %s2456 = scalar_lea.vmem %s3, 832
  %v2457 = vld [vmem:[%s2456] sm:$0xff]
  %v2458 = vld [vmem:[%s2456 + $0x8] sm:$0xff]
  %v2459 = vld [vmem:[%s2456 + $0x10] sm:$0xff]
  %v2460 = vld [vmem:[%s2456 + $0x18] sm:$0xff]
  %2462 = vrot.lane.b32.xlu0 %v2374, 32
  %v2463 = vpop.permute.xlu0 %2462
  %v2464 = vsel %vm504, %v2463, 0
  %2466 = vmatprep.subr.mxu0 0.0
  %2467 = vmatpush1.msra.mxu0 %v2457
  %2468 = vmatprep.subr.mxu0 0.0
  %2469 = vmatpush1.msra.mxu0 %v2458
  %2470 = vmatprep.subr.mxu0 0.0
  %2471 = vmatpush1.msra.mxu0 %v2459
  %2472 = vmatprep.subr.mxu0 0.0
  %2473 = vmatpush1.msra.mxu0 %v2460
  %2474 = vmatprep.subr.mxu0 0.0
  %2475 = vmatpush1.msra.mxu0 0.0
  %2476 = vmatprep.subr.mxu0 0.0
  %2477 = vmatpush1.msra.mxu0 0.0
  %2478 = vmatprep.subr.mxu0 0.0
  %2479 = vmatpush1.msra.mxu0 0.0
  %2480 = vmatprep.subr.mxu0 0.0
  %2481 = vmatpush1.msra.mxu0 0.0
  %2482 = vmatprep.subr.mxu0 0.0
  %2483 = vmatpush1.msra.mxu0 0.0
  %2484 = vmatprep.subr.mxu0 0.0
  %2485 = vmatpush1.msra.mxu0 0.0
  %2486 = vmatprep.subr.mxu0 0.0
  %2487 = vmatpush1.msra.mxu0 0.0
  %2488 = vmatprep.subr.mxu0 0.0
  %2489 = vmatpush1.msra.mxu0 0.0
  %2490 = vmatprep.subr.mxu0 0.0
  %2491 = vmatpush1.msra.mxu0 0.0
  %2492 = vmatprep.subr.mxu0 0.0
  %2493 = vmatpush1.msra.mxu0 0.0
  %2494 = vmatprep.subr.mxu0 0.0
  %2495 = vmatpush1.msra.mxu0 0.0
  %2496 = vmatprep.subr.mxu0 0.0
  %2497 = vmatpush1.msra.mxu0 0.0
  %2498 = vmatprep.subr.mxu0 0.0
  %2499 = vmatpush1.msra.mxu0 0.0
  %2500 = vmatprep.subr.mxu0 0.0
  %2501 = vmatpush1.msra.mxu0 0.0
  %2502 = vmatprep.subr.mxu0 0.0
  %2503 = vmatpush1.msra.mxu0 0.0
  %2504 = vmatprep.subr.mxu0 0.0
  %2505 = vmatpush1.msra.mxu0 0.0
  %2506 = vmatprep.subr.mxu0 0.0
  %2507 = vmatpush1.msra.mxu0 0.0
  %2508 = vmatprep.subr.mxu0 0.0
  %2509 = vmatpush1.msra.mxu0 0.0
  %2510 = vmatprep.subr.mxu0 0.0
  %2511 = vmatpush1.msra.mxu0 0.0
  %2512 = vmatprep.subr.mxu0 0.0
  %2513 = vmatpush1.msra.mxu0 0.0
  %2514 = vmatprep.subr.mxu0 0.0
  %2515 = vmatpush1.msra.mxu0 0.0
  %2516 = vmatprep.subr.mxu0 0.0
  %2517 = vmatpush1.msra.mxu0 0.0
  %2518 = vmatprep.subr.mxu0 0.0
  %2519 = vmatpush1.msra.mxu0 0.0
  %2520 = vmatprep.subr.mxu0 0.0
  %2521 = vmatpush1.msra.mxu0 0.0
  %2522 = vmatprep.subr.mxu0 0.0
  %2523 = vmatpush1.msra.mxu0 0.0
  %2524 = vmatprep.subr.mxu0 0.0
  %2525 = vmatpush1.msra.mxu0 0.0
  %2526 = vmatprep.subr.mxu0 0.0
  %2527 = vmatpush1.msra.mxu0 0.0
  %2528 = vmatprep.subr.mxu0 0.0
  %2529 = vmatpush1.msra.mxu0 0.0
  %2530 = vmatprep.mubr.f32.mxu0 0.0
  %2531 = vmatmul.mubr.f32.gmra.mrb[0].mxu0 %v2464
  %v2532 = vpop.f32.mrb[0].mxu0
  %v2533 = vadd.f32 0.0, %v2532
  %v2534 = vpop.f32.mrb[0].mxu0
  %2535 = vdwg.mxu0
  %v2536 = vadd.f32 %v2455, %v2533
  %v2537 = vld [vmem:[#allocation2 + $0x70] sm:$0xff]
  %v2538 = vld [vmem:[#allocation2 + $0x78] sm:$0xff]
  %2539 = vmatprep.subr.mxu0 0.0
  %2540 = vmatpush1.msra.mxu0 %v18
  %2541 = vmatprep.subr.mxu0 0.0
  %2542 = vmatpush1.msra.mxu0 %v19
  %2543 = vmatprep.subr.mxu0 0.0
  %2544 = vmatpush1.msra.mxu0 %v20
  %2545 = vmatprep.subr.mxu0 0.0
  %2546 = vmatpush1.msra.mxu0 %v21
  %2547 = vmatprep.subr.mxu0 0.0
  %2548 = vmatpush1.msra.mxu0 0.0
  %2549 = vmatprep.subr.mxu0 0.0
  %2550 = vmatpush1.msra.mxu0 0.0
  %2551 = vmatprep.subr.mxu0 0.0
  %2552 = vmatpush1.msra.mxu0 0.0
  %2553 = vmatprep.subr.mxu0 0.0
  %2554 = vmatpush1.msra.mxu0 0.0
  %2555 = vmatprep.subr.mxu0 0.0
  %2556 = vmatpush1.msra.mxu0 0.0
  %2557 = vmatprep.subr.mxu0 0.0
  %2558 = vmatpush1.msra.mxu0 0.0
  %2559 = vmatprep.subr.mxu0 0.0
  %2560 = vmatpush1.msra.mxu0 0.0
  %2561 = vmatprep.subr.mxu0 0.0
  %2562 = vmatpush1.msra.mxu0 0.0
  %2563 = vmatprep.subr.mxu0 0.0
  %2564 = vmatpush1.msra.mxu0 0.0
  %2565 = vmatprep.subr.mxu0 0.0
  %2566 = vmatpush1.msra.mxu0 0.0
  %2567 = vmatprep.subr.mxu0 0.0
  %2568 = vmatpush1.msra.mxu0 0.0
  %2569 = vmatprep.subr.mxu0 0.0
  %2570 = vmatpush1.msra.mxu0 0.0
  %2571 = vmatprep.subr.mxu0 0.0
  %2572 = vmatpush1.msra.mxu0 0.0
  %2573 = vmatprep.subr.mxu0 0.0
  %2574 = vmatpush1.msra.mxu0 0.0
  %2575 = vmatprep.subr.mxu0 0.0
  %2576 = vmatpush1.msra.mxu0 0.0
  %2577 = vmatprep.subr.mxu0 0.0
  %2578 = vmatpush1.msra.mxu0 0.0
  %2579 = vmatprep.subr.mxu0 0.0
  %2580 = vmatpush1.msra.mxu0 0.0
  %2581 = vmatprep.subr.mxu0 0.0
  %2582 = vmatpush1.msra.mxu0 0.0
  %2583 = vmatprep.subr.mxu0 0.0
  %2584 = vmatpush1.msra.mxu0 0.0
  %2585 = vmatprep.subr.mxu0 0.0
  %2586 = vmatpush1.msra.mxu0 0.0
  %2587 = vmatprep.subr.mxu0 0.0
  %2588 = vmatpush1.msra.mxu0 0.0
  %2589 = vmatprep.subr.mxu0 0.0
  %2590 = vmatpush1.msra.mxu0 0.0
  %2591 = vmatprep.subr.mxu0 0.0
  %2592 = vmatpush1.msra.mxu0 0.0
  %2593 = vmatprep.subr.mxu0 0.0
  %2594 = vmatpush1.msra.mxu0 0.0
  %2595 = vmatprep.subr.mxu0 0.0
  %2596 = vmatpush1.msra.mxu0 0.0
  %2597 = vmatprep.subr.mxu0 0.0
  %2598 = vmatpush1.msra.mxu0 0.0
  %2599 = vmatprep.subr.mxu0 0.0
  %2600 = vmatpush1.msra.mxu0 0.0
  %2601 = vmatprep.subr.mxu0 0.0
  %2602 = vmatpush1.msra.mxu0 0.0
  %2603 = vmatprep.mubr.f32.mxu0 0.0
  %2604 = vmatmul.mubr.f32.gmra.mrb[0].mxu0 %v2383
  %v2605 = vpop.f32.mrb[0].mxu0
  %v2606 = vadd.f32 0.0, %v2605
  %v2607 = vpop.f32.mrb[0].mxu0
  %2608 = vmatprep.mubr.f32.mxu0 0.0
  %2609 = vmatmul.mubr.f32.gmra.mrb[0].mxu0 %v2464
  %v2610 = vpop.f32.mrb[0].mxu0
  %v2611 = vadd.f32 0.0, %v2610
  %v2612 = vpop.f32.mrb[0].mxu0
  %2613 = vdwg.mxu0
  %v2614 = vadd.f32 %v2537, %v2606
  %v2615 = vadd.f32 %v2538, %v2611
  %v2616 = vxor.u32 %v2614, 2147483648
  %v2617 = vxor.u32 %v2615, 2147483648
  %v2618 = vmul.f32 %v2616, 1.442695
  %v2619 = vpow.pop %v2618
  %v2620 = vmul.f32 %v2617, 1.442695
  %v2621 = vpow.pop %v2620
  %v2622 = vadd.f32 %v2619, 1.0
  %v2623 = vadd.f32 %v2621, 1.0
  %v2624 = vrcp.pop %v2622
  %v2625 = vmul.f32 1.0, %v2624
  %v2626 = vrcp.pop %v2623
  %v2627 = vmul.f32 1.0, %v2626
  %v2628 = vtanh.pop %v2614
  %v2629 = vtanh.pop %v2615
  %v2630 = vmul.f32 %v2625, %v2361
  %v2631 = vmul.f32 %v2627, %v2362
  %2634 = vrot.lane.b32.xlu0 %v2628, 64
  %v2635 = vpop.permute.xlu0 %2634
  %2636 = vrot.lane.b32.xlu0 %v2629, 64
  %v2637 = vpop.permute.xlu0 %2636
  %v2640 = vmul.f32 %v2625, %v2635
  %v2641 = vmul.f32 %v2627, %v2637
  %2644 = vrot.lane.b32.xlu0 %v2640, 32
  %v2645 = vpop.permute.xlu0 %2644
  %2646 = vrot.lane.b32.xlu0 %v2641, 32
  %v2647 = vpop.permute.xlu0 %2646
  %v2650 = vadd.f32 %v2630, %v2645
  %v2651 = vadd.f32 %v2631, %v2647
  %v2652 = vtanh.pop %v2650
  %v2653 = vtanh.pop %v2651
  %2656 = vrot.lane.b32.xlu0 %v2652, 64
  %v2657 = vpop.permute.xlu0 %2656
  %2658 = vrot.lane.b32.xlu0 %v2653, 64
  %v2659 = vpop.permute.xlu0 %2658
  %v2662 = vmul.f32 %v2625, %v2657
  %v2663 = vmul.f32 %v2627, %v2659
  %s2664 = scalar_lea.vmem %s3, 224
  %v2665 = vld [vmem:[%s2664] sm:$0xff]
  %v2666 = vld [vmem:[%s2664 + $0x8] sm:$0xff]
  %v2667 = vld [vmem:[%s2664 + $0x10] sm:$0xff]
  %v2668 = vld [vmem:[%s2664 + $0x18] sm:$0xff]
  %2670 = vrot.lane.b32.xlu0 %v2662, 32
  %v2671 = vpop.permute.xlu0 %2670
  %v2672 = vsel %vm504, %v2671, 0
  %2674 = vmatprep.subr.mxu0 0.0
  %2675 = vmatpush1.msra.mxu0 %v2665
  %2676 = vmatprep.subr.mxu0 0.0
  %2677 = vmatpush1.msra.mxu0 %v2666
  %2678 = vmatprep.subr.mxu0 0.0
  %2679 = vmatpush1.msra.mxu0 %v2667
  %2680 = vmatprep.subr.mxu0 0.0
  %2681 = vmatpush1.msra.mxu0 %v2668
  %2682 = vmatprep.subr.mxu0 0.0
  %2683 = vmatpush1.msra.mxu0 0.0
  %2684 = vmatprep.subr.mxu0 0.0
  %2685 = vmatpush1.msra.mxu0 0.0
  %2686 = vmatprep.subr.mxu0 0.0
  %2687 = vmatpush1.msra.mxu0 0.0
  %2688 = vmatprep.subr.mxu0 0.0
  %2689 = vmatpush1.msra.mxu0 0.0
  %2690 = vmatprep.subr.mxu0 0.0
  %2691 = vmatpush1.msra.mxu0 0.0
  %2692 = vmatprep.subr.mxu0 0.0
  %2693 = vmatpush1.msra.mxu0 0.0
  %2694 = vmatprep.subr.mxu0 0.0
  %2695 = vmatpush1.msra.mxu0 0.0
  %2696 = vmatprep.subr.mxu0 0.0
  %2697 = vmatpush1.msra.mxu0 0.0
  %2698 = vmatprep.subr.mxu0 0.0
  %2699 = vmatpush1.msra.mxu0 0.0
  %2700 = vmatprep.subr.mxu0 0.0
  %2701 = vmatpush1.msra.mxu0 0.0
  %2702 = vmatprep.subr.mxu0 0.0
  %2703 = vmatpush1.msra.mxu0 0.0
  %2704 = vmatprep.subr.mxu0 0.0
  %2705 = vmatpush1.msra.mxu0 0.0
  %2706 = vmatprep.subr.mxu0 0.0
  %2707 = vmatpush1.msra.mxu0 0.0
  %2708 = vmatprep.subr.mxu0 0.0
  %2709 = vmatpush1.msra.mxu0 0.0
  %2710 = vmatprep.subr.mxu0 0.0
  %2711 = vmatpush1.msra.mxu0 0.0
  %2712 = vmatprep.subr.mxu0 0.0
  %2713 = vmatpush1.msra.mxu0 0.0
  %2714 = vmatprep.subr.mxu0 0.0
  %2715 = vmatpush1.msra.mxu0 0.0
  %2716 = vmatprep.subr.mxu0 0.0
  %2717 = vmatpush1.msra.mxu0 0.0
  %2718 = vmatprep.subr.mxu0 0.0
  %2719 = vmatpush1.msra.mxu0 0.0
  %2720 = vmatprep.subr.mxu0 0.0
  %2721 = vmatpush1.msra.mxu0 0.0
  %2722 = vmatprep.subr.mxu0 0.0
  %2723 = vmatpush1.msra.mxu0 0.0
  %2724 = vmatprep.subr.mxu0 0.0
  %2725 = vmatpush1.msra.mxu0 0.0
  %2726 = vmatprep.subr.mxu0 0.0
  %2727 = vmatpush1.msra.mxu0 0.0
  %2728 = vmatprep.subr.mxu0 0.0
  %2729 = vmatpush1.msra.mxu0 0.0
  %2730 = vmatprep.subr.mxu0 0.0
  %2731 = vmatpush1.msra.mxu0 0.0
  %2732 = vmatprep.subr.mxu0 0.0
  %2733 = vmatpush1.msra.mxu0 0.0
  %2734 = vmatprep.subr.mxu0 0.0
  %2735 = vmatpush1.msra.mxu0 0.0
  %2736 = vmatprep.subr.mxu0 0.0
  %2737 = vmatpush1.msra.mxu0 0.0
  %2738 = vmatprep.mubr.f32.mxu0 0.0
  %2739 = vmatmul.mubr.f32.gmra.mrb[0].mxu0 %v2672
  %v2740 = vpop.f32.mrb[0].mxu0
  %v2741 = vadd.f32 0.0, %v2740
  %v2742 = vpop.f32.mrb[0].mxu0
  %2743 = vdwg.mxu0
  %v2744 = vadd.f32 %v2536, %v2741
  %s2745 = scalar_lea.vmem %s3, 864
  %v2746 = vld [vmem:[%s2745] sm:$0xff]
  %v2747 = vld [vmem:[%s2745 + $0x8] sm:$0xff]
  %v2748 = vld [vmem:[%s2745 + $0x10] sm:$0xff]
  %v2749 = vld [vmem:[%s2745 + $0x18] sm:$0xff]
  %2751 = vrot.lane.b32.xlu0 %v2663, 32
  %v2752 = vpop.permute.xlu0 %2751
  %v2753 = vsel %vm504, %v2752, 0
  %2755 = vmatprep.subr.mxu0 0.0
  %2756 = vmatpush1.msra.mxu0 %v2746
  %2757 = vmatprep.subr.mxu0 0.0
  %2758 = vmatpush1.msra.mxu0 %v2747
  %2759 = vmatprep.subr.mxu0 0.0
  %2760 = vmatpush1.msra.mxu0 %v2748
  %2761 = vmatprep.subr.mxu0 0.0
  %2762 = vmatpush1.msra.mxu0 %v2749
  %2763 = vmatprep.subr.mxu0 0.0
  %2764 = vmatpush1.msra.mxu0 0.0
  %2765 = vmatprep.subr.mxu0 0.0
  %2766 = vmatpush1.msra.mxu0 0.0
  %2767 = vmatprep.subr.mxu0 0.0
  %2768 = vmatpush1.msra.mxu0 0.0
  %2769 = vmatprep.subr.mxu0 0.0
  %2770 = vmatpush1.msra.mxu0 0.0
  %2771 = vmatprep.subr.mxu0 0.0
  %2772 = vmatpush1.msra.mxu0 0.0
  %2773 = vmatprep.subr.mxu0 0.0
  %2774 = vmatpush1.msra.mxu0 0.0
  %2775 = vmatprep.subr.mxu0 0.0
  %2776 = vmatpush1.msra.mxu0 0.0
  %2777 = vmatprep.subr.mxu0 0.0
  %2778 = vmatpush1.msra.mxu0 0.0
  %2779 = vmatprep.subr.mxu0 0.0
  %2780 = vmatpush1.msra.mxu0 0.0
  %2781 = vmatprep.subr.mxu0 0.0
  %2782 = vmatpush1.msra.mxu0 0.0
  %2783 = vmatprep.subr.mxu0 0.0
  %2784 = vmatpush1.msra.mxu0 0.0
  %2785 = vmatprep.subr.mxu0 0.0
  %2786 = vmatpush1.msra.mxu0 0.0
  %2787 = vmatprep.subr.mxu0 0.0
  %2788 = vmatpush1.msra.mxu0 0.0
  %2789 = vmatprep.subr.mxu0 0.0
  %2790 = vmatpush1.msra.mxu0 0.0
  %2791 = vmatprep.subr.mxu0 0.0
  %2792 = vmatpush1.msra.mxu0 0.0
  %2793 = vmatprep.subr.mxu0 0.0
  %2794 = vmatpush1.msra.mxu0 0.0
  %2795 = vmatprep.subr.mxu0 0.0
  %2796 = vmatpush1.msra.mxu0 0.0
  %2797 = vmatprep.subr.mxu0 0.0
  %2798 = vmatpush1.msra.mxu0 0.0
  %2799 = vmatprep.subr.mxu0 0.0
  %2800 = vmatpush1.msra.mxu0 0.0
  %2801 = vmatprep.subr.mxu0 0.0
  %2802 = vmatpush1.msra.mxu0 0.0
  %2803 = vmatprep.subr.mxu0 0.0
  %2804 = vmatpush1.msra.mxu0 0.0
  %2805 = vmatprep.subr.mxu0 0.0
  %2806 = vmatpush1.msra.mxu0 0.0
  %2807 = vmatprep.subr.mxu0 0.0
  %2808 = vmatpush1.msra.mxu0 0.0
  %2809 = vmatprep.subr.mxu0 0.0
  %2810 = vmatpush1.msra.mxu0 0.0
  %2811 = vmatprep.subr.mxu0 0.0
  %2812 = vmatpush1.msra.mxu0 0.0
  %2813 = vmatprep.subr.mxu0 0.0
  %2814 = vmatpush1.msra.mxu0 0.0
  %2815 = vmatprep.subr.mxu0 0.0
  %2816 = vmatpush1.msra.mxu0 0.0
  %2817 = vmatprep.subr.mxu0 0.0
  %2818 = vmatpush1.msra.mxu0 0.0
  %2819 = vmatprep.mubr.f32.mxu0 0.0
  %2820 = vmatmul.mubr.f32.gmra.mrb[0].mxu0 %v2753
  %v2821 = vpop.f32.mrb[0].mxu0
  %v2822 = vadd.f32 0.0, %v2821
  %v2823 = vpop.f32.mrb[0].mxu0
  %2824 = vdwg.mxu0
  %v2825 = vadd.f32 %v2744, %v2822
  %v2826 = vld [vmem:[#allocation2 + $0x80] sm:$0xff]
  %v2827 = vld [vmem:[#allocation2 + $0x88] sm:$0xff]
  %2828 = vmatprep.subr.mxu0 0.0
  %2829 = vmatpush1.msra.mxu0 %v18
  %2830 = vmatprep.subr.mxu0 0.0
  %2831 = vmatpush1.msra.mxu0 %v19
  %2832 = vmatprep.subr.mxu0 0.0
  %2833 = vmatpush1.msra.mxu0 %v20
  %2834 = vmatprep.subr.mxu0 0.0
  %2835 = vmatpush1.msra.mxu0 %v21
  %2836 = vmatprep.subr.mxu0 0.0
  %2837 = vmatpush1.msra.mxu0 0.0
  %2838 = vmatprep.subr.mxu0 0.0
  %2839 = vmatpush1.msra.mxu0 0.0
  %2840 = vmatprep.subr.mxu0 0.0
  %2841 = vmatpush1.msra.mxu0 0.0
  %2842 = vmatprep.subr.mxu0 0.0
  %2843 = vmatpush1.msra.mxu0 0.0
  %2844 = vmatprep.subr.mxu0 0.0
  %2845 = vmatpush1.msra.mxu0 0.0
  %2846 = vmatprep.subr.mxu0 0.0
  %2847 = vmatpush1.msra.mxu0 0.0
  %2848 = vmatprep.subr.mxu0 0.0
  %2849 = vmatpush1.msra.mxu0 0.0
  %2850 = vmatprep.subr.mxu0 0.0
  %2851 = vmatpush1.msra.mxu0 0.0
  %2852 = vmatprep.subr.mxu0 0.0
  %2853 = vmatpush1.msra.mxu0 0.0
  %2854 = vmatprep.subr.mxu0 0.0
  %2855 = vmatpush1.msra.mxu0 0.0
  %2856 = vmatprep.subr.mxu0 0.0
  %2857 = vmatpush1.msra.mxu0 0.0
  %2858 = vmatprep.subr.mxu0 0.0
  %2859 = vmatpush1.msra.mxu0 0.0
  %2860 = vmatprep.subr.mxu0 0.0
  %2861 = vmatpush1.msra.mxu0 0.0
  %2862 = vmatprep.subr.mxu0 0.0
  %2863 = vmatpush1.msra.mxu0 0.0
  %2864 = vmatprep.subr.mxu0 0.0
  %2865 = vmatpush1.msra.mxu0 0.0
  %2866 = vmatprep.subr.mxu0 0.0
  %2867 = vmatpush1.msra.mxu0 0.0
  %2868 = vmatprep.subr.mxu0 0.0
  %2869 = vmatpush1.msra.mxu0 0.0
  %2870 = vmatprep.subr.mxu0 0.0
  %2871 = vmatpush1.msra.mxu0 0.0
  %2872 = vmatprep.subr.mxu0 0.0
  %2873 = vmatpush1.msra.mxu0 0.0
  %2874 = vmatprep.subr.mxu0 0.0
  %2875 = vmatpush1.msra.mxu0 0.0
  %2876 = vmatprep.subr.mxu0 0.0
  %2877 = vmatpush1.msra.mxu0 0.0
  %2878 = vmatprep.subr.mxu0 0.0
  %2879 = vmatpush1.msra.mxu0 0.0
  %2880 = vmatprep.subr.mxu0 0.0
  %2881 = vmatpush1.msra.mxu0 0.0
  %2882 = vmatprep.subr.mxu0 0.0
  %2883 = vmatpush1.msra.mxu0 0.0
  %2884 = vmatprep.subr.mxu0 0.0
  %2885 = vmatpush1.msra.mxu0 0.0
  %2886 = vmatprep.subr.mxu0 0.0
  %2887 = vmatpush1.msra.mxu0 0.0
  %2888 = vmatprep.subr.mxu0 0.0
  %2889 = vmatpush1.msra.mxu0 0.0
  %2890 = vmatprep.subr.mxu0 0.0
  %2891 = vmatpush1.msra.mxu0 0.0
  %2892 = vmatprep.mubr.f32.mxu0 0.0
  %2893 = vmatmul.mubr.f32.gmra.mrb[0].mxu0 %v2672
  %v2894 = vpop.f32.mrb[0].mxu0
  %v2895 = vadd.f32 0.0, %v2894
  %v2896 = vpop.f32.mrb[0].mxu0
  %2897 = vmatprep.mubr.f32.mxu0 0.0
  %2898 = vmatmul.mubr.f32.gmra.mrb[0].mxu0 %v2753
  %v2899 = vpop.f32.mrb[0].mxu0
  %v2900 = vadd.f32 0.0, %v2899
  %v2901 = vpop.f32.mrb[0].mxu0
  %2902 = vdwg.mxu0
  %v2903 = vadd.f32 %v2826, %v2895
  %v2904 = vadd.f32 %v2827, %v2900
  %v2905 = vxor.u32 %v2903, 2147483648
  %v2906 = vxor.u32 %v2904, 2147483648
  %v2907 = vmul.f32 %v2905, 1.442695
  %v2908 = vpow.pop %v2907
  %v2909 = vmul.f32 %v2906, 1.442695
  %v2910 = vpow.pop %v2909
  %v2911 = vadd.f32 %v2908, 1.0
  %v2912 = vadd.f32 %v2910, 1.0
  %v2913 = vrcp.pop %v2911
  %v2914 = vmul.f32 1.0, %v2913
  %v2915 = vrcp.pop %v2912
  %v2916 = vmul.f32 1.0, %v2915
  %v2917 = vtanh.pop %v2903
  %v2918 = vtanh.pop %v2904
  %v2919 = vmul.f32 %v2914, %v2650
  %v2920 = vmul.f32 %v2916, %v2651
  %2923 = vrot.lane.b32.xlu0 %v2917, 64
  %v2924 = vpop.permute.xlu0 %2923
  %2925 = vrot.lane.b32.xlu0 %v2918, 64
  %v2926 = vpop.permute.xlu0 %2925
  %v2929 = vmul.f32 %v2914, %v2924
  %v2930 = vmul.f32 %v2916, %v2926
  %2933 = vrot.lane.b32.xlu0 %v2929, 32
  %v2934 = vpop.permute.xlu0 %2933
  %2935 = vrot.lane.b32.xlu0 %v2930, 32
  %v2936 = vpop.permute.xlu0 %2935
  %v2939 = vadd.f32 %v2919, %v2934
  %v2940 = vadd.f32 %v2920, %v2936
  %v2941 = vtanh.pop %v2939
  %v2942 = vtanh.pop %v2940
  %2945 = vrot.lane.b32.xlu0 %v2941, 64
  %v2946 = vpop.permute.xlu0 %2945
  %2947 = vrot.lane.b32.xlu0 %v2942, 64
  %v2948 = vpop.permute.xlu0 %2947
  %v2951 = vmul.f32 %v2914, %v2946
  %v2952 = vmul.f32 %v2916, %v2948
  %s2953 = scalar_lea.vmem %s3, 256
  %v2954 = vld [vmem:[%s2953] sm:$0xff]
  %v2955 = vld [vmem:[%s2953 + $0x8] sm:$0xff]
  %v2956 = vld [vmem:[%s2953 + $0x10] sm:$0xff]
  %v2957 = vld [vmem:[%s2953 + $0x18] sm:$0xff]
  %2959 = vrot.lane.b32.xlu0 %v2951, 32
  %v2960 = vpop.permute.xlu0 %2959
  %v2961 = vsel %vm504, %v2960, 0
  %2963 = vmatprep.subr.mxu0 0.0
  %2964 = vmatpush1.msra.mxu0 %v2954
  %2965 = vmatprep.subr.mxu0 0.0
  %2966 = vmatpush1.msra.mxu0 %v2955
  %2967 = vmatprep.subr.mxu0 0.0
  %2968 = vmatpush1.msra.mxu0 %v2956
  %2969 = vmatprep.subr.mxu0 0.0
  %2970 = vmatpush1.msra.mxu0 %v2957
  %2971 = vmatprep.subr.mxu0 0.0
  %2972 = vmatpush1.msra.mxu0 0.0
  %2973 = vmatprep.subr.mxu0 0.0
  %2974 = vmatpush1.msra.mxu0 0.0
  %2975 = vmatprep.subr.mxu0 0.0
  %2976 = vmatpush1.msra.mxu0 0.0
  %2977 = vmatprep.subr.mxu0 0.0
  %2978 = vmatpush1.msra.mxu0 0.0
  %2979 = vmatprep.subr.mxu0 0.0
  %2980 = vmatpush1.msra.mxu0 0.0
  %2981 = vmatprep.subr.mxu0 0.0
  %2982 = vmatpush1.msra.mxu0 0.0
  %2983 = vmatprep.subr.mxu0 0.0
  %2984 = vmatpush1.msra.mxu0 0.0
  %2985 = vmatprep.subr.mxu0 0.0
  %2986 = vmatpush1.msra.mxu0 0.0
  %2987 = vmatprep.subr.mxu0 0.0
  %2988 = vmatpush1.msra.mxu0 0.0
  %2989 = vmatprep.subr.mxu0 0.0
  %2990 = vmatpush1.msra.mxu0 0.0
  %2991 = vmatprep.subr.mxu0 0.0
  %2992 = vmatpush1.msra.mxu0 0.0
  %2993 = vmatprep.subr.mxu0 0.0
  %2994 = vmatpush1.msra.mxu0 0.0
  %2995 = vmatprep.subr.mxu0 0.0
  %2996 = vmatpush1.msra.mxu0 0.0
  %2997 = vmatprep.subr.mxu0 0.0
  %2998 = vmatpush1.msra.mxu0 0.0
  %2999 = vmatprep.subr.mxu0 0.0
  %3000 = vmatpush1.msra.mxu0 0.0
  %3001 = vmatprep.subr.mxu0 0.0
  %3002 = vmatpush1.msra.mxu0 0.0
  %3003 = vmatprep.subr.mxu0 0.0
  %3004 = vmatpush1.msra.mxu0 0.0
  %3005 = vmatprep.subr.mxu0 0.0
  %3006 = vmatpush1.msra.mxu0 0.0
  %3007 = vmatprep.subr.mxu0 0.0
  %3008 = vmatpush1.msra.mxu0 0.0
  %3009 = vmatprep.subr.mxu0 0.0
  %3010 = vmatpush1.msra.mxu0 0.0
  %3011 = vmatprep.subr.mxu0 0.0
  %3012 = vmatpush1.msra.mxu0 0.0
  %3013 = vmatprep.subr.mxu0 0.0
  %3014 = vmatpush1.msra.mxu0 0.0
  %3015 = vmatprep.subr.mxu0 0.0
  %3016 = vmatpush1.msra.mxu0 0.0
  %3017 = vmatprep.subr.mxu0 0.0
  %3018 = vmatpush1.msra.mxu0 0.0
  %3019 = vmatprep.subr.mxu0 0.0
  %3020 = vmatpush1.msra.mxu0 0.0
  %3021 = vmatprep.subr.mxu0 0.0
  %3022 = vmatpush1.msra.mxu0 0.0
  %3023 = vmatprep.subr.mxu0 0.0
  %3024 = vmatpush1.msra.mxu0 0.0
  %3025 = vmatprep.subr.mxu0 0.0
  %3026 = vmatpush1.msra.mxu0 0.0
  %3027 = vmatprep.mubr.f32.mxu0 0.0
  %3028 = vmatmul.mubr.f32.gmra.mrb[0].mxu0 %v2961
  %v3029 = vpop.f32.mrb[0].mxu0
  %v3030 = vadd.f32 0.0, %v3029
  %v3031 = vpop.f32.mrb[0].mxu0
  %3032 = vdwg.mxu0
  %v3033 = vadd.f32 %v2825, %v3030
  %s3034 = scalar_lea.vmem %s3, 896
  %v3035 = vld [vmem:[%s3034] sm:$0xff]
  %v3036 = vld [vmem:[%s3034 + $0x8] sm:$0xff]
  %v3037 = vld [vmem:[%s3034 + $0x10] sm:$0xff]
  %v3038 = vld [vmem:[%s3034 + $0x18] sm:$0xff]
  %3040 = vrot.lane.b32.xlu0 %v2952, 32
  %v3041 = vpop.permute.xlu0 %3040
  %v3042 = vsel %vm504, %v3041, 0
  %3044 = vmatprep.subr.mxu0 0.0
  %3045 = vmatpush1.msra.mxu0 %v3035
  %3046 = vmatprep.subr.mxu0 0.0
  %3047 = vmatpush1.msra.mxu0 %v3036
  %3048 = vmatprep.subr.mxu0 0.0
  %3049 = vmatpush1.msra.mxu0 %v3037
  %3050 = vmatprep.subr.mxu0 0.0
  %3051 = vmatpush1.msra.mxu0 %v3038
  %3052 = vmatprep.subr.mxu0 0.0
  %3053 = vmatpush1.msra.mxu0 0.0
  %3054 = vmatprep.subr.mxu0 0.0
  %3055 = vmatpush1.msra.mxu0 0.0
  %3056 = vmatprep.subr.mxu0 0.0
  %3057 = vmatpush1.msra.mxu0 0.0
  %3058 = vmatprep.subr.mxu0 0.0
  %3059 = vmatpush1.msra.mxu0 0.0
  %3060 = vmatprep.subr.mxu0 0.0
  %3061 = vmatpush1.msra.mxu0 0.0
  %3062 = vmatprep.subr.mxu0 0.0
  %3063 = vmatpush1.msra.mxu0 0.0
  %3064 = vmatprep.subr.mxu0 0.0
  %3065 = vmatpush1.msra.mxu0 0.0
  %3066 = vmatprep.subr.mxu0 0.0
  %3067 = vmatpush1.msra.mxu0 0.0
  %3068 = vmatprep.subr.mxu0 0.0
  %3069 = vmatpush1.msra.mxu0 0.0
  %3070 = vmatprep.subr.mxu0 0.0
  %3071 = vmatpush1.msra.mxu0 0.0
  %3072 = vmatprep.subr.mxu0 0.0
  %3073 = vmatpush1.msra.mxu0 0.0
  %3074 = vmatprep.subr.mxu0 0.0
  %3075 = vmatpush1.msra.mxu0 0.0
  %3076 = vmatprep.subr.mxu0 0.0
  %3077 = vmatpush1.msra.mxu0 0.0
  %3078 = vmatprep.subr.mxu0 0.0
  %3079 = vmatpush1.msra.mxu0 0.0
  %3080 = vmatprep.subr.mxu0 0.0
  %3081 = vmatpush1.msra.mxu0 0.0
  %3082 = vmatprep.subr.mxu0 0.0
  %3083 = vmatpush1.msra.mxu0 0.0
  %3084 = vmatprep.subr.mxu0 0.0
  %3085 = vmatpush1.msra.mxu0 0.0
  %3086 = vmatprep.subr.mxu0 0.0
  %3087 = vmatpush1.msra.mxu0 0.0
  %3088 = vmatprep.subr.mxu0 0.0
  %3089 = vmatpush1.msra.mxu0 0.0
  %3090 = vmatprep.subr.mxu0 0.0
  %3091 = vmatpush1.msra.mxu0 0.0
  %3092 = vmatprep.subr.mxu0 0.0
  %3093 = vmatpush1.msra.mxu0 0.0
  %3094 = vmatprep.subr.mxu0 0.0
  %3095 = vmatpush1.msra.mxu0 0.0
  %3096 = vmatprep.subr.mxu0 0.0
  %3097 = vmatpush1.msra.mxu0 0.0
  %3098 = vmatprep.subr.mxu0 0.0
  %3099 = vmatpush1.msra.mxu0 0.0
  %3100 = vmatprep.subr.mxu0 0.0
  %3101 = vmatpush1.msra.mxu0 0.0
  %3102 = vmatprep.subr.mxu0 0.0
  %3103 = vmatpush1.msra.mxu0 0.0
  %3104 = vmatprep.subr.mxu0 0.0
  %3105 = vmatpush1.msra.mxu0 0.0
  %3106 = vmatprep.subr.mxu0 0.0
  %3107 = vmatpush1.msra.mxu0 0.0
  %3108 = vmatprep.mubr.f32.mxu0 0.0
  %3109 = vmatmul.mubr.f32.gmra.mrb[0].mxu0 %v3042
  %v3110 = vpop.f32.mrb[0].mxu0
  %v3111 = vadd.f32 0.0, %v3110
  %v3112 = vpop.f32.mrb[0].mxu0
  %3113 = vdwg.mxu0
  %v3114 = vadd.f32 %v3033, %v3111
  %v3115 = vld [vmem:[#allocation2 + $0x90] sm:$0xff]
  %v3116 = vld [vmem:[#allocation2 + $0x98] sm:$0xff]
  %3117 = vmatprep.subr.mxu0 0.0
  %3118 = vmatpush1.msra.mxu0 %v18
  %3119 = vmatprep.subr.mxu0 0.0
  %3120 = vmatpush1.msra.mxu0 %v19
  %3121 = vmatprep.subr.mxu0 0.0
  %3122 = vmatpush1.msra.mxu0 %v20
  %3123 = vmatprep.subr.mxu0 0.0
  %3124 = vmatpush1.msra.mxu0 %v21
  %3125 = vmatprep.subr.mxu0 0.0
  %3126 = vmatpush1.msra.mxu0 0.0
  %3127 = vmatprep.subr.mxu0 0.0
  %3128 = vmatpush1.msra.mxu0 0.0
  %3129 = vmatprep.subr.mxu0 0.0
  %3130 = vmatpush1.msra.mxu0 0.0
  %3131 = vmatprep.subr.mxu0 0.0
  %3132 = vmatpush1.msra.mxu0 0.0
  %3133 = vmatprep.subr.mxu0 0.0
  %3134 = vmatpush1.msra.mxu0 0.0
  %3135 = vmatprep.subr.mxu0 0.0
  %3136 = vmatpush1.msra.mxu0 0.0
  %3137 = vmatprep.subr.mxu0 0.0
  %3138 = vmatpush1.msra.mxu0 0.0
  %3139 = vmatprep.subr.mxu0 0.0
  %3140 = vmatpush1.msra.mxu0 0.0
  %3141 = vmatprep.subr.mxu0 0.0
  %3142 = vmatpush1.msra.mxu0 0.0
  %3143 = vmatprep.subr.mxu0 0.0
  %3144 = vmatpush1.msra.mxu0 0.0
  %3145 = vmatprep.subr.mxu0 0.0
  %3146 = vmatpush1.msra.mxu0 0.0
  %3147 = vmatprep.subr.mxu0 0.0
  %3148 = vmatpush1.msra.mxu0 0.0
  %3149 = vmatprep.subr.mxu0 0.0
  %3150 = vmatpush1.msra.mxu0 0.0
  %3151 = vmatprep.subr.mxu0 0.0
  %3152 = vmatpush1.msra.mxu0 0.0
  %3153 = vmatprep.subr.mxu0 0.0
  %3154 = vmatpush1.msra.mxu0 0.0
  %3155 = vmatprep.subr.mxu0 0.0
  %3156 = vmatpush1.msra.mxu0 0.0
  %3157 = vmatprep.subr.mxu0 0.0
  %3158 = vmatpush1.msra.mxu0 0.0
  %3159 = vmatprep.subr.mxu0 0.0
  %3160 = vmatpush1.msra.mxu0 0.0
  %3161 = vmatprep.subr.mxu0 0.0
  %3162 = vmatpush1.msra.mxu0 0.0
  %3163 = vmatprep.subr.mxu0 0.0
  %3164 = vmatpush1.msra.mxu0 0.0
  %3165 = vmatprep.subr.mxu0 0.0
  %3166 = vmatpush1.msra.mxu0 0.0
  %3167 = vmatprep.subr.mxu0 0.0
  %3168 = vmatpush1.msra.mxu0 0.0
  %3169 = vmatprep.subr.mxu0 0.0
  %3170 = vmatpush1.msra.mxu0 0.0
  %3171 = vmatprep.subr.mxu0 0.0
  %3172 = vmatpush1.msra.mxu0 0.0
  %3173 = vmatprep.subr.mxu0 0.0
  %3174 = vmatpush1.msra.mxu0 0.0
  %3175 = vmatprep.subr.mxu0 0.0
  %3176 = vmatpush1.msra.mxu0 0.0
  %3177 = vmatprep.subr.mxu0 0.0
  %3178 = vmatpush1.msra.mxu0 0.0
  %3179 = vmatprep.subr.mxu0 0.0
  %3180 = vmatpush1.msra.mxu0 0.0
  %3181 = vmatprep.mubr.f32.mxu0 0.0
  %3182 = vmatmul.mubr.f32.gmra.mrb[0].mxu0 %v2961
  %v3183 = vpop.f32.mrb[0].mxu0
  %v3184 = vadd.f32 0.0, %v3183
  %v3185 = vpop.f32.mrb[0].mxu0
  %3186 = vmatprep.mubr.f32.mxu0 0.0
  %3187 = vmatmul.mubr.f32.gmra.mrb[0].mxu0 %v3042
  %v3188 = vpop.f32.mrb[0].mxu0
  %v3189 = vadd.f32 0.0, %v3188
  %v3190 = vpop.f32.mrb[0].mxu0
  %3191 = vdwg.mxu0
  %v3192 = vadd.f32 %v3115, %v3184
  %v3193 = vadd.f32 %v3116, %v3189
  %v3194 = vxor.u32 %v3192, 2147483648
  %v3195 = vxor.u32 %v3193, 2147483648
  %v3196 = vmul.f32 %v3194, 1.442695
  %v3197 = vpow.pop %v3196
  %v3198 = vmul.f32 %v3195, 1.442695
  %v3199 = vpow.pop %v3198
  %v3200 = vadd.f32 %v3197, 1.0
  %v3201 = vadd.f32 %v3199, 1.0
  %v3202 = vrcp.pop %v3200
  %v3203 = vmul.f32 1.0, %v3202
  %v3204 = vrcp.pop %v3201
  %v3205 = vmul.f32 1.0, %v3204
  %v3206 = vtanh.pop %v3192
  %v3207 = vtanh.pop %v3193
  %v3208 = vmul.f32 %v3203, %v2939
  %v3209 = vmul.f32 %v3205, %v2940
  %3212 = vrot.lane.b32.xlu0 %v3206, 64
  %v3213 = vpop.permute.xlu0 %3212
  %3214 = vrot.lane.b32.xlu0 %v3207, 64
  %v3215 = vpop.permute.xlu0 %3214
  %v3218 = vmul.f32 %v3203, %v3213
  %v3219 = vmul.f32 %v3205, %v3215
  %3222 = vrot.lane.b32.xlu0 %v3218, 32
  %v3223 = vpop.permute.xlu0 %3222
  %3224 = vrot.lane.b32.xlu0 %v3219, 32
  %v3225 = vpop.permute.xlu0 %3224
  %v3228 = vadd.f32 %v3208, %v3223
  %v3229 = vadd.f32 %v3209, %v3225
  %v3230 = vtanh.pop %v3228
  %v3231 = vtanh.pop %v3229
  %3234 = vrot.lane.b32.xlu0 %v3230, 64
  %v3235 = vpop.permute.xlu0 %3234
  %3236 = vrot.lane.b32.xlu0 %v3231, 64
  %v3237 = vpop.permute.xlu0 %3236
  %v3240 = vmul.f32 %v3203, %v3235
  %v3241 = vmul.f32 %v3205, %v3237
  %s3242 = scalar_lea.vmem %s3, 288
  %v3243 = vld [vmem:[%s3242] sm:$0xff]
  %v3244 = vld [vmem:[%s3242 + $0x8] sm:$0xff]
  %v3245 = vld [vmem:[%s3242 + $0x10] sm:$0xff]
  %v3246 = vld [vmem:[%s3242 + $0x18] sm:$0xff]
  %3248 = vrot.lane.b32.xlu0 %v3240, 32
  %v3249 = vpop.permute.xlu0 %3248
  %v3250 = vsel %vm504, %v3249, 0
  %3252 = vmatprep.subr.mxu0 0.0
  %3253 = vmatpush1.msra.mxu0 %v3243
  %3254 = vmatprep.subr.mxu0 0.0
  %3255 = vmatpush1.msra.mxu0 %v3244
  %3256 = vmatprep.subr.mxu0 0.0
  %3257 = vmatpush1.msra.mxu0 %v3245
  %3258 = vmatprep.subr.mxu0 0.0
  %3259 = vmatpush1.msra.mxu0 %v3246
  %3260 = vmatprep.subr.mxu0 0.0
  %3261 = vmatpush1.msra.mxu0 0.0
  %3262 = vmatprep.subr.mxu0 0.0
  %3263 = vmatpush1.msra.mxu0 0.0
  %3264 = vmatprep.subr.mxu0 0.0
  %3265 = vmatpush1.msra.mxu0 0.0
  %3266 = vmatprep.subr.mxu0 0.0
  %3267 = vmatpush1.msra.mxu0 0.0
  %3268 = vmatprep.subr.mxu0 0.0
  %3269 = vmatpush1.msra.mxu0 0.0
  %3270 = vmatprep.subr.mxu0 0.0
  %3271 = vmatpush1.msra.mxu0 0.0
  %3272 = vmatprep.subr.mxu0 0.0
  %3273 = vmatpush1.msra.mxu0 0.0
  %3274 = vmatprep.subr.mxu0 0.0
  %3275 = vmatpush1.msra.mxu0 0.0
  %3276 = vmatprep.subr.mxu0 0.0
  %3277 = vmatpush1.msra.mxu0 0.0
  %3278 = vmatprep.subr.mxu0 0.0
  %3279 = vmatpush1.msra.mxu0 0.0
  %3280 = vmatprep.subr.mxu0 0.0
  %3281 = vmatpush1.msra.mxu0 0.0
  %3282 = vmatprep.subr.mxu0 0.0
  %3283 = vmatpush1.msra.mxu0 0.0
  %3284 = vmatprep.subr.mxu0 0.0
  %3285 = vmatpush1.msra.mxu0 0.0
  %3286 = vmatprep.subr.mxu0 0.0
  %3287 = vmatpush1.msra.mxu0 0.0
  %3288 = vmatprep.subr.mxu0 0.0
  %3289 = vmatpush1.msra.mxu0 0.0
  %3290 = vmatprep.subr.mxu0 0.0
  %3291 = vmatpush1.msra.mxu0 0.0
  %3292 = vmatprep.subr.mxu0 0.0
  %3293 = vmatpush1.msra.mxu0 0.0
  %3294 = vmatprep.subr.mxu0 0.0
  %3295 = vmatpush1.msra.mxu0 0.0
  %3296 = vmatprep.subr.mxu0 0.0
  %3297 = vmatpush1.msra.mxu0 0.0
  %3298 = vmatprep.subr.mxu0 0.0
  %3299 = vmatpush1.msra.mxu0 0.0
  %3300 = vmatprep.subr.mxu0 0.0
  %3301 = vmatpush1.msra.mxu0 0.0
  %3302 = vmatprep.subr.mxu0 0.0
  %3303 = vmatpush1.msra.mxu0 0.0
  %3304 = vmatprep.subr.mxu0 0.0
  %3305 = vmatpush1.msra.mxu0 0.0
  %3306 = vmatprep.subr.mxu0 0.0
  %3307 = vmatpush1.msra.mxu0 0.0
  %3308 = vmatprep.subr.mxu0 0.0
  %3309 = vmatpush1.msra.mxu0 0.0
  %3310 = vmatprep.subr.mxu0 0.0
  %3311 = vmatpush1.msra.mxu0 0.0
  %3312 = vmatprep.subr.mxu0 0.0
  %3313 = vmatpush1.msra.mxu0 0.0
  %3314 = vmatprep.subr.mxu0 0.0
  %3315 = vmatpush1.msra.mxu0 0.0
  %3316 = vmatprep.mubr.f32.mxu0 0.0
  %3317 = vmatmul.mubr.f32.gmra.mrb[0].mxu0 %v3250
  %v3318 = vpop.f32.mrb[0].mxu0
  %v3319 = vadd.f32 0.0, %v3318
  %v3320 = vpop.f32.mrb[0].mxu0
  %3321 = vdwg.mxu0
  %v3322 = vadd.f32 %v3114, %v3319
  %s3323 = scalar_lea.vmem %s3, 928
  %v3324 = vld [vmem:[%s3323] sm:$0xff]
  %v3325 = vld [vmem:[%s3323 + $0x8] sm:$0xff]
  %v3326 = vld [vmem:[%s3323 + $0x10] sm:$0xff]
  %v3327 = vld [vmem:[%s3323 + $0x18] sm:$0xff]
  %3329 = vrot.lane.b32.xlu0 %v3241, 32
  %v3330 = vpop.permute.xlu0 %3329
  %v3331 = vsel %vm504, %v3330, 0
  %3333 = vmatprep.subr.mxu0 0.0
  %3334 = vmatpush1.msra.mxu0 %v3324
  %3335 = vmatprep.subr.mxu0 0.0
  %3336 = vmatpush1.msra.mxu0 %v3325
  %3337 = vmatprep.subr.mxu0 0.0
  %3338 = vmatpush1.msra.mxu0 %v3326
  %3339 = vmatprep.subr.mxu0 0.0
  %3340 = vmatpush1.msra.mxu0 %v3327
  %3341 = vmatprep.subr.mxu0 0.0
  %3342 = vmatpush1.msra.mxu0 0.0
  %3343 = vmatprep.subr.mxu0 0.0
  %3344 = vmatpush1.msra.mxu0 0.0
  %3345 = vmatprep.subr.mxu0 0.0
  %3346 = vmatpush1.msra.mxu0 0.0
  %3347 = vmatprep.subr.mxu0 0.0
  %3348 = vmatpush1.msra.mxu0 0.0
  %3349 = vmatprep.subr.mxu0 0.0
  %3350 = vmatpush1.msra.mxu0 0.0
  %3351 = vmatprep.subr.mxu0 0.0
  %3352 = vmatpush1.msra.mxu0 0.0
  %3353 = vmatprep.subr.mxu0 0.0
  %3354 = vmatpush1.msra.mxu0 0.0
  %3355 = vmatprep.subr.mxu0 0.0
  %3356 = vmatpush1.msra.mxu0 0.0
  %3357 = vmatprep.subr.mxu0 0.0
  %3358 = vmatpush1.msra.mxu0 0.0
  %3359 = vmatprep.subr.mxu0 0.0
  %3360 = vmatpush1.msra.mxu0 0.0
  %3361 = vmatprep.subr.mxu0 0.0
  %3362 = vmatpush1.msra.mxu0 0.0
  %3363 = vmatprep.subr.mxu0 0.0
  %3364 = vmatpush1.msra.mxu0 0.0
  %3365 = vmatprep.subr.mxu0 0.0
  %3366 = vmatpush1.msra.mxu0 0.0
  %3367 = vmatprep.subr.mxu0 0.0
  %3368 = vmatpush1.msra.mxu0 0.0
  %3369 = vmatprep.subr.mxu0 0.0
  %3370 = vmatpush1.msra.mxu0 0.0
  %3371 = vmatprep.subr.mxu0 0.0
  %3372 = vmatpush1.msra.mxu0 0.0
  %3373 = vmatprep.subr.mxu0 0.0
  %3374 = vmatpush1.msra.mxu0 0.0
  %3375 = vmatprep.subr.mxu0 0.0
  %3376 = vmatpush1.msra.mxu0 0.0
  %3377 = vmatprep.subr.mxu0 0.0
  %3378 = vmatpush1.msra.mxu0 0.0
  %3379 = vmatprep.subr.mxu0 0.0
  %3380 = vmatpush1.msra.mxu0 0.0
  %3381 = vmatprep.subr.mxu0 0.0
  %3382 = vmatpush1.msra.mxu0 0.0
  %3383 = vmatprep.subr.mxu0 0.0
  %3384 = vmatpush1.msra.mxu0 0.0
  %3385 = vmatprep.subr.mxu0 0.0
  %3386 = vmatpush1.msra.mxu0 0.0
  %3387 = vmatprep.subr.mxu0 0.0
  %3388 = vmatpush1.msra.mxu0 0.0
  %3389 = vmatprep.subr.mxu0 0.0
  %3390 = vmatpush1.msra.mxu0 0.0
  %3391 = vmatprep.subr.mxu0 0.0
  %3392 = vmatpush1.msra.mxu0 0.0
  %3393 = vmatprep.subr.mxu0 0.0
  %3394 = vmatpush1.msra.mxu0 0.0
  %3395 = vmatprep.subr.mxu0 0.0
  %3396 = vmatpush1.msra.mxu0 0.0
  %3397 = vmatprep.mubr.f32.mxu0 0.0
  %3398 = vmatmul.mubr.f32.gmra.mrb[0].mxu0 %v3331
  %v3399 = vpop.f32.mrb[0].mxu0
  %v3400 = vadd.f32 0.0, %v3399
  %v3401 = vpop.f32.mrb[0].mxu0
  %3402 = vdwg.mxu0
  %v3403 = vadd.f32 %v3322, %v3400
  %v3404 = vld [vmem:[#allocation2 + $0xa0] sm:$0xff]
  %v3405 = vld [vmem:[#allocation2 + $0xa8] sm:$0xff]
  %3406 = vmatprep.subr.mxu0 0.0
  %3407 = vmatpush1.msra.mxu0 %v18
  %3408 = vmatprep.subr.mxu0 0.0
  %3409 = vmatpush1.msra.mxu0 %v19
  %3410 = vmatprep.subr.mxu0 0.0
  %3411 = vmatpush1.msra.mxu0 %v20
  %3412 = vmatprep.subr.mxu0 0.0
  %3413 = vmatpush1.msra.mxu0 %v21
  %3414 = vmatprep.subr.mxu0 0.0
  %3415 = vmatpush1.msra.mxu0 0.0
  %3416 = vmatprep.subr.mxu0 0.0
  %3417 = vmatpush1.msra.mxu0 0.0
  %3418 = vmatprep.subr.mxu0 0.0
  %3419 = vmatpush1.msra.mxu0 0.0
  %3420 = vmatprep.subr.mxu0 0.0
  %3421 = vmatpush1.msra.mxu0 0.0
  %3422 = vmatprep.subr.mxu0 0.0
  %3423 = vmatpush1.msra.mxu0 0.0
  %3424 = vmatprep.subr.mxu0 0.0
  %3425 = vmatpush1.msra.mxu0 0.0
  %3426 = vmatprep.subr.mxu0 0.0
  %3427 = vmatpush1.msra.mxu0 0.0
  %3428 = vmatprep.subr.mxu0 0.0
  %3429 = vmatpush1.msra.mxu0 0.0
  %3430 = vmatprep.subr.mxu0 0.0
  %3431 = vmatpush1.msra.mxu0 0.0
  %3432 = vmatprep.subr.mxu0 0.0
  %3433 = vmatpush1.msra.mxu0 0.0
  %3434 = vmatprep.subr.mxu0 0.0
  %3435 = vmatpush1.msra.mxu0 0.0
  %3436 = vmatprep.subr.mxu0 0.0
  %3437 = vmatpush1.msra.mxu0 0.0
  %3438 = vmatprep.subr.mxu0 0.0
  %3439 = vmatpush1.msra.mxu0 0.0
  %3440 = vmatprep.subr.mxu0 0.0
  %3441 = vmatpush1.msra.mxu0 0.0
  %3442 = vmatprep.subr.mxu0 0.0
  %3443 = vmatpush1.msra.mxu0 0.0
  %3444 = vmatprep.subr.mxu0 0.0
  %3445 = vmatpush1.msra.mxu0 0.0
  %3446 = vmatprep.subr.mxu0 0.0
  %3447 = vmatpush1.msra.mxu0 0.0
  %3448 = vmatprep.subr.mxu0 0.0
  %3449 = vmatpush1.msra.mxu0 0.0
  %3450 = vmatprep.subr.mxu0 0.0
  %3451 = vmatpush1.msra.mxu0 0.0
  %3452 = vmatprep.subr.mxu0 0.0
  %3453 = vmatpush1.msra.mxu0 0.0
  %3454 = vmatprep.subr.mxu0 0.0
  %3455 = vmatpush1.msra.mxu0 0.0
  %3456 = vmatprep.subr.mxu0 0.0
  %3457 = vmatpush1.msra.mxu0 0.0
  %3458 = vmatprep.subr.mxu0 0.0
  %3459 = vmatpush1.msra.mxu0 0.0
  %3460 = vmatprep.subr.mxu0 0.0
  %3461 = vmatpush1.msra.mxu0 0.0
  %3462 = vmatprep.subr.mxu0 0.0
  %3463 = vmatpush1.msra.mxu0 0.0
  %3464 = vmatprep.subr.mxu0 0.0
  %3465 = vmatpush1.msra.mxu0 0.0
  %3466 = vmatprep.subr.mxu0 0.0
  %3467 = vmatpush1.msra.mxu0 0.0
  %3468 = vmatprep.subr.mxu0 0.0
  %3469 = vmatpush1.msra.mxu0 0.0
  %3470 = vmatprep.mubr.f32.mxu0 0.0
  %3471 = vmatmul.mubr.f32.gmra.mrb[0].mxu0 %v3250
  %v3472 = vpop.f32.mrb[0].mxu0
  %v3473 = vadd.f32 0.0, %v3472
  %v3474 = vpop.f32.mrb[0].mxu0
  %3475 = vmatprep.mubr.f32.mxu0 0.0
  %3476 = vmatmul.mubr.f32.gmra.mrb[0].mxu0 %v3331
  %v3477 = vpop.f32.mrb[0].mxu0
  %v3478 = vadd.f32 0.0, %v3477
  %v3479 = vpop.f32.mrb[0].mxu0
  %3480 = vdwg.mxu0
  %v3481 = vadd.f32 %v3404, %v3473
  %v3482 = vadd.f32 %v3405, %v3478
  %v3483 = vxor.u32 %v3481, 2147483648
  %v3484 = vxor.u32 %v3482, 2147483648
  %v3485 = vmul.f32 %v3483, 1.442695
  %v3486 = vpow.pop %v3485
  %v3487 = vmul.f32 %v3484, 1.442695
  %v3488 = vpow.pop %v3487
  %v3489 = vadd.f32 %v3486, 1.0
  %v3490 = vadd.f32 %v3488, 1.0
  %v3491 = vrcp.pop %v3489
  %v3492 = vmul.f32 1.0, %v3491
  %v3493 = vrcp.pop %v3490
  %v3494 = vmul.f32 1.0, %v3493
  %v3495 = vtanh.pop %v3481
  %v3496 = vtanh.pop %v3482
  %v3497 = vmul.f32 %v3492, %v3228
  %v3498 = vmul.f32 %v3494, %v3229
  %3501 = vrot.lane.b32.xlu0 %v3495, 64
  %v3502 = vpop.permute.xlu0 %3501
  %3503 = vrot.lane.b32.xlu0 %v3496, 64
  %v3504 = vpop.permute.xlu0 %3503
  %v3507 = vmul.f32 %v3492, %v3502
  %v3508 = vmul.f32 %v3494, %v3504
  %3511 = vrot.lane.b32.xlu0 %v3507, 32
  %v3512 = vpop.permute.xlu0 %3511
  %3513 = vrot.lane.b32.xlu0 %v3508, 32
  %v3514 = vpop.permute.xlu0 %3513
  %v3517 = vadd.f32 %v3497, %v3512
  %v3518 = vadd.f32 %v3498, %v3514
  %v3519 = vtanh.pop %v3517
  %v3520 = vtanh.pop %v3518
  %3523 = vrot.lane.b32.xlu0 %v3519, 64
  %v3524 = vpop.permute.xlu0 %3523
  %3525 = vrot.lane.b32.xlu0 %v3520, 64
  %v3526 = vpop.permute.xlu0 %3525
  %v3529 = vmul.f32 %v3492, %v3524
  %v3530 = vmul.f32 %v3494, %v3526
  %s3531 = scalar_lea.vmem %s3, 320
  %v3532 = vld [vmem:[%s3531] sm:$0xff]
  %v3533 = vld [vmem:[%s3531 + $0x8] sm:$0xff]
  %v3534 = vld [vmem:[%s3531 + $0x10] sm:$0xff]
  %v3535 = vld [vmem:[%s3531 + $0x18] sm:$0xff]
  %3537 = vrot.lane.b32.xlu0 %v3529, 32
  %v3538 = vpop.permute.xlu0 %3537
  %v3539 = vsel %vm504, %v3538, 0
  %3541 = vmatprep.subr.mxu0 0.0
  %3542 = vmatpush1.msra.mxu0 %v3532
  %3543 = vmatprep.subr.mxu0 0.0
  %3544 = vmatpush1.msra.mxu0 %v3533
  %3545 = vmatprep.subr.mxu0 0.0
  %3546 = vmatpush1.msra.mxu0 %v3534
  %3547 = vmatprep.subr.mxu0 0.0
  %3548 = vmatpush1.msra.mxu0 %v3535
  %3549 = vmatprep.subr.mxu0 0.0
  %3550 = vmatpush1.msra.mxu0 0.0
  %3551 = vmatprep.subr.mxu0 0.0
  %3552 = vmatpush1.msra.mxu0 0.0
  %3553 = vmatprep.subr.mxu0 0.0
  %3554 = vmatpush1.msra.mxu0 0.0
  %3555 = vmatprep.subr.mxu0 0.0
  %3556 = vmatpush1.msra.mxu0 0.0
  %3557 = vmatprep.subr.mxu0 0.0
  %3558 = vmatpush1.msra.mxu0 0.0
  %3559 = vmatprep.subr.mxu0 0.0
  %3560 = vmatpush1.msra.mxu0 0.0
  %3561 = vmatprep.subr.mxu0 0.0
  %3562 = vmatpush1.msra.mxu0 0.0
  %3563 = vmatprep.subr.mxu0 0.0
  %3564 = vmatpush1.msra.mxu0 0.0
  %3565 = vmatprep.subr.mxu0 0.0
  %3566 = vmatpush1.msra.mxu0 0.0
  %3567 = vmatprep.subr.mxu0 0.0
  %3568 = vmatpush1.msra.mxu0 0.0
  %3569 = vmatprep.subr.mxu0 0.0
  %3570 = vmatpush1.msra.mxu0 0.0
  %3571 = vmatprep.subr.mxu0 0.0
  %3572 = vmatpush1.msra.mxu0 0.0
  %3573 = vmatprep.subr.mxu0 0.0
  %3574 = vmatpush1.msra.mxu0 0.0
  %3575 = vmatprep.subr.mxu0 0.0
  %3576 = vmatpush1.msra.mxu0 0.0
  %3577 = vmatprep.subr.mxu0 0.0
  %3578 = vmatpush1.msra.mxu0 0.0
  %3579 = vmatprep.subr.mxu0 0.0
  %3580 = vmatpush1.msra.mxu0 0.0
  %3581 = vmatprep.subr.mxu0 0.0
  %3582 = vmatpush1.msra.mxu0 0.0
  %3583 = vmatprep.subr.mxu0 0.0
  %3584 = vmatpush1.msra.mxu0 0.0
  %3585 = vmatprep.subr.mxu0 0.0
  %3586 = vmatpush1.msra.mxu0 0.0
  %3587 = vmatprep.subr.mxu0 0.0
  %3588 = vmatpush1.msra.mxu0 0.0
  %3589 = vmatprep.subr.mxu0 0.0
  %3590 = vmatpush1.msra.mxu0 0.0
  %3591 = vmatprep.subr.mxu0 0.0
  %3592 = vmatpush1.msra.mxu0 0.0
  %3593 = vmatprep.subr.mxu0 0.0
  %3594 = vmatpush1.msra.mxu0 0.0
  %3595 = vmatprep.subr.mxu0 0.0
  %3596 = vmatpush1.msra.mxu0 0.0
  %3597 = vmatprep.subr.mxu0 0.0
  %3598 = vmatpush1.msra.mxu0 0.0
  %3599 = vmatprep.subr.mxu0 0.0
  %3600 = vmatpush1.msra.mxu0 0.0
  %3601 = vmatprep.subr.mxu0 0.0
  %3602 = vmatpush1.msra.mxu0 0.0
  %3603 = vmatprep.subr.mxu0 0.0
  %3604 = vmatpush1.msra.mxu0 0.0
  %3605 = vmatprep.mubr.f32.mxu0 0.0
  %3606 = vmatmul.mubr.f32.gmra.mrb[0].mxu0 %v3539
  %v3607 = vpop.f32.mrb[0].mxu0
  %v3608 = vadd.f32 0.0, %v3607
  %v3609 = vpop.f32.mrb[0].mxu0
  %3610 = vdwg.mxu0
  %v3611 = vadd.f32 %v3403, %v3608
  %s3612 = scalar_lea.vmem %s3, 960
  %v3613 = vld [vmem:[%s3612] sm:$0xff]
  %v3614 = vld [vmem:[%s3612 + $0x8] sm:$0xff]
  %v3615 = vld [vmem:[%s3612 + $0x10] sm:$0xff]
  %v3616 = vld [vmem:[%s3612 + $0x18] sm:$0xff]
  %3618 = vrot.lane.b32.xlu0 %v3530, 32
  %v3619 = vpop.permute.xlu0 %3618
  %v3620 = vsel %vm504, %v3619, 0
  %3622 = vmatprep.subr.mxu0 0.0
  %3623 = vmatpush1.msra.mxu0 %v3613
  %3624 = vmatprep.subr.mxu0 0.0
  %3625 = vmatpush1.msra.mxu0 %v3614
  %3626 = vmatprep.subr.mxu0 0.0
  %3627 = vmatpush1.msra.mxu0 %v3615
  %3628 = vmatprep.subr.mxu0 0.0
  %3629 = vmatpush1.msra.mxu0 %v3616
  %3630 = vmatprep.subr.mxu0 0.0
  %3631 = vmatpush1.msra.mxu0 0.0
  %3632 = vmatprep.subr.mxu0 0.0
  %3633 = vmatpush1.msra.mxu0 0.0
  %3634 = vmatprep.subr.mxu0 0.0
  %3635 = vmatpush1.msra.mxu0 0.0
  %3636 = vmatprep.subr.mxu0 0.0
  %3637 = vmatpush1.msra.mxu0 0.0
  %3638 = vmatprep.subr.mxu0 0.0
  %3639 = vmatpush1.msra.mxu0 0.0
  %3640 = vmatprep.subr.mxu0 0.0
  %3641 = vmatpush1.msra.mxu0 0.0
  %3642 = vmatprep.subr.mxu0 0.0
  %3643 = vmatpush1.msra.mxu0 0.0
  %3644 = vmatprep.subr.mxu0 0.0
  %3645 = vmatpush1.msra.mxu0 0.0
  %3646 = vmatprep.subr.mxu0 0.0
  %3647 = vmatpush1.msra.mxu0 0.0
  %3648 = vmatprep.subr.mxu0 0.0
  %3649 = vmatpush1.msra.mxu0 0.0
  %3650 = vmatprep.subr.mxu0 0.0
  %3651 = vmatpush1.msra.mxu0 0.0
  %3652 = vmatprep.subr.mxu0 0.0
  %3653 = vmatpush1.msra.mxu0 0.0
  %3654 = vmatprep.subr.mxu0 0.0
  %3655 = vmatpush1.msra.mxu0 0.0
  %3656 = vmatprep.subr.mxu0 0.0
  %3657 = vmatpush1.msra.mxu0 0.0
  %3658 = vmatprep.subr.mxu0 0.0
  %3659 = vmatpush1.msra.mxu0 0.0
  %3660 = vmatprep.subr.mxu0 0.0
  %3661 = vmatpush1.msra.mxu0 0.0
  %3662 = vmatprep.subr.mxu0 0.0
  %3663 = vmatpush1.msra.mxu0 0.0
  %3664 = vmatprep.subr.mxu0 0.0
  %3665 = vmatpush1.msra.mxu0 0.0
  %3666 = vmatprep.subr.mxu0 0.0
  %3667 = vmatpush1.msra.mxu0 0.0
  %3668 = vmatprep.subr.mxu0 0.0
  %3669 = vmatpush1.msra.mxu0 0.0
  %3670 = vmatprep.subr.mxu0 0.0
  %3671 = vmatpush1.msra.mxu0 0.0
  %3672 = vmatprep.subr.mxu0 0.0
  %3673 = vmatpush1.msra.mxu0 0.0
  %3674 = vmatprep.subr.mxu0 0.0
  %3675 = vmatpush1.msra.mxu0 0.0
  %3676 = vmatprep.subr.mxu0 0.0
  %3677 = vmatpush1.msra.mxu0 0.0
  %3678 = vmatprep.subr.mxu0 0.0
  %3679 = vmatpush1.msra.mxu0 0.0
  %3680 = vmatprep.subr.mxu0 0.0
  %3681 = vmatpush1.msra.mxu0 0.0
  %3682 = vmatprep.subr.mxu0 0.0
  %3683 = vmatpush1.msra.mxu0 0.0
  %3684 = vmatprep.subr.mxu0 0.0
  %3685 = vmatpush1.msra.mxu0 0.0
  %3686 = vmatprep.mubr.f32.mxu0 0.0
  %3687 = vmatmul.mubr.f32.gmra.mrb[0].mxu0 %v3620
  %v3688 = vpop.f32.mrb[0].mxu0
  %v3689 = vadd.f32 0.0, %v3688
  %v3690 = vpop.f32.mrb[0].mxu0
  %3691 = vdwg.mxu0
  %v3692 = vadd.f32 %v3611, %v3689
  %v3693 = vld [vmem:[#allocation2 + $0xb0] sm:$0xff]
  %v3694 = vld [vmem:[#allocation2 + $0xb8] sm:$0xff]
  %3695 = vmatprep.subr.mxu0 0.0
  %3696 = vmatpush1.msra.mxu0 %v18
  %3697 = vmatprep.subr.mxu0 0.0
  %3698 = vmatpush1.msra.mxu0 %v19
  %3699 = vmatprep.subr.mxu0 0.0
  %3700 = vmatpush1.msra.mxu0 %v20
  %3701 = vmatprep.subr.mxu0 0.0
  %3702 = vmatpush1.msra.mxu0 %v21
  %3703 = vmatprep.subr.mxu0 0.0
  %3704 = vmatpush1.msra.mxu0 0.0
  %3705 = vmatprep.subr.mxu0 0.0
  %3706 = vmatpush1.msra.mxu0 0.0
  %3707 = vmatprep.subr.mxu0 0.0
  %3708 = vmatpush1.msra.mxu0 0.0
  %3709 = vmatprep.subr.mxu0 0.0
  %3710 = vmatpush1.msra.mxu0 0.0
  %3711 = vmatprep.subr.mxu0 0.0
  %3712 = vmatpush1.msra.mxu0 0.0
  %3713 = vmatprep.subr.mxu0 0.0
  %3714 = vmatpush1.msra.mxu0 0.0
  %3715 = vmatprep.subr.mxu0 0.0
  %3716 = vmatpush1.msra.mxu0 0.0
  %3717 = vmatprep.subr.mxu0 0.0
  %3718 = vmatpush1.msra.mxu0 0.0
  %3719 = vmatprep.subr.mxu0 0.0
  %3720 = vmatpush1.msra.mxu0 0.0
  %3721 = vmatprep.subr.mxu0 0.0
  %3722 = vmatpush1.msra.mxu0 0.0
  %3723 = vmatprep.subr.mxu0 0.0
  %3724 = vmatpush1.msra.mxu0 0.0
  %3725 = vmatprep.subr.mxu0 0.0
  %3726 = vmatpush1.msra.mxu0 0.0
  %3727 = vmatprep.subr.mxu0 0.0
  %3728 = vmatpush1.msra.mxu0 0.0
  %3729 = vmatprep.subr.mxu0 0.0
  %3730 = vmatpush1.msra.mxu0 0.0
  %3731 = vmatprep.subr.mxu0 0.0
  %3732 = vmatpush1.msra.mxu0 0.0
  %3733 = vmatprep.subr.mxu0 0.0
  %3734 = vmatpush1.msra.mxu0 0.0
  %3735 = vmatprep.subr.mxu0 0.0
  %3736 = vmatpush1.msra.mxu0 0.0
  %3737 = vmatprep.subr.mxu0 0.0
  %3738 = vmatpush1.msra.mxu0 0.0
  %3739 = vmatprep.subr.mxu0 0.0
  %3740 = vmatpush1.msra.mxu0 0.0
  %3741 = vmatprep.subr.mxu0 0.0
  %3742 = vmatpush1.msra.mxu0 0.0
  %3743 = vmatprep.subr.mxu0 0.0
  %3744 = vmatpush1.msra.mxu0 0.0
  %3745 = vmatprep.subr.mxu0 0.0
  %3746 = vmatpush1.msra.mxu0 0.0
  %3747 = vmatprep.subr.mxu0 0.0
  %3748 = vmatpush1.msra.mxu0 0.0
  %3749 = vmatprep.subr.mxu0 0.0
  %3750 = vmatpush1.msra.mxu0 0.0
  %3751 = vmatprep.subr.mxu0 0.0
  %3752 = vmatpush1.msra.mxu0 0.0
  %3753 = vmatprep.subr.mxu0 0.0
  %3754 = vmatpush1.msra.mxu0 0.0
  %3755 = vmatprep.subr.mxu0 0.0
  %3756 = vmatpush1.msra.mxu0 0.0
  %3757 = vmatprep.subr.mxu0 0.0
  %3758 = vmatpush1.msra.mxu0 0.0
  %3759 = vmatprep.mubr.f32.mxu0 0.0
  %3760 = vmatmul.mubr.f32.gmra.mrb[0].mxu0 %v3539
  %v3761 = vpop.f32.mrb[0].mxu0
  %v3762 = vadd.f32 0.0, %v3761
  %v3763 = vpop.f32.mrb[0].mxu0
  %3764 = vmatprep.mubr.f32.mxu0 0.0
  %3765 = vmatmul.mubr.f32.gmra.mrb[0].mxu0 %v3620
  %v3766 = vpop.f32.mrb[0].mxu0
  %v3767 = vadd.f32 0.0, %v3766
  %v3768 = vpop.f32.mrb[0].mxu0
  %3769 = vdwg.mxu0
  %v3770 = vadd.f32 %v3693, %v3762
  %v3771 = vadd.f32 %v3694, %v3767
  %v3772 = vxor.u32 %v3770, 2147483648
  %v3773 = vxor.u32 %v3771, 2147483648
  %v3774 = vmul.f32 %v3772, 1.442695
  %v3775 = vpow.pop %v3774
  %v3776 = vmul.f32 %v3773, 1.442695
  %v3777 = vpow.pop %v3776
  %v3778 = vadd.f32 %v3775, 1.0
  %v3779 = vadd.f32 %v3777, 1.0
  %v3780 = vrcp.pop %v3778
  %v3781 = vmul.f32 1.0, %v3780
  %v3782 = vrcp.pop %v3779
  %v3783 = vmul.f32 1.0, %v3782
  %v3784 = vtanh.pop %v3770
  %v3785 = vtanh.pop %v3771
  %v3786 = vmul.f32 %v3781, %v3517
  %v3787 = vmul.f32 %v3783, %v3518
  %3790 = vrot.lane.b32.xlu0 %v3784, 64
  %v3791 = vpop.permute.xlu0 %3790
  %3792 = vrot.lane.b32.xlu0 %v3785, 64
  %v3793 = vpop.permute.xlu0 %3792
  %v3796 = vmul.f32 %v3781, %v3791
  %v3797 = vmul.f32 %v3783, %v3793
  %3800 = vrot.lane.b32.xlu0 %v3796, 32
  %v3801 = vpop.permute.xlu0 %3800
  %3802 = vrot.lane.b32.xlu0 %v3797, 32
  %v3803 = vpop.permute.xlu0 %3802
  %v3806 = vadd.f32 %v3786, %v3801
  %v3807 = vadd.f32 %v3787, %v3803
  %v3808 = vtanh.pop %v3806
  %v3809 = vtanh.pop %v3807
  %3812 = vrot.lane.b32.xlu0 %v3808, 64
  %v3813 = vpop.permute.xlu0 %3812
  %3814 = vrot.lane.b32.xlu0 %v3809, 64
  %v3815 = vpop.permute.xlu0 %3814
  %v3818 = vmul.f32 %v3781, %v3813
  %v3819 = vmul.f32 %v3783, %v3815
  %s3820 = scalar_lea.vmem %s3, 352
  %v3821 = vld [vmem:[%s3820] sm:$0xff]
  %v3822 = vld [vmem:[%s3820 + $0x8] sm:$0xff]
  %v3823 = vld [vmem:[%s3820 + $0x10] sm:$0xff]
  %v3824 = vld [vmem:[%s3820 + $0x18] sm:$0xff]
  %3826 = vrot.lane.b32.xlu0 %v3818, 32
  %v3827 = vpop.permute.xlu0 %3826
  %v3828 = vsel %vm504, %v3827, 0
  %3830 = vmatprep.subr.mxu0 0.0
  %3831 = vmatpush1.msra.mxu0 %v3821
  %3832 = vmatprep.subr.mxu0 0.0
  %3833 = vmatpush1.msra.mxu0 %v3822
  %3834 = vmatprep.subr.mxu0 0.0
  %3835 = vmatpush1.msra.mxu0 %v3823
  %3836 = vmatprep.subr.mxu0 0.0
  %3837 = vmatpush1.msra.mxu0 %v3824
  %3838 = vmatprep.subr.mxu0 0.0
  %3839 = vmatpush1.msra.mxu0 0.0
  %3840 = vmatprep.subr.mxu0 0.0
  %3841 = vmatpush1.msra.mxu0 0.0
  %3842 = vmatprep.subr.mxu0 0.0
  %3843 = vmatpush1.msra.mxu0 0.0
  %3844 = vmatprep.subr.mxu0 0.0
  %3845 = vmatpush1.msra.mxu0 0.0
  %3846 = vmatprep.subr.mxu0 0.0
  %3847 = vmatpush1.msra.mxu0 0.0
  %3848 = vmatprep.subr.mxu0 0.0
  %3849 = vmatpush1.msra.mxu0 0.0
  %3850 = vmatprep.subr.mxu0 0.0
  %3851 = vmatpush1.msra.mxu0 0.0
  %3852 = vmatprep.subr.mxu0 0.0
  %3853 = vmatpush1.msra.mxu0 0.0
  %3854 = vmatprep.subr.mxu0 0.0
  %3855 = vmatpush1.msra.mxu0 0.0
  %3856 = vmatprep.subr.mxu0 0.0
  %3857 = vmatpush1.msra.mxu0 0.0
  %3858 = vmatprep.subr.mxu0 0.0
  %3859 = vmatpush1.msra.mxu0 0.0
  %3860 = vmatprep.subr.mxu0 0.0
  %3861 = vmatpush1.msra.mxu0 0.0
  %3862 = vmatprep.subr.mxu0 0.0
  %3863 = vmatpush1.msra.mxu0 0.0
  %3864 = vmatprep.subr.mxu0 0.0
  %3865 = vmatpush1.msra.mxu0 0.0
  %3866 = vmatprep.subr.mxu0 0.0
  %3867 = vmatpush1.msra.mxu0 0.0
  %3868 = vmatprep.subr.mxu0 0.0
  %3869 = vmatpush1.msra.mxu0 0.0
  %3870 = vmatprep.subr.mxu0 0.0
  %3871 = vmatpush1.msra.mxu0 0.0
  %3872 = vmatprep.subr.mxu0 0.0
  %3873 = vmatpush1.msra.mxu0 0.0
  %3874 = vmatprep.subr.mxu0 0.0
  %3875 = vmatpush1.msra.mxu0 0.0
  %3876 = vmatprep.subr.mxu0 0.0
  %3877 = vmatpush1.msra.mxu0 0.0
  %3878 = vmatprep.subr.mxu0 0.0
  %3879 = vmatpush1.msra.mxu0 0.0
  %3880 = vmatprep.subr.mxu0 0.0
  %3881 = vmatpush1.msra.mxu0 0.0
  %3882 = vmatprep.subr.mxu0 0.0
  %3883 = vmatpush1.msra.mxu0 0.0
  %3884 = vmatprep.subr.mxu0 0.0
  %3885 = vmatpush1.msra.mxu0 0.0
  %3886 = vmatprep.subr.mxu0 0.0
  %3887 = vmatpush1.msra.mxu0 0.0
  %3888 = vmatprep.subr.mxu0 0.0
  %3889 = vmatpush1.msra.mxu0 0.0
  %3890 = vmatprep.subr.mxu0 0.0
  %3891 = vmatpush1.msra.mxu0 0.0
  %3892 = vmatprep.subr.mxu0 0.0
  %3893 = vmatpush1.msra.mxu0 0.0
  %3894 = vmatprep.mubr.f32.mxu0 0.0
  %3895 = vmatmul.mubr.f32.gmra.mrb[0].mxu0 %v3828
  %v3896 = vpop.f32.mrb[0].mxu0
  %v3897 = vadd.f32 0.0, %v3896
  %v3898 = vpop.f32.mrb[0].mxu0
  %3899 = vdwg.mxu0
  %v3900 = vadd.f32 %v3692, %v3897
  %s3901 = scalar_lea.vmem %s3, 992
  %v3902 = vld [vmem:[%s3901] sm:$0xff]
  %v3903 = vld [vmem:[%s3901 + $0x8] sm:$0xff]
  %v3904 = vld [vmem:[%s3901 + $0x10] sm:$0xff]
  %v3905 = vld [vmem:[%s3901 + $0x18] sm:$0xff]
  %3907 = vrot.lane.b32.xlu0 %v3819, 32
  %v3908 = vpop.permute.xlu0 %3907
  %v3909 = vsel %vm504, %v3908, 0
  %3911 = vmatprep.subr.mxu0 0.0
  %3912 = vmatpush1.msra.mxu0 %v3902
  %3913 = vmatprep.subr.mxu0 0.0
  %3914 = vmatpush1.msra.mxu0 %v3903
  %3915 = vmatprep.subr.mxu0 0.0
  %3916 = vmatpush1.msra.mxu0 %v3904
  %3917 = vmatprep.subr.mxu0 0.0
  %3918 = vmatpush1.msra.mxu0 %v3905
  %3919 = vmatprep.subr.mxu0 0.0
  %3920 = vmatpush1.msra.mxu0 0.0
  %3921 = vmatprep.subr.mxu0 0.0
  %3922 = vmatpush1.msra.mxu0 0.0
  %3923 = vmatprep.subr.mxu0 0.0
  %3924 = vmatpush1.msra.mxu0 0.0
  %3925 = vmatprep.subr.mxu0 0.0
  %3926 = vmatpush1.msra.mxu0 0.0
  %3927 = vmatprep.subr.mxu0 0.0
  %3928 = vmatpush1.msra.mxu0 0.0
  %3929 = vmatprep.subr.mxu0 0.0
  %3930 = vmatpush1.msra.mxu0 0.0
  %3931 = vmatprep.subr.mxu0 0.0
  %3932 = vmatpush1.msra.mxu0 0.0
  %3933 = vmatprep.subr.mxu0 0.0
  %3934 = vmatpush1.msra.mxu0 0.0
  %3935 = vmatprep.subr.mxu0 0.0
  %3936 = vmatpush1.msra.mxu0 0.0
  %3937 = vmatprep.subr.mxu0 0.0
  %3938 = vmatpush1.msra.mxu0 0.0
  %3939 = vmatprep.subr.mxu0 0.0
  %3940 = vmatpush1.msra.mxu0 0.0
  %3941 = vmatprep.subr.mxu0 0.0
  %3942 = vmatpush1.msra.mxu0 0.0
  %3943 = vmatprep.subr.mxu0 0.0
  %3944 = vmatpush1.msra.mxu0 0.0
  %3945 = vmatprep.subr.mxu0 0.0
  %3946 = vmatpush1.msra.mxu0 0.0
  %3947 = vmatprep.subr.mxu0 0.0
  %3948 = vmatpush1.msra.mxu0 0.0
  %3949 = vmatprep.subr.mxu0 0.0
  %3950 = vmatpush1.msra.mxu0 0.0
  %3951 = vmatprep.subr.mxu0 0.0
  %3952 = vmatpush1.msra.mxu0 0.0
  %3953 = vmatprep.subr.mxu0 0.0
  %3954 = vmatpush1.msra.mxu0 0.0
  %3955 = vmatprep.subr.mxu0 0.0
  %3956 = vmatpush1.msra.mxu0 0.0
  %3957 = vmatprep.subr.mxu0 0.0
  %3958 = vmatpush1.msra.mxu0 0.0
  %3959 = vmatprep.subr.mxu0 0.0
  %3960 = vmatpush1.msra.mxu0 0.0
  %3961 = vmatprep.subr.mxu0 0.0
  %3962 = vmatpush1.msra.mxu0 0.0
  %3963 = vmatprep.subr.mxu0 0.0
  %3964 = vmatpush1.msra.mxu0 0.0
  %3965 = vmatprep.subr.mxu0 0.0
  %3966 = vmatpush1.msra.mxu0 0.0
  %3967 = vmatprep.subr.mxu0 0.0
  %3968 = vmatpush1.msra.mxu0 0.0
  %3969 = vmatprep.subr.mxu0 0.0
  %3970 = vmatpush1.msra.mxu0 0.0
  %3971 = vmatprep.subr.mxu0 0.0
  %3972 = vmatpush1.msra.mxu0 0.0
  %3973 = vmatprep.subr.mxu0 0.0
  %3974 = vmatpush1.msra.mxu0 0.0
  %3975 = vmatprep.mubr.f32.mxu0 0.0
  %3976 = vmatmul.mubr.f32.gmra.mrb[0].mxu0 %v3909
  %v3977 = vpop.f32.mrb[0].mxu0
  %v3978 = vadd.f32 0.0, %v3977
  %v3979 = vpop.f32.mrb[0].mxu0
  %3980 = vdwg.mxu0
  %v3981 = vadd.f32 %v3900, %v3978
  %v3982 = vld [vmem:[#allocation2 + $0xc0] sm:$0xff]
  %v3983 = vld [vmem:[#allocation2 + $0xc8] sm:$0xff]
  %3984 = vmatprep.subr.mxu0 0.0
  %3985 = vmatpush1.msra.mxu0 %v18
  %3986 = vmatprep.subr.mxu0 0.0
  %3987 = vmatpush1.msra.mxu0 %v19
  %3988 = vmatprep.subr.mxu0 0.0
  %3989 = vmatpush1.msra.mxu0 %v20
  %3990 = vmatprep.subr.mxu0 0.0
  %3991 = vmatpush1.msra.mxu0 %v21
  %3992 = vmatprep.subr.mxu0 0.0
  %3993 = vmatpush1.msra.mxu0 0.0
  %3994 = vmatprep.subr.mxu0 0.0
  %3995 = vmatpush1.msra.mxu0 0.0
  %3996 = vmatprep.subr.mxu0 0.0
  %3997 = vmatpush1.msra.mxu0 0.0
  %3998 = vmatprep.subr.mxu0 0.0
  %3999 = vmatpush1.msra.mxu0 0.0
  %4000 = vmatprep.subr.mxu0 0.0
  %4001 = vmatpush1.msra.mxu0 0.0
  %4002 = vmatprep.subr.mxu0 0.0
  %4003 = vmatpush1.msra.mxu0 0.0
  %4004 = vmatprep.subr.mxu0 0.0
  %4005 = vmatpush1.msra.mxu0 0.0
  %4006 = vmatprep.subr.mxu0 0.0
  %4007 = vmatpush1.msra.mxu0 0.0
  %4008 = vmatprep.subr.mxu0 0.0
  %4009 = vmatpush1.msra.mxu0 0.0
  %4010 = vmatprep.subr.mxu0 0.0
  %4011 = vmatpush1.msra.mxu0 0.0
  %4012 = vmatprep.subr.mxu0 0.0
  %4013 = vmatpush1.msra.mxu0 0.0
  %4014 = vmatprep.subr.mxu0 0.0
  %4015 = vmatpush1.msra.mxu0 0.0
  %4016 = vmatprep.subr.mxu0 0.0
  %4017 = vmatpush1.msra.mxu0 0.0
  %4018 = vmatprep.subr.mxu0 0.0
  %4019 = vmatpush1.msra.mxu0 0.0
  %4020 = vmatprep.subr.mxu0 0.0
  %4021 = vmatpush1.msra.mxu0 0.0
  %4022 = vmatprep.subr.mxu0 0.0
  %4023 = vmatpush1.msra.mxu0 0.0
  %4024 = vmatprep.subr.mxu0 0.0
  %4025 = vmatpush1.msra.mxu0 0.0
  %4026 = vmatprep.subr.mxu0 0.0
  %4027 = vmatpush1.msra.mxu0 0.0
  %4028 = vmatprep.subr.mxu0 0.0
  %4029 = vmatpush1.msra.mxu0 0.0
  %4030 = vmatprep.subr.mxu0 0.0
  %4031 = vmatpush1.msra.mxu0 0.0
  %4032 = vmatprep.subr.mxu0 0.0
  %4033 = vmatpush1.msra.mxu0 0.0
  %4034 = vmatprep.subr.mxu0 0.0
  %4035 = vmatpush1.msra.mxu0 0.0
  %4036 = vmatprep.subr.mxu0 0.0
  %4037 = vmatpush1.msra.mxu0 0.0
  %4038 = vmatprep.subr.mxu0 0.0
  %4039 = vmatpush1.msra.mxu0 0.0
  %4040 = vmatprep.subr.mxu0 0.0
  %4041 = vmatpush1.msra.mxu0 0.0
  %4042 = vmatprep.subr.mxu0 0.0
  %4043 = vmatpush1.msra.mxu0 0.0
  %4044 = vmatprep.subr.mxu0 0.0
  %4045 = vmatpush1.msra.mxu0 0.0
  %4046 = vmatprep.subr.mxu0 0.0
  %4047 = vmatpush1.msra.mxu0 0.0
  %4048 = vmatprep.mubr.f32.mxu0 0.0
  %4049 = vmatmul.mubr.f32.gmra.mrb[0].mxu0 %v3828
  %v4050 = vpop.f32.mrb[0].mxu0
  %v4051 = vadd.f32 0.0, %v4050
  %v4052 = vpop.f32.mrb[0].mxu0
  %4053 = vmatprep.mubr.f32.mxu0 0.0
  %4054 = vmatmul.mubr.f32.gmra.mrb[0].mxu0 %v3909
  %v4055 = vpop.f32.mrb[0].mxu0
  %v4056 = vadd.f32 0.0, %v4055
  %v4057 = vpop.f32.mrb[0].mxu0
  %4058 = vdwg.mxu0
  %v4059 = vadd.f32 %v3982, %v4051
  %v4060 = vadd.f32 %v3983, %v4056
  %v4061 = vxor.u32 %v4059, 2147483648
  %v4062 = vxor.u32 %v4060, 2147483648
  %v4063 = vmul.f32 %v4061, 1.442695
  %v4064 = vpow.pop %v4063
  %v4065 = vmul.f32 %v4062, 1.442695
  %v4066 = vpow.pop %v4065
  %v4067 = vadd.f32 %v4064, 1.0
  %v4068 = vadd.f32 %v4066, 1.0
  %v4069 = vrcp.pop %v4067
  %v4070 = vmul.f32 1.0, %v4069
  %v4071 = vrcp.pop %v4068
  %v4072 = vmul.f32 1.0, %v4071
  %v4073 = vtanh.pop %v4059
  %v4074 = vtanh.pop %v4060
  %v4075 = vmul.f32 %v4070, %v3806
  %v4076 = vmul.f32 %v4072, %v3807
  %4079 = vrot.lane.b32.xlu0 %v4073, 64
  %v4080 = vpop.permute.xlu0 %4079
  %4081 = vrot.lane.b32.xlu0 %v4074, 64
  %v4082 = vpop.permute.xlu0 %4081
  %v4085 = vmul.f32 %v4070, %v4080
  %v4086 = vmul.f32 %v4072, %v4082
  %4089 = vrot.lane.b32.xlu0 %v4085, 32
  %v4090 = vpop.permute.xlu0 %4089
  %4091 = vrot.lane.b32.xlu0 %v4086, 32
  %v4092 = vpop.permute.xlu0 %4091
  %v4095 = vadd.f32 %v4075, %v4090
  %v4096 = vadd.f32 %v4076, %v4092
  %v4097 = vtanh.pop %v4095
  %v4098 = vtanh.pop %v4096
  %4101 = vrot.lane.b32.xlu0 %v4097, 64
  %v4102 = vpop.permute.xlu0 %4101
  %4103 = vrot.lane.b32.xlu0 %v4098, 64
  %v4104 = vpop.permute.xlu0 %4103
  %v4107 = vmul.f32 %v4070, %v4102
  %v4108 = vmul.f32 %v4072, %v4104
  %s4109 = scalar_lea.vmem %s3, 384
  %v4110 = vld [vmem:[%s4109] sm:$0xff]
  %v4111 = vld [vmem:[%s4109 + $0x8] sm:$0xff]
  %v4112 = vld [vmem:[%s4109 + $0x10] sm:$0xff]
  %v4113 = vld [vmem:[%s4109 + $0x18] sm:$0xff]
  %4115 = vrot.lane.b32.xlu0 %v4107, 32
  %v4116 = vpop.permute.xlu0 %4115
  %v4117 = vsel %vm504, %v4116, 0
  %4119 = vmatprep.subr.mxu0 0.0
  %4120 = vmatpush1.msra.mxu0 %v4110
  %4121 = vmatprep.subr.mxu0 0.0
  %4122 = vmatpush1.msra.mxu0 %v4111
  %4123 = vmatprep.subr.mxu0 0.0
  %4124 = vmatpush1.msra.mxu0 %v4112
  %4125 = vmatprep.subr.mxu0 0.0
  %4126 = vmatpush1.msra.mxu0 %v4113
  %4127 = vmatprep.subr.mxu0 0.0
  %4128 = vmatpush1.msra.mxu0 0.0
  %4129 = vmatprep.subr.mxu0 0.0
  %4130 = vmatpush1.msra.mxu0 0.0
  %4131 = vmatprep.subr.mxu0 0.0
  %4132 = vmatpush1.msra.mxu0 0.0
  %4133 = vmatprep.subr.mxu0 0.0
  %4134 = vmatpush1.msra.mxu0 0.0
  %4135 = vmatprep.subr.mxu0 0.0
  %4136 = vmatpush1.msra.mxu0 0.0
  %4137 = vmatprep.subr.mxu0 0.0
  %4138 = vmatpush1.msra.mxu0 0.0
  %4139 = vmatprep.subr.mxu0 0.0
  %4140 = vmatpush1.msra.mxu0 0.0
  %4141 = vmatprep.subr.mxu0 0.0
  %4142 = vmatpush1.msra.mxu0 0.0
  %4143 = vmatprep.subr.mxu0 0.0
  %4144 = vmatpush1.msra.mxu0 0.0
  %4145 = vmatprep.subr.mxu0 0.0
  %4146 = vmatpush1.msra.mxu0 0.0
  %4147 = vmatprep.subr.mxu0 0.0
  %4148 = vmatpush1.msra.mxu0 0.0
  %4149 = vmatprep.subr.mxu0 0.0
  %4150 = vmatpush1.msra.mxu0 0.0
  %4151 = vmatprep.subr.mxu0 0.0
  %4152 = vmatpush1.msra.mxu0 0.0
  %4153 = vmatprep.subr.mxu0 0.0
  %4154 = vmatpush1.msra.mxu0 0.0
  %4155 = vmatprep.subr.mxu0 0.0
  %4156 = vmatpush1.msra.mxu0 0.0
  %4157 = vmatprep.subr.mxu0 0.0
  %4158 = vmatpush1.msra.mxu0 0.0
  %4159 = vmatprep.subr.mxu0 0.0
  %4160 = vmatpush1.msra.mxu0 0.0
  %4161 = vmatprep.subr.mxu0 0.0
  %4162 = vmatpush1.msra.mxu0 0.0
  %4163 = vmatprep.subr.mxu0 0.0
  %4164 = vmatpush1.msra.mxu0 0.0
  %4165 = vmatprep.subr.mxu0 0.0
  %4166 = vmatpush1.msra.mxu0 0.0
  %4167 = vmatprep.subr.mxu0 0.0
  %4168 = vmatpush1.msra.mxu0 0.0
  %4169 = vmatprep.subr.mxu0 0.0
  %4170 = vmatpush1.msra.mxu0 0.0
  %4171 = vmatprep.subr.mxu0 0.0
  %4172 = vmatpush1.msra.mxu0 0.0
  %4173 = vmatprep.subr.mxu0 0.0
  %4174 = vmatpush1.msra.mxu0 0.0
  %4175 = vmatprep.subr.mxu0 0.0
  %4176 = vmatpush1.msra.mxu0 0.0
  %4177 = vmatprep.subr.mxu0 0.0
  %4178 = vmatpush1.msra.mxu0 0.0
  %4179 = vmatprep.subr.mxu0 0.0
  %4180 = vmatpush1.msra.mxu0 0.0
  %4181 = vmatprep.subr.mxu0 0.0
  %4182 = vmatpush1.msra.mxu0 0.0
  %4183 = vmatprep.mubr.f32.mxu0 0.0
  %4184 = vmatmul.mubr.f32.gmra.mrb[0].mxu0 %v4117
  %v4185 = vpop.f32.mrb[0].mxu0
  %v4186 = vadd.f32 0.0, %v4185
  %v4187 = vpop.f32.mrb[0].mxu0
  %4188 = vdwg.mxu0
  %v4189 = vadd.f32 %v3981, %v4186
  %s4190 = scalar_lea.vmem %s3, 1024
  %v4191 = vld [vmem:[%s4190] sm:$0xff]
  %v4192 = vld [vmem:[%s4190 + $0x8] sm:$0xff]
  %v4193 = vld [vmem:[%s4190 + $0x10] sm:$0xff]
  %v4194 = vld [vmem:[%s4190 + $0x18] sm:$0xff]
  %4196 = vrot.lane.b32.xlu0 %v4108, 32
  %v4197 = vpop.permute.xlu0 %4196
  %v4198 = vsel %vm504, %v4197, 0
  %4200 = vmatprep.subr.mxu0 0.0
  %4201 = vmatpush1.msra.mxu0 %v4191
  %4202 = vmatprep.subr.mxu0 0.0
  %4203 = vmatpush1.msra.mxu0 %v4192
  %4204 = vmatprep.subr.mxu0 0.0
  %4205 = vmatpush1.msra.mxu0 %v4193
  %4206 = vmatprep.subr.mxu0 0.0
  %4207 = vmatpush1.msra.mxu0 %v4194
  %4208 = vmatprep.subr.mxu0 0.0
  %4209 = vmatpush1.msra.mxu0 0.0
  %4210 = vmatprep.subr.mxu0 0.0
  %4211 = vmatpush1.msra.mxu0 0.0
  %4212 = vmatprep.subr.mxu0 0.0
  %4213 = vmatpush1.msra.mxu0 0.0
  %4214 = vmatprep.subr.mxu0 0.0
  %4215 = vmatpush1.msra.mxu0 0.0
  %4216 = vmatprep.subr.mxu0 0.0
  %4217 = vmatpush1.msra.mxu0 0.0
  %4218 = vmatprep.subr.mxu0 0.0
  %4219 = vmatpush1.msra.mxu0 0.0
  %4220 = vmatprep.subr.mxu0 0.0
  %4221 = vmatpush1.msra.mxu0 0.0
  %4222 = vmatprep.subr.mxu0 0.0
  %4223 = vmatpush1.msra.mxu0 0.0
  %4224 = vmatprep.subr.mxu0 0.0
  %4225 = vmatpush1.msra.mxu0 0.0
  %4226 = vmatprep.subr.mxu0 0.0
  %4227 = vmatpush1.msra.mxu0 0.0
  %4228 = vmatprep.subr.mxu0 0.0
  %4229 = vmatpush1.msra.mxu0 0.0
  %4230 = vmatprep.subr.mxu0 0.0
  %4231 = vmatpush1.msra.mxu0 0.0
  %4232 = vmatprep.subr.mxu0 0.0
  %4233 = vmatpush1.msra.mxu0 0.0
  %4234 = vmatprep.subr.mxu0 0.0
  %4235 = vmatpush1.msra.mxu0 0.0
  %4236 = vmatprep.subr.mxu0 0.0
  %4237 = vmatpush1.msra.mxu0 0.0
  %4238 = vmatprep.subr.mxu0 0.0
  %4239 = vmatpush1.msra.mxu0 0.0
  %4240 = vmatprep.subr.mxu0 0.0
  %4241 = vmatpush1.msra.mxu0 0.0
  %4242 = vmatprep.subr.mxu0 0.0
  %4243 = vmatpush1.msra.mxu0 0.0
  %4244 = vmatprep.subr.mxu0 0.0
  %4245 = vmatpush1.msra.mxu0 0.0
  %4246 = vmatprep.subr.mxu0 0.0
  %4247 = vmatpush1.msra.mxu0 0.0
  %4248 = vmatprep.subr.mxu0 0.0
  %4249 = vmatpush1.msra.mxu0 0.0
  %4250 = vmatprep.subr.mxu0 0.0
  %4251 = vmatpush1.msra.mxu0 0.0
  %4252 = vmatprep.subr.mxu0 0.0
  %4253 = vmatpush1.msra.mxu0 0.0
  %4254 = vmatprep.subr.mxu0 0.0
  %4255 = vmatpush1.msra.mxu0 0.0
  %4256 = vmatprep.subr.mxu0 0.0
  %4257 = vmatpush1.msra.mxu0 0.0
  %4258 = vmatprep.subr.mxu0 0.0
  %4259 = vmatpush1.msra.mxu0 0.0
  %4260 = vmatprep.subr.mxu0 0.0
  %4261 = vmatpush1.msra.mxu0 0.0
  %4262 = vmatprep.subr.mxu0 0.0
  %4263 = vmatpush1.msra.mxu0 0.0
  %4264 = vmatprep.mubr.f32.mxu0 0.0
  %4265 = vmatmul.mubr.f32.gmra.mrb[0].mxu0 %v4198
  %v4266 = vpop.f32.mrb[0].mxu0
  %v4267 = vadd.f32 0.0, %v4266
  %v4268 = vpop.f32.mrb[0].mxu0
  %4269 = vdwg.mxu0
  %v4270 = vadd.f32 %v4189, %v4267
  %v4271 = vld [vmem:[#allocation2 + $0xd0] sm:$0xff]
  %v4272 = vld [vmem:[#allocation2 + $0xd8] sm:$0xff]
  %4273 = vmatprep.subr.mxu0 0.0
  %4274 = vmatpush1.msra.mxu0 %v18
  %4275 = vmatprep.subr.mxu0 0.0
  %4276 = vmatpush1.msra.mxu0 %v19
  %4277 = vmatprep.subr.mxu0 0.0
  %4278 = vmatpush1.msra.mxu0 %v20
  %4279 = vmatprep.subr.mxu0 0.0
  %4280 = vmatpush1.msra.mxu0 %v21
  %4281 = vmatprep.subr.mxu0 0.0
  %4282 = vmatpush1.msra.mxu0 0.0
  %4283 = vmatprep.subr.mxu0 0.0
  %4284 = vmatpush1.msra.mxu0 0.0
  %4285 = vmatprep.subr.mxu0 0.0
  %4286 = vmatpush1.msra.mxu0 0.0
  %4287 = vmatprep.subr.mxu0 0.0
  %4288 = vmatpush1.msra.mxu0 0.0
  %4289 = vmatprep.subr.mxu0 0.0
  %4290 = vmatpush1.msra.mxu0 0.0
  %4291 = vmatprep.subr.mxu0 0.0
  %4292 = vmatpush1.msra.mxu0 0.0
  %4293 = vmatprep.subr.mxu0 0.0
  %4294 = vmatpush1.msra.mxu0 0.0
  %4295 = vmatprep.subr.mxu0 0.0
  %4296 = vmatpush1.msra.mxu0 0.0
  %4297 = vmatprep.subr.mxu0 0.0
  %4298 = vmatpush1.msra.mxu0 0.0
  %4299 = vmatprep.subr.mxu0 0.0
  %4300 = vmatpush1.msra.mxu0 0.0
  %4301 = vmatprep.subr.mxu0 0.0
  %4302 = vmatpush1.msra.mxu0 0.0
  %4303 = vmatprep.subr.mxu0 0.0
  %4304 = vmatpush1.msra.mxu0 0.0
  %4305 = vmatprep.subr.mxu0 0.0
  %4306 = vmatpush1.msra.mxu0 0.0
  %4307 = vmatprep.subr.mxu0 0.0
  %4308 = vmatpush1.msra.mxu0 0.0
  %4309 = vmatprep.subr.mxu0 0.0
  %4310 = vmatpush1.msra.mxu0 0.0
  %4311 = vmatprep.subr.mxu0 0.0
  %4312 = vmatpush1.msra.mxu0 0.0
  %4313 = vmatprep.subr.mxu0 0.0
  %4314 = vmatpush1.msra.mxu0 0.0
  %4315 = vmatprep.subr.mxu0 0.0
  %4316 = vmatpush1.msra.mxu0 0.0
  %4317 = vmatprep.subr.mxu0 0.0
  %4318 = vmatpush1.msra.mxu0 0.0
  %4319 = vmatprep.subr.mxu0 0.0
  %4320 = vmatpush1.msra.mxu0 0.0
  %4321 = vmatprep.subr.mxu0 0.0
  %4322 = vmatpush1.msra.mxu0 0.0
  %4323 = vmatprep.subr.mxu0 0.0
  %4324 = vmatpush1.msra.mxu0 0.0
  %4325 = vmatprep.subr.mxu0 0.0
  %4326 = vmatpush1.msra.mxu0 0.0
  %4327 = vmatprep.subr.mxu0 0.0
  %4328 = vmatpush1.msra.mxu0 0.0
  %4329 = vmatprep.subr.mxu0 0.0
  %4330 = vmatpush1.msra.mxu0 0.0
  %4331 = vmatprep.subr.mxu0 0.0
  %4332 = vmatpush1.msra.mxu0 0.0
  %4333 = vmatprep.subr.mxu0 0.0
  %4334 = vmatpush1.msra.mxu0 0.0
  %4335 = vmatprep.subr.mxu0 0.0
  %4336 = vmatpush1.msra.mxu0 0.0
  %4337 = vmatprep.mubr.f32.mxu0 0.0
  %4338 = vmatmul.mubr.f32.gmra.mrb[0].mxu0 %v4117
  %v4339 = vpop.f32.mrb[0].mxu0
  %v4340 = vadd.f32 0.0, %v4339
  %v4341 = vpop.f32.mrb[0].mxu0
  %4342 = vmatprep.mubr.f32.mxu0 0.0
  %4343 = vmatmul.mubr.f32.gmra.mrb[0].mxu0 %v4198
  %v4344 = vpop.f32.mrb[0].mxu0
  %v4345 = vadd.f32 0.0, %v4344
  %v4346 = vpop.f32.mrb[0].mxu0
  %4347 = vdwg.mxu0
  %v4348 = vadd.f32 %v4271, %v4340
  %v4349 = vadd.f32 %v4272, %v4345
  %v4350 = vxor.u32 %v4348, 2147483648
  %v4351 = vxor.u32 %v4349, 2147483648
  %v4352 = vmul.f32 %v4350, 1.442695
  %v4353 = vpow.pop %v4352
  %v4354 = vmul.f32 %v4351, 1.442695
  %v4355 = vpow.pop %v4354
  %v4356 = vadd.f32 %v4353, 1.0
  %v4357 = vadd.f32 %v4355, 1.0
  %v4358 = vrcp.pop %v4356
  %v4359 = vmul.f32 1.0, %v4358
  %v4360 = vrcp.pop %v4357
  %v4361 = vmul.f32 1.0, %v4360
  %v4362 = vtanh.pop %v4348
  %v4363 = vtanh.pop %v4349
  %v4364 = vmul.f32 %v4359, %v4095
  %v4365 = vmul.f32 %v4361, %v4096
  %4368 = vrot.lane.b32.xlu0 %v4362, 64
  %v4369 = vpop.permute.xlu0 %4368
  %4370 = vrot.lane.b32.xlu0 %v4363, 64
  %v4371 = vpop.permute.xlu0 %4370
  %v4374 = vmul.f32 %v4359, %v4369
  %v4375 = vmul.f32 %v4361, %v4371
  %4378 = vrot.lane.b32.xlu0 %v4374, 32
  %v4379 = vpop.permute.xlu0 %4378
  %4380 = vrot.lane.b32.xlu0 %v4375, 32
  %v4381 = vpop.permute.xlu0 %4380
  %v4384 = vadd.f32 %v4364, %v4379
  %v4385 = vadd.f32 %v4365, %v4381
  %v4386 = vtanh.pop %v4384
  %v4387 = vtanh.pop %v4385
  %4390 = vrot.lane.b32.xlu0 %v4386, 64
  %v4391 = vpop.permute.xlu0 %4390
  %4392 = vrot.lane.b32.xlu0 %v4387, 64
  %v4393 = vpop.permute.xlu0 %4392
  %v4396 = vmul.f32 %v4359, %v4391
  %v4397 = vmul.f32 %v4361, %v4393
  %s4398 = scalar_lea.vmem %s3, 416
  %v4399 = vld [vmem:[%s4398] sm:$0xff]
  %v4400 = vld [vmem:[%s4398 + $0x8] sm:$0xff]
  %v4401 = vld [vmem:[%s4398 + $0x10] sm:$0xff]
  %v4402 = vld [vmem:[%s4398 + $0x18] sm:$0xff]
  %4404 = vrot.lane.b32.xlu0 %v4396, 32
  %v4405 = vpop.permute.xlu0 %4404
  %v4406 = vsel %vm504, %v4405, 0
  %4408 = vmatprep.subr.mxu0 0.0
  %4409 = vmatpush1.msra.mxu0 %v4399
  %4410 = vmatprep.subr.mxu0 0.0
  %4411 = vmatpush1.msra.mxu0 %v4400
  %4412 = vmatprep.subr.mxu0 0.0
  %4413 = vmatpush1.msra.mxu0 %v4401
  %4414 = vmatprep.subr.mxu0 0.0
  %4415 = vmatpush1.msra.mxu0 %v4402
  %4416 = vmatprep.subr.mxu0 0.0
  %4417 = vmatpush1.msra.mxu0 0.0
  %4418 = vmatprep.subr.mxu0 0.0
  %4419 = vmatpush1.msra.mxu0 0.0
  %4420 = vmatprep.subr.mxu0 0.0
  %4421 = vmatpush1.msra.mxu0 0.0
  %4422 = vmatprep.subr.mxu0 0.0
  %4423 = vmatpush1.msra.mxu0 0.0
  %4424 = vmatprep.subr.mxu0 0.0
  %4425 = vmatpush1.msra.mxu0 0.0
  %4426 = vmatprep.subr.mxu0 0.0
  %4427 = vmatpush1.msra.mxu0 0.0
  %4428 = vmatprep.subr.mxu0 0.0
  %4429 = vmatpush1.msra.mxu0 0.0
  %4430 = vmatprep.subr.mxu0 0.0
  %4431 = vmatpush1.msra.mxu0 0.0
  %4432 = vmatprep.subr.mxu0 0.0
  %4433 = vmatpush1.msra.mxu0 0.0
  %4434 = vmatprep.subr.mxu0 0.0
  %4435 = vmatpush1.msra.mxu0 0.0
  %4436 = vmatprep.subr.mxu0 0.0
  %4437 = vmatpush1.msra.mxu0 0.0
  %4438 = vmatprep.subr.mxu0 0.0
  %4439 = vmatpush1.msra.mxu0 0.0
  %4440 = vmatprep.subr.mxu0 0.0
  %4441 = vmatpush1.msra.mxu0 0.0
  %4442 = vmatprep.subr.mxu0 0.0
  %4443 = vmatpush1.msra.mxu0 0.0
  %4444 = vmatprep.subr.mxu0 0.0
  %4445 = vmatpush1.msra.mxu0 0.0
  %4446 = vmatprep.subr.mxu0 0.0
  %4447 = vmatpush1.msra.mxu0 0.0
  %4448 = vmatprep.subr.mxu0 0.0
  %4449 = vmatpush1.msra.mxu0 0.0
  %4450 = vmatprep.subr.mxu0 0.0
  %4451 = vmatpush1.msra.mxu0 0.0
  %4452 = vmatprep.subr.mxu0 0.0
  %4453 = vmatpush1.msra.mxu0 0.0
  %4454 = vmatprep.subr.mxu0 0.0
  %4455 = vmatpush1.msra.mxu0 0.0
  %4456 = vmatprep.subr.mxu0 0.0
  %4457 = vmatpush1.msra.mxu0 0.0
  %4458 = vmatprep.subr.mxu0 0.0
  %4459 = vmatpush1.msra.mxu0 0.0
  %4460 = vmatprep.subr.mxu0 0.0
  %4461 = vmatpush1.msra.mxu0 0.0
  %4462 = vmatprep.subr.mxu0 0.0
  %4463 = vmatpush1.msra.mxu0 0.0
  %4464 = vmatprep.subr.mxu0 0.0
  %4465 = vmatpush1.msra.mxu0 0.0
  %4466 = vmatprep.subr.mxu0 0.0
  %4467 = vmatpush1.msra.mxu0 0.0
  %4468 = vmatprep.subr.mxu0 0.0
  %4469 = vmatpush1.msra.mxu0 0.0
  %4470 = vmatprep.subr.mxu0 0.0
  %4471 = vmatpush1.msra.mxu0 0.0
  %4472 = vmatprep.mubr.f32.mxu0 0.0
  %4473 = vmatmul.mubr.f32.gmra.mrb[0].mxu0 %v4406
  %v4474 = vpop.f32.mrb[0].mxu0
  %v4475 = vadd.f32 0.0, %v4474
  %v4476 = vpop.f32.mrb[0].mxu0
  %4477 = vdwg.mxu0
  %v4478 = vadd.f32 %v4270, %v4475
  %s4479 = scalar_lea.vmem %s3, 1056
  %v4480 = vld [vmem:[%s4479] sm:$0xff]
  %v4481 = vld [vmem:[%s4479 + $0x8] sm:$0xff]
  %v4482 = vld [vmem:[%s4479 + $0x10] sm:$0xff]
  %v4483 = vld [vmem:[%s4479 + $0x18] sm:$0xff]
  %4485 = vrot.lane.b32.xlu0 %v4397, 32
  %v4486 = vpop.permute.xlu0 %4485
  %v4487 = vsel %vm504, %v4486, 0
  %4489 = vmatprep.subr.mxu0 0.0
  %4490 = vmatpush1.msra.mxu0 %v4480
  %4491 = vmatprep.subr.mxu0 0.0
  %4492 = vmatpush1.msra.mxu0 %v4481
  %4493 = vmatprep.subr.mxu0 0.0
  %4494 = vmatpush1.msra.mxu0 %v4482
  %4495 = vmatprep.subr.mxu0 0.0
  %4496 = vmatpush1.msra.mxu0 %v4483
  %4497 = vmatprep.subr.mxu0 0.0
  %4498 = vmatpush1.msra.mxu0 0.0
  %4499 = vmatprep.subr.mxu0 0.0
  %4500 = vmatpush1.msra.mxu0 0.0
  %4501 = vmatprep.subr.mxu0 0.0
  %4502 = vmatpush1.msra.mxu0 0.0
  %4503 = vmatprep.subr.mxu0 0.0
  %4504 = vmatpush1.msra.mxu0 0.0
  %4505 = vmatprep.subr.mxu0 0.0
  %4506 = vmatpush1.msra.mxu0 0.0
  %4507 = vmatprep.subr.mxu0 0.0
  %4508 = vmatpush1.msra.mxu0 0.0
  %4509 = vmatprep.subr.mxu0 0.0
  %4510 = vmatpush1.msra.mxu0 0.0
  %4511 = vmatprep.subr.mxu0 0.0
  %4512 = vmatpush1.msra.mxu0 0.0
  %4513 = vmatprep.subr.mxu0 0.0
  %4514 = vmatpush1.msra.mxu0 0.0
  %4515 = vmatprep.subr.mxu0 0.0
  %4516 = vmatpush1.msra.mxu0 0.0
  %4517 = vmatprep.subr.mxu0 0.0
  %4518 = vmatpush1.msra.mxu0 0.0
  %4519 = vmatprep.subr.mxu0 0.0
  %4520 = vmatpush1.msra.mxu0 0.0
  %4521 = vmatprep.subr.mxu0 0.0
  %4522 = vmatpush1.msra.mxu0 0.0
  %4523 = vmatprep.subr.mxu0 0.0
  %4524 = vmatpush1.msra.mxu0 0.0
  %4525 = vmatprep.subr.mxu0 0.0
  %4526 = vmatpush1.msra.mxu0 0.0
  %4527 = vmatprep.subr.mxu0 0.0
  %4528 = vmatpush1.msra.mxu0 0.0
  %4529 = vmatprep.subr.mxu0 0.0
  %4530 = vmatpush1.msra.mxu0 0.0
  %4531 = vmatprep.subr.mxu0 0.0
  %4532 = vmatpush1.msra.mxu0 0.0
  %4533 = vmatprep.subr.mxu0 0.0
  %4534 = vmatpush1.msra.mxu0 0.0
  %4535 = vmatprep.subr.mxu0 0.0
  %4536 = vmatpush1.msra.mxu0 0.0
  %4537 = vmatprep.subr.mxu0 0.0
  %4538 = vmatpush1.msra.mxu0 0.0
  %4539 = vmatprep.subr.mxu0 0.0
  %4540 = vmatpush1.msra.mxu0 0.0
  %4541 = vmatprep.subr.mxu0 0.0
  %4542 = vmatpush1.msra.mxu0 0.0
  %4543 = vmatprep.subr.mxu0 0.0
  %4544 = vmatpush1.msra.mxu0 0.0
  %4545 = vmatprep.subr.mxu0 0.0
  %4546 = vmatpush1.msra.mxu0 0.0
  %4547 = vmatprep.subr.mxu0 0.0
  %4548 = vmatpush1.msra.mxu0 0.0
  %4549 = vmatprep.subr.mxu0 0.0
  %4550 = vmatpush1.msra.mxu0 0.0
  %4551 = vmatprep.subr.mxu0 0.0
  %4552 = vmatpush1.msra.mxu0 0.0
  %4553 = vmatprep.mubr.f32.mxu0 0.0
  %4554 = vmatmul.mubr.f32.gmra.mrb[0].mxu0 %v4487
  %v4555 = vpop.f32.mrb[0].mxu0
  %v4556 = vadd.f32 0.0, %v4555
  %v4557 = vpop.f32.mrb[0].mxu0
  %4558 = vdwg.mxu0
  %v4559 = vadd.f32 %v4478, %v4556
  %v4560 = vld [vmem:[#allocation2 + $0xe0] sm:$0xff]
  %v4561 = vld [vmem:[#allocation2 + $0xe8] sm:$0xff]
  %4562 = vmatprep.subr.mxu0 0.0
  %4563 = vmatpush1.msra.mxu0 %v18
  %4564 = vmatprep.subr.mxu0 0.0
  %4565 = vmatpush1.msra.mxu0 %v19
  %4566 = vmatprep.subr.mxu0 0.0
  %4567 = vmatpush1.msra.mxu0 %v20
  %4568 = vmatprep.subr.mxu0 0.0
  %4569 = vmatpush1.msra.mxu0 %v21
  %4570 = vmatprep.subr.mxu0 0.0
  %4571 = vmatpush1.msra.mxu0 0.0
  %4572 = vmatprep.subr.mxu0 0.0
  %4573 = vmatpush1.msra.mxu0 0.0
  %4574 = vmatprep.subr.mxu0 0.0
  %4575 = vmatpush1.msra.mxu0 0.0
  %4576 = vmatprep.subr.mxu0 0.0
  %4577 = vmatpush1.msra.mxu0 0.0
  %4578 = vmatprep.subr.mxu0 0.0
  %4579 = vmatpush1.msra.mxu0 0.0
  %4580 = vmatprep.subr.mxu0 0.0
  %4581 = vmatpush1.msra.mxu0 0.0
  %4582 = vmatprep.subr.mxu0 0.0
  %4583 = vmatpush1.msra.mxu0 0.0
  %4584 = vmatprep.subr.mxu0 0.0
  %4585 = vmatpush1.msra.mxu0 0.0
  %4586 = vmatprep.subr.mxu0 0.0
  %4587 = vmatpush1.msra.mxu0 0.0
  %4588 = vmatprep.subr.mxu0 0.0
  %4589 = vmatpush1.msra.mxu0 0.0
  %4590 = vmatprep.subr.mxu0 0.0
  %4591 = vmatpush1.msra.mxu0 0.0
  %4592 = vmatprep.subr.mxu0 0.0
  %4593 = vmatpush1.msra.mxu0 0.0
  %4594 = vmatprep.subr.mxu0 0.0
  %4595 = vmatpush1.msra.mxu0 0.0
  %4596 = vmatprep.subr.mxu0 0.0
  %4597 = vmatpush1.msra.mxu0 0.0
  %4598 = vmatprep.subr.mxu0 0.0
  %4599 = vmatpush1.msra.mxu0 0.0
  %4600 = vmatprep.subr.mxu0 0.0
  %4601 = vmatpush1.msra.mxu0 0.0
  %4602 = vmatprep.subr.mxu0 0.0
  %4603 = vmatpush1.msra.mxu0 0.0
  %4604 = vmatprep.subr.mxu0 0.0
  %4605 = vmatpush1.msra.mxu0 0.0
  %4606 = vmatprep.subr.mxu0 0.0
  %4607 = vmatpush1.msra.mxu0 0.0
  %4608 = vmatprep.subr.mxu0 0.0
  %4609 = vmatpush1.msra.mxu0 0.0
  %4610 = vmatprep.subr.mxu0 0.0
  %4611 = vmatpush1.msra.mxu0 0.0
  %4612 = vmatprep.subr.mxu0 0.0
  %4613 = vmatpush1.msra.mxu0 0.0
  %4614 = vmatprep.subr.mxu0 0.0
  %4615 = vmatpush1.msra.mxu0 0.0
  %4616 = vmatprep.subr.mxu0 0.0
  %4617 = vmatpush1.msra.mxu0 0.0
  %4618 = vmatprep.subr.mxu0 0.0
  %4619 = vmatpush1.msra.mxu0 0.0
  %4620 = vmatprep.subr.mxu0 0.0
  %4621 = vmatpush1.msra.mxu0 0.0
  %4622 = vmatprep.subr.mxu0 0.0
  %4623 = vmatpush1.msra.mxu0 0.0
  %4624 = vmatprep.subr.mxu0 0.0
  %4625 = vmatpush1.msra.mxu0 0.0
  %4626 = vmatprep.mubr.f32.mxu0 0.0
  %4627 = vmatmul.mubr.f32.gmra.mrb[0].mxu0 %v4406
  %v4628 = vpop.f32.mrb[0].mxu0
  %v4629 = vadd.f32 0.0, %v4628
  %v4630 = vpop.f32.mrb[0].mxu0
  %4631 = vmatprep.mubr.f32.mxu0 0.0
  %4632 = vmatmul.mubr.f32.gmra.mrb[0].mxu0 %v4487
  %v4633 = vpop.f32.mrb[0].mxu0
  %v4634 = vadd.f32 0.0, %v4633
  %v4635 = vpop.f32.mrb[0].mxu0
  %4636 = vdwg.mxu0
  %v4637 = vadd.f32 %v4560, %v4629
  %v4638 = vadd.f32 %v4561, %v4634
  %v4639 = vxor.u32 %v4637, 2147483648
  %v4640 = vxor.u32 %v4638, 2147483648
  %v4641 = vmul.f32 %v4639, 1.442695
  %v4642 = vpow.pop %v4641
  %v4643 = vmul.f32 %v4640, 1.442695
  %v4644 = vpow.pop %v4643
  %v4645 = vadd.f32 %v4642, 1.0
  %v4646 = vadd.f32 %v4644, 1.0
  %v4647 = vrcp.pop %v4645
  %v4648 = vmul.f32 1.0, %v4647
  %v4649 = vrcp.pop %v4646
  %v4650 = vmul.f32 1.0, %v4649
  %v4651 = vtanh.pop %v4637
  %v4652 = vtanh.pop %v4638
  %v4653 = vmul.f32 %v4648, %v4384
  %v4654 = vmul.f32 %v4650, %v4385
  %4657 = vrot.lane.b32.xlu0 %v4651, 64
  %v4658 = vpop.permute.xlu0 %4657
  %4659 = vrot.lane.b32.xlu0 %v4652, 64
  %v4660 = vpop.permute.xlu0 %4659
  %v4663 = vmul.f32 %v4648, %v4658
  %v4664 = vmul.f32 %v4650, %v4660
  %4667 = vrot.lane.b32.xlu0 %v4663, 32
  %v4668 = vpop.permute.xlu0 %4667
  %4669 = vrot.lane.b32.xlu0 %v4664, 32
  %v4670 = vpop.permute.xlu0 %4669
  %v4673 = vadd.f32 %v4653, %v4668
  %v4674 = vadd.f32 %v4654, %v4670
  %v4675 = vtanh.pop %v4673
  %v4676 = vtanh.pop %v4674
  %4679 = vrot.lane.b32.xlu0 %v4675, 64
  %v4680 = vpop.permute.xlu0 %4679
  %4681 = vrot.lane.b32.xlu0 %v4676, 64
  %v4682 = vpop.permute.xlu0 %4681
  %v4685 = vmul.f32 %v4648, %v4680
  %v4686 = vmul.f32 %v4650, %v4682
  %s4687 = scalar_lea.vmem %s3, 448
  %v4688 = vld [vmem:[%s4687] sm:$0xff]
  %v4689 = vld [vmem:[%s4687 + $0x8] sm:$0xff]
  %v4690 = vld [vmem:[%s4687 + $0x10] sm:$0xff]
  %v4691 = vld [vmem:[%s4687 + $0x18] sm:$0xff]
  %4693 = vrot.lane.b32.xlu0 %v4685, 32
  %v4694 = vpop.permute.xlu0 %4693
  %v4695 = vsel %vm504, %v4694, 0
  %4697 = vmatprep.subr.mxu0 0.0
  %4698 = vmatpush1.msra.mxu0 %v4688
  %4699 = vmatprep.subr.mxu0 0.0
  %4700 = vmatpush1.msra.mxu0 %v4689
  %4701 = vmatprep.subr.mxu0 0.0
  %4702 = vmatpush1.msra.mxu0 %v4690
  %4703 = vmatprep.subr.mxu0 0.0
  %4704 = vmatpush1.msra.mxu0 %v4691
  %4705 = vmatprep.subr.mxu0 0.0
  %4706 = vmatpush1.msra.mxu0 0.0
  %4707 = vmatprep.subr.mxu0 0.0
  %4708 = vmatpush1.msra.mxu0 0.0
  %4709 = vmatprep.subr.mxu0 0.0
  %4710 = vmatpush1.msra.mxu0 0.0
  %4711 = vmatprep.subr.mxu0 0.0
  %4712 = vmatpush1.msra.mxu0 0.0
  %4713 = vmatprep.subr.mxu0 0.0
  %4714 = vmatpush1.msra.mxu0 0.0
  %4715 = vmatprep.subr.mxu0 0.0
  %4716 = vmatpush1.msra.mxu0 0.0
  %4717 = vmatprep.subr.mxu0 0.0
  %4718 = vmatpush1.msra.mxu0 0.0
  %4719 = vmatprep.subr.mxu0 0.0
  %4720 = vmatpush1.msra.mxu0 0.0
  %4721 = vmatprep.subr.mxu0 0.0
  %4722 = vmatpush1.msra.mxu0 0.0
  %4723 = vmatprep.subr.mxu0 0.0
  %4724 = vmatpush1.msra.mxu0 0.0
  %4725 = vmatprep.subr.mxu0 0.0
  %4726 = vmatpush1.msra.mxu0 0.0
  %4727 = vmatprep.subr.mxu0 0.0
  %4728 = vmatpush1.msra.mxu0 0.0
  %4729 = vmatprep.subr.mxu0 0.0
  %4730 = vmatpush1.msra.mxu0 0.0
  %4731 = vmatprep.subr.mxu0 0.0
  %4732 = vmatpush1.msra.mxu0 0.0
  %4733 = vmatprep.subr.mxu0 0.0
  %4734 = vmatpush1.msra.mxu0 0.0
  %4735 = vmatprep.subr.mxu0 0.0
  %4736 = vmatpush1.msra.mxu0 0.0
  %4737 = vmatprep.subr.mxu0 0.0
  %4738 = vmatpush1.msra.mxu0 0.0
  %4739 = vmatprep.subr.mxu0 0.0
  %4740 = vmatpush1.msra.mxu0 0.0
  %4741 = vmatprep.subr.mxu0 0.0
  %4742 = vmatpush1.msra.mxu0 0.0
  %4743 = vmatprep.subr.mxu0 0.0
  %4744 = vmatpush1.msra.mxu0 0.0
  %4745 = vmatprep.subr.mxu0 0.0
  %4746 = vmatpush1.msra.mxu0 0.0
  %4747 = vmatprep.subr.mxu0 0.0
  %4748 = vmatpush1.msra.mxu0 0.0
  %4749 = vmatprep.subr.mxu0 0.0
  %4750 = vmatpush1.msra.mxu0 0.0
  %4751 = vmatprep.subr.mxu0 0.0
  %4752 = vmatpush1.msra.mxu0 0.0
  %4753 = vmatprep.subr.mxu0 0.0
  %4754 = vmatpush1.msra.mxu0 0.0
  %4755 = vmatprep.subr.mxu0 0.0
  %4756 = vmatpush1.msra.mxu0 0.0
  %4757 = vmatprep.subr.mxu0 0.0
  %4758 = vmatpush1.msra.mxu0 0.0
  %4759 = vmatprep.subr.mxu0 0.0
  %4760 = vmatpush1.msra.mxu0 0.0
  %4761 = vmatprep.mubr.f32.mxu0 0.0
  %4762 = vmatmul.mubr.f32.gmra.mrb[0].mxu0 %v4695
  %v4763 = vpop.f32.mrb[0].mxu0
  %v4764 = vadd.f32 0.0, %v4763
  %v4765 = vpop.f32.mrb[0].mxu0
  %4766 = vdwg.mxu0
  %v4767 = vadd.f32 %v4559, %v4764
  %s4768 = scalar_lea.vmem %s3, 1088
  %v4769 = vld [vmem:[%s4768] sm:$0xff]
  %v4770 = vld [vmem:[%s4768 + $0x8] sm:$0xff]
  %v4771 = vld [vmem:[%s4768 + $0x10] sm:$0xff]
  %v4772 = vld [vmem:[%s4768 + $0x18] sm:$0xff]
  %4774 = vrot.lane.b32.xlu0 %v4686, 32
  %v4775 = vpop.permute.xlu0 %4774
  %v4776 = vsel %vm504, %v4775, 0
  %4778 = vmatprep.subr.mxu0 0.0
  %4779 = vmatpush1.msra.mxu0 %v4769
  %4780 = vmatprep.subr.mxu0 0.0
  %4781 = vmatpush1.msra.mxu0 %v4770
  %4782 = vmatprep.subr.mxu0 0.0
  %4783 = vmatpush1.msra.mxu0 %v4771
  %4784 = vmatprep.subr.mxu0 0.0
  %4785 = vmatpush1.msra.mxu0 %v4772
  %4786 = vmatprep.subr.mxu0 0.0
  %4787 = vmatpush1.msra.mxu0 0.0
  %4788 = vmatprep.subr.mxu0 0.0
  %4789 = vmatpush1.msra.mxu0 0.0
  %4790 = vmatprep.subr.mxu0 0.0
  %4791 = vmatpush1.msra.mxu0 0.0
  %4792 = vmatprep.subr.mxu0 0.0
  %4793 = vmatpush1.msra.mxu0 0.0
  %4794 = vmatprep.subr.mxu0 0.0
  %4795 = vmatpush1.msra.mxu0 0.0
  %4796 = vmatprep.subr.mxu0 0.0
  %4797 = vmatpush1.msra.mxu0 0.0
  %4798 = vmatprep.subr.mxu0 0.0
  %4799 = vmatpush1.msra.mxu0 0.0
  %4800 = vmatprep.subr.mxu0 0.0
  %4801 = vmatpush1.msra.mxu0 0.0
  %4802 = vmatprep.subr.mxu0 0.0
  %4803 = vmatpush1.msra.mxu0 0.0
  %4804 = vmatprep.subr.mxu0 0.0
  %4805 = vmatpush1.msra.mxu0 0.0
  %4806 = vmatprep.subr.mxu0 0.0
  %4807 = vmatpush1.msra.mxu0 0.0
  %4808 = vmatprep.subr.mxu0 0.0
  %4809 = vmatpush1.msra.mxu0 0.0
  %4810 = vmatprep.subr.mxu0 0.0
  %4811 = vmatpush1.msra.mxu0 0.0
  %4812 = vmatprep.subr.mxu0 0.0
  %4813 = vmatpush1.msra.mxu0 0.0
  %4814 = vmatprep.subr.mxu0 0.0
  %4815 = vmatpush1.msra.mxu0 0.0
  %4816 = vmatprep.subr.mxu0 0.0
  %4817 = vmatpush1.msra.mxu0 0.0
  %4818 = vmatprep.subr.mxu0 0.0
  %4819 = vmatpush1.msra.mxu0 0.0
  %4820 = vmatprep.subr.mxu0 0.0
  %4821 = vmatpush1.msra.mxu0 0.0
  %4822 = vmatprep.subr.mxu0 0.0
  %4823 = vmatpush1.msra.mxu0 0.0
  %4824 = vmatprep.subr.mxu0 0.0
  %4825 = vmatpush1.msra.mxu0 0.0
  %4826 = vmatprep.subr.mxu0 0.0
  %4827 = vmatpush1.msra.mxu0 0.0
  %4828 = vmatprep.subr.mxu0 0.0
  %4829 = vmatpush1.msra.mxu0 0.0
  %4830 = vmatprep.subr.mxu0 0.0
  %4831 = vmatpush1.msra.mxu0 0.0
  %4832 = vmatprep.subr.mxu0 0.0
  %4833 = vmatpush1.msra.mxu0 0.0
  %4834 = vmatprep.subr.mxu0 0.0
  %4835 = vmatpush1.msra.mxu0 0.0
  %4836 = vmatprep.subr.mxu0 0.0
  %4837 = vmatpush1.msra.mxu0 0.0
  %4838 = vmatprep.subr.mxu0 0.0
  %4839 = vmatpush1.msra.mxu0 0.0
  %4840 = vmatprep.subr.mxu0 0.0
  %4841 = vmatpush1.msra.mxu0 0.0
  %4842 = vmatprep.mubr.f32.mxu0 0.0
  %4843 = vmatmul.mubr.f32.gmra.mrb[0].mxu0 %v4776
  %v4844 = vpop.f32.mrb[0].mxu0
  %v4845 = vadd.f32 0.0, %v4844
  %v4846 = vpop.f32.mrb[0].mxu0
  %4847 = vdwg.mxu0
  %v4848 = vadd.f32 %v4767, %v4845
  %v4849 = vld [vmem:[#allocation2 + $0xf0] sm:$0xff]
  %v4850 = vld [vmem:[#allocation2 + $0xf8] sm:$0xff]
  %4851 = vmatprep.subr.mxu0 0.0
  %4852 = vmatpush1.msra.mxu0 %v18
  %4853 = vmatprep.subr.mxu0 0.0
  %4854 = vmatpush1.msra.mxu0 %v19
  %4855 = vmatprep.subr.mxu0 0.0
  %4856 = vmatpush1.msra.mxu0 %v20
  %4857 = vmatprep.subr.mxu0 0.0
  %4858 = vmatpush1.msra.mxu0 %v21
  %4859 = vmatprep.subr.mxu0 0.0
  %4860 = vmatpush1.msra.mxu0 0.0
  %4861 = vmatprep.subr.mxu0 0.0
  %4862 = vmatpush1.msra.mxu0 0.0
  %4863 = vmatprep.subr.mxu0 0.0
  %4864 = vmatpush1.msra.mxu0 0.0
  %4865 = vmatprep.subr.mxu0 0.0
  %4866 = vmatpush1.msra.mxu0 0.0
  %4867 = vmatprep.subr.mxu0 0.0
  %4868 = vmatpush1.msra.mxu0 0.0
  %4869 = vmatprep.subr.mxu0 0.0
  %4870 = vmatpush1.msra.mxu0 0.0
  %4871 = vmatprep.subr.mxu0 0.0
  %4872 = vmatpush1.msra.mxu0 0.0
  %4873 = vmatprep.subr.mxu0 0.0
  %4874 = vmatpush1.msra.mxu0 0.0
  %4875 = vmatprep.subr.mxu0 0.0
  %4876 = vmatpush1.msra.mxu0 0.0
  %4877 = vmatprep.subr.mxu0 0.0
  %4878 = vmatpush1.msra.mxu0 0.0
  %4879 = vmatprep.subr.mxu0 0.0
  %4880 = vmatpush1.msra.mxu0 0.0
  %4881 = vmatprep.subr.mxu0 0.0
  %4882 = vmatpush1.msra.mxu0 0.0
  %4883 = vmatprep.subr.mxu0 0.0
  %4884 = vmatpush1.msra.mxu0 0.0
  %4885 = vmatprep.subr.mxu0 0.0
  %4886 = vmatpush1.msra.mxu0 0.0
  %4887 = vmatprep.subr.mxu0 0.0
  %4888 = vmatpush1.msra.mxu0 0.0
  %4889 = vmatprep.subr.mxu0 0.0
  %4890 = vmatpush1.msra.mxu0 0.0
  %4891 = vmatprep.subr.mxu0 0.0
  %4892 = vmatpush1.msra.mxu0 0.0
  %4893 = vmatprep.subr.mxu0 0.0
  %4894 = vmatpush1.msra.mxu0 0.0
  %4895 = vmatprep.subr.mxu0 0.0
  %4896 = vmatpush1.msra.mxu0 0.0
  %4897 = vmatprep.subr.mxu0 0.0
  %4898 = vmatpush1.msra.mxu0 0.0
  %4899 = vmatprep.subr.mxu0 0.0
  %4900 = vmatpush1.msra.mxu0 0.0
  %4901 = vmatprep.subr.mxu0 0.0
  %4902 = vmatpush1.msra.mxu0 0.0
  %4903 = vmatprep.subr.mxu0 0.0
  %4904 = vmatpush1.msra.mxu0 0.0
  %4905 = vmatprep.subr.mxu0 0.0
  %4906 = vmatpush1.msra.mxu0 0.0
  %4907 = vmatprep.subr.mxu0 0.0
  %4908 = vmatpush1.msra.mxu0 0.0
  %4909 = vmatprep.subr.mxu0 0.0
  %4910 = vmatpush1.msra.mxu0 0.0
  %4911 = vmatprep.subr.mxu0 0.0
  %4912 = vmatpush1.msra.mxu0 0.0
  %4913 = vmatprep.subr.mxu0 0.0
  %4914 = vmatpush1.msra.mxu0 0.0
  %4915 = vmatprep.mubr.f32.mxu0 0.0
  %4916 = vmatmul.mubr.f32.gmra.mrb[0].mxu0 %v4695
  %v4917 = vpop.f32.mrb[0].mxu0
  %v4918 = vadd.f32 0.0, %v4917
  %v4919 = vpop.f32.mrb[0].mxu0
  %4920 = vmatprep.mubr.f32.mxu0 0.0
  %4921 = vmatmul.mubr.f32.gmra.mrb[0].mxu0 %v4776
  %v4922 = vpop.f32.mrb[0].mxu0
  %v4923 = vadd.f32 0.0, %v4922
  %v4924 = vpop.f32.mrb[0].mxu0
  %4925 = vdwg.mxu0
  %v4926 = vadd.f32 %v4849, %v4918
  %v4927 = vadd.f32 %v4850, %v4923
  %v4928 = vxor.u32 %v4926, 2147483648
  %v4929 = vxor.u32 %v4927, 2147483648
  %v4930 = vmul.f32 %v4928, 1.442695
  %v4931 = vpow.pop %v4930
  %v4932 = vmul.f32 %v4929, 1.442695
  %v4933 = vpow.pop %v4932
  %v4934 = vadd.f32 %v4931, 1.0
  %v4935 = vadd.f32 %v4933, 1.0
  %v4936 = vrcp.pop %v4934
  %v4937 = vmul.f32 1.0, %v4936
  %v4938 = vrcp.pop %v4935
  %v4939 = vmul.f32 1.0, %v4938
  %v4940 = vtanh.pop %v4926
  %v4941 = vtanh.pop %v4927
  %v4942 = vmul.f32 %v4937, %v4673
  %v4943 = vmul.f32 %v4939, %v4674
  %4946 = vrot.lane.b32.xlu0 %v4940, 64
  %v4947 = vpop.permute.xlu0 %4946
  %4948 = vrot.lane.b32.xlu0 %v4941, 64
  %v4949 = vpop.permute.xlu0 %4948
  %v4952 = vmul.f32 %v4937, %v4947
  %v4953 = vmul.f32 %v4939, %v4949
  %4956 = vrot.lane.b32.xlu0 %v4952, 32
  %v4957 = vpop.permute.xlu0 %4956
  %4958 = vrot.lane.b32.xlu0 %v4953, 32
  %v4959 = vpop.permute.xlu0 %4958
  %v4962 = vadd.f32 %v4942, %v4957
  %v4963 = vadd.f32 %v4943, %v4959
  %v4964 = vtanh.pop %v4962
  %v4965 = vtanh.pop %v4963
  %4968 = vrot.lane.b32.xlu0 %v4964, 64
  %v4969 = vpop.permute.xlu0 %4968
  %4970 = vrot.lane.b32.xlu0 %v4965, 64
  %v4971 = vpop.permute.xlu0 %4970
  %v4974 = vmul.f32 %v4937, %v4969
  %v4975 = vmul.f32 %v4939, %v4971
  %s4976 = scalar_lea.vmem %s3, 480
  %v4977 = vld [vmem:[%s4976] sm:$0xff]
  %v4978 = vld [vmem:[%s4976 + $0x8] sm:$0xff]
  %v4979 = vld [vmem:[%s4976 + $0x10] sm:$0xff]
  %v4980 = vld [vmem:[%s4976 + $0x18] sm:$0xff]
  %4982 = vrot.lane.b32.xlu0 %v4974, 32
  %v4983 = vpop.permute.xlu0 %4982
  %v4984 = vsel %vm504, %v4983, 0
  %4986 = vmatprep.subr.mxu0 0.0
  %4987 = vmatpush1.msra.mxu0 %v4977
  %4988 = vmatprep.subr.mxu0 0.0
  %4989 = vmatpush1.msra.mxu0 %v4978
  %4990 = vmatprep.subr.mxu0 0.0
  %4991 = vmatpush1.msra.mxu0 %v4979
  %4992 = vmatprep.subr.mxu0 0.0
  %4993 = vmatpush1.msra.mxu0 %v4980
  %4994 = vmatprep.subr.mxu0 0.0
  %4995 = vmatpush1.msra.mxu0 0.0
  %4996 = vmatprep.subr.mxu0 0.0
  %4997 = vmatpush1.msra.mxu0 0.0
  %4998 = vmatprep.subr.mxu0 0.0
  %4999 = vmatpush1.msra.mxu0 0.0
  %5000 = vmatprep.subr.mxu0 0.0
  %5001 = vmatpush1.msra.mxu0 0.0
  %5002 = vmatprep.subr.mxu0 0.0
  %5003 = vmatpush1.msra.mxu0 0.0
  %5004 = vmatprep.subr.mxu0 0.0
  %5005 = vmatpush1.msra.mxu0 0.0
  %5006 = vmatprep.subr.mxu0 0.0
  %5007 = vmatpush1.msra.mxu0 0.0
  %5008 = vmatprep.subr.mxu0 0.0
  %5009 = vmatpush1.msra.mxu0 0.0
  %5010 = vmatprep.subr.mxu0 0.0
  %5011 = vmatpush1.msra.mxu0 0.0
  %5012 = vmatprep.subr.mxu0 0.0
  %5013 = vmatpush1.msra.mxu0 0.0
  %5014 = vmatprep.subr.mxu0 0.0
  %5015 = vmatpush1.msra.mxu0 0.0
  %5016 = vmatprep.subr.mxu0 0.0
  %5017 = vmatpush1.msra.mxu0 0.0
  %5018 = vmatprep.subr.mxu0 0.0
  %5019 = vmatpush1.msra.mxu0 0.0
  %5020 = vmatprep.subr.mxu0 0.0
  %5021 = vmatpush1.msra.mxu0 0.0
  %5022 = vmatprep.subr.mxu0 0.0
  %5023 = vmatpush1.msra.mxu0 0.0
  %5024 = vmatprep.subr.mxu0 0.0
  %5025 = vmatpush1.msra.mxu0 0.0
  %5026 = vmatprep.subr.mxu0 0.0
  %5027 = vmatpush1.msra.mxu0 0.0
  %5028 = vmatprep.subr.mxu0 0.0
  %5029 = vmatpush1.msra.mxu0 0.0
  %5030 = vmatprep.subr.mxu0 0.0
  %5031 = vmatpush1.msra.mxu0 0.0
  %5032 = vmatprep.subr.mxu0 0.0
  %5033 = vmatpush1.msra.mxu0 0.0
  %5034 = vmatprep.subr.mxu0 0.0
  %5035 = vmatpush1.msra.mxu0 0.0
  %5036 = vmatprep.subr.mxu0 0.0
  %5037 = vmatpush1.msra.mxu0 0.0
  %5038 = vmatprep.subr.mxu0 0.0
  %5039 = vmatpush1.msra.mxu0 0.0
  %5040 = vmatprep.subr.mxu0 0.0
  %5041 = vmatpush1.msra.mxu0 0.0
  %5042 = vmatprep.subr.mxu0 0.0
  %5043 = vmatpush1.msra.mxu0 0.0
  %5044 = vmatprep.subr.mxu0 0.0
  %5045 = vmatpush1.msra.mxu0 0.0
  %5046 = vmatprep.subr.mxu0 0.0
  %5047 = vmatpush1.msra.mxu0 0.0
  %5048 = vmatprep.subr.mxu0 0.0
  %5049 = vmatpush1.msra.mxu0 0.0
  %5050 = vmatprep.mubr.f32.mxu0 0.0
  %5051 = vmatmul.mubr.f32.gmra.mrb[0].mxu0 %v4984
  %v5052 = vpop.f32.mrb[0].mxu0
  %v5053 = vadd.f32 0.0, %v5052
  %v5054 = vpop.f32.mrb[0].mxu0
  %5055 = vdwg.mxu0
  %v5056 = vadd.f32 %v4848, %v5053
  %s5057 = scalar_lea.vmem %s3, 1120
  %v5058 = vld [vmem:[%s5057] sm:$0xff]
  %v5059 = vld [vmem:[%s5057 + $0x8] sm:$0xff]
  %v5060 = vld [vmem:[%s5057 + $0x10] sm:$0xff]
  %v5061 = vld [vmem:[%s5057 + $0x18] sm:$0xff]
  %5063 = vrot.lane.b32.xlu0 %v4975, 32
  %v5064 = vpop.permute.xlu0 %5063
  %v5065 = vsel %vm504, %v5064, 0
  %5067 = vmatprep.subr.mxu0 0.0
  %5068 = vmatpush1.msra.mxu0 %v5058
  %5069 = vmatprep.subr.mxu0 0.0
  %5070 = vmatpush1.msra.mxu0 %v5059
  %5071 = vmatprep.subr.mxu0 0.0
  %5072 = vmatpush1.msra.mxu0 %v5060
  %5073 = vmatprep.subr.mxu0 0.0
  %5074 = vmatpush1.msra.mxu0 %v5061
  %5075 = vmatprep.subr.mxu0 0.0
  %5076 = vmatpush1.msra.mxu0 0.0
  %5077 = vmatprep.subr.mxu0 0.0
  %5078 = vmatpush1.msra.mxu0 0.0
  %5079 = vmatprep.subr.mxu0 0.0
  %5080 = vmatpush1.msra.mxu0 0.0
  %5081 = vmatprep.subr.mxu0 0.0
  %5082 = vmatpush1.msra.mxu0 0.0
  %5083 = vmatprep.subr.mxu0 0.0
  %5084 = vmatpush1.msra.mxu0 0.0
  %5085 = vmatprep.subr.mxu0 0.0
  %5086 = vmatpush1.msra.mxu0 0.0
  %5087 = vmatprep.subr.mxu0 0.0
  %5088 = vmatpush1.msra.mxu0 0.0
  %5089 = vmatprep.subr.mxu0 0.0
  %5090 = vmatpush1.msra.mxu0 0.0
  %5091 = vmatprep.subr.mxu0 0.0
  %5092 = vmatpush1.msra.mxu0 0.0
  %5093 = vmatprep.subr.mxu0 0.0
  %5094 = vmatpush1.msra.mxu0 0.0
  %5095 = vmatprep.subr.mxu0 0.0
  %5096 = vmatpush1.msra.mxu0 0.0
  %5097 = vmatprep.subr.mxu0 0.0
  %5098 = vmatpush1.msra.mxu0 0.0
  %5099 = vmatprep.subr.mxu0 0.0
  %5100 = vmatpush1.msra.mxu0 0.0
  %5101 = vmatprep.subr.mxu0 0.0
  %5102 = vmatpush1.msra.mxu0 0.0
  %5103 = vmatprep.subr.mxu0 0.0
  %5104 = vmatpush1.msra.mxu0 0.0
  %5105 = vmatprep.subr.mxu0 0.0
  %5106 = vmatpush1.msra.mxu0 0.0
  %5107 = vmatprep.subr.mxu0 0.0
  %5108 = vmatpush1.msra.mxu0 0.0
  %5109 = vmatprep.subr.mxu0 0.0
  %5110 = vmatpush1.msra.mxu0 0.0
  %5111 = vmatprep.subr.mxu0 0.0
  %5112 = vmatpush1.msra.mxu0 0.0
  %5113 = vmatprep.subr.mxu0 0.0
  %5114 = vmatpush1.msra.mxu0 0.0
  %5115 = vmatprep.subr.mxu0 0.0
  %5116 = vmatpush1.msra.mxu0 0.0
  %5117 = vmatprep.subr.mxu0 0.0
  %5118 = vmatpush1.msra.mxu0 0.0
  %5119 = vmatprep.subr.mxu0 0.0
  %5120 = vmatpush1.msra.mxu0 0.0
  %5121 = vmatprep.subr.mxu0 0.0
  %5122 = vmatpush1.msra.mxu0 0.0
  %5123 = vmatprep.subr.mxu0 0.0
  %5124 = vmatpush1.msra.mxu0 0.0
  %5125 = vmatprep.subr.mxu0 0.0
  %5126 = vmatpush1.msra.mxu0 0.0
  %5127 = vmatprep.subr.mxu0 0.0
  %5128 = vmatpush1.msra.mxu0 0.0
  %5129 = vmatprep.subr.mxu0 0.0
  %5130 = vmatpush1.msra.mxu0 0.0
  %5131 = vmatprep.mubr.f32.mxu0 0.0
  %5132 = vmatmul.mubr.f32.gmra.mrb[0].mxu0 %v5065
  %v5133 = vpop.f32.mrb[0].mxu0
  %v5134 = vadd.f32 0.0, %v5133
  %v5135 = vpop.f32.mrb[0].mxu0
  %5136 = vdwg.mxu0
  %v5137 = vadd.f32 %v5056, %v5134
  %v5138 = vld [vmem:[#allocation2 + $0x100] sm:$0xff]
  %v5139 = vld [vmem:[#allocation2 + $0x108] sm:$0xff]
  %5140 = vmatprep.subr.mxu0 0.0
  %5141 = vmatpush1.msra.mxu0 %v18
  %5142 = vmatprep.subr.mxu0 0.0
  %5143 = vmatpush1.msra.mxu0 %v19
  %5144 = vmatprep.subr.mxu0 0.0
  %5145 = vmatpush1.msra.mxu0 %v20
  %5146 = vmatprep.subr.mxu0 0.0
  %5147 = vmatpush1.msra.mxu0 %v21
  %5148 = vmatprep.subr.mxu0 0.0
  %5149 = vmatpush1.msra.mxu0 0.0
  %5150 = vmatprep.subr.mxu0 0.0
  %5151 = vmatpush1.msra.mxu0 0.0
  %5152 = vmatprep.subr.mxu0 0.0
  %5153 = vmatpush1.msra.mxu0 0.0
  %5154 = vmatprep.subr.mxu0 0.0
  %5155 = vmatpush1.msra.mxu0 0.0
  %5156 = vmatprep.subr.mxu0 0.0
  %5157 = vmatpush1.msra.mxu0 0.0
  %5158 = vmatprep.subr.mxu0 0.0
  %5159 = vmatpush1.msra.mxu0 0.0
  %5160 = vmatprep.subr.mxu0 0.0
  %5161 = vmatpush1.msra.mxu0 0.0
  %5162 = vmatprep.subr.mxu0 0.0
  %5163 = vmatpush1.msra.mxu0 0.0
  %5164 = vmatprep.subr.mxu0 0.0
  %5165 = vmatpush1.msra.mxu0 0.0
  %5166 = vmatprep.subr.mxu0 0.0
  %5167 = vmatpush1.msra.mxu0 0.0
  %5168 = vmatprep.subr.mxu0 0.0
  %5169 = vmatpush1.msra.mxu0 0.0
  %5170 = vmatprep.subr.mxu0 0.0
  %5171 = vmatpush1.msra.mxu0 0.0
  %5172 = vmatprep.subr.mxu0 0.0
  %5173 = vmatpush1.msra.mxu0 0.0
  %5174 = vmatprep.subr.mxu0 0.0
  %5175 = vmatpush1.msra.mxu0 0.0
  %5176 = vmatprep.subr.mxu0 0.0
  %5177 = vmatpush1.msra.mxu0 0.0
  %5178 = vmatprep.subr.mxu0 0.0
  %5179 = vmatpush1.msra.mxu0 0.0
  %5180 = vmatprep.subr.mxu0 0.0
  %5181 = vmatpush1.msra.mxu0 0.0
  %5182 = vmatprep.subr.mxu0 0.0
  %5183 = vmatpush1.msra.mxu0 0.0
  %5184 = vmatprep.subr.mxu0 0.0
  %5185 = vmatpush1.msra.mxu0 0.0
  %5186 = vmatprep.subr.mxu0 0.0
  %5187 = vmatpush1.msra.mxu0 0.0
  %5188 = vmatprep.subr.mxu0 0.0
  %5189 = vmatpush1.msra.mxu0 0.0
  %5190 = vmatprep.subr.mxu0 0.0
  %5191 = vmatpush1.msra.mxu0 0.0
  %5192 = vmatprep.subr.mxu0 0.0
  %5193 = vmatpush1.msra.mxu0 0.0
  %5194 = vmatprep.subr.mxu0 0.0
  %5195 = vmatpush1.msra.mxu0 0.0
  %5196 = vmatprep.subr.mxu0 0.0
  %5197 = vmatpush1.msra.mxu0 0.0
  %5198 = vmatprep.subr.mxu0 0.0
  %5199 = vmatpush1.msra.mxu0 0.0
  %5200 = vmatprep.subr.mxu0 0.0
  %5201 = vmatpush1.msra.mxu0 0.0
  %5202 = vmatprep.subr.mxu0 0.0
  %5203 = vmatpush1.msra.mxu0 0.0
  %5204 = vmatprep.mubr.f32.mxu0 0.0
  %5205 = vmatmul.mubr.f32.gmra.mrb[0].mxu0 %v4984
  %v5206 = vpop.f32.mrb[0].mxu0
  %v5207 = vadd.f32 0.0, %v5206
  %v5208 = vpop.f32.mrb[0].mxu0
  %5209 = vmatprep.mubr.f32.mxu0 0.0
  %5210 = vmatmul.mubr.f32.gmra.mrb[0].mxu0 %v5065
  %v5211 = vpop.f32.mrb[0].mxu0
  %v5212 = vadd.f32 0.0, %v5211
  %v5213 = vpop.f32.mrb[0].mxu0
  %5214 = vdwg.mxu0
  %v5215 = vadd.f32 %v5138, %v5207
  %v5216 = vadd.f32 %v5139, %v5212
  %v5217 = vxor.u32 %v5215, 2147483648
  %v5218 = vxor.u32 %v5216, 2147483648
  %v5219 = vmul.f32 %v5217, 1.442695
  %v5220 = vpow.pop %v5219
  %v5221 = vmul.f32 %v5218, 1.442695
  %v5222 = vpow.pop %v5221
  %v5223 = vadd.f32 %v5220, 1.0
  %v5224 = vadd.f32 %v5222, 1.0
  %v5225 = vrcp.pop %v5223
  %v5226 = vmul.f32 1.0, %v5225
  %v5227 = vrcp.pop %v5224
  %v5228 = vmul.f32 1.0, %v5227
  %v5229 = vtanh.pop %v5215
  %v5230 = vtanh.pop %v5216
  %v5231 = vmul.f32 %v5226, %v4962
  %v5232 = vmul.f32 %v5228, %v4963
  %5235 = vrot.lane.b32.xlu0 %v5229, 64
  %v5236 = vpop.permute.xlu0 %5235
  %5237 = vrot.lane.b32.xlu0 %v5230, 64
  %v5238 = vpop.permute.xlu0 %5237
  %v5241 = vmul.f32 %v5226, %v5236
  %v5242 = vmul.f32 %v5228, %v5238
  %5245 = vrot.lane.b32.xlu0 %v5241, 32
  %v5246 = vpop.permute.xlu0 %5245
  %5247 = vrot.lane.b32.xlu0 %v5242, 32
  %v5248 = vpop.permute.xlu0 %5247
  %v5251 = vadd.f32 %v5231, %v5246
  %v5252 = vadd.f32 %v5232, %v5248
  %v5253 = vtanh.pop %v5251
  %v5254 = vtanh.pop %v5252
  %5257 = vrot.lane.b32.xlu0 %v5253, 64
  %v5258 = vpop.permute.xlu0 %5257
  %5259 = vrot.lane.b32.xlu0 %v5254, 64
  %v5260 = vpop.permute.xlu0 %5259
  %v5263 = vmul.f32 %v5226, %v5258
  %v5264 = vmul.f32 %v5228, %v5260
  %s5265 = scalar_lea.vmem %s3, 512
  %v5266 = vld [vmem:[%s5265] sm:$0xff]
  %v5267 = vld [vmem:[%s5265 + $0x8] sm:$0xff]
  %v5268 = vld [vmem:[%s5265 + $0x10] sm:$0xff]
  %v5269 = vld [vmem:[%s5265 + $0x18] sm:$0xff]
  %5271 = vrot.lane.b32.xlu0 %v5263, 32
  %v5272 = vpop.permute.xlu0 %5271
  %v5273 = vsel %vm504, %v5272, 0
  %5275 = vmatprep.subr.mxu0 0.0
  %5276 = vmatpush1.msra.mxu0 %v5266
  %5277 = vmatprep.subr.mxu0 0.0
  %5278 = vmatpush1.msra.mxu0 %v5267
  %5279 = vmatprep.subr.mxu0 0.0
  %5280 = vmatpush1.msra.mxu0 %v5268
  %5281 = vmatprep.subr.mxu0 0.0
  %5282 = vmatpush1.msra.mxu0 %v5269
  %5283 = vmatprep.subr.mxu0 0.0
  %5284 = vmatpush1.msra.mxu0 0.0
  %5285 = vmatprep.subr.mxu0 0.0
  %5286 = vmatpush1.msra.mxu0 0.0
  %5287 = vmatprep.subr.mxu0 0.0
  %5288 = vmatpush1.msra.mxu0 0.0
  %5289 = vmatprep.subr.mxu0 0.0
  %5290 = vmatpush1.msra.mxu0 0.0
  %5291 = vmatprep.subr.mxu0 0.0
  %5292 = vmatpush1.msra.mxu0 0.0
  %5293 = vmatprep.subr.mxu0 0.0
  %5294 = vmatpush1.msra.mxu0 0.0
  %5295 = vmatprep.subr.mxu0 0.0
  %5296 = vmatpush1.msra.mxu0 0.0
  %5297 = vmatprep.subr.mxu0 0.0
  %5298 = vmatpush1.msra.mxu0 0.0
  %5299 = vmatprep.subr.mxu0 0.0
  %5300 = vmatpush1.msra.mxu0 0.0
  %5301 = vmatprep.subr.mxu0 0.0
  %5302 = vmatpush1.msra.mxu0 0.0
  %5303 = vmatprep.subr.mxu0 0.0
  %5304 = vmatpush1.msra.mxu0 0.0
  %5305 = vmatprep.subr.mxu0 0.0
  %5306 = vmatpush1.msra.mxu0 0.0
  %5307 = vmatprep.subr.mxu0 0.0
  %5308 = vmatpush1.msra.mxu0 0.0
  %5309 = vmatprep.subr.mxu0 0.0
  %5310 = vmatpush1.msra.mxu0 0.0
  %5311 = vmatprep.subr.mxu0 0.0
  %5312 = vmatpush1.msra.mxu0 0.0
  %5313 = vmatprep.subr.mxu0 0.0
  %5314 = vmatpush1.msra.mxu0 0.0
  %5315 = vmatprep.subr.mxu0 0.0
  %5316 = vmatpush1.msra.mxu0 0.0
  %5317 = vmatprep.subr.mxu0 0.0
  %5318 = vmatpush1.msra.mxu0 0.0
  %5319 = vmatprep.subr.mxu0 0.0
  %5320 = vmatpush1.msra.mxu0 0.0
  %5321 = vmatprep.subr.mxu0 0.0
  %5322 = vmatpush1.msra.mxu0 0.0
  %5323 = vmatprep.subr.mxu0 0.0
  %5324 = vmatpush1.msra.mxu0 0.0
  %5325 = vmatprep.subr.mxu0 0.0
  %5326 = vmatpush1.msra.mxu0 0.0
  %5327 = vmatprep.subr.mxu0 0.0
  %5328 = vmatpush1.msra.mxu0 0.0
  %5329 = vmatprep.subr.mxu0 0.0
  %5330 = vmatpush1.msra.mxu0 0.0
  %5331 = vmatprep.subr.mxu0 0.0
  %5332 = vmatpush1.msra.mxu0 0.0
  %5333 = vmatprep.subr.mxu0 0.0
  %5334 = vmatpush1.msra.mxu0 0.0
  %5335 = vmatprep.subr.mxu0 0.0
  %5336 = vmatpush1.msra.mxu0 0.0
  %5337 = vmatprep.subr.mxu0 0.0
  %5338 = vmatpush1.msra.mxu0 0.0
  %5339 = vmatprep.mubr.f32.mxu0 0.0
  %5340 = vmatmul.mubr.f32.gmra.mrb[0].mxu0 %v5273
  %v5341 = vpop.f32.mrb[0].mxu0
  %v5342 = vadd.f32 0.0, %v5341
  %v5343 = vpop.f32.mrb[0].mxu0
  %5344 = vdwg.mxu0
  %v5345 = vadd.f32 %v5137, %v5342
  %s5346 = scalar_lea.vmem %s3, 1152
  %v5347 = vld [vmem:[%s5346] sm:$0xff]
  %v5348 = vld [vmem:[%s5346 + $0x8] sm:$0xff]
  %v5349 = vld [vmem:[%s5346 + $0x10] sm:$0xff]
  %v5350 = vld [vmem:[%s5346 + $0x18] sm:$0xff]
  %5352 = vrot.lane.b32.xlu0 %v5264, 32
  %v5353 = vpop.permute.xlu0 %5352
  %v5354 = vsel %vm504, %v5353, 0
  %5356 = vmatprep.subr.mxu0 0.0
  %5357 = vmatpush1.msra.mxu0 %v5347
  %5358 = vmatprep.subr.mxu0 0.0
  %5359 = vmatpush1.msra.mxu0 %v5348
  %5360 = vmatprep.subr.mxu0 0.0
  %5361 = vmatpush1.msra.mxu0 %v5349
  %5362 = vmatprep.subr.mxu0 0.0
  %5363 = vmatpush1.msra.mxu0 %v5350
  %5364 = vmatprep.subr.mxu0 0.0
  %5365 = vmatpush1.msra.mxu0 0.0
  %5366 = vmatprep.subr.mxu0 0.0
  %5367 = vmatpush1.msra.mxu0 0.0
  %5368 = vmatprep.subr.mxu0 0.0
  %5369 = vmatpush1.msra.mxu0 0.0
  %5370 = vmatprep.subr.mxu0 0.0
  %5371 = vmatpush1.msra.mxu0 0.0
  %5372 = vmatprep.subr.mxu0 0.0
  %5373 = vmatpush1.msra.mxu0 0.0
  %5374 = vmatprep.subr.mxu0 0.0
  %5375 = vmatpush1.msra.mxu0 0.0
  %5376 = vmatprep.subr.mxu0 0.0
  %5377 = vmatpush1.msra.mxu0 0.0
  %5378 = vmatprep.subr.mxu0 0.0
  %5379 = vmatpush1.msra.mxu0 0.0
  %5380 = vmatprep.subr.mxu0 0.0
  %5381 = vmatpush1.msra.mxu0 0.0
  %5382 = vmatprep.subr.mxu0 0.0
  %5383 = vmatpush1.msra.mxu0 0.0
  %5384 = vmatprep.subr.mxu0 0.0
  %5385 = vmatpush1.msra.mxu0 0.0
  %5386 = vmatprep.subr.mxu0 0.0
  %5387 = vmatpush1.msra.mxu0 0.0
  %5388 = vmatprep.subr.mxu0 0.0
  %5389 = vmatpush1.msra.mxu0 0.0
  %5390 = vmatprep.subr.mxu0 0.0
  %5391 = vmatpush1.msra.mxu0 0.0
  %5392 = vmatprep.subr.mxu0 0.0
  %5393 = vmatpush1.msra.mxu0 0.0
  %5394 = vmatprep.subr.mxu0 0.0
  %5395 = vmatpush1.msra.mxu0 0.0
  %5396 = vmatprep.subr.mxu0 0.0
  %5397 = vmatpush1.msra.mxu0 0.0
  %5398 = vmatprep.subr.mxu0 0.0
  %5399 = vmatpush1.msra.mxu0 0.0
  %5400 = vmatprep.subr.mxu0 0.0
  %5401 = vmatpush1.msra.mxu0 0.0
  %5402 = vmatprep.subr.mxu0 0.0
  %5403 = vmatpush1.msra.mxu0 0.0
  %5404 = vmatprep.subr.mxu0 0.0
  %5405 = vmatpush1.msra.mxu0 0.0
  %5406 = vmatprep.subr.mxu0 0.0
  %5407 = vmatpush1.msra.mxu0 0.0
  %5408 = vmatprep.subr.mxu0 0.0
  %5409 = vmatpush1.msra.mxu0 0.0
  %5410 = vmatprep.subr.mxu0 0.0
  %5411 = vmatpush1.msra.mxu0 0.0
  %5412 = vmatprep.subr.mxu0 0.0
  %5413 = vmatpush1.msra.mxu0 0.0
  %5414 = vmatprep.subr.mxu0 0.0
  %5415 = vmatpush1.msra.mxu0 0.0
  %5416 = vmatprep.subr.mxu0 0.0
  %5417 = vmatpush1.msra.mxu0 0.0
  %5418 = vmatprep.subr.mxu0 0.0
  %5419 = vmatpush1.msra.mxu0 0.0
  %5420 = vmatprep.mubr.f32.mxu0 0.0
  %5421 = vmatmul.mubr.f32.gmra.mrb[0].mxu0 %v5354
  %v5422 = vpop.f32.mrb[0].mxu0
  %v5423 = vadd.f32 0.0, %v5422
  %v5424 = vpop.f32.mrb[0].mxu0
  %5425 = vdwg.mxu0
  %v5426 = vadd.f32 %v5345, %v5423
  %v5427 = vld [vmem:[#allocation2 + $0x110] sm:$0xff]
  %v5428 = vld [vmem:[#allocation2 + $0x118] sm:$0xff]
  %5429 = vmatprep.subr.mxu0 0.0
  %5430 = vmatpush1.msra.mxu0 %v18
  %5431 = vmatprep.subr.mxu0 0.0
  %5432 = vmatpush1.msra.mxu0 %v19
  %5433 = vmatprep.subr.mxu0 0.0
  %5434 = vmatpush1.msra.mxu0 %v20
  %5435 = vmatprep.subr.mxu0 0.0
  %5436 = vmatpush1.msra.mxu0 %v21
  %5437 = vmatprep.subr.mxu0 0.0
  %5438 = vmatpush1.msra.mxu0 0.0
  %5439 = vmatprep.subr.mxu0 0.0
  %5440 = vmatpush1.msra.mxu0 0.0
  %5441 = vmatprep.subr.mxu0 0.0
  %5442 = vmatpush1.msra.mxu0 0.0
  %5443 = vmatprep.subr.mxu0 0.0
  %5444 = vmatpush1.msra.mxu0 0.0
  %5445 = vmatprep.subr.mxu0 0.0
  %5446 = vmatpush1.msra.mxu0 0.0
  %5447 = vmatprep.subr.mxu0 0.0
  %5448 = vmatpush1.msra.mxu0 0.0
  %5449 = vmatprep.subr.mxu0 0.0
  %5450 = vmatpush1.msra.mxu0 0.0
  %5451 = vmatprep.subr.mxu0 0.0
  %5452 = vmatpush1.msra.mxu0 0.0
  %5453 = vmatprep.subr.mxu0 0.0
  %5454 = vmatpush1.msra.mxu0 0.0
  %5455 = vmatprep.subr.mxu0 0.0
  %5456 = vmatpush1.msra.mxu0 0.0
  %5457 = vmatprep.subr.mxu0 0.0
  %5458 = vmatpush1.msra.mxu0 0.0
  %5459 = vmatprep.subr.mxu0 0.0
  %5460 = vmatpush1.msra.mxu0 0.0
  %5461 = vmatprep.subr.mxu0 0.0
  %5462 = vmatpush1.msra.mxu0 0.0
  %5463 = vmatprep.subr.mxu0 0.0
  %5464 = vmatpush1.msra.mxu0 0.0
  %5465 = vmatprep.subr.mxu0 0.0
  %5466 = vmatpush1.msra.mxu0 0.0
  %5467 = vmatprep.subr.mxu0 0.0
  %5468 = vmatpush1.msra.mxu0 0.0
  %5469 = vmatprep.subr.mxu0 0.0
  %5470 = vmatpush1.msra.mxu0 0.0
  %5471 = vmatprep.subr.mxu0 0.0
  %5472 = vmatpush1.msra.mxu0 0.0
  %5473 = vmatprep.subr.mxu0 0.0
  %5474 = vmatpush1.msra.mxu0 0.0
  %5475 = vmatprep.subr.mxu0 0.0
  %5476 = vmatpush1.msra.mxu0 0.0
  %5477 = vmatprep.subr.mxu0 0.0
  %5478 = vmatpush1.msra.mxu0 0.0
  %5479 = vmatprep.subr.mxu0 0.0
  %5480 = vmatpush1.msra.mxu0 0.0
  %5481 = vmatprep.subr.mxu0 0.0
  %5482 = vmatpush1.msra.mxu0 0.0
  %5483 = vmatprep.subr.mxu0 0.0
  %5484 = vmatpush1.msra.mxu0 0.0
  %5485 = vmatprep.subr.mxu0 0.0
  %5486 = vmatpush1.msra.mxu0 0.0
  %5487 = vmatprep.subr.mxu0 0.0
  %5488 = vmatpush1.msra.mxu0 0.0
  %5489 = vmatprep.subr.mxu0 0.0
  %5490 = vmatpush1.msra.mxu0 0.0
  %5491 = vmatprep.subr.mxu0 0.0
  %5492 = vmatpush1.msra.mxu0 0.0
  %5493 = vmatprep.mubr.f32.mxu0 0.0
  %5494 = vmatmul.mubr.f32.gmra.mrb[0].mxu0 %v5273
  %v5495 = vpop.f32.mrb[0].mxu0
  %v5496 = vadd.f32 0.0, %v5495
  %v5497 = vpop.f32.mrb[0].mxu0
  %5498 = vmatprep.mubr.f32.mxu0 0.0
  %5499 = vmatmul.mubr.f32.gmra.mrb[0].mxu0 %v5354
  %v5500 = vpop.f32.mrb[0].mxu0
  %v5501 = vadd.f32 0.0, %v5500
  %v5502 = vpop.f32.mrb[0].mxu0
  %5503 = vdwg.mxu0
  %v5504 = vadd.f32 %v5427, %v5496
  %v5505 = vadd.f32 %v5428, %v5501
  %v5506 = vxor.u32 %v5504, 2147483648
  %v5507 = vxor.u32 %v5505, 2147483648
  %v5508 = vmul.f32 %v5506, 1.442695
  %v5509 = vpow.pop %v5508
  %v5510 = vmul.f32 %v5507, 1.442695
  %v5511 = vpow.pop %v5510
  %v5512 = vadd.f32 %v5509, 1.0
  %v5513 = vadd.f32 %v5511, 1.0
  %v5514 = vrcp.pop %v5512
  %v5515 = vmul.f32 1.0, %v5514
  %v5516 = vrcp.pop %v5513
  %v5517 = vmul.f32 1.0, %v5516
  %v5518 = vtanh.pop %v5504
  %v5519 = vtanh.pop %v5505
  %v5520 = vmul.f32 %v5515, %v5251
  %v5521 = vmul.f32 %v5517, %v5252
  %5524 = vrot.lane.b32.xlu0 %v5518, 64
  %v5525 = vpop.permute.xlu0 %5524
  %5526 = vrot.lane.b32.xlu0 %v5519, 64
  %v5527 = vpop.permute.xlu0 %5526
  %v5530 = vmul.f32 %v5515, %v5525
  %v5531 = vmul.f32 %v5517, %v5527
  %5534 = vrot.lane.b32.xlu0 %v5530, 32
  %v5535 = vpop.permute.xlu0 %5534
  %5536 = vrot.lane.b32.xlu0 %v5531, 32
  %v5537 = vpop.permute.xlu0 %5536
  %v5540 = vadd.f32 %v5520, %v5535
  %v5541 = vadd.f32 %v5521, %v5537
  %v5542 = vtanh.pop %v5540
  %v5543 = vtanh.pop %v5541
  %5546 = vrot.lane.b32.xlu0 %v5542, 64
  %v5547 = vpop.permute.xlu0 %5546
  %5548 = vrot.lane.b32.xlu0 %v5543, 64
  %v5549 = vpop.permute.xlu0 %5548
  %v5552 = vmul.f32 %v5515, %v5547
  %v5553 = vmul.f32 %v5517, %v5549
  %s5554 = scalar_lea.vmem %s3, 544
  %v5555 = vld [vmem:[%s5554] sm:$0xff]
  %v5556 = vld [vmem:[%s5554 + $0x8] sm:$0xff]
  %v5557 = vld [vmem:[%s5554 + $0x10] sm:$0xff]
  %v5558 = vld [vmem:[%s5554 + $0x18] sm:$0xff]
  %5560 = vrot.lane.b32.xlu0 %v5552, 32
  %v5561 = vpop.permute.xlu0 %5560
  %v5562 = vsel %vm504, %v5561, 0
  %5564 = vmatprep.subr.mxu0 0.0
  %5565 = vmatpush1.msra.mxu0 %v5555
  %5566 = vmatprep.subr.mxu0 0.0
  %5567 = vmatpush1.msra.mxu0 %v5556
  %5568 = vmatprep.subr.mxu0 0.0
  %5569 = vmatpush1.msra.mxu0 %v5557
  %5570 = vmatprep.subr.mxu0 0.0
  %5571 = vmatpush1.msra.mxu0 %v5558
  %5572 = vmatprep.subr.mxu0 0.0
  %5573 = vmatpush1.msra.mxu0 0.0
  %5574 = vmatprep.subr.mxu0 0.0
  %5575 = vmatpush1.msra.mxu0 0.0
  %5576 = vmatprep.subr.mxu0 0.0
  %5577 = vmatpush1.msra.mxu0 0.0
  %5578 = vmatprep.subr.mxu0 0.0
  %5579 = vmatpush1.msra.mxu0 0.0
  %5580 = vmatprep.subr.mxu0 0.0
  %5581 = vmatpush1.msra.mxu0 0.0
  %5582 = vmatprep.subr.mxu0 0.0
  %5583 = vmatpush1.msra.mxu0 0.0
  %5584 = vmatprep.subr.mxu0 0.0
  %5585 = vmatpush1.msra.mxu0 0.0
  %5586 = vmatprep.subr.mxu0 0.0
  %5587 = vmatpush1.msra.mxu0 0.0
  %5588 = vmatprep.subr.mxu0 0.0
  %5589 = vmatpush1.msra.mxu0 0.0
  %5590 = vmatprep.subr.mxu0 0.0
  %5591 = vmatpush1.msra.mxu0 0.0
  %5592 = vmatprep.subr.mxu0 0.0
  %5593 = vmatpush1.msra.mxu0 0.0
  %5594 = vmatprep.subr.mxu0 0.0
  %5595 = vmatpush1.msra.mxu0 0.0
  %5596 = vmatprep.subr.mxu0 0.0
  %5597 = vmatpush1.msra.mxu0 0.0
  %5598 = vmatprep.subr.mxu0 0.0
  %5599 = vmatpush1.msra.mxu0 0.0
  %5600 = vmatprep.subr.mxu0 0.0
  %5601 = vmatpush1.msra.mxu0 0.0
  %5602 = vmatprep.subr.mxu0 0.0
  %5603 = vmatpush1.msra.mxu0 0.0
  %5604 = vmatprep.subr.mxu0 0.0
  %5605 = vmatpush1.msra.mxu0 0.0
  %5606 = vmatprep.subr.mxu0 0.0
  %5607 = vmatpush1.msra.mxu0 0.0
  %5608 = vmatprep.subr.mxu0 0.0
  %5609 = vmatpush1.msra.mxu0 0.0
  %5610 = vmatprep.subr.mxu0 0.0
  %5611 = vmatpush1.msra.mxu0 0.0
  %5612 = vmatprep.subr.mxu0 0.0
  %5613 = vmatpush1.msra.mxu0 0.0
  %5614 = vmatprep.subr.mxu0 0.0
  %5615 = vmatpush1.msra.mxu0 0.0
  %5616 = vmatprep.subr.mxu0 0.0
  %5617 = vmatpush1.msra.mxu0 0.0
  %5618 = vmatprep.subr.mxu0 0.0
  %5619 = vmatpush1.msra.mxu0 0.0
  %5620 = vmatprep.subr.mxu0 0.0
  %5621 = vmatpush1.msra.mxu0 0.0
  %5622 = vmatprep.subr.mxu0 0.0
  %5623 = vmatpush1.msra.mxu0 0.0
  %5624 = vmatprep.subr.mxu0 0.0
  %5625 = vmatpush1.msra.mxu0 0.0
  %5626 = vmatprep.subr.mxu0 0.0
  %5627 = vmatpush1.msra.mxu0 0.0
  %5628 = vmatprep.mubr.f32.mxu0 0.0
  %5629 = vmatmul.mubr.f32.gmra.mrb[0].mxu0 %v5562
  %v5630 = vpop.f32.mrb[0].mxu0
  %v5631 = vadd.f32 0.0, %v5630
  %v5632 = vpop.f32.mrb[0].mxu0
  %5633 = vdwg.mxu0
  %v5634 = vadd.f32 %v5426, %v5631
  %s5635 = scalar_lea.vmem %s3, 1184
  %v5636 = vld [vmem:[%s5635] sm:$0xff]
  %v5637 = vld [vmem:[%s5635 + $0x8] sm:$0xff]
  %v5638 = vld [vmem:[%s5635 + $0x10] sm:$0xff]
  %v5639 = vld [vmem:[%s5635 + $0x18] sm:$0xff]
  %5641 = vrot.lane.b32.xlu0 %v5553, 32
  %v5642 = vpop.permute.xlu0 %5641
  %v5643 = vsel %vm504, %v5642, 0
  %5645 = vmatprep.subr.mxu0 0.0
  %5646 = vmatpush1.msra.mxu0 %v5636
  %5647 = vmatprep.subr.mxu0 0.0
  %5648 = vmatpush1.msra.mxu0 %v5637
  %5649 = vmatprep.subr.mxu0 0.0
  %5650 = vmatpush1.msra.mxu0 %v5638
  %5651 = vmatprep.subr.mxu0 0.0
  %5652 = vmatpush1.msra.mxu0 %v5639
  %5653 = vmatprep.subr.mxu0 0.0
  %5654 = vmatpush1.msra.mxu0 0.0
  %5655 = vmatprep.subr.mxu0 0.0
  %5656 = vmatpush1.msra.mxu0 0.0
  %5657 = vmatprep.subr.mxu0 0.0
  %5658 = vmatpush1.msra.mxu0 0.0
  %5659 = vmatprep.subr.mxu0 0.0
  %5660 = vmatpush1.msra.mxu0 0.0
  %5661 = vmatprep.subr.mxu0 0.0
  %5662 = vmatpush1.msra.mxu0 0.0
  %5663 = vmatprep.subr.mxu0 0.0
  %5664 = vmatpush1.msra.mxu0 0.0
  %5665 = vmatprep.subr.mxu0 0.0
  %5666 = vmatpush1.msra.mxu0 0.0
  %5667 = vmatprep.subr.mxu0 0.0
  %5668 = vmatpush1.msra.mxu0 0.0
  %5669 = vmatprep.subr.mxu0 0.0
  %5670 = vmatpush1.msra.mxu0 0.0
  %5671 = vmatprep.subr.mxu0 0.0
  %5672 = vmatpush1.msra.mxu0 0.0
  %5673 = vmatprep.subr.mxu0 0.0
  %5674 = vmatpush1.msra.mxu0 0.0
  %5675 = vmatprep.subr.mxu0 0.0
  %5676 = vmatpush1.msra.mxu0 0.0
  %5677 = vmatprep.subr.mxu0 0.0
  %5678 = vmatpush1.msra.mxu0 0.0
  %5679 = vmatprep.subr.mxu0 0.0
  %5680 = vmatpush1.msra.mxu0 0.0
  %5681 = vmatprep.subr.mxu0 0.0
  %5682 = vmatpush1.msra.mxu0 0.0
  %5683 = vmatprep.subr.mxu0 0.0
  %5684 = vmatpush1.msra.mxu0 0.0
  %5685 = vmatprep.subr.mxu0 0.0
  %5686 = vmatpush1.msra.mxu0 0.0
  %5687 = vmatprep.subr.mxu0 0.0
  %5688 = vmatpush1.msra.mxu0 0.0
  %5689 = vmatprep.subr.mxu0 0.0
  %5690 = vmatpush1.msra.mxu0 0.0
  %5691 = vmatprep.subr.mxu0 0.0
  %5692 = vmatpush1.msra.mxu0 0.0
  %5693 = vmatprep.subr.mxu0 0.0
  %5694 = vmatpush1.msra.mxu0 0.0
  %5695 = vmatprep.subr.mxu0 0.0
  %5696 = vmatpush1.msra.mxu0 0.0
  %5697 = vmatprep.subr.mxu0 0.0
  %5698 = vmatpush1.msra.mxu0 0.0
  %5699 = vmatprep.subr.mxu0 0.0
  %5700 = vmatpush1.msra.mxu0 0.0
  %5701 = vmatprep.subr.mxu0 0.0
  %5702 = vmatpush1.msra.mxu0 0.0
  %5703 = vmatprep.subr.mxu0 0.0
  %5704 = vmatpush1.msra.mxu0 0.0
  %5705 = vmatprep.subr.mxu0 0.0
  %5706 = vmatpush1.msra.mxu0 0.0
  %5707 = vmatprep.subr.mxu0 0.0
  %5708 = vmatpush1.msra.mxu0 0.0
  %5709 = vmatprep.mubr.f32.mxu0 0.0
  %5710 = vmatmul.mubr.f32.gmra.mrb[0].mxu0 %v5643
  %v5711 = vpop.f32.mrb[0].mxu0
  %v5712 = vadd.f32 0.0, %v5711
  %v5713 = vpop.f32.mrb[0].mxu0
  %5714 = vdwg.mxu0
  %v5715 = vadd.f32 %v5634, %v5712
  %v5716 = vld [vmem:[#allocation2 + $0x120] sm:$0xff]
  %v5717 = vld [vmem:[#allocation2 + $0x128] sm:$0xff]
  %5718 = vmatprep.subr.mxu0 0.0
  %5719 = vmatpush1.msra.mxu0 %v18
  %5720 = vmatprep.subr.mxu0 0.0
  %5721 = vmatpush1.msra.mxu0 %v19
  %5722 = vmatprep.subr.mxu0 0.0
  %5723 = vmatpush1.msra.mxu0 %v20
  %5724 = vmatprep.subr.mxu0 0.0
  %5725 = vmatpush1.msra.mxu0 %v21
  %5726 = vmatprep.subr.mxu0 0.0
  %5727 = vmatpush1.msra.mxu0 0.0
  %5728 = vmatprep.subr.mxu0 0.0
  %5729 = vmatpush1.msra.mxu0 0.0
  %5730 = vmatprep.subr.mxu0 0.0
  %5731 = vmatpush1.msra.mxu0 0.0
  %5732 = vmatprep.subr.mxu0 0.0
  %5733 = vmatpush1.msra.mxu0 0.0
  %5734 = vmatprep.subr.mxu0 0.0
  %5735 = vmatpush1.msra.mxu0 0.0
  %5736 = vmatprep.subr.mxu0 0.0
  %5737 = vmatpush1.msra.mxu0 0.0
  %5738 = vmatprep.subr.mxu0 0.0
  %5739 = vmatpush1.msra.mxu0 0.0
  %5740 = vmatprep.subr.mxu0 0.0
  %5741 = vmatpush1.msra.mxu0 0.0
  %5742 = vmatprep.subr.mxu0 0.0
  %5743 = vmatpush1.msra.mxu0 0.0
  %5744 = vmatprep.subr.mxu0 0.0
  %5745 = vmatpush1.msra.mxu0 0.0
  %5746 = vmatprep.subr.mxu0 0.0
  %5747 = vmatpush1.msra.mxu0 0.0
  %5748 = vmatprep.subr.mxu0 0.0
  %5749 = vmatpush1.msra.mxu0 0.0
  %5750 = vmatprep.subr.mxu0 0.0
  %5751 = vmatpush1.msra.mxu0 0.0
  %5752 = vmatprep.subr.mxu0 0.0
  %5753 = vmatpush1.msra.mxu0 0.0
  %5754 = vmatprep.subr.mxu0 0.0
  %5755 = vmatpush1.msra.mxu0 0.0
  %5756 = vmatprep.subr.mxu0 0.0
  %5757 = vmatpush1.msra.mxu0 0.0
  %5758 = vmatprep.subr.mxu0 0.0
  %5759 = vmatpush1.msra.mxu0 0.0
  %5760 = vmatprep.subr.mxu0 0.0
  %5761 = vmatpush1.msra.mxu0 0.0
  %5762 = vmatprep.subr.mxu0 0.0
  %5763 = vmatpush1.msra.mxu0 0.0
  %5764 = vmatprep.subr.mxu0 0.0
  %5765 = vmatpush1.msra.mxu0 0.0
  %5766 = vmatprep.subr.mxu0 0.0
  %5767 = vmatpush1.msra.mxu0 0.0
  %5768 = vmatprep.subr.mxu0 0.0
  %5769 = vmatpush1.msra.mxu0 0.0
  %5770 = vmatprep.subr.mxu0 0.0
  %5771 = vmatpush1.msra.mxu0 0.0
  %5772 = vmatprep.subr.mxu0 0.0
  %5773 = vmatpush1.msra.mxu0 0.0
  %5774 = vmatprep.subr.mxu0 0.0
  %5775 = vmatpush1.msra.mxu0 0.0
  %5776 = vmatprep.subr.mxu0 0.0
  %5777 = vmatpush1.msra.mxu0 0.0
  %5778 = vmatprep.subr.mxu0 0.0
  %5779 = vmatpush1.msra.mxu0 0.0
  %5780 = vmatprep.subr.mxu0 0.0
  %5781 = vmatpush1.msra.mxu0 0.0
  %5782 = vmatprep.mubr.f32.mxu0 0.0
  %5783 = vmatmul.mubr.f32.gmra.mrb[0].mxu0 %v5562
  %v5784 = vpop.f32.mrb[0].mxu0
  %v5785 = vadd.f32 0.0, %v5784
  %v5786 = vpop.f32.mrb[0].mxu0
  %5787 = vmatprep.mubr.f32.mxu0 0.0
  %5788 = vmatmul.mubr.f32.gmra.mrb[0].mxu0 %v5643
  %v5789 = vpop.f32.mrb[0].mxu0
  %v5790 = vadd.f32 0.0, %v5789
  %v5791 = vpop.f32.mrb[0].mxu0
  %5792 = vdwg.mxu0
  %v5793 = vadd.f32 %v5716, %v5785
  %v5794 = vadd.f32 %v5717, %v5790
  %v5795 = vxor.u32 %v5793, 2147483648
  %v5796 = vxor.u32 %v5794, 2147483648
  %v5797 = vmul.f32 %v5795, 1.442695
  %v5798 = vpow.pop %v5797
  %v5799 = vmul.f32 %v5796, 1.442695
  %v5800 = vpow.pop %v5799
  %v5801 = vadd.f32 %v5798, 1.0
  %v5802 = vadd.f32 %v5800, 1.0
  %v5803 = vrcp.pop %v5801
  %v5804 = vmul.f32 1.0, %v5803
  %v5805 = vrcp.pop %v5802
  %v5806 = vmul.f32 1.0, %v5805
  %v5807 = vtanh.pop %v5793
  %v5808 = vtanh.pop %v5794
  %v5809 = vmul.f32 %v5804, %v5540
  %v5810 = vmul.f32 %v5806, %v5541
  %5813 = vrot.lane.b32.xlu0 %v5807, 64
  %v5814 = vpop.permute.xlu0 %5813
  %5815 = vrot.lane.b32.xlu0 %v5808, 64
  %v5816 = vpop.permute.xlu0 %5815
  %v5819 = vmul.f32 %v5804, %v5814
  %v5820 = vmul.f32 %v5806, %v5816
  %5823 = vrot.lane.b32.xlu0 %v5819, 32
  %v5824 = vpop.permute.xlu0 %5823
  %5825 = vrot.lane.b32.xlu0 %v5820, 32
  %v5826 = vpop.permute.xlu0 %5825
  %v5829 = vadd.f32 %v5809, %v5824
  %v5830 = vadd.f32 %v5810, %v5826
  %v5831 = vtanh.pop %v5829
  %v5832 = vtanh.pop %v5830
  %5835 = vrot.lane.b32.xlu0 %v5831, 64
  %v5836 = vpop.permute.xlu0 %5835
  %5837 = vrot.lane.b32.xlu0 %v5832, 64
  %v5838 = vpop.permute.xlu0 %5837
  %v5841 = vmul.f32 %v5804, %v5836
  %v5842 = vmul.f32 %v5806, %v5838
  %s5843 = scalar_lea.vmem %s3, 576
  %v5844 = vld [vmem:[%s5843] sm:$0xff]
  %v5845 = vld [vmem:[%s5843 + $0x8] sm:$0xff]
  %v5846 = vld [vmem:[%s5843 + $0x10] sm:$0xff]
  %v5847 = vld [vmem:[%s5843 + $0x18] sm:$0xff]
  %5849 = vrot.lane.b32.xlu0 %v5841, 32
  %v5850 = vpop.permute.xlu0 %5849
  %v5851 = vsel %vm504, %v5850, 0
  %5853 = vmatprep.subr.mxu0 0.0
  %5854 = vmatpush1.msra.mxu0 %v5844
  %5855 = vmatprep.subr.mxu0 0.0
  %5856 = vmatpush1.msra.mxu0 %v5845
  %5857 = vmatprep.subr.mxu0 0.0
  %5858 = vmatpush1.msra.mxu0 %v5846
  %5859 = vmatprep.subr.mxu0 0.0
  %5860 = vmatpush1.msra.mxu0 %v5847
  %5861 = vmatprep.subr.mxu0 0.0
  %5862 = vmatpush1.msra.mxu0 0.0
  %5863 = vmatprep.subr.mxu0 0.0
  %5864 = vmatpush1.msra.mxu0 0.0
  %5865 = vmatprep.subr.mxu0 0.0
  %5866 = vmatpush1.msra.mxu0 0.0
  %5867 = vmatprep.subr.mxu0 0.0
  %5868 = vmatpush1.msra.mxu0 0.0
  %5869 = vmatprep.subr.mxu0 0.0
  %5870 = vmatpush1.msra.mxu0 0.0
  %5871 = vmatprep.subr.mxu0 0.0
  %5872 = vmatpush1.msra.mxu0 0.0
  %5873 = vmatprep.subr.mxu0 0.0
  %5874 = vmatpush1.msra.mxu0 0.0
  %5875 = vmatprep.subr.mxu0 0.0
  %5876 = vmatpush1.msra.mxu0 0.0
  %5877 = vmatprep.subr.mxu0 0.0
  %5878 = vmatpush1.msra.mxu0 0.0
  %5879 = vmatprep.subr.mxu0 0.0
  %5880 = vmatpush1.msra.mxu0 0.0
  %5881 = vmatprep.subr.mxu0 0.0
  %5882 = vmatpush1.msra.mxu0 0.0
  %5883 = vmatprep.subr.mxu0 0.0
  %5884 = vmatpush1.msra.mxu0 0.0
  %5885 = vmatprep.subr.mxu0 0.0
  %5886 = vmatpush1.msra.mxu0 0.0
  %5887 = vmatprep.subr.mxu0 0.0
  %5888 = vmatpush1.msra.mxu0 0.0
  %5889 = vmatprep.subr.mxu0 0.0
  %5890 = vmatpush1.msra.mxu0 0.0
  %5891 = vmatprep.subr.mxu0 0.0
  %5892 = vmatpush1.msra.mxu0 0.0
  %5893 = vmatprep.subr.mxu0 0.0
  %5894 = vmatpush1.msra.mxu0 0.0
  %5895 = vmatprep.subr.mxu0 0.0
  %5896 = vmatpush1.msra.mxu0 0.0
  %5897 = vmatprep.subr.mxu0 0.0
  %5898 = vmatpush1.msra.mxu0 0.0
  %5899 = vmatprep.subr.mxu0 0.0
  %5900 = vmatpush1.msra.mxu0 0.0
  %5901 = vmatprep.subr.mxu0 0.0
  %5902 = vmatpush1.msra.mxu0 0.0
  %5903 = vmatprep.subr.mxu0 0.0
  %5904 = vmatpush1.msra.mxu0 0.0
  %5905 = vmatprep.subr.mxu0 0.0
  %5906 = vmatpush1.msra.mxu0 0.0
  %5907 = vmatprep.subr.mxu0 0.0
  %5908 = vmatpush1.msra.mxu0 0.0
  %5909 = vmatprep.subr.mxu0 0.0
  %5910 = vmatpush1.msra.mxu0 0.0
  %5911 = vmatprep.subr.mxu0 0.0
  %5912 = vmatpush1.msra.mxu0 0.0
  %5913 = vmatprep.subr.mxu0 0.0
  %5914 = vmatpush1.msra.mxu0 0.0
  %5915 = vmatprep.subr.mxu0 0.0
  %5916 = vmatpush1.msra.mxu0 0.0
  %5917 = vmatprep.mubr.f32.mxu0 0.0
  %5918 = vmatmul.mubr.f32.gmra.mrb[0].mxu0 %v5851
  %v5919 = vpop.f32.mrb[0].mxu0
  %v5920 = vadd.f32 0.0, %v5919
  %v5921 = vpop.f32.mrb[0].mxu0
  %5922 = vdwg.mxu0
  %v5923 = vadd.f32 %v5715, %v5920
  %s5924 = scalar_lea.vmem %s3, 1216
  %v5925 = vld [vmem:[%s5924] sm:$0xff]
  %v5926 = vld [vmem:[%s5924 + $0x8] sm:$0xff]
  %v5927 = vld [vmem:[%s5924 + $0x10] sm:$0xff]
  %v5928 = vld [vmem:[%s5924 + $0x18] sm:$0xff]
  %5930 = vrot.lane.b32.xlu0 %v5842, 32
  %v5931 = vpop.permute.xlu0 %5930
  %v5932 = vsel %vm504, %v5931, 0
  %5934 = vmatprep.subr.mxu0 0.0
  %5935 = vmatpush1.msra.mxu0 %v5925
  %5936 = vmatprep.subr.mxu0 0.0
  %5937 = vmatpush1.msra.mxu0 %v5926
  %5938 = vmatprep.subr.mxu0 0.0
  %5939 = vmatpush1.msra.mxu0 %v5927
  %5940 = vmatprep.subr.mxu0 0.0
  %5941 = vmatpush1.msra.mxu0 %v5928
  %5942 = vmatprep.subr.mxu0 0.0
  %5943 = vmatpush1.msra.mxu0 0.0
  %5944 = vmatprep.subr.mxu0 0.0
  %5945 = vmatpush1.msra.mxu0 0.0
  %5946 = vmatprep.subr.mxu0 0.0
  %5947 = vmatpush1.msra.mxu0 0.0
  %5948 = vmatprep.subr.mxu0 0.0
  %5949 = vmatpush1.msra.mxu0 0.0
  %5950 = vmatprep.subr.mxu0 0.0
  %5951 = vmatpush1.msra.mxu0 0.0
  %5952 = vmatprep.subr.mxu0 0.0
  %5953 = vmatpush1.msra.mxu0 0.0
  %5954 = vmatprep.subr.mxu0 0.0
  %5955 = vmatpush1.msra.mxu0 0.0
  %5956 = vmatprep.subr.mxu0 0.0
  %5957 = vmatpush1.msra.mxu0 0.0
  %5958 = vmatprep.subr.mxu0 0.0
  %5959 = vmatpush1.msra.mxu0 0.0
  %5960 = vmatprep.subr.mxu0 0.0
  %5961 = vmatpush1.msra.mxu0 0.0
  %5962 = vmatprep.subr.mxu0 0.0
  %5963 = vmatpush1.msra.mxu0 0.0
  %5964 = vmatprep.subr.mxu0 0.0
  %5965 = vmatpush1.msra.mxu0 0.0
  %5966 = vmatprep.subr.mxu0 0.0
  %5967 = vmatpush1.msra.mxu0 0.0
  %5968 = vmatprep.subr.mxu0 0.0
  %5969 = vmatpush1.msra.mxu0 0.0
  %5970 = vmatprep.subr.mxu0 0.0
  %5971 = vmatpush1.msra.mxu0 0.0
  %5972 = vmatprep.subr.mxu0 0.0
  %5973 = vmatpush1.msra.mxu0 0.0
  %5974 = vmatprep.subr.mxu0 0.0
  %5975 = vmatpush1.msra.mxu0 0.0
  %5976 = vmatprep.subr.mxu0 0.0
  %5977 = vmatpush1.msra.mxu0 0.0
  %5978 = vmatprep.subr.mxu0 0.0
  %5979 = vmatpush1.msra.mxu0 0.0
  %5980 = vmatprep.subr.mxu0 0.0
  %5981 = vmatpush1.msra.mxu0 0.0
  %5982 = vmatprep.subr.mxu0 0.0
  %5983 = vmatpush1.msra.mxu0 0.0
  %5984 = vmatprep.subr.mxu0 0.0
  %5985 = vmatpush1.msra.mxu0 0.0
  %5986 = vmatprep.subr.mxu0 0.0
  %5987 = vmatpush1.msra.mxu0 0.0
  %5988 = vmatprep.subr.mxu0 0.0
  %5989 = vmatpush1.msra.mxu0 0.0
  %5990 = vmatprep.subr.mxu0 0.0
  %5991 = vmatpush1.msra.mxu0 0.0
  %5992 = vmatprep.subr.mxu0 0.0
  %5993 = vmatpush1.msra.mxu0 0.0
  %5994 = vmatprep.subr.mxu0 0.0
  %5995 = vmatpush1.msra.mxu0 0.0
  %5996 = vmatprep.subr.mxu0 0.0
  %5997 = vmatpush1.msra.mxu0 0.0
  %5998 = vmatprep.mubr.f32.mxu0 0.0
  %5999 = vmatmul.mubr.f32.gmra.mrb[0].mxu0 %v5932
  %v6000 = vpop.f32.mrb[0].mxu0
  %v6001 = vadd.f32 0.0, %v6000
  %v6002 = vpop.f32.mrb[0].mxu0
  %6003 = vdwg.mxu0
  %v6004 = vadd.f32 %v5923, %v6001
  %v6005 = vld [vmem:[#allocation2 + $0x130] sm:$0xff]
  %v6006 = vld [vmem:[#allocation2 + $0x138] sm:$0xff]
  %6007 = vmatprep.subr.mxu0 0.0
  %6008 = vmatpush1.msra.mxu0 %v18
  %6009 = vmatprep.subr.mxu0 0.0
  %6010 = vmatpush1.msra.mxu0 %v19
  %6011 = vmatprep.subr.mxu0 0.0
  %6012 = vmatpush1.msra.mxu0 %v20
  %6013 = vmatprep.subr.mxu0 0.0
  %6014 = vmatpush1.msra.mxu0 %v21
  %6015 = vmatprep.subr.mxu0 0.0
  %6016 = vmatpush1.msra.mxu0 0.0
  %6017 = vmatprep.subr.mxu0 0.0
  %6018 = vmatpush1.msra.mxu0 0.0
  %6019 = vmatprep.subr.mxu0 0.0
  %6020 = vmatpush1.msra.mxu0 0.0
  %6021 = vmatprep.subr.mxu0 0.0
  %6022 = vmatpush1.msra.mxu0 0.0
  %6023 = vmatprep.subr.mxu0 0.0
  %6024 = vmatpush1.msra.mxu0 0.0
  %6025 = vmatprep.subr.mxu0 0.0
  %6026 = vmatpush1.msra.mxu0 0.0
  %6027 = vmatprep.subr.mxu0 0.0
  %6028 = vmatpush1.msra.mxu0 0.0
  %6029 = vmatprep.subr.mxu0 0.0
  %6030 = vmatpush1.msra.mxu0 0.0
  %6031 = vmatprep.subr.mxu0 0.0
  %6032 = vmatpush1.msra.mxu0 0.0
  %6033 = vmatprep.subr.mxu0 0.0
  %6034 = vmatpush1.msra.mxu0 0.0
  %6035 = vmatprep.subr.mxu0 0.0
  %6036 = vmatpush1.msra.mxu0 0.0
  %6037 = vmatprep.subr.mxu0 0.0
  %6038 = vmatpush1.msra.mxu0 0.0
  %6039 = vmatprep.subr.mxu0 0.0
  %6040 = vmatpush1.msra.mxu0 0.0
  %6041 = vmatprep.subr.mxu0 0.0
  %6042 = vmatpush1.msra.mxu0 0.0
  %6043 = vmatprep.subr.mxu0 0.0
  %6044 = vmatpush1.msra.mxu0 0.0
  %6045 = vmatprep.subr.mxu0 0.0
  %6046 = vmatpush1.msra.mxu0 0.0
  %6047 = vmatprep.subr.mxu0 0.0
  %6048 = vmatpush1.msra.mxu0 0.0
  %6049 = vmatprep.subr.mxu0 0.0
  %6050 = vmatpush1.msra.mxu0 0.0
  %6051 = vmatprep.subr.mxu0 0.0
  %6052 = vmatpush1.msra.mxu0 0.0
  %6053 = vmatprep.subr.mxu0 0.0
  %6054 = vmatpush1.msra.mxu0 0.0
  %6055 = vmatprep.subr.mxu0 0.0
  %6056 = vmatpush1.msra.mxu0 0.0
  %6057 = vmatprep.subr.mxu0 0.0
  %6058 = vmatpush1.msra.mxu0 0.0
  %6059 = vmatprep.subr.mxu0 0.0
  %6060 = vmatpush1.msra.mxu0 0.0
  %6061 = vmatprep.subr.mxu0 0.0
  %6062 = vmatpush1.msra.mxu0 0.0
  %6063 = vmatprep.subr.mxu0 0.0
  %6064 = vmatpush1.msra.mxu0 0.0
  %6065 = vmatprep.subr.mxu0 0.0
  %6066 = vmatpush1.msra.mxu0 0.0
  %6067 = vmatprep.subr.mxu0 0.0
  %6068 = vmatpush1.msra.mxu0 0.0
  %6069 = vmatprep.subr.mxu0 0.0
  %6070 = vmatpush1.msra.mxu0 0.0
  %6071 = vmatprep.mubr.f32.mxu0 0.0
  %6072 = vmatmul.mubr.f32.gmra.mrb[0].mxu0 %v5851
  %v6073 = vpop.f32.mrb[0].mxu0
  %v6074 = vadd.f32 0.0, %v6073
  %v6075 = vpop.f32.mrb[0].mxu0
  %6076 = vmatprep.mubr.f32.mxu0 0.0
  %6077 = vmatmul.mubr.f32.gmra.mrb[0].mxu0 %v5932
  %v6078 = vpop.f32.mrb[0].mxu0
  %v6079 = vadd.f32 0.0, %v6078
  %v6080 = vpop.f32.mrb[0].mxu0
  %6081 = vdwg.mxu0
  %v6082 = vadd.f32 %v6005, %v6074
  %v6083 = vadd.f32 %v6006, %v6079
  %v6084 = vxor.u32 %v6082, 2147483648
  %v6085 = vxor.u32 %v6083, 2147483648
  %v6086 = vmul.f32 %v6084, 1.442695
  %v6087 = vpow.pop %v6086
  %v6088 = vmul.f32 %v6085, 1.442695
  %v6089 = vpow.pop %v6088
  %v6090 = vadd.f32 %v6087, 1.0
  %v6091 = vadd.f32 %v6089, 1.0
  %v6092 = vrcp.pop %v6090
  %v6093 = vmul.f32 1.0, %v6092
  %v6094 = vrcp.pop %v6091
  %v6095 = vmul.f32 1.0, %v6094
  %v6096 = vtanh.pop %v6082
  %v6097 = vtanh.pop %v6083
  %v6098 = vmul.f32 %v6093, %v5829
  %v6099 = vmul.f32 %v6095, %v5830
  %6102 = vrot.lane.b32.xlu0 %v6096, 64
  %v6103 = vpop.permute.xlu0 %6102
  %6104 = vrot.lane.b32.xlu0 %v6097, 64
  %v6105 = vpop.permute.xlu0 %6104
  %v6108 = vmul.f32 %v6093, %v6103
  %v6109 = vmul.f32 %v6095, %v6105
  %6112 = vrot.lane.b32.xlu0 %v6108, 32
  %v6113 = vpop.permute.xlu0 %6112
  %6114 = vrot.lane.b32.xlu0 %v6109, 32
  %v6115 = vpop.permute.xlu0 %6114
  %v6118 = vadd.f32 %v6098, %v6113
  %v6119 = vadd.f32 %v6099, %v6115
  %v6120 = vtanh.pop %v6118
  %v6121 = vtanh.pop %v6119
  %6124 = vrot.lane.b32.xlu0 %v6120, 64
  %v6125 = vpop.permute.xlu0 %6124
  %6126 = vrot.lane.b32.xlu0 %v6121, 64
  %v6127 = vpop.permute.xlu0 %6126
  %v6130 = vmul.f32 %v6093, %v6125
  %v6131 = vmul.f32 %v6095, %v6127
  %s6132 = scalar_lea.vmem %s3, 608
  %v6133 = vld [vmem:[%s6132] sm:$0xff]
  %v6134 = vld [vmem:[%s6132 + $0x8] sm:$0xff]
  %v6135 = vld [vmem:[%s6132 + $0x10] sm:$0xff]
  %v6136 = vld [vmem:[%s6132 + $0x18] sm:$0xff]
  %6138 = vrot.lane.b32.xlu0 %v6130, 32
  %v6139 = vpop.permute.xlu0 %6138
  %v6140 = vsel %vm504, %v6139, 0
  %6142 = vmatprep.subr.mxu0 0.0
  %6143 = vmatpush1.msra.mxu0 %v6133
  %6144 = vmatprep.subr.mxu0 0.0
  %6145 = vmatpush1.msra.mxu0 %v6134
  %6146 = vmatprep.subr.mxu0 0.0
  %6147 = vmatpush1.msra.mxu0 %v6135
  %6148 = vmatprep.subr.mxu0 0.0
  %6149 = vmatpush1.msra.mxu0 %v6136
  %6150 = vmatprep.subr.mxu0 0.0
  %6151 = vmatpush1.msra.mxu0 0.0
  %6152 = vmatprep.subr.mxu0 0.0
  %6153 = vmatpush1.msra.mxu0 0.0
  %6154 = vmatprep.subr.mxu0 0.0
  %6155 = vmatpush1.msra.mxu0 0.0
  %6156 = vmatprep.subr.mxu0 0.0
  %6157 = vmatpush1.msra.mxu0 0.0
  %6158 = vmatprep.subr.mxu0 0.0
  %6159 = vmatpush1.msra.mxu0 0.0
  %6160 = vmatprep.subr.mxu0 0.0
  %6161 = vmatpush1.msra.mxu0 0.0
  %6162 = vmatprep.subr.mxu0 0.0
  %6163 = vmatpush1.msra.mxu0 0.0
  %6164 = vmatprep.subr.mxu0 0.0
  %6165 = vmatpush1.msra.mxu0 0.0
  %6166 = vmatprep.subr.mxu0 0.0
  %6167 = vmatpush1.msra.mxu0 0.0
  %6168 = vmatprep.subr.mxu0 0.0
  %6169 = vmatpush1.msra.mxu0 0.0
  %6170 = vmatprep.subr.mxu0 0.0
  %6171 = vmatpush1.msra.mxu0 0.0
  %6172 = vmatprep.subr.mxu0 0.0
  %6173 = vmatpush1.msra.mxu0 0.0
  %6174 = vmatprep.subr.mxu0 0.0
  %6175 = vmatpush1.msra.mxu0 0.0
  %6176 = vmatprep.subr.mxu0 0.0
  %6177 = vmatpush1.msra.mxu0 0.0
  %6178 = vmatprep.subr.mxu0 0.0
  %6179 = vmatpush1.msra.mxu0 0.0
  %6180 = vmatprep.subr.mxu0 0.0
  %6181 = vmatpush1.msra.mxu0 0.0
  %6182 = vmatprep.subr.mxu0 0.0
  %6183 = vmatpush1.msra.mxu0 0.0
  %6184 = vmatprep.subr.mxu0 0.0
  %6185 = vmatpush1.msra.mxu0 0.0
  %6186 = vmatprep.subr.mxu0 0.0
  %6187 = vmatpush1.msra.mxu0 0.0
  %6188 = vmatprep.subr.mxu0 0.0
  %6189 = vmatpush1.msra.mxu0 0.0
  %6190 = vmatprep.subr.mxu0 0.0
  %6191 = vmatpush1.msra.mxu0 0.0
  %6192 = vmatprep.subr.mxu0 0.0
  %6193 = vmatpush1.msra.mxu0 0.0
  %6194 = vmatprep.subr.mxu0 0.0
  %6195 = vmatpush1.msra.mxu0 0.0
  %6196 = vmatprep.subr.mxu0 0.0
  %6197 = vmatpush1.msra.mxu0 0.0
  %6198 = vmatprep.subr.mxu0 0.0
  %6199 = vmatpush1.msra.mxu0 0.0
  %6200 = vmatprep.subr.mxu0 0.0
  %6201 = vmatpush1.msra.mxu0 0.0
  %6202 = vmatprep.subr.mxu0 0.0
  %6203 = vmatpush1.msra.mxu0 0.0
  %6204 = vmatprep.subr.mxu0 0.0
  %6205 = vmatpush1.msra.mxu0 0.0
  %6206 = vmatprep.mubr.f32.mxu0 0.0
  %6207 = vmatmul.mubr.f32.gmra.mrb[0].mxu0 %v6140
  %v6208 = vpop.f32.mrb[0].mxu0
  %v6209 = vadd.f32 0.0, %v6208
  %v6210 = vpop.f32.mrb[0].mxu0
  %6211 = vdwg.mxu0
  %v6212 = vadd.f32 %v6004, %v6209
  %s6213 = scalar_lea.vmem %s3, 1248
  %v6214 = vld [vmem:[%s6213] sm:$0xff]
  %v6215 = vld [vmem:[%s6213 + $0x8] sm:$0xff]
  %v6216 = vld [vmem:[%s6213 + $0x10] sm:$0xff]
  %v6217 = vld [vmem:[%s6213 + $0x18] sm:$0xff]
  %6219 = vrot.lane.b32.xlu0 %v6131, 32
  %v6220 = vpop.permute.xlu0 %6219
  %v6221 = vsel %vm504, %v6220, 0
  %6223 = vmatprep.subr.mxu0 0.0
  %6224 = vmatpush1.msra.mxu0 %v6214
  %6225 = vmatprep.subr.mxu0 0.0
  %6226 = vmatpush1.msra.mxu0 %v6215
  %6227 = vmatprep.subr.mxu0 0.0
  %6228 = vmatpush1.msra.mxu0 %v6216
  %6229 = vmatprep.subr.mxu0 0.0
  %6230 = vmatpush1.msra.mxu0 %v6217
  %6231 = vmatprep.subr.mxu0 0.0
  %6232 = vmatpush1.msra.mxu0 0.0
  %6233 = vmatprep.subr.mxu0 0.0
  %6234 = vmatpush1.msra.mxu0 0.0
  %6235 = vmatprep.subr.mxu0 0.0
  %6236 = vmatpush1.msra.mxu0 0.0
  %6237 = vmatprep.subr.mxu0 0.0
  %6238 = vmatpush1.msra.mxu0 0.0
  %6239 = vmatprep.subr.mxu0 0.0
  %6240 = vmatpush1.msra.mxu0 0.0
  %6241 = vmatprep.subr.mxu0 0.0
  %6242 = vmatpush1.msra.mxu0 0.0
  %6243 = vmatprep.subr.mxu0 0.0
  %6244 = vmatpush1.msra.mxu0 0.0
  %6245 = vmatprep.subr.mxu0 0.0
  %6246 = vmatpush1.msra.mxu0 0.0
  %6247 = vmatprep.subr.mxu0 0.0
  %6248 = vmatpush1.msra.mxu0 0.0
  %6249 = vmatprep.subr.mxu0 0.0
  %6250 = vmatpush1.msra.mxu0 0.0
  %6251 = vmatprep.subr.mxu0 0.0
  %6252 = vmatpush1.msra.mxu0 0.0
  %6253 = vmatprep.subr.mxu0 0.0
  %6254 = vmatpush1.msra.mxu0 0.0
  %6255 = vmatprep.subr.mxu0 0.0
  %6256 = vmatpush1.msra.mxu0 0.0
  %6257 = vmatprep.subr.mxu0 0.0
  %6258 = vmatpush1.msra.mxu0 0.0
  %6259 = vmatprep.subr.mxu0 0.0
  %6260 = vmatpush1.msra.mxu0 0.0
  %6261 = vmatprep.subr.mxu0 0.0
  %6262 = vmatpush1.msra.mxu0 0.0
  %6263 = vmatprep.subr.mxu0 0.0
  %6264 = vmatpush1.msra.mxu0 0.0
  %6265 = vmatprep.subr.mxu0 0.0
  %6266 = vmatpush1.msra.mxu0 0.0
  %6267 = vmatprep.subr.mxu0 0.0
  %6268 = vmatpush1.msra.mxu0 0.0
  %6269 = vmatprep.subr.mxu0 0.0
  %6270 = vmatpush1.msra.mxu0 0.0
  %6271 = vmatprep.subr.mxu0 0.0
  %6272 = vmatpush1.msra.mxu0 0.0
  %6273 = vmatprep.subr.mxu0 0.0
  %6274 = vmatpush1.msra.mxu0 0.0
  %6275 = vmatprep.subr.mxu0 0.0
  %6276 = vmatpush1.msra.mxu0 0.0
  %6277 = vmatprep.subr.mxu0 0.0
  %6278 = vmatpush1.msra.mxu0 0.0
  %6279 = vmatprep.subr.mxu0 0.0
  %6280 = vmatpush1.msra.mxu0 0.0
  %6281 = vmatprep.subr.mxu0 0.0
  %6282 = vmatpush1.msra.mxu0 0.0
  %6283 = vmatprep.subr.mxu0 0.0
  %6284 = vmatpush1.msra.mxu0 0.0
  %6285 = vmatprep.subr.mxu0 0.0
  %6286 = vmatpush1.msra.mxu0 0.0
  %6287 = vmatprep.mubr.f32.mxu0 0.0
  %6288 = vmatmul.mubr.f32.gmra.mrb[0].mxu0 %v6221
  %v6289 = vpop.f32.mrb[0].mxu0
  %v6290 = vadd.f32 0.0, %v6289
  %v6291 = vpop.f32.mrb[0].mxu0
  %6292 = vdwg.mxu0
  %v6293 = vadd.f32 %v6212, %v6290
  %v6294 = vlaneseq
  %v6295 = vshrl.u32 %v6294, 7
  %v6296 = vsub.s32 0, %v6295
  %v6297 = vrot.slane %v23, %v6296
  %v6298 = vadd.f32 %v6293, %v6297
  %v6299 = vmax.f32 %v6298, 0.0
  %6301 = vrot.lane.b32.xlu0 %v6297, 96
  %v6302 = vpop.permute.xlu0 %6301
  %v6304 = vmul.f32 %v6299, %v6302
  %v6305 = vsel %vm504, %v6304, 0.0
  %6306 = vadd.xlane.f32.xlu0 %v6305
  %v6307 = vpop.xlane.xlu0 %6306
  %v6308 = vadd.f32 %v6307, %v6297
  %v6309 = vxor.u32 %v6308, 2147483648
  %v6310 = vmul.f32 %v6309, 1.442695
  %v6311 = vpow.pop %v6310
  %v6312 = vadd.f32 %v6311, 1.0
  %v6313 = vrcp.pop %v6312
  %v6314 = vmul.f32 1.0, %v6313
  %6316 = vrot.lane.b32.xlu0 %v6314, 64
  %v6317 = vpop.permute.xlu0 %6316
  %vm6319 = vcmask 1024
  %6320 = vst.msk [vmem:[%s4] sm:$0x3] %vm6319, %v6317
  // Predicated region
  $region18: #{tpu_custom_call.1} parent=0 // pred_check
    _
  $region19: #{tpu_custom_call.1} parent=0 // pred_check_branch
    %6322 = sbr.rel (0) target = $region21
  $region20: #{tpu_custom_call.1} parent=0 // pred_region
    _
  $region21: #{tpu_custom_call.1} parent=0 // pred_fallthru
    _
  // Predicated region
  $region22: #{tpu_custom_call.1} parent=0 // pred_check
    _
  $region23: #{tpu_custom_call.1} parent=0 // pred_check_branch
    %6324 = sbr.rel (0) target = $region25
  $region24: #{tpu_custom_call.1} parent=0 // pred_region
    _
  $region25: #{tpu_custom_call.1} parent=0 // pred_fallthru
    _

</llo_original>
